<compile_context>
chip_gen: v6e
topology: v6e:2x2x1
jax: 0.10.0
libtpu: 0.0.40
codegen_flags: <defaults>
</compile_context>

<pallas_src>
import math

import jax
import jax.numpy as jnp
from jax.experimental import pallas as pl
from jax.experimental.pallas import tpu as pltpu

HIDDEN = 512
LANE = 128  # pad obs_dim / act_dim to this many lanes


def _round_up(x, m):
    return (x + m - 1) // m * m


def _ceil_div(a, b):
    return -(-a // b)


def _tpu_generation():
    """Best-effort TPU generation (5, 6, 7, ...). 0 -> unknown (conservative)."""
    try:
        kind = jax.devices()[0].device_kind.lower()
    except Exception:
        return 0
    for g in (7, 6, 5, 4, 3):
        if f"v{g}" in kind or f"tpu{g}" in kind:
            return g
    return 0


def _batch_tiling(B, *, min_rows, max_tile, min_steps):
    """Pick (TB, B_pad): TB a multiple of 128 (>= min_rows for a single step),
    TB <= max_tile, >= min_steps grid steps when B is large enough, and
    padding bounded to < 128 rows per step (no round_up(B, TB) blowup)."""
    B_pad = _round_up(max(B, min_rows), 128)
    steps = max(min_steps, _ceil_div(B_pad, max_tile))
    steps = max(1, min(steps, B_pad // 128))
    TB = _round_up(_ceil_div(B_pad, steps), 128)
    B_pad = steps * TB
    return TB, B_pad


def make_actor_kernel(use_bf16_act):
    """Fused 4-layer MLP: (Linear -> Tanh) x3 -> Linear.
    bf16 MXU matmuls with f32 accumulation; f32 bias-add; tanh in bf16 on
    v6e/v7x (bf16 EUP) or f32 on v5e."""
    act_dtype = jnp.bfloat16 if use_bf16_act else jnp.float32

    def kernel(x_ref,
               w1_ref, b1_ref,
               w2_ref, b2_ref,
               w3_ref, b3_ref,
               w4_ref, b4_ref,
               mu_ref):
        def layer(h, w_ref, b_ref):
            y = jnp.dot(h, w_ref[...], preferred_element_type=jnp.float32) + b_ref[...]
            # cast once, tanh in the gated dtype, result is bf16 for the next MXU op
            return jnp.tanh(y.astype(act_dtype)).astype(jnp.bfloat16)

        h = layer(x_ref[...], w1_ref, b1_ref)           # x already bf16
        h = layer(h, w2_ref, b2_ref)
        h = layer(h, w3_ref, b3_ref)
        mu_ref[...] = jnp.dot(h, w4_ref[...],
                              preferred_element_type=jnp.float32) + b4_ref[...]

    return kernel


def _build_actor_call(kernel, *, B_pad, TB, OBS_P, ACT_P, H, cost, weight_buffers):
    const = lambda i: (0, 0)  # grid-invariant: stays VMEM-resident across steps
    if weight_buffers is None:
        wspec = lambda shp: pl.BlockSpec(shp, const)
    else:
        wspec = lambda shp: pl.BlockSpec(
            shp, const, pipeline_mode=pl.Buffered(weight_buffers))

    return pl.pallas_call(
        kernel,
        out_shape=jax.ShapeDtypeStruct((B_pad, ACT_P), jnp.float32),
        grid=(B_pad // TB,),
        in_specs=[
            pl.BlockSpec((TB, OBS_P), lambda i: (i, 0)),   # state tile (bf16)
            wspec((OBS_P, H)), wspec((1, H)),              # w1, b1
            wspec((H, H)), wspec((1, H)),                  # w2, b2
            wspec((H, H)), wspec((1, H)),                  # w3, b3
            wspec((H, ACT_P)), wspec((1, ACT_P)),          # w4, b4
        ],
        out_specs=pl.BlockSpec((TB, ACT_P), lambda i: (i, 0)),
        compiler_params=pltpu.CompilerParams(
            dimension_semantics=("parallel",)),
        cost_estimate=cost,
    )


def ppo_forward(state, params, *, batch_tile=512):
    """Returns (mu, std) — the parameters of the Normal distribution built by
    PPONet.forward. std does not depend on state and is computed here."""
    B, obs_dim = state.shape
    H = params["w2"].shape[0]
    OBS_P = params["w1"].shape[0]   # padded obs dim (multiple of 128)
    ACT_P = params["w4"].shape[1]   # padded act dim (multiple of 128)
    act_dim = params["log_std"].shape[-1]

    gen = _tpu_generation()
    use_bf16_act = gen >= 6                       # bf16 EUP/VPU only on v6e+
    min_rows = 256 if gen >= 6 else 128           # fill the MXU (2x256^2 vs 4x128^2)
    min_steps = 2 if (gen >= 7 and B >= 2 * min_rows) else 1  # use both v7x TCs

    TB, B_pad = _batch_tiling(B, min_rows=min_rows, max_tile=batch_tile,
                              min_steps=min_steps)

    # Lane-dense bf16 state slab [B_pad, OBS_P] built directly in bf16.
    if (B_pad, OBS_P) == (B, obs_dim):
        x = state.astype(jnp.bfloat16)
    else:
        x = jnp.zeros((B_pad, OBS_P), jnp.bfloat16).at[:B, :obs_dim].set(
            state.astype(jnp.bfloat16))

    # Cost estimate over the *useful* rows only (padding excluded).
    flops = 2 * B * (obs_dim * H + 2 * H * H + H * act_dim)
    transcendentals = 3 * B * H
    bytes_accessed = (
        int(state.size) * state.dtype.itemsize
        + sum(int(params[f"w{k}"].size) * 2 + int(params[f"b{k}"].size) * 4
              for k in range(1, 5))
        + B * act_dim * 4)
    cost = pl.CostEstimate(flops=flops, transcendentals=transcendentals,
                           bytes_accessed=bytes_accessed)

    kernel = make_actor_kernel(use_bf16_act)
    args = (x,
            params["w1"], params["b1"],
            params["w2"], params["b2"],
            params["w3"], params["b3"],
            params["w4"], params["b4"])
    try:
        mu_pad = _build_actor_call(kernel, B_pad=B_pad, TB=TB, OBS_P=OBS_P,
                                   ACT_P=ACT_P, H=H, cost=cost,
                                   weight_buffers=1)(*args)
    except Exception:
        # jax without BlockSpec pipeline_mode / Buffered(1): default
        # double-buffered weight specs (~1.3 MB extra VMEM, still tiny).
        mu_pad = _build_actor_call(kernel, B_pad=B_pad, TB=TB, OBS_P=OBS_P,
                                   ACT_P=ACT_P, H=H, cost=cost,
                                   weight_buffers=None)(*args)

    mu = mu_pad[:B, :act_dim]
    std = jnp.broadcast_to(jnp.exp(params["log_std"]), mu.shape)
    return mu, std


def init_params(key, obs_dim, act_dim, hidden=HIDDEN):
    """Init mimicking nn.Linear's U(-1/sqrt(fan_in), 1/sqrt(fan_in)).

    Returns (params, params_fp32):
      params      — kernel weights [in, out], zero-padded to 128 lanes on the
                    obs/act axes, bf16 weights / f32 biases, plus log_std.
      params_fp32 — the unpadded fp32 originals (torch-equivalent reference).
    """
    obs_p = _round_up(obs_dim, LANE)
    act_p = _round_up(act_dim, LANE)
    dims_true = [(obs_dim, hidden), (hidden, hidden), (hidden, hidden), (hidden, act_dim)]
    dims_pad = [(obs_p, hidden), (hidden, hidden), (hidden, hidden), (hidden, act_p)]
    params, params_fp32 = {}, {}
    for i, ((fi, fo), (pi, po)) in enumerate(zip(dims_true, dims_pad), start=1):
        key, kw, kb = jax.random.split(key, 3)
        bound = 1.0 / math.sqrt(fi)
        w = jax.random.uniform(kw, (fi, fo), jnp.float32, -bound, bound)
        b = jax.random.uniform(kb, (fo,), jnp.float32, -bound, bound)
        params_fp32[f"w{i}"] = w
        params_fp32[f"b{i}"] = b
        w_pad = jnp.zeros((pi, po), jnp.float32).at[:fi, :fo].set(w)
        b_pad = jnp.zeros((1, po), jnp.float32).at[0, :fo].set(b)
        params[f"w{i}"] = w_pad.astype(jnp.bfloat16)
        params[f"b{i}"] = b_pad
    params["log_std"] = jnp.zeros((1, act_dim), jnp.float32)
    params_fp32["log_std"] = jnp.zeros((act_dim,), jnp.float32)
    return params, params_fp32


def reference_forward(state, params, obs_dim, act_dim, use_bf16_act):
    """Pure-JAX reference mirroring the kernel's exact precision path."""
    act_dt = jnp.bfloat16 if use_bf16_act else jnp.float32
    B = state.shape[0]
    obs_p = params["w1"].shape[0]
    x = jnp.zeros((B, obs_p), jnp.bfloat16).at[:, :obs_dim].set(
        state.astype(jnp.bfloat16))

    def layer(h, w, b):
        y = jnp.dot(h, w, preferred_element_type=jnp.float32) + b
        return jnp.tanh(y.astype(act_dt)).astype(jnp.bfloat16)

    h = layer(x, params["w1"], params["b1"])
    h = layer(h, params["w2"], params["b2"])
    h = layer(h, params["w3"], params["b3"])
    mu = (jnp.dot(h, params["w4"], preferred_element_type=jnp.float32)
          + params["b4"])[:, :act_dim]
    std = jnp.broadcast_to(jnp.exp(params["log_std"]), mu.shape)
    return mu, std


def reference_forward_fp32(state, params_fp32, act_dim):
    """True fp32 torch-equivalent PPONet.forward (actor head)."""
    h = state
    for i in (1, 2, 3):
        h = jnp.tanh(h @ params_fp32[f"w{i}"] + params_fp32[f"b{i}"])
    mu = h @ params_fp32["w4"] + params_fp32["b4"]
    std = jnp.broadcast_to(jnp.exp(params_fp32["log_std"]), mu.shape)
    return mu, std


if __name__ == "__main__":
    obs_dim = 8
    act_dim = 4
    batch = 8

    key = jax.random.PRNGKey(0)
    key, kp, kx = jax.random.split(key, 3)
    params, params_fp32 = init_params(kp, obs_dim, act_dim)
    state = jax.random.normal(kx, (batch, obs_dim), jnp.float32)

    mu, std = jax.block_until_ready(ppo_forward(state, params))
    assert mu.shape == (batch, act_dim) and std.shape == (batch, act_dim)

    # Exact-precision-path reference (bf16 matmuls, gated tanh dtype).
    use_bf16_act = _tpu_generation() >= 6
    mu_ref, std_ref = reference_forward(state, params, obs_dim, act_dim, use_bf16_act)
    assert jnp.allclose(mu, mu_ref, atol=2e-3, rtol=2e-3), \
        float(jnp.max(jnp.abs(mu - mu_ref)))
    assert jnp.allclose(std, std_ref, atol=1e-6, rtol=1e-6)

    # Looser check against the true fp32 PyTorch-equivalent model: documents the
    # accuracy cost of the bf16 weight/activation path through the 4-layer stack.
    mu32, std32 = reference_forward_fp32(state, params_fp32, act_dim)
    assert jnp.allclose(mu, mu32, atol=5e-2, rtol=5e-2), \
        float(jnp.max(jnp.abs(mu - mu32)))
    assert jnp.allclose(std, std32, atol=1e-6, rtol=1e-6)

    print("KERNEL_OK")
</pallas_src>

<mosaic_0001>
module attributes {stable_mosaic.version = 11 : i64} {
  func.func @kernel(%arg0: i32, %arg1: memref<128x128xbf16, #tpu.memory_space<vmem>>, %arg2: memref<128x512xbf16, #tpu.memory_space<vmem>>, %arg3: memref<1x512xf32, #tpu.memory_space<vmem>>, %arg4: memref<512x512xbf16, #tpu.memory_space<vmem>>, %arg5: memref<1x512xf32, #tpu.memory_space<vmem>>, %arg6: memref<512x512xbf16, #tpu.memory_space<vmem>>, %arg7: memref<1x512xf32, #tpu.memory_space<vmem>>, %arg8: memref<512x128xbf16, #tpu.memory_space<vmem>>, %arg9: memref<1x128xf32, #tpu.memory_space<vmem>>, %arg10: memref<128x128xf32, #tpu.memory_space<vmem>>) attributes {dimension_semantics = [#tpu.dimension_semantics<parallel>], iteration_bounds = array<i64: 1>, scalar_prefetch = 0 : i64, scratch_operands = 0 : i64, tpu.core_type = #tpu.core_type<tc>, window_params = [{transform_indices = @transform_0, window_bounds = array<i64: 128, 128>}, {pipeline_mode = #tpu.pipeline_mode<synchronous>, transform_indices = @transform_1, window_bounds = array<i64: 128, 512>}, {pipeline_mode = #tpu.pipeline_mode<synchronous>, transform_indices = @transform_2, window_bounds = array<i64: 1, 512>}, {pipeline_mode = #tpu.pipeline_mode<synchronous>, transform_indices = @transform_3, window_bounds = array<i64: 512, 512>}, {pipeline_mode = #tpu.pipeline_mode<synchronous>, transform_indices = @transform_4, window_bounds = array<i64: 1, 512>}, {pipeline_mode = #tpu.pipeline_mode<synchronous>, transform_indices = @transform_5, window_bounds = array<i64: 512, 512>}, {pipeline_mode = #tpu.pipeline_mode<synchronous>, transform_indices = @transform_6, window_bounds = array<i64: 1, 512>}, {pipeline_mode = #tpu.pipeline_mode<synchronous>, transform_indices = @transform_7, window_bounds = array<i64: 512, 128>}, {pipeline_mode = #tpu.pipeline_mode<synchronous>, transform_indices = @transform_8, window_bounds = array<i64: 1, 128>}, {transform_indices = @transform_9, window_bounds = array<i64: 128, 128>}]} {
    %c0 = arith.constant 0 : index
    %c0_0 = arith.constant 0 : index
    %0 = vector.load %arg1[%c0, %c0_0] : memref<128x128xbf16, #tpu.memory_space<vmem>>, vector<128x128xbf16>
    %c0_1 = arith.constant 0 : index
    %c0_2 = arith.constant 0 : index
    %1 = vector.load %arg2[%c0_1, %c0_2] : memref<128x512xbf16, #tpu.memory_space<vmem>>, vector<128x512xbf16>
    %cst = arith.constant dense<0.000000e+00> : vector<128x512xf32>
    %2 = tpu.matmul %0, %1, %cst {dimension_numbers = #tpu.dot_dimension_numbers<[1], [0], [0], [1], [0, 0, 1, 1], [], []>} : vector<128x128xbf16>, vector<128x512xbf16>, vector<128x512xf32> -> vector<128x512xf32>
    %c0_3 = arith.constant 0 : index
    %c0_4 = arith.constant 0 : index
    %3 = vector.load %arg3[%c0_3, %c0_4] : memref<1x512xf32, #tpu.memory_space<vmem>>, vector<1x512xf32>
    %4 = vector.broadcast %3 : vector<1x512xf32> to vector<128x512xf32>
    %5 = arith.addf %2, %4 : vector<128x512xf32>
    %6 = math.tanh %5 : vector<128x512xf32>
    %7 = arith.truncf %6 : vector<128x512xf32> to vector<128x512xbf16>
    %c0_5 = arith.constant 0 : index
    %c0_6 = arith.constant 0 : index
    %8 = vector.load %arg4[%c0_5, %c0_6] : memref<512x512xbf16, #tpu.memory_space<vmem>>, vector<512x512xbf16>
    %cst_7 = arith.constant dense<0.000000e+00> : vector<128x512xf32>
    %9 = tpu.matmul %7, %8, %cst_7 {dimension_numbers = #tpu.dot_dimension_numbers<[1], [0], [0], [1], [0, 0, 1, 1], [], []>} : vector<128x512xbf16>, vector<512x512xbf16>, vector<128x512xf32> -> vector<128x512xf32>
    %c0_8 = arith.constant 0 : index
    %c0_9 = arith.constant 0 : index
    %10 = vector.load %arg5[%c0_8, %c0_9] : memref<1x512xf32, #tpu.memory_space<vmem>>, vector<1x512xf32>
    %11 = vector.broadcast %10 : vector<1x512xf32> to vector<128x512xf32>
    %12 = arith.addf %9, %11 : vector<128x512xf32>
    %13 = math.tanh %12 : vector<128x512xf32>
    %14 = arith.truncf %13 : vector<128x512xf32> to vector<128x512xbf16>
    %c0_10 = arith.constant 0 : index
    %c0_11 = arith.constant 0 : index
    %15 = vector.load %arg6[%c0_10, %c0_11] : memref<512x512xbf16, #tpu.memory_space<vmem>>, vector<512x512xbf16>
    %cst_12 = arith.constant dense<0.000000e+00> : vector<128x512xf32>
    %16 = tpu.matmul %14, %15, %cst_12 {dimension_numbers = #tpu.dot_dimension_numbers<[1], [0], [0], [1], [0, 0, 1, 1], [], []>} : vector<128x512xbf16>, vector<512x512xbf16>, vector<128x512xf32> -> vector<128x512xf32>
    %c0_13 = arith.constant 0 : index
    %c0_14 = arith.constant 0 : index
    %17 = vector.load %arg7[%c0_13, %c0_14] : memref<1x512xf32, #tpu.memory_space<vmem>>, vector<1x512xf32>
    %18 = vector.broadcast %17 : vector<1x512xf32> to vector<128x512xf32>
    %19 = arith.addf %16, %18 : vector<128x512xf32>
    %20 = math.tanh %19 : vector<128x512xf32>
    %21 = arith.truncf %20 : vector<128x512xf32> to vector<128x512xbf16>
    %c0_15 = arith.constant 0 : index
    %c0_16 = arith.constant 0 : index
    %22 = vector.load %arg8[%c0_15, %c0_16] : memref<512x128xbf16, #tpu.memory_space<vmem>>, vector<512x128xbf16>
    %cst_17 = arith.constant dense<0.000000e+00> : vector<128x128xf32>
    %23 = tpu.matmul %21, %22, %cst_17 {dimension_numbers = #tpu.dot_dimension_numbers<[1], [0], [0], [1], [0, 0, 1, 1], [], []>} : vector<128x512xbf16>, vector<512x128xbf16>, vector<128x128xf32> -> vector<128x128xf32>
    %c0_18 = arith.constant 0 : index
    %c0_19 = arith.constant 0 : index
    %24 = vector.load %arg9[%c0_18, %c0_19] : memref<1x128xf32, #tpu.memory_space<vmem>>, vector<1x128xf32>
    %25 = vector.broadcast %24 : vector<1x128xf32> to vector<128x128xf32>
    %26 = arith.addf %23, %25 : vector<128x128xf32>
    %c0_20 = arith.constant 0 : index
    %c0_21 = arith.constant 0 : index
    %27 = vector.load %arg10[%c0_20, %c0_21] : memref<128x128xf32, #tpu.memory_space<vmem>>, vector<128x128xf32>
    tpu.vector_store %arg10[%c0_20, %c0_21], %26 {strides = array<i32>} : memref<128x128xf32, #tpu.memory_space<vmem>>, vector<128x128xf32>,
    return
  }
  func.func @transform_0(%arg0: i32) -> (i32, i32) {
    %c0_i32 = arith.constant 0 : i32
    %c0_i32_0 = arith.constant 0 : i32
    return %arg0, %c0_i32 : i32, i32
  }
  func.func @transform_1(%arg0: i32) -> (i32, i32) {
    %c0_i32 = arith.constant 0 : i32
    %c0_i32_0 = arith.constant 0 : i32
    %c0_i32_1 = arith.constant 0 : i32
    return %c0_i32, %c0_i32_0 : i32, i32
  }
  func.func @transform_2(%arg0: i32) -> (i32, i32) {
    %c0_i32 = arith.constant 0 : i32
    %c0_i32_0 = arith.constant 0 : i32
    %c0_i32_1 = arith.constant 0 : i32
    return %c0_i32, %c0_i32_0 : i32, i32
  }
  func.func @transform_3(%arg0: i32) -> (i32, i32) {
    %c0_i32 = arith.constant 0 : i32
    %c0_i32_0 = arith.constant 0 : i32
    %c0_i32_1 = arith.constant 0 : i32
    return %c0_i32, %c0_i32_0 : i32, i32
  }
  func.func @transform_4(%arg0: i32) -> (i32, i32) {
    %c0_i32 = arith.constant 0 : i32
    %c0_i32_0 = arith.constant 0 : i32
    %c0_i32_1 = arith.constant 0 : i32
    return %c0_i32, %c0_i32_0 : i32, i32
  }
  func.func @transform_5(%arg0: i32) -> (i32, i32) {
    %c0_i32 = arith.constant 0 : i32
    %c0_i32_0 = arith.constant 0 : i32
    %c0_i32_1 = arith.constant 0 : i32
    return %c0_i32, %c0_i32_0 : i32, i32
  }
  func.func @transform_6(%arg0: i32) -> (i32, i32) {
    %c0_i32 = arith.constant 0 : i32
    %c0_i32_0 = arith.constant 0 : i32
    %c0_i32_1 = arith.constant 0 : i32
    return %c0_i32, %c0_i32_0 : i32, i32
  }
  func.func @transform_7(%arg0: i32) -> (i32, i32) {
    %c0_i32 = arith.constant 0 : i32
    %c0_i32_0 = arith.constant 0 : i32
    %c0_i32_1 = arith.constant 0 : i32
    return %c0_i32, %c0_i32_0 : i32, i32
  }
  func.func @transform_8(%arg0: i32) -> (i32, i32) {
    %c0_i32 = arith.constant 0 : i32
    %c0_i32_0 = arith.constant 0 : i32
    %c0_i32_1 = arith.constant 0 : i32
    return %c0_i32, %c0_i32_0 : i32, i32
  }
  func.func @transform_9(%arg0: i32) -> (i32, i32) {
    %c0_i32 = arith.constant 0 : i32
    %c0_i32_0 = arith.constant 0 : i32
    return %arg0, %c0_i32 : i32, i32
  }
}

module attributes {stable_mosaic.version = 11 : i64} {
  func.func @kernel(%arg0: i32, %arg1: memref<128x128xbf16, #tpu.memory_space<vmem>>, %arg2: memref<128x512xbf16, #tpu.memory_space<vmem>>, %arg3: memref<1x512xf32, #tpu.memory_space<vmem>>, %arg4: memref<512x512xbf16, #tpu.memory_space<vmem>>, %arg5: memref<1x512xf32, #tpu.memory_space<vmem>>, %arg6: memref<512x512xbf16, #tpu.memory_space<vmem>>, %arg7: memref<1x512xf32, #tpu.memory_space<vmem>>, %arg8: memref<512x128xbf16, #tpu.memory_space<vmem>>, %arg9: memref<1x128xf32, #tpu.memory_space<vmem>>, %arg10: memref<128x128xf32, #tpu.memory_space<vmem>>) attributes {dimension_semantics = [#tpu.dimension_semantics<parallel>], iteration_bounds = array<i64: 1>, scalar_prefetch = 0 : i64, scratch_operands = 0 : i64, tpu.core_type = #tpu.core_type<tc>, window_params = [{transform_indices = @transform_0, window_bounds = array<i64: 128, 128>}, {pipeline_mode = #tpu.pipeline_mode<synchronous>, transform_indices = @transform_1, window_bounds = array<i64: 128, 512>}, {pipeline_mode = #tpu.pipeline_mode<synchronous>, transform_indices = @transform_2, window_bounds = array<i64: 1, 512>}, {pipeline_mode = #tpu.pipeline_mode<synchronous>, transform_indices = @transform_3, window_bounds = array<i64: 512, 512>}, {pipeline_mode = #tpu.pipeline_mode<synchronous>, transform_indices = @transform_4, window_bounds = array<i64: 1, 512>}, {pipeline_mode = #tpu.pipeline_mode<synchronous>, transform_indices = @transform_5, window_bounds = array<i64: 512, 512>}, {pipeline_mode = #tpu.pipeline_mode<synchronous>, transform_indices = @transform_6, window_bounds = array<i64: 1, 512>}, {pipeline_mode = #tpu.pipeline_mode<synchronous>, transform_indices = @transform_7, window_bounds = array<i64: 512, 128>}, {pipeline_mode = #tpu.pipeline_mode<synchronous>, transform_indices = @transform_8, window_bounds = array<i64: 1, 128>}, {transform_indices = @transform_9, window_bounds = array<i64: 128, 128>}]} {
    %c0 = arith.constant 0 : index
    %c0_0 = arith.constant 0 : index
    %0 = vector.load %arg1[%c0, %c0_0] : memref<128x128xbf16, #tpu.memory_space<vmem>>, vector<128x128xbf16>
    %c0_1 = arith.constant 0 : index
    %c0_2 = arith.constant 0 : index
    %1 = vector.load %arg2[%c0_1, %c0_2] : memref<128x512xbf16, #tpu.memory_space<vmem>>, vector<128x512xbf16>
    %cst = arith.constant dense<0.000000e+00> : vector<128x512xf32>
    %2 = tpu.matmul %0, %1, %cst {dimension_numbers = #tpu.dot_dimension_numbers<[1], [0], [0], [1], [0, 0, 1, 1], [], []>} : vector<128x128xbf16>, vector<128x512xbf16>, vector<128x512xf32> -> vector<128x512xf32>
    %c0_3 = arith.constant 0 : index
    %c0_4 = arith.constant 0 : index
    %3 = vector.load %arg3[%c0_3, %c0_4] : memref<1x512xf32, #tpu.memory_space<vmem>>, vector<1x512xf32>
    %4 = vector.broadcast %3 : vector<1x512xf32> to vector<128x512xf32>
    %5 = arith.addf %2, %4 : vector<128x512xf32>
    %6 = math.tanh %5 : vector<128x512xf32>
    %7 = arith.truncf %6 : vector<128x512xf32> to vector<128x512xbf16>
    %c0_5 = arith.constant 0 : index
    %c0_6 = arith.constant 0 : index
    %8 = vector.load %arg4[%c0_5, %c0_6] : memref<512x512xbf16, #tpu.memory_space<vmem>>, vector<512x512xbf16>
    %cst_7 = arith.constant dense<0.000000e+00> : vector<128x512xf32>
    %9 = tpu.matmul %7, %8, %cst_7 {dimension_numbers = #tpu.dot_dimension_numbers<[1], [0], [0], [1], [0, 0, 1, 1], [], []>} : vector<128x512xbf16>, vector<512x512xbf16>, vector<128x512xf32> -> vector<128x512xf32>
    %c0_8 = arith.constant 0 : index
    %c0_9 = arith.constant 0 : index
    %10 = vector.load %arg5[%c0_8, %c0_9] : memref<1x512xf32, #tpu.memory_space<vmem>>, vector<1x512xf32>
    %11 = vector.broadcast %10 : vector<1x512xf32> to vector<128x512xf32>
    %12 = arith.addf %9, %11 : vector<128x512xf32>
    %13 = math.tanh %12 : vector<128x512xf32>
    %14 = arith.truncf %13 : vector<128x512xf32> to vector<128x512xbf16>
    %c0_10 = arith.constant 0 : index
    %c0_11 = arith.constant 0 : index
    %15 = vector.load %arg6[%c0_10, %c0_11] : memref<512x512xbf16, #tpu.memory_space<vmem>>, vector<512x512xbf16>
    %cst_12 = arith.constant dense<0.000000e+00> : vector<128x512xf32>
    %16 = tpu.matmul %14, %15, %cst_12 {dimension_numbers = #tpu.dot_dimension_numbers<[1], [0], [0], [1], [0, 0, 1, 1], [], []>} : vector<128x512xbf16>, vector<512x512xbf16>, vector<128x512xf32> -> vector<128x512xf32>
    %c0_13 = arith.constant 0 : index
    %c0_14 = arith.constant 0 : index
    %17 = vector.load %arg7[%c0_13, %c0_14] : memref<1x512xf32, #tpu.memory_space<vmem>>, vector<1x512xf32>
    %18 = vector.broadcast %17 : vector<1x512xf32> to vector<128x512xf32>
    %19 = arith.addf %16, %18 : vector<128x512xf32>
    %20 = math.tanh %19 : vector<128x512xf32>
    %21 = arith.truncf %20 : vector<128x512xf32> to vector<128x512xbf16>
    %c0_15 = arith.constant 0 : index
    %c0_16 = arith.constant 0 : index
    %22 = vector.load %arg8[%c0_15, %c0_16] : memref<512x128xbf16, #tpu.memory_space<vmem>>, vector<512x128xbf16>
    %cst_17 = arith.constant dense<0.000000e+00> : vector<128x128xf32>
    %23 = tpu.matmul %21, %22, %cst_17 {dimension_numbers = #tpu.dot_dimension_numbers<[1], [0], [0], [1], [0, 0, 1, 1], [], []>} : vector<128x512xbf16>, vector<512x128xbf16>, vector<128x128xf32> -> vector<128x128xf32>
    %c0_18 = arith.constant 0 : index
    %c0_19 = arith.constant 0 : index
    %24 = vector.load %arg9[%c0_18, %c0_19] : memref<1x128xf32, #tpu.memory_space<vmem>>, vector<1x128xf32>
    %25 = vector.broadcast %24 : vector<1x128xf32> to vector<128x128xf32>
    %26 = arith.addf %23, %25 : vector<128x128xf32>
    %c0_20 = arith.constant 0 : index
    %c0_21 = arith.constant 0 : index
    %27 = vector.load %arg10[%c0_20, %c0_21] : memref<128x128xf32, #tpu.memory_space<vmem>>, vector<128x128xf32>
    tpu.vector_store %arg10[%c0_20, %c0_21], %26 {strides = array<i32>} : memref<128x128xf32, #tpu.memory_space<vmem>>, vector<128x128xf32>,
    return
  }
  func.func @transform_0(%arg0: i32) -> (i32, i32) {
    %c0_i32 = arith.constant 0 : i32
    %c0_i32_0 = arith.constant 0 : i32
    return %arg0, %c0_i32 : i32, i32
  }
  func.func @transform_1(%arg0: i32) -> (i32, i32) {
    %c0_i32 = arith.constant 0 : i32
    %c0_i32_0 = arith.constant 0 : i32
    %c0_i32_1 = arith.constant 0 : i32
    return %c0_i32, %c0_i32_0 : i32, i32
  }
  func.func @transform_2(%arg0: i32) -> (i32, i32) {
    %c0_i32 = arith.constant 0 : i32
    %c0_i32_0 = arith.constant 0 : i32
    %c0_i32_1 = arith.constant 0 : i32
    return %c0_i32, %c0_i32_0 : i32, i32
  }
  func.func @transform_3(%arg0: i32) -> (i32, i32) {
    %c0_i32 = arith.constant 0 : i32
    %c0_i32_0 = arith.constant 0 : i32
    %c0_i32_1 = arith.constant 0 : i32
    return %c0_i32, %c0_i32_0 : i32, i32
  }
  func.func @transform_4(%arg0: i32) -> (i32, i32) {
    %c0_i32 = arith.constant 0 : i32
    %c0_i32_0 = arith.constant 0 : i32
    %c0_i32_1 = arith.constant 0 : i32
    return %c0_i32, %c0_i32_0 : i32, i32
  }
  func.func @transform_5(%arg0: i32) -> (i32, i32) {
    %c0_i32 = arith.constant 0 : i32
    %c0_i32_0 = arith.constant 0 : i32
    %c0_i32_1 = arith.constant 0 : i32
    return %c0_i32, %c0_i32_0 : i32, i32
  }
  func.func @transform_6(%arg0: i32) -> (i32, i32) {
    %c0_i32 = arith.constant 0 : i32
    %c0_i32_0 = arith.constant 0 : i32
    %c0_i32_1 = arith.constant 0 : i32
    return %c0_i32, %c0_i32_0 : i32, i32
  }
  func.func @transform_7(%arg0: i32) -> (i32, i32) {
    %c0_i32 = arith.constant 0 : i32
    %c0_i32_0 = arith.constant 0 : i32
    %c0_i32_1 = arith.constant 0 : i32
    return %c0_i32, %c0_i32_0 : i32, i32
  }
  func.func @transform_8(%arg0: i32) -> (i32, i32) {
    %c0_i32 = arith.constant 0 : i32
    %c0_i32_0 = arith.constant 0 : i32
    %c0_i32_1 = arith.constant 0 : i32
    return %c0_i32, %c0_i32_0 : i32, i32
  }
  func.func @transform_9(%arg0: i32) -> (i32, i32) {
    %c0_i32 = arith.constant 0 : i32
    %c0_i32_0 = arith.constant 0 : i32
    return %arg0, %c0_i32 : i32, i32
  }
}

</mosaic_0001>

<llo_original>
// kernel: tpu_custom_call.1
$region0: #{tpu_custom_call.1}
  #allocation0 [shape = 'u32[]', space=smem, size = 0x4, offset = 0x4, fixed_abs, tag = 'smem constant byte address 0x4 - core index']
  #allocation1 [shape = 'u32[144,128]{1,0:T(1,128)}', space=vmem, size = 0x12000, scoped, tag = 'internal scratch']
  %s0 = inlined_call_operand.hbm [shape: bf16[128,128], index: 0, kind: input, shape index: {}]
  %s1 = inlined_call_operand.hbm [shape: bf16[128,512], index: 1, kind: input, shape index: {}]
  %s2 = inlined_call_operand.hbm [shape: f32[1,512], index: 2, kind: input, shape index: {}]
  %s3 = inlined_call_operand.hbm [shape: bf16[512,512], index: 3, kind: input, shape index: {}]
  %s4 = inlined_call_operand.vmem [shape: f32[1,512], index: 4, kind: input, shape index: {}]
  %s5 = inlined_call_operand.hbm [shape: bf16[512,512], index: 5, kind: input, shape index: {}]
  %s6 = inlined_call_operand.vmem [shape: f32[1,512], index: 6, kind: input, shape index: {}]
  %s7 = inlined_call_operand.hbm [shape: bf16[512,128], index: 7, kind: input, shape index: {}]
  %s8 = inlined_call_operand.vmem [shape: f32[1,128], index: 8, kind: input, shape index: {}]
  %s9 = inlined_call_operand.hbm [shape: f32[128,128], index: 9, kind: output, shape index: {}]
  %s10 = sld [smem:[#allocation0]]
  $region70: #{tpu_custom_call.1} parent=0
    _
  %s12 = ssub.s32 1, %s10
  %s13 = scalar_select 0, %s12, %s10
  $region1: #{tpu_custom_call.1} parent=0
    #allocation2 [shape = 'u8[32768]{0}', space=vmem, size = 0x8000, scoped, tag = 'input window, operand 0, single buffered']
    #allocation3 [shape = 's32[1]{0}', space=sflag, size = 0x4, scoped, tag = 'scoped memory for tpu_custom_call.1']
    #allocation4 [shape = 's32[1]{0}', space=sflag, size = 0x4, scoped, tag = 'scoped memory for tpu_custom_call.1']
    #allocation5 [shape = 'u8[131072]{0}', space=vmem, size = 0x20000, scoped, tag = 'input window, operand 1, single buffered']
    #allocation6 [shape = 's32[1]{0}', space=sflag, size = 0x4, scoped, tag = 'scoped memory for tpu_custom_call.1']
    #allocation7 [shape = 'u8[2048]{0}', space=vmem, size = 0x800, scoped, tag = 'input window, operand 2, single buffered']
    #allocation8 [shape = 'u8[524288]{0}', space=vmem, size = 0x80000, scoped, tag = 'input window, operand 3, single buffered']
    #allocation9 [shape = 's32[1]{0}', space=sflag, size = 0x4, scoped, tag = 'scoped memory for tpu_custom_call.1']
    #allocation10 [shape = 'u8[524288]{0}', space=vmem, size = 0x80000, scoped, tag = 'input window, operand 5, single buffered']
    #allocation11 [shape = 'u8[131072]{0}', space=vmem, size = 0x20000, scoped, tag = 'input window, operand 7, single buffered']
    #allocation12 [shape = 's32[1]{0}', space=sflag, size = 0x4, scoped, tag = 'scoped memory for tpu_custom_call.1']
    #allocation13 [shape = 'u8[65536]{0}', space=vmem, size = 0x10000, scoped, tag = 'output window, operand 0, single buffered']
    %14 = vsyncpa [#allocation3], 0
    %15 = vsyncpa [#allocation6], 0
    %16 = vsyncpa [#allocation9], 0
    %17 = vsyncpa [#allocation12], 0
    %18 = vsyncpa [#allocation4], 0
    // Predicated region
    $region2: #{tpu_custom_call.1} parent=1 // pred_check
      _
    $region3: #{tpu_custom_call.1} parent=1 // pred_check_branch
      %20 = sbr.rel (0) target = $region5
    $region4: #{tpu_custom_call.1} parent=1 // pred_region
      %s22 = ssub.s32 1024, 1024
      %23 = vsyncadd [#allocation3], %s22
      %s24 = sshll.u32 [#allocation2], 4
      %s25 = int_to_ptr.vmem [resolvable:$true] %s24
      %30 = dma.hbm_to_vmem [thread:$0]  %s0, 1024, %s25, [#allocation3], 64, 64, 4
    $region5: #{tpu_custom_call.1} parent=1 // pred_fallthru
      _
    // Predicated region
    $region6: #{tpu_custom_call.1} parent=1 // pred_check
      _
    $region7: #{tpu_custom_call.1} parent=1 // pred_check_branch
      %32 = sbr.rel (0) target = $region9
    $region8: #{tpu_custom_call.1} parent=1 // pred_region
      %s34 = ssub.s32 4096, 4096
      %35 = vsyncadd [#allocation6], %s34
      %s36 = sshll.u32 [#allocation5], 4
      %s37 = int_to_ptr.vmem [resolvable:$true] %s36
      %42 = dma.hbm_to_vmem [thread:$0]  %s1, 4096, %s37, [#allocation6], 256, 256, 16
    $region9: #{tpu_custom_call.1} parent=1 // pred_fallthru
      _
    // Predicated region
    $region10: #{tpu_custom_call.1} parent=1 // pred_check
      _
    $region11: #{tpu_custom_call.1} parent=1 // pred_check_branch
      %44 = sbr.rel (0) target = $region13
    $region12: #{tpu_custom_call.1} parent=1 // pred_region
      %s46 = ssub.s32 64, 64
      %47 = vsyncadd [#allocation6], %s46
      %s49 = sshll.u32 [#allocation7], 4
      %s50 = int_to_ptr.vmem [resolvable:$true] %s49
      %52 = dma.hbm_to_vmem [thread:$0]  %s2, 64, %s50, [#allocation6]
    $region13: #{tpu_custom_call.1} parent=1 // pred_fallthru
      _
    // Predicated region
    $region14: #{tpu_custom_call.1} parent=1 // pred_check
      _
    $region15: #{tpu_custom_call.1} parent=1 // pred_check_branch
      %54 = sbr.rel (0) target = $region17
    $region16: #{tpu_custom_call.1} parent=1 // pred_region
      %s56 = ssub.s32 16384, 16384
      %57 = vsyncadd [#allocation9], %s56
      %s58 = sshll.u32 [#allocation8], 4
      %s59 = int_to_ptr.vmem [resolvable:$true] %s58
      %64 = dma.hbm_to_vmem [thread:$0]  %s3, 16384, %s59, [#allocation9], 256, 256, 16
    $region17: #{tpu_custom_call.1} parent=1 // pred_fallthru
      _
    // Predicated region
    $region18: #{tpu_custom_call.1} parent=1 // pred_check
      _
    $region19: #{tpu_custom_call.1} parent=1 // pred_check_branch
      %66 = sbr.rel (0) target = $region21
    $region20: #{tpu_custom_call.1} parent=1 // pred_region
      _
    $region21: #{tpu_custom_call.1} parent=1 // pred_fallthru
      _
    // Predicated region
    $region22: #{tpu_custom_call.1} parent=1 // pred_check
      _
    $region23: #{tpu_custom_call.1} parent=1 // pred_check_branch
      %68 = sbr.rel (0) target = $region25
    $region24: #{tpu_custom_call.1} parent=1 // pred_region
      %s70 = ssub.s32 16384, 16384
      %71 = vsyncadd [#allocation9], %s70
      %s72 = sshll.u32 [#allocation10], 4
      %s73 = int_to_ptr.vmem [resolvable:$true] %s72
      %78 = dma.hbm_to_vmem [thread:$0]  %s5, 16384, %s73, [#allocation9], 256, 256, 16
    $region25: #{tpu_custom_call.1} parent=1 // pred_fallthru
      _
    // Predicated region
    $region26: #{tpu_custom_call.1} parent=1 // pred_check
      _
    $region27: #{tpu_custom_call.1} parent=1 // pred_check_branch
      %80 = sbr.rel (0) target = $region29
    $region28: #{tpu_custom_call.1} parent=1 // pred_region
      _
    $region29: #{tpu_custom_call.1} parent=1 // pred_fallthru
      _
    // Predicated region
    $region30: #{tpu_custom_call.1} parent=1 // pred_check
      _
    $region31: #{tpu_custom_call.1} parent=1 // pred_check_branch
      %82 = sbr.rel (0) target = $region33
    $region32: #{tpu_custom_call.1} parent=1 // pred_region
      %s84 = ssub.s32 4096, 4096
      %85 = vsyncadd [#allocation12], %s84
      %s86 = sshll.u32 [#allocation11], 4
      %s87 = int_to_ptr.vmem [resolvable:$true] %s86
      %92 = dma.hbm_to_vmem [thread:$0]  %s7, 4096, %s87, [#allocation12], 64, 64, 4
    $region33: #{tpu_custom_call.1} parent=1 // pred_fallthru
      _
    // Predicated region
    $region34: #{tpu_custom_call.1} parent=1 // pred_check
      _
    $region35: #{tpu_custom_call.1} parent=1 // pred_check_branch
      %94 = sbr.rel (0) target = $region37
    $region36: #{tpu_custom_call.1} parent=1 // pred_region
      _
    $region37: #{tpu_custom_call.1} parent=1 // pred_fallthru
      _
    // Predicated region
    $region38: #{tpu_custom_call.1} parent=1 // pred_check
      _
    $region39: #{tpu_custom_call.1} parent=1 // pred_check_branch
      %96 = sbr.rel (0) target = $region41
    $region40: #{tpu_custom_call.1} parent=1 // pred_region
      %97 = dma.done [#allocation3], 1024
    $region41: #{tpu_custom_call.1} parent=1 // pred_fallthru
      _
    // Predicated region
    $region42: #{tpu_custom_call.1} parent=1 // pred_check
      _
    $region43: #{tpu_custom_call.1} parent=1 // pred_check_branch
      %99 = sbr.rel (0) target = $region45
    $region44: #{tpu_custom_call.1} parent=1 // pred_region
      %100 = dma.done [#allocation6], 4096
    $region45: #{tpu_custom_call.1} parent=1 // pred_fallthru
      _
    // Predicated region
    $region46: #{tpu_custom_call.1} parent=1 // pred_check
      _
    $region47: #{tpu_custom_call.1} parent=1 // pred_check_branch
      %102 = sbr.rel (0) target = $region49
    $region48: #{tpu_custom_call.1} parent=1 // pred_region
      %103 = dma.done [#allocation6], 64
    $region49: #{tpu_custom_call.1} parent=1 // pred_fallthru
      _
    // Predicated region
    $region50: #{tpu_custom_call.1} parent=1 // pred_check
      _
    $region51: #{tpu_custom_call.1} parent=1 // pred_check_branch
      %105 = sbr.rel (0) target = $region53
    $region52: #{tpu_custom_call.1} parent=1 // pred_region
      %106 = dma.done [#allocation9], 16384
    $region53: #{tpu_custom_call.1} parent=1 // pred_fallthru
      _
    // Predicated region
    $region54: #{tpu_custom_call.1} parent=1 // pred_check
      _
    $region55: #{tpu_custom_call.1} parent=1 // pred_check_branch
      %108 = sbr.rel (0) target = $region57
    $region56: #{tpu_custom_call.1} parent=1 // pred_region
      %109 = dma.done [#allocation9], 16384
    $region57: #{tpu_custom_call.1} parent=1 // pred_fallthru
      _
    // Predicated region
    $region58: #{tpu_custom_call.1} parent=1 // pred_check
      _
    $region59: #{tpu_custom_call.1} parent=1 // pred_check_branch
      %111 = sbr.rel (0) target = $region61
    $region60: #{tpu_custom_call.1} parent=1 // pred_region
      %112 = dma.done [#allocation12], 4096
    $region61: #{tpu_custom_call.1} parent=1 // pred_fallthru
      _
    %v114 = vld [vmem:[#allocation2] sm:$0xf]
    %v115 = vld [vmem:[#allocation2 + $0x4] sm:$0xf]
    %v116 = vld [vmem:[#allocation2 + $0x8] sm:$0xf]
    %v117 = vld [vmem:[#allocation2 + $0xc] sm:$0xf]
    %v118 = vld [vmem:[#allocation2 + $0x10] sm:$0xf]
    %v119 = vld [vmem:[#allocation2 + $0x14] sm:$0xf]
    %v120 = vld [vmem:[#allocation2 + $0x18] sm:$0xf]
    %v121 = vld [vmem:[#allocation2 + $0x1c] sm:$0xf]
    %v122 = vld [vmem:[#allocation2 + $0x20] sm:$0xf]
    %v123 = vld [vmem:[#allocation2 + $0x24] sm:$0xf]
    %v124 = vld [vmem:[#allocation2 + $0x28] sm:$0xf]
    %v125 = vld [vmem:[#allocation2 + $0x2c] sm:$0xf]
    %v126 = vld [vmem:[#allocation2 + $0x30] sm:$0xf]
    %v127 = vld [vmem:[#allocation2 + $0x34] sm:$0xf]
    %v128 = vld [vmem:[#allocation2 + $0x38] sm:$0xf]
    %v129 = vld [vmem:[#allocation2 + $0x3c] sm:$0xf]
    %v130 = vld [vmem:[#allocation5] sm:$0xff]
    %v131 = vld [vmem:[#allocation5 + $0x8] sm:$0xff]
    %v132 = vld [vmem:[#allocation5 + $0x10] sm:$0xff]
    %v133 = vld [vmem:[#allocation5 + $0x18] sm:$0xff]
    %v134 = vld [vmem:[#allocation5 + $0x20] sm:$0xff]
    %v135 = vld [vmem:[#allocation5 + $0x28] sm:$0xff]
    %v136 = vld [vmem:[#allocation5 + $0x30] sm:$0xff]
    %v137 = vld [vmem:[#allocation5 + $0x38] sm:$0xff]
    %v138 = vld [vmem:[#allocation5 + $0x40] sm:$0xff]
    %v139 = vld [vmem:[#allocation5 + $0x48] sm:$0xff]
    %v140 = vld [vmem:[#allocation5 + $0x50] sm:$0xff]
    %v141 = vld [vmem:[#allocation5 + $0x58] sm:$0xff]
    %v142 = vld [vmem:[#allocation5 + $0x60] sm:$0xff]
    %v143 = vld [vmem:[#allocation5 + $0x68] sm:$0xff]
    %v144 = vld [vmem:[#allocation5 + $0x70] sm:$0xff]
    %v145 = vld [vmem:[#allocation5 + $0x78] sm:$0xff]
    %v146 = vld [vmem:[#allocation5 + $0x80] sm:$0xff]
    %v147 = vld [vmem:[#allocation5 + $0x88] sm:$0xff]
    %v148 = vld [vmem:[#allocation5 + $0x90] sm:$0xff]
    %v149 = vld [vmem:[#allocation5 + $0x98] sm:$0xff]
    %v150 = vld [vmem:[#allocation5 + $0xa0] sm:$0xff]
    %v151 = vld [vmem:[#allocation5 + $0xa8] sm:$0xff]
    %v152 = vld [vmem:[#allocation5 + $0xb0] sm:$0xff]
    %v153 = vld [vmem:[#allocation5 + $0xb8] sm:$0xff]
    %v154 = vld [vmem:[#allocation5 + $0xc0] sm:$0xff]
    %v155 = vld [vmem:[#allocation5 + $0xc8] sm:$0xff]
    %v156 = vld [vmem:[#allocation5 + $0xd0] sm:$0xff]
    %v157 = vld [vmem:[#allocation5 + $0xd8] sm:$0xff]
    %v158 = vld [vmem:[#allocation5 + $0xe0] sm:$0xff]
    %v159 = vld [vmem:[#allocation5 + $0xe8] sm:$0xff]
    %v160 = vld [vmem:[#allocation5 + $0xf0] sm:$0xff]
    %v161 = vld [vmem:[#allocation5 + $0xf8] sm:$0xff]
    %v162 = vld [vmem:[#allocation7] sm:$0xf]
    %v164 = vlaneseq
    %v165 = vshrl.u32 %v164, 7
    %v166 = vsub.s32 0, %v165
    %v167 = vrot.slane %v162, %v166
    %v168 = vlaneseq
    %v169 = vshrl.u32 %v168, 7
    %v170 = vsub.s32 1, %v169
    %v171 = vrot.slane %v162, %v170
    %v172 = vlaneseq
    %v173 = vshrl.u32 %v172, 7
    %v174 = vsub.s32 2, %v173
    %v175 = vrot.slane %v162, %v174
    %v176 = vlaneseq
    %v177 = vshrl.u32 %v176, 7
    %v178 = vsub.s32 3, %v177
    %v179 = vrot.slane %v162, %v178
    %v200 = vunpack.c.l.b16 %v114
    %v201 = vunpack.c.l.b16 %v115
    %v202 = vunpack.c.l.b16 %v116
    %v203 = vunpack.c.l.b16 %v117
    %v204 = vunpack.c.l.b16 %v118
    %v205 = vunpack.c.l.b16 %v119
    %v206 = vunpack.c.l.b16 %v120
    %v207 = vunpack.c.l.b16 %v121
    %v208 = vunpack.c.l.b16 %v122
    %v209 = vunpack.c.l.b16 %v123
    %v210 = vunpack.c.l.b16 %v124
    %v211 = vunpack.c.l.b16 %v125
    %v212 = vunpack.c.l.b16 %v126
    %v213 = vunpack.c.l.b16 %v127
    %v214 = vunpack.c.l.b16 %v128
    %v215 = vunpack.c.l.b16 %v129
    %v216 = vpack.c.b16 %v201, %v200
    %v217 = vpack.c.b16 %v203, %v202
    %v218 = vpack.c.b16 %v205, %v204
    %v219 = vpack.c.b16 %v207, %v206
    %v220 = vpack.c.b16 %v209, %v208
    %v221 = vpack.c.b16 %v211, %v210
    %v222 = vpack.c.b16 %v213, %v212
    %v223 = vpack.c.b16 %v215, %v214
    %v264 = vunpack.c.l.b16 %v130
    %v265 = vunpack.c.h.b16 %v130
    %v266 = vunpack.c.l.b16 %v131
    %v267 = vunpack.c.h.b16 %v131
    %v268 = vunpack.c.l.b16 %v132
    %v269 = vunpack.c.h.b16 %v132
    %v270 = vunpack.c.l.b16 %v133
    %v271 = vunpack.c.h.b16 %v133
    %v272 = vunpack.c.l.b16 %v134
    %v273 = vunpack.c.h.b16 %v134
    %v274 = vunpack.c.l.b16 %v135
    %v275 = vunpack.c.h.b16 %v135
    %v276 = vunpack.c.l.b16 %v136
    %v277 = vunpack.c.h.b16 %v136
    %v278 = vunpack.c.l.b16 %v137
    %v279 = vunpack.c.h.b16 %v137
    %v280 = vunpack.c.l.b16 %v138
    %v281 = vunpack.c.h.b16 %v138
    %v282 = vunpack.c.l.b16 %v139
    %v283 = vunpack.c.h.b16 %v139
    %v284 = vunpack.c.l.b16 %v140
    %v285 = vunpack.c.h.b16 %v140
    %v286 = vunpack.c.l.b16 %v141
    %v287 = vunpack.c.h.b16 %v141
    %v288 = vunpack.c.l.b16 %v142
    %v289 = vunpack.c.h.b16 %v142
    %v290 = vunpack.c.l.b16 %v143
    %v291 = vunpack.c.h.b16 %v143
    %v292 = vunpack.c.l.b16 %v144
    %v293 = vunpack.c.h.b16 %v144
    %v294 = vunpack.c.l.b16 %v145
    %v295 = vunpack.c.h.b16 %v145
    %v296 = vunpack.c.l.b16 %v146
    %v297 = vunpack.c.h.b16 %v146
    %v298 = vunpack.c.l.b16 %v147
    %v299 = vunpack.c.h.b16 %v147
    %v300 = vunpack.c.l.b16 %v148
    %v301 = vunpack.c.h.b16 %v148
    %v302 = vunpack.c.l.b16 %v149
    %v303 = vunpack.c.h.b16 %v149
    %v304 = vunpack.c.l.b16 %v150
    %v305 = vunpack.c.h.b16 %v150
    %v306 = vunpack.c.l.b16 %v151
    %v307 = vunpack.c.h.b16 %v151
    %v308 = vunpack.c.l.b16 %v152
    %v309 = vunpack.c.h.b16 %v152
    %v310 = vunpack.c.l.b16 %v153
    %v311 = vunpack.c.h.b16 %v153
    %v312 = vunpack.c.l.b16 %v154
    %v313 = vunpack.c.h.b16 %v154
    %v314 = vunpack.c.l.b16 %v155
    %v315 = vunpack.c.h.b16 %v155
    %v316 = vunpack.c.l.b16 %v156
    %v317 = vunpack.c.h.b16 %v156
    %v318 = vunpack.c.l.b16 %v157
    %v319 = vunpack.c.h.b16 %v157
    %v320 = vunpack.c.l.b16 %v158
    %v321 = vunpack.c.h.b16 %v158
    %v322 = vunpack.c.l.b16 %v159
    %v323 = vunpack.c.h.b16 %v159
    %v324 = vunpack.c.l.b16 %v160
    %v325 = vunpack.c.h.b16 %v160
    %v326 = vunpack.c.l.b16 %v161
    %v327 = vunpack.c.h.b16 %v161
    %v328 = vpack.c.b16 %v268, %v264
    %v329 = vpack.c.b16 %v269, %v265
    %v330 = vpack.c.b16 %v270, %v266
    %v331 = vpack.c.b16 %v271, %v267
    %v332 = vpack.c.b16 %v276, %v272
    %v333 = vpack.c.b16 %v277, %v273
    %v334 = vpack.c.b16 %v278, %v274
    %v335 = vpack.c.b16 %v279, %v275
    %v336 = vpack.c.b16 %v284, %v280
    %v337 = vpack.c.b16 %v285, %v281
    %v338 = vpack.c.b16 %v286, %v282
    %v339 = vpack.c.b16 %v287, %v283
    %v340 = vpack.c.b16 %v292, %v288
    %v341 = vpack.c.b16 %v293, %v289
    %v342 = vpack.c.b16 %v294, %v290
    %v343 = vpack.c.b16 %v295, %v291
    %v344 = vpack.c.b16 %v300, %v296
    %v345 = vpack.c.b16 %v301, %v297
    %v346 = vpack.c.b16 %v302, %v298
    %v347 = vpack.c.b16 %v303, %v299
    %v348 = vpack.c.b16 %v308, %v304
    %v349 = vpack.c.b16 %v309, %v305
    %v350 = vpack.c.b16 %v310, %v306
    %v351 = vpack.c.b16 %v311, %v307
    %v352 = vpack.c.b16 %v316, %v312
    %v353 = vpack.c.b16 %v317, %v313
    %v354 = vpack.c.b16 %v318, %v314
    %v355 = vpack.c.b16 %v319, %v315
    %v356 = vpack.c.b16 %v324, %v320
    %v357 = vpack.c.b16 %v325, %v321
    %v358 = vpack.c.b16 %v326, %v322
    %v359 = vpack.c.b16 %v327, %v323
    %392 = vmatprep.subr.bf16.mxu0 %v357
    %393 = vmatpush1.bf16.msra.mxu0 %v356
    %394 = vmatprep.subr.bf16.mxu0 %v353
    %395 = vmatpush1.bf16.msra.mxu0 %v352
    %396 = vmatprep.subr.bf16.mxu0 %v349
    %397 = vmatpush1.bf16.msra.mxu0 %v348
    %398 = vmatprep.subr.bf16.mxu0 %v345
    %399 = vmatpush1.bf16.msra.mxu0 %v344
    %400 = vmatprep.subr.bf16.mxu0 %v341
    %401 = vmatpush1.bf16.msra.mxu0 %v340
    %402 = vmatprep.subr.bf16.mxu0 %v337
    %403 = vmatpush1.bf16.msra.mxu0 %v336
    %404 = vmatprep.subr.bf16.mxu0 %v333
    %405 = vmatpush1.bf16.msra.mxu0 %v332
    %406 = vmatprep.subr.bf16.mxu0 %v329
    %407 = vmatpush1.bf16.msra.mxu0 %v328
    %408 = vmatprep.subr.bf16.mxu0 0
    %409 = vmatpush2.bf16.msra.mxu0 0
    %410 = vmatprep.subr.bf16.mxu0 0
    %411 = vmatpush2.bf16.msra.mxu0 0
    %412 = vmatprep.subr.bf16.mxu0 0
    %413 = vmatpush2.bf16.msra.mxu0 0
    %414 = vmatprep.subr.bf16.mxu0 0
    %415 = vmatpush2.bf16.msra.mxu0 0
    %416 = vmatprep.subr.bf16.mxu0 0
    %417 = vmatpush2.bf16.msra.mxu0 0
    %418 = vmatprep.subr.bf16.mxu0 0
    %419 = vmatpush2.bf16.msra.mxu0 0
    %420 = vmatprep.subr.bf16.mxu0 0
    %421 = vmatpush2.bf16.msra.mxu0 0
    %422 = vmatprep.subr.bf16.mxu0 0
    %423 = vmatpush2.bf16.msra.mxu0 0
    %424 = vmatprep.mubr.bf16.mxu0 0
    %425 = vmatmul.mubr.bf16.gmra.mxu0 %v216
    %v426 = vpop.f32.mrf.mxu0
    %v427 = vadd.f32 %v167, %v426
    %v428 = vpop.f32.mrf.mxu0
    %v429 = vadd.f32 %v171, %v428
    %v430 = vpop.f32.mrf.mxu0
    %v431 = vadd.f32 %v167, %v430
    %v432 = vpop.f32.mrf.mxu0
    %v433 = vadd.f32 %v171, %v432
    %434 = vmatprep.mubr.bf16.mxu0 0
    %435 = vmatmul.mubr.bf16.gmra.mxu0 %v217
    %v436 = vpop.f32.mrf.mxu0
    %v437 = vadd.f32 %v167, %v436
    %v438 = vpop.f32.mrf.mxu0
    %v439 = vadd.f32 %v171, %v438
    %v440 = vpop.f32.mrf.mxu0
    %v441 = vadd.f32 %v167, %v440
    %v442 = vpop.f32.mrf.mxu0
    %v443 = vadd.f32 %v171, %v442
    %444 = vmatprep.mubr.bf16.mxu0 0
    %445 = vmatmul.mubr.bf16.gmra.mxu0 %v218
    %v446 = vpop.f32.mrf.mxu0
    %v447 = vadd.f32 %v167, %v446
    %v448 = vpop.f32.mrf.mxu0
    %v449 = vadd.f32 %v171, %v448
    %v450 = vpop.f32.mrf.mxu0
    %v451 = vadd.f32 %v167, %v450
    %v452 = vpop.f32.mrf.mxu0
    %v453 = vadd.f32 %v171, %v452
    %454 = vmatprep.mubr.bf16.mxu0 0
    %455 = vmatmul.mubr.bf16.gmra.mxu0 %v219
    %v456 = vpop.f32.mrf.mxu0
    %v457 = vadd.f32 %v167, %v456
    %v458 = vpop.f32.mrf.mxu0
    %v459 = vadd.f32 %v171, %v458
    %v460 = vpop.f32.mrf.mxu0
    %v461 = vadd.f32 %v167, %v460
    %v462 = vpop.f32.mrf.mxu0
    %v463 = vadd.f32 %v171, %v462
    %464 = vmatprep.mubr.bf16.mxu0 0
    %465 = vmatmul.mubr.bf16.gmra.mxu0 %v220
    %v466 = vpop.f32.mrf.mxu0
    %v467 = vadd.f32 %v167, %v466
    %v468 = vpop.f32.mrf.mxu0
    %v469 = vadd.f32 %v171, %v468
    %v470 = vpop.f32.mrf.mxu0
    %v471 = vadd.f32 %v167, %v470
    %v472 = vpop.f32.mrf.mxu0
    %v473 = vadd.f32 %v171, %v472
    %474 = vmatprep.mubr.bf16.mxu0 0
    %475 = vmatmul.mubr.bf16.gmra.mxu0 %v221
    %v476 = vpop.f32.mrf.mxu0
    %v477 = vadd.f32 %v167, %v476
    %v478 = vpop.f32.mrf.mxu0
    %v479 = vadd.f32 %v171, %v478
    %v480 = vpop.f32.mrf.mxu0
    %v481 = vadd.f32 %v167, %v480
    %v482 = vpop.f32.mrf.mxu0
    %v483 = vadd.f32 %v171, %v482
    %484 = vmatprep.mubr.bf16.mxu0 0
    %485 = vmatmul.mubr.bf16.gmra.mxu0 %v222
    %v486 = vpop.f32.mrf.mxu0
    %v487 = vadd.f32 %v167, %v486
    %v488 = vpop.f32.mrf.mxu0
    %v489 = vadd.f32 %v171, %v488
    %v490 = vpop.f32.mrf.mxu0
    %v491 = vadd.f32 %v167, %v490
    %v492 = vpop.f32.mrf.mxu0
    %v493 = vadd.f32 %v171, %v492
    %494 = vmatprep.mubr.bf16.mxu0 0
    %495 = vmatmul.mubr.bf16.gmra.mxu0 %v223
    %v496 = vpop.f32.mrf.mxu0
    %v497 = vadd.f32 %v167, %v496
    %v498 = vpop.f32.mrf.mxu0
    %v499 = vadd.f32 %v171, %v498
    %v500 = vpop.f32.mrf.mxu0
    %v501 = vadd.f32 %v167, %v500
    %v502 = vpop.f32.mrf.mxu0
    %v503 = vadd.f32 %v171, %v502
    %504 = vdwg.mxu0
    %505 = vmatprep.subr.bf16.mxu0 %v359
    %506 = vmatpush1.bf16.msra.mxu0 %v358
    %507 = vmatprep.subr.bf16.mxu0 %v355
    %508 = vmatpush1.bf16.msra.mxu0 %v354
    %509 = vmatprep.subr.bf16.mxu0 %v351
    %510 = vmatpush1.bf16.msra.mxu0 %v350
    %511 = vmatprep.subr.bf16.mxu0 %v347
    %512 = vmatpush1.bf16.msra.mxu0 %v346
    %513 = vmatprep.subr.bf16.mxu0 %v343
    %514 = vmatpush1.bf16.msra.mxu0 %v342
    %515 = vmatprep.subr.bf16.mxu0 %v339
    %516 = vmatpush1.bf16.msra.mxu0 %v338
    %517 = vmatprep.subr.bf16.mxu0 %v335
    %518 = vmatpush1.bf16.msra.mxu0 %v334
    %519 = vmatprep.subr.bf16.mxu0 %v331
    %520 = vmatpush1.bf16.msra.mxu0 %v330
    %521 = vmatprep.subr.bf16.mxu0 0
    %522 = vmatpush2.bf16.msra.mxu0 0
    %523 = vmatprep.subr.bf16.mxu0 0
    %524 = vmatpush2.bf16.msra.mxu0 0
    %525 = vmatprep.subr.bf16.mxu0 0
    %526 = vmatpush2.bf16.msra.mxu0 0
    %527 = vmatprep.subr.bf16.mxu0 0
    %528 = vmatpush2.bf16.msra.mxu0 0
    %529 = vmatprep.subr.bf16.mxu0 0
    %530 = vmatpush2.bf16.msra.mxu0 0
    %531 = vmatprep.subr.bf16.mxu0 0
    %532 = vmatpush2.bf16.msra.mxu0 0
    %533 = vmatprep.subr.bf16.mxu0 0
    %534 = vmatpush2.bf16.msra.mxu0 0
    %535 = vmatprep.subr.bf16.mxu0 0
    %536 = vmatpush2.bf16.msra.mxu0 0
    %537 = vmatprep.mubr.bf16.mxu0 0
    %538 = vmatmul.mubr.bf16.gmra.mxu0 %v216
    %v539 = vpop.f32.mrf.mxu0
    %v540 = vadd.f32 %v175, %v539
    %v541 = vpop.f32.mrf.mxu0
    %v542 = vadd.f32 %v179, %v541
    %v543 = vpop.f32.mrf.mxu0
    %v544 = vadd.f32 %v175, %v543
    %v545 = vpop.f32.mrf.mxu0
    %v546 = vadd.f32 %v179, %v545
    %547 = vmatprep.mubr.bf16.mxu0 0
    %548 = vmatmul.mubr.bf16.gmra.mxu0 %v217
    %v549 = vpop.f32.mrf.mxu0
    %v550 = vadd.f32 %v175, %v549
    %v551 = vpop.f32.mrf.mxu0
    %v552 = vadd.f32 %v179, %v551
    %v553 = vpop.f32.mrf.mxu0
    %v554 = vadd.f32 %v175, %v553
    %v555 = vpop.f32.mrf.mxu0
    %v556 = vadd.f32 %v179, %v555
    %557 = vmatprep.mubr.bf16.mxu0 0
    %558 = vmatmul.mubr.bf16.gmra.mxu0 %v218
    %v559 = vpop.f32.mrf.mxu0
    %v560 = vadd.f32 %v175, %v559
    %v561 = vpop.f32.mrf.mxu0
    %v562 = vadd.f32 %v179, %v561
    %v563 = vpop.f32.mrf.mxu0
    %v564 = vadd.f32 %v175, %v563
    %v565 = vpop.f32.mrf.mxu0
    %v566 = vadd.f32 %v179, %v565
    %567 = vmatprep.mubr.bf16.mxu0 0
    %568 = vmatmul.mubr.bf16.gmra.mxu0 %v219
    %v569 = vpop.f32.mrf.mxu0
    %v570 = vadd.f32 %v175, %v569
    %v571 = vpop.f32.mrf.mxu0
    %v572 = vadd.f32 %v179, %v571
    %v573 = vpop.f32.mrf.mxu0
    %v574 = vadd.f32 %v175, %v573
    %v575 = vpop.f32.mrf.mxu0
    %v576 = vadd.f32 %v179, %v575
    %577 = vmatprep.mubr.bf16.mxu0 0
    %578 = vmatmul.mubr.bf16.gmra.mxu0 %v220
    %v579 = vpop.f32.mrf.mxu0
    %v580 = vadd.f32 %v175, %v579
    %v581 = vpop.f32.mrf.mxu0
    %v582 = vadd.f32 %v179, %v581
    %v583 = vpop.f32.mrf.mxu0
    %v584 = vadd.f32 %v175, %v583
    %v585 = vpop.f32.mrf.mxu0
    %v586 = vadd.f32 %v179, %v585
    %587 = vmatprep.mubr.bf16.mxu0 0
    %588 = vmatmul.mubr.bf16.gmra.mxu0 %v221
    %v589 = vpop.f32.mrf.mxu0
    %v590 = vadd.f32 %v175, %v589
    %v591 = vpop.f32.mrf.mxu0
    %v592 = vadd.f32 %v179, %v591
    %v593 = vpop.f32.mrf.mxu0
    %v594 = vadd.f32 %v175, %v593
    %v595 = vpop.f32.mrf.mxu0
    %v596 = vadd.f32 %v179, %v595
    %597 = vmatprep.mubr.bf16.mxu0 0
    %598 = vmatmul.mubr.bf16.gmra.mxu0 %v222
    %v599 = vpop.f32.mrf.mxu0
    %v600 = vadd.f32 %v175, %v599
    %v601 = vpop.f32.mrf.mxu0
    %v602 = vadd.f32 %v179, %v601
    %v603 = vpop.f32.mrf.mxu0
    %v604 = vadd.f32 %v175, %v603
    %v605 = vpop.f32.mrf.mxu0
    %v606 = vadd.f32 %v179, %v605
    %607 = vmatprep.mubr.bf16.mxu0 0
    %608 = vmatmul.mubr.bf16.gmra.mxu0 %v223
    %v609 = vpop.f32.mrf.mxu0
    %v610 = vadd.f32 %v175, %v609
    %v611 = vpop.f32.mrf.mxu0
    %v612 = vadd.f32 %v179, %v611
    %v613 = vpop.f32.mrf.mxu0
    %v614 = vadd.f32 %v175, %v613
    %v615 = vpop.f32.mrf.mxu0
    %v616 = vadd.f32 %v179, %v615
    %617 = vdwg.mxu0
    %v618 = vtanh.pop %v427
    %v619 = vtanh.pop %v429
    %v620 = vtanh.pop %v540
    %v621 = vtanh.pop %v542
    %v622 = vtanh.pop %v431
    %v623 = vtanh.pop %v433
    %v624 = vtanh.pop %v544
    %v625 = vtanh.pop %v546
    %v626 = vtanh.pop %v437
    %v627 = vtanh.pop %v439
    %v628 = vtanh.pop %v550
    %v629 = vtanh.pop %v552
    %v630 = vtanh.pop %v441
    %v631 = vtanh.pop %v443
    %v632 = vtanh.pop %v554
    %v633 = vtanh.pop %v556
    %v634 = vtanh.pop %v447
    %v635 = vtanh.pop %v449
    %v636 = vtanh.pop %v560
    %v637 = vtanh.pop %v562
    %v638 = vtanh.pop %v451
    %v639 = vtanh.pop %v453
    %v640 = vtanh.pop %v564
    %v641 = vtanh.pop %v566
    %v642 = vtanh.pop %v457
    %v643 = vtanh.pop %v459
    %v644 = vtanh.pop %v570
    %v645 = vtanh.pop %v572
    %v646 = vtanh.pop %v461
    %v647 = vtanh.pop %v463
    %v648 = vtanh.pop %v574
    %v649 = vtanh.pop %v576
    %v650 = vtanh.pop %v467
    %v651 = vtanh.pop %v469
    %v652 = vtanh.pop %v580
    %v653 = vtanh.pop %v582
    %v654 = vtanh.pop %v471
    %v655 = vtanh.pop %v473
    %v656 = vtanh.pop %v584
    %v657 = vtanh.pop %v586
    %v658 = vtanh.pop %v477
    %v659 = vtanh.pop %v479
    %v660 = vtanh.pop %v590
    %v661 = vtanh.pop %v592
    %v662 = vtanh.pop %v481
    %v663 = vtanh.pop %v483
    %v664 = vtanh.pop %v594
    %v665 = vtanh.pop %v596
    %v666 = vtanh.pop %v487
    %v667 = vtanh.pop %v489
    %v668 = vtanh.pop %v600
    %v669 = vtanh.pop %v602
    %v670 = vtanh.pop %v491
    %v671 = vtanh.pop %v493
    %v672 = vtanh.pop %v604
    %v673 = vtanh.pop %v606
    %v674 = vtanh.pop %v497
    %v675 = vtanh.pop %v499
    %v676 = vtanh.pop %v610
    %v677 = vtanh.pop %v612
    %v678 = vtanh.pop %v501
    %v679 = vtanh.pop %v503
    %v680 = vtanh.pop %v614
    %v681 = vtanh.pop %v616
    %v682 = vpack.c.bf16 %v622, %v618
    %v683 = vpack.c.bf16 %v623, %v619
    %v684 = vpack.c.bf16 %v624, %v620
    %v685 = vpack.c.bf16 %v625, %v621
    %v686 = vpack.c.bf16 %v630, %v626
    %v687 = vpack.c.bf16 %v631, %v627
    %v688 = vpack.c.bf16 %v632, %v628
    %v689 = vpack.c.bf16 %v633, %v629
    %v690 = vpack.c.bf16 %v638, %v634
    %v691 = vpack.c.bf16 %v639, %v635
    %v692 = vpack.c.bf16 %v640, %v636
    %v693 = vpack.c.bf16 %v641, %v637
    %v694 = vpack.c.bf16 %v646, %v642
    %v695 = vpack.c.bf16 %v647, %v643
    %v696 = vpack.c.bf16 %v648, %v644
    %v697 = vpack.c.bf16 %v649, %v645
    %v698 = vpack.c.bf16 %v654, %v650
    %v699 = vpack.c.bf16 %v655, %v651
    %v700 = vpack.c.bf16 %v656, %v652
    %v701 = vpack.c.bf16 %v657, %v653
    %v702 = vpack.c.bf16 %v662, %v658
    %v703 = vpack.c.bf16 %v663, %v659
    %v704 = vpack.c.bf16 %v664, %v660
    %v705 = vpack.c.bf16 %v665, %v661
    %v706 = vpack.c.bf16 %v670, %v666
    %v707 = vpack.c.bf16 %v671, %v667
    %v708 = vpack.c.bf16 %v672, %v668
    %v709 = vpack.c.bf16 %v673, %v669
    %v710 = vpack.c.bf16 %v678, %v674
    %v711 = vpack.c.bf16 %v679, %v675
    %v712 = vpack.c.bf16 %v680, %v676
    %v713 = vpack.c.bf16 %v681, %v677
    %v714 = vld [vmem:[#allocation8] sm:$0xff]
    %v715 = vld [vmem:[#allocation8 + $0x8] sm:$0xff]
    %v716 = vld [vmem:[#allocation8 + $0x10] sm:$0xff]
    %v717 = vld [vmem:[#allocation8 + $0x18] sm:$0xff]
    %v718 = vld [vmem:[#allocation8 + $0x20] sm:$0xff]
    %v719 = vld [vmem:[#allocation8 + $0x28] sm:$0xff]
    %v720 = vld [vmem:[#allocation8 + $0x30] sm:$0xff]
    %v721 = vld [vmem:[#allocation8 + $0x38] sm:$0xff]
    %v722 = vld [vmem:[#allocation8 + $0x40] sm:$0xff]
    %v723 = vld [vmem:[#allocation8 + $0x48] sm:$0xff]
    %v724 = vld [vmem:[#allocation8 + $0x50] sm:$0xff]
    %v725 = vld [vmem:[#allocation8 + $0x58] sm:$0xff]
    %v726 = vld [vmem:[#allocation8 + $0x60] sm:$0xff]
    %v727 = vld [vmem:[#allocation8 + $0x68] sm:$0xff]
    %v728 = vld [vmem:[#allocation8 + $0x70] sm:$0xff]
    %v729 = vld [vmem:[#allocation8 + $0x78] sm:$0xff]
    %v730 = vld [vmem:[#allocation8 + $0x80] sm:$0xff]
    %v731 = vld [vmem:[#allocation8 + $0x88] sm:$0xff]
    %v732 = vld [vmem:[#allocation8 + $0x90] sm:$0xff]
    %v733 = vld [vmem:[#allocation8 + $0x98] sm:$0xff]
    %v734 = vld [vmem:[#allocation8 + $0xa0] sm:$0xff]
    %v735 = vld [vmem:[#allocation8 + $0xa8] sm:$0xff]
    %v736 = vld [vmem:[#allocation8 + $0xb0] sm:$0xff]
    %v737 = vld [vmem:[#allocation8 + $0xb8] sm:$0xff]
    %v738 = vld [vmem:[#allocation8 + $0xc0] sm:$0xff]
    %v739 = vld [vmem:[#allocation8 + $0xc8] sm:$0xff]
    %v740 = vld [vmem:[#allocation8 + $0xd0] sm:$0xff]
    %v741 = vld [vmem:[#allocation8 + $0xd8] sm:$0xff]
    %v742 = vld [vmem:[#allocation8 + $0xe0] sm:$0xff]
    %v743 = vld [vmem:[#allocation8 + $0xe8] sm:$0xff]
    %v744 = vld [vmem:[#allocation8 + $0xf0] sm:$0xff]
    %v745 = vld [vmem:[#allocation8 + $0xf8] sm:$0xff]
    %v746 = vld [vmem:[#allocation8 + $0x100] sm:$0xff]
    %v747 = vld [vmem:[#allocation8 + $0x108] sm:$0xff]
    %v748 = vld [vmem:[#allocation8 + $0x110] sm:$0xff]
    %v749 = vld [vmem:[#allocation8 + $0x118] sm:$0xff]
    %v750 = vld [vmem:[#allocation8 + $0x120] sm:$0xff]
    %v751 = vld [vmem:[#allocation8 + $0x128] sm:$0xff]
    %v752 = vld [vmem:[#allocation8 + $0x130] sm:$0xff]
    %v753 = vld [vmem:[#allocation8 + $0x138] sm:$0xff]
    %v754 = vld [vmem:[#allocation8 + $0x140] sm:$0xff]
    %v755 = vld [vmem:[#allocation8 + $0x148] sm:$0xff]
    %v756 = vld [vmem:[#allocation8 + $0x150] sm:$0xff]
    %v757 = vld [vmem:[#allocation8 + $0x158] sm:$0xff]
    %v758 = vld [vmem:[#allocation8 + $0x160] sm:$0xff]
    %v759 = vld [vmem:[#allocation8 + $0x168] sm:$0xff]
    %v760 = vld [vmem:[#allocation8 + $0x170] sm:$0xff]
    %v761 = vld [vmem:[#allocation8 + $0x178] sm:$0xff]
    %v762 = vld [vmem:[#allocation8 + $0x180] sm:$0xff]
    %v763 = vld [vmem:[#allocation8 + $0x188] sm:$0xff]
    %v764 = vld [vmem:[#allocation8 + $0x190] sm:$0xff]
    %v765 = vld [vmem:[#allocation8 + $0x198] sm:$0xff]
    %v766 = vld [vmem:[#allocation8 + $0x1a0] sm:$0xff]
    %v767 = vld [vmem:[#allocation8 + $0x1a8] sm:$0xff]
    %v768 = vld [vmem:[#allocation8 + $0x1b0] sm:$0xff]
    %v769 = vld [vmem:[#allocation8 + $0x1b8] sm:$0xff]
    %v770 = vld [vmem:[#allocation8 + $0x1c0] sm:$0xff]
    %v771 = vld [vmem:[#allocation8 + $0x1c8] sm:$0xff]
    %v772 = vld [vmem:[#allocation8 + $0x1d0] sm:$0xff]
    %v773 = vld [vmem:[#allocation8 + $0x1d8] sm:$0xff]
    %v774 = vld [vmem:[#allocation8 + $0x1e0] sm:$0xff]
    %v775 = vld [vmem:[#allocation8 + $0x1e8] sm:$0xff]
    %v776 = vld [vmem:[#allocation8 + $0x1f0] sm:$0xff]
    %v777 = vld [vmem:[#allocation8 + $0x1f8] sm:$0xff]
    %v778 = vld [vmem:[#allocation8 + $0x200] sm:$0xff]
    %v779 = vld [vmem:[#allocation8 + $0x208] sm:$0xff]
    %v780 = vld [vmem:[#allocation8 + $0x210] sm:$0xff]
    %v781 = vld [vmem:[#allocation8 + $0x218] sm:$0xff]
    %v782 = vld [vmem:[#allocation8 + $0x220] sm:$0xff]
    %v783 = vld [vmem:[#allocation8 + $0x228] sm:$0xff]
    %v784 = vld [vmem:[#allocation8 + $0x230] sm:$0xff]
    %v785 = vld [vmem:[#allocation8 + $0x238] sm:$0xff]
    %v786 = vld [vmem:[#allocation8 + $0x240] sm:$0xff]
    %v787 = vld [vmem:[#allocation8 + $0x248] sm:$0xff]
    %v788 = vld [vmem:[#allocation8 + $0x250] sm:$0xff]
    %v789 = vld [vmem:[#allocation8 + $0x258] sm:$0xff]
    %v790 = vld [vmem:[#allocation8 + $0x260] sm:$0xff]
    %v791 = vld [vmem:[#allocation8 + $0x268] sm:$0xff]
    %v792 = vld [vmem:[#allocation8 + $0x270] sm:$0xff]
    %v793 = vld [vmem:[#allocation8 + $0x278] sm:$0xff]
    %v794 = vld [vmem:[#allocation8 + $0x280] sm:$0xff]
    %v795 = vld [vmem:[#allocation8 + $0x288] sm:$0xff]
    %v796 = vld [vmem:[#allocation8 + $0x290] sm:$0xff]
    %v797 = vld [vmem:[#allocation8 + $0x298] sm:$0xff]
    %v798 = vld [vmem:[#allocation8 + $0x2a0] sm:$0xff]
    %v799 = vld [vmem:[#allocation8 + $0x2a8] sm:$0xff]
    %v800 = vld [vmem:[#allocation8 + $0x2b0] sm:$0xff]
    %v801 = vld [vmem:[#allocation8 + $0x2b8] sm:$0xff]
    %v802 = vld [vmem:[#allocation8 + $0x2c0] sm:$0xff]
    %v803 = vld [vmem:[#allocation8 + $0x2c8] sm:$0xff]
    %v804 = vld [vmem:[#allocation8 + $0x2d0] sm:$0xff]
    %v805 = vld [vmem:[#allocation8 + $0x2d8] sm:$0xff]
    %v806 = vld [vmem:[#allocation8 + $0x2e0] sm:$0xff]
    %v807 = vld [vmem:[#allocation8 + $0x2e8] sm:$0xff]
    %v808 = vld [vmem:[#allocation8 + $0x2f0] sm:$0xff]
    %v809 = vld [vmem:[#allocation8 + $0x2f8] sm:$0xff]
    %v810 = vld [vmem:[#allocation8 + $0x300] sm:$0xff]
    %v811 = vld [vmem:[#allocation8 + $0x308] sm:$0xff]
    %v812 = vld [vmem:[#allocation8 + $0x310] sm:$0xff]
    %v813 = vld [vmem:[#allocation8 + $0x318] sm:$0xff]
    %v814 = vld [vmem:[#allocation8 + $0x320] sm:$0xff]
    %v815 = vld [vmem:[#allocation8 + $0x328] sm:$0xff]
    %v816 = vld [vmem:[#allocation8 + $0x330] sm:$0xff]
    %v817 = vld [vmem:[#allocation8 + $0x338] sm:$0xff]
    %v818 = vld [vmem:[#allocation8 + $0x340] sm:$0xff]
    %v819 = vld [vmem:[#allocation8 + $0x348] sm:$0xff]
    %v820 = vld [vmem:[#allocation8 + $0x350] sm:$0xff]
    %v821 = vld [vmem:[#allocation8 + $0x358] sm:$0xff]
    %v822 = vld [vmem:[#allocation8 + $0x360] sm:$0xff]
    %v823 = vld [vmem:[#allocation8 + $0x368] sm:$0xff]
    %v824 = vld [vmem:[#allocation8 + $0x370] sm:$0xff]
    %v825 = vld [vmem:[#allocation8 + $0x378] sm:$0xff]
    %v826 = vld [vmem:[#allocation8 + $0x380] sm:$0xff]
    %v827 = vld [vmem:[#allocation8 + $0x388] sm:$0xff]
    %v828 = vld [vmem:[#allocation8 + $0x390] sm:$0xff]
    %v829 = vld [vmem:[#allocation8 + $0x398] sm:$0xff]
    %v830 = vld [vmem:[#allocation8 + $0x3a0] sm:$0xff]
    %v831 = vld [vmem:[#allocation8 + $0x3a8] sm:$0xff]
    %v832 = vld [vmem:[#allocation8 + $0x3b0] sm:$0xff]
    %v833 = vld [vmem:[#allocation8 + $0x3b8] sm:$0xff]
    %v834 = vld [vmem:[#allocation8 + $0x3c0] sm:$0xff]
    %v835 = vld [vmem:[#allocation8 + $0x3c8] sm:$0xff]
    %v836 = vld [vmem:[#allocation8 + $0x3d0] sm:$0xff]
    %v837 = vld [vmem:[#allocation8 + $0x3d8] sm:$0xff]
    %v838 = vld [vmem:[#allocation8 + $0x3e0] sm:$0xff]
    %v839 = vld [vmem:[#allocation8 + $0x3e8] sm:$0xff]
    %v840 = vld [vmem:[#allocation8 + $0x3f0] sm:$0xff]
    %v841 = vld [vmem:[#allocation8 + $0x3f8] sm:$0xff]
    %v842 = vld [vmem:[%s4] sm:$0xf]
    %v844 = vlaneseq
    %v845 = vshrl.u32 %v844, 7
    %v846 = vsub.s32 0, %v845
    %v847 = vrot.slane %v842, %v846
    %v848 = vlaneseq
    %v849 = vshrl.u32 %v848, 7
    %v850 = vsub.s32 1, %v849
    %v851 = vrot.slane %v842, %v850
    %v852 = vlaneseq
    %v853 = vshrl.u32 %v852, 7
    %v854 = vsub.s32 2, %v853
    %v855 = vrot.slane %v842, %v854
    %v856 = vlaneseq
    %v857 = vshrl.u32 %v856, 7
    %v858 = vsub.s32 3, %v857
    %v859 = vrot.slane %v842, %v858
    %v992 = vunpack.c.l.b16 %v714
    %v993 = vunpack.c.h.b16 %v714
    %v994 = vunpack.c.l.b16 %v715
    %v995 = vunpack.c.h.b16 %v715
    %v996 = vunpack.c.l.b16 %v716
    %v997 = vunpack.c.h.b16 %v716
    %v998 = vunpack.c.l.b16 %v717
    %v999 = vunpack.c.h.b16 %v717
    %v1000 = vunpack.c.l.b16 %v718
    %v1001 = vunpack.c.h.b16 %v718
    %v1002 = vunpack.c.l.b16 %v719
    %v1003 = vunpack.c.h.b16 %v719
    %v1004 = vunpack.c.l.b16 %v720
    %v1005 = vunpack.c.h.b16 %v720
    %v1006 = vunpack.c.l.b16 %v721
    %v1007 = vunpack.c.h.b16 %v721
    %v1008 = vunpack.c.l.b16 %v722
    %v1009 = vunpack.c.h.b16 %v722
    %v1010 = vunpack.c.l.b16 %v723
    %v1011 = vunpack.c.h.b16 %v723
    %v1012 = vunpack.c.l.b16 %v724
    %v1013 = vunpack.c.h.b16 %v724
    %v1014 = vunpack.c.l.b16 %v725
    %v1015 = vunpack.c.h.b16 %v725
    %v1016 = vunpack.c.l.b16 %v726
    %v1017 = vunpack.c.h.b16 %v726
    %v1018 = vunpack.c.l.b16 %v727
    %v1019 = vunpack.c.h.b16 %v727
    %v1020 = vunpack.c.l.b16 %v728
    %v1021 = vunpack.c.h.b16 %v728
    %v1022 = vunpack.c.l.b16 %v729
    %v1023 = vunpack.c.h.b16 %v729
    %v1024 = vunpack.c.l.b16 %v730
    %v1025 = vunpack.c.h.b16 %v730
    %v1026 = vunpack.c.l.b16 %v731
    %v1027 = vunpack.c.h.b16 %v731
    %v1028 = vunpack.c.l.b16 %v732
    %v1029 = vunpack.c.h.b16 %v732
    %v1030 = vunpack.c.l.b16 %v733
    %v1031 = vunpack.c.h.b16 %v733
    %v1032 = vunpack.c.l.b16 %v734
    %v1033 = vunpack.c.h.b16 %v734
    %v1034 = vunpack.c.l.b16 %v735
    %v1035 = vunpack.c.h.b16 %v735
    %v1036 = vunpack.c.l.b16 %v736
    %v1037 = vunpack.c.h.b16 %v736
    %v1038 = vunpack.c.l.b16 %v737
    %v1039 = vunpack.c.h.b16 %v737
    %v1040 = vunpack.c.l.b16 %v738
    %v1041 = vunpack.c.h.b16 %v738
    %v1042 = vunpack.c.l.b16 %v739
    %v1043 = vunpack.c.h.b16 %v739
    %v1044 = vunpack.c.l.b16 %v740
    %v1045 = vunpack.c.h.b16 %v740
    %v1046 = vunpack.c.l.b16 %v741
    %v1047 = vunpack.c.h.b16 %v741
    %v1048 = vunpack.c.l.b16 %v742
    %v1049 = vunpack.c.h.b16 %v742
    %v1050 = vunpack.c.l.b16 %v743
    %v1051 = vunpack.c.h.b16 %v743
    %v1052 = vunpack.c.l.b16 %v744
    %v1053 = vunpack.c.h.b16 %v744
    %v1054 = vunpack.c.l.b16 %v745
    %v1055 = vunpack.c.h.b16 %v745
    %v1056 = vunpack.c.l.b16 %v746
    %v1057 = vunpack.c.h.b16 %v746
    %v1058 = vunpack.c.l.b16 %v747
    %v1059 = vunpack.c.h.b16 %v747
    %v1060 = vunpack.c.l.b16 %v748
    %v1061 = vunpack.c.h.b16 %v748
    %v1062 = vunpack.c.l.b16 %v749
    %v1063 = vunpack.c.h.b16 %v749
    %v1064 = vunpack.c.l.b16 %v750
    %v1065 = vunpack.c.h.b16 %v750
    %v1066 = vunpack.c.l.b16 %v751
    %v1067 = vunpack.c.h.b16 %v751
    %v1068 = vunpack.c.l.b16 %v752
    %v1069 = vunpack.c.h.b16 %v752
    %v1070 = vunpack.c.l.b16 %v753
    %v1071 = vunpack.c.h.b16 %v753
    %v1072 = vunpack.c.l.b16 %v754
    %v1073 = vunpack.c.h.b16 %v754
    %v1074 = vunpack.c.l.b16 %v755
    %v1075 = vunpack.c.h.b16 %v755
    %v1076 = vunpack.c.l.b16 %v756
    %v1077 = vunpack.c.h.b16 %v756
    %v1078 = vunpack.c.l.b16 %v757
    %v1079 = vunpack.c.h.b16 %v757
    %v1080 = vunpack.c.l.b16 %v758
    %v1081 = vunpack.c.h.b16 %v758
    %v1082 = vunpack.c.l.b16 %v759
    %v1083 = vunpack.c.h.b16 %v759
    %v1084 = vunpack.c.l.b16 %v760
    %v1085 = vunpack.c.h.b16 %v760
    %v1086 = vunpack.c.l.b16 %v761
    %v1087 = vunpack.c.h.b16 %v761
    %v1088 = vunpack.c.l.b16 %v762
    %v1089 = vunpack.c.h.b16 %v762
    %v1090 = vunpack.c.l.b16 %v763
    %v1091 = vunpack.c.h.b16 %v763
    %v1092 = vunpack.c.l.b16 %v764
    %v1093 = vunpack.c.h.b16 %v764
    %v1094 = vunpack.c.l.b16 %v765
    %v1095 = vunpack.c.h.b16 %v765
    %v1096 = vunpack.c.l.b16 %v766
    %v1097 = vunpack.c.h.b16 %v766
    %v1098 = vunpack.c.l.b16 %v767
    %v1099 = vunpack.c.h.b16 %v767
    %v1100 = vunpack.c.l.b16 %v768
    %v1101 = vunpack.c.h.b16 %v768
    %v1102 = vunpack.c.l.b16 %v769
    %v1103 = vunpack.c.h.b16 %v769
    %v1104 = vunpack.c.l.b16 %v770
    %v1105 = vunpack.c.h.b16 %v770
    %v1106 = vunpack.c.l.b16 %v771
    %v1107 = vunpack.c.h.b16 %v771
    %v1108 = vunpack.c.l.b16 %v772
    %v1109 = vunpack.c.h.b16 %v772
    %v1110 = vunpack.c.l.b16 %v773
    %v1111 = vunpack.c.h.b16 %v773
    %v1112 = vunpack.c.l.b16 %v774
    %v1113 = vunpack.c.h.b16 %v774
    %v1114 = vunpack.c.l.b16 %v775
    %v1115 = vunpack.c.h.b16 %v775
    %v1116 = vunpack.c.l.b16 %v776
    %v1117 = vunpack.c.h.b16 %v776
    %v1118 = vunpack.c.l.b16 %v777
    %v1119 = vunpack.c.h.b16 %v777
    %v1120 = vunpack.c.l.b16 %v778
    %v1121 = vunpack.c.h.b16 %v778
    %v1122 = vunpack.c.l.b16 %v779
    %v1123 = vunpack.c.h.b16 %v779
    %v1124 = vunpack.c.l.b16 %v780
    %v1125 = vunpack.c.h.b16 %v780
    %v1126 = vunpack.c.l.b16 %v781
    %v1127 = vunpack.c.h.b16 %v781
    %v1128 = vunpack.c.l.b16 %v782
    %v1129 = vunpack.c.h.b16 %v782
    %v1130 = vunpack.c.l.b16 %v783
    %v1131 = vunpack.c.h.b16 %v783
    %v1132 = vunpack.c.l.b16 %v784
    %v1133 = vunpack.c.h.b16 %v784
    %v1134 = vunpack.c.l.b16 %v785
    %v1135 = vunpack.c.h.b16 %v785
    %v1136 = vunpack.c.l.b16 %v786
    %v1137 = vunpack.c.h.b16 %v786
    %v1138 = vunpack.c.l.b16 %v787
    %v1139 = vunpack.c.h.b16 %v787
    %v1140 = vunpack.c.l.b16 %v788
    %v1141 = vunpack.c.h.b16 %v788
    %v1142 = vunpack.c.l.b16 %v789
    %v1143 = vunpack.c.h.b16 %v789
    %v1144 = vunpack.c.l.b16 %v790
    %v1145 = vunpack.c.h.b16 %v790
    %v1146 = vunpack.c.l.b16 %v791
    %v1147 = vunpack.c.h.b16 %v791
    %v1148 = vunpack.c.l.b16 %v792
    %v1149 = vunpack.c.h.b16 %v792
    %v1150 = vunpack.c.l.b16 %v793
    %v1151 = vunpack.c.h.b16 %v793
    %v1152 = vunpack.c.l.b16 %v794
    %v1153 = vunpack.c.h.b16 %v794
    %v1154 = vunpack.c.l.b16 %v795
    %v1155 = vunpack.c.h.b16 %v795
    %v1156 = vunpack.c.l.b16 %v796
    %v1157 = vunpack.c.h.b16 %v796
    %v1158 = vunpack.c.l.b16 %v797
    %v1159 = vunpack.c.h.b16 %v797
    %v1160 = vunpack.c.l.b16 %v798
    %v1161 = vunpack.c.h.b16 %v798
    %v1162 = vunpack.c.l.b16 %v799
    %v1163 = vunpack.c.h.b16 %v799
    %v1164 = vunpack.c.l.b16 %v800
    %v1165 = vunpack.c.h.b16 %v800
    %v1166 = vunpack.c.l.b16 %v801
    %v1167 = vunpack.c.h.b16 %v801
    %v1168 = vunpack.c.l.b16 %v802
    %v1169 = vunpack.c.h.b16 %v802
    %v1170 = vunpack.c.l.b16 %v803
    %v1171 = vunpack.c.h.b16 %v803
    %v1172 = vunpack.c.l.b16 %v804
    %v1173 = vunpack.c.h.b16 %v804
    %v1174 = vunpack.c.l.b16 %v805
    %v1175 = vunpack.c.h.b16 %v805
    %v1176 = vunpack.c.l.b16 %v806
    %v1177 = vunpack.c.h.b16 %v806
    %v1178 = vunpack.c.l.b16 %v807
    %v1179 = vunpack.c.h.b16 %v807
    %v1180 = vunpack.c.l.b16 %v808
    %v1181 = vunpack.c.h.b16 %v808
    %v1182 = vunpack.c.l.b16 %v809
    %v1183 = vunpack.c.h.b16 %v809
    %v1184 = vunpack.c.l.b16 %v810
    %v1185 = vunpack.c.h.b16 %v810
    %v1186 = vunpack.c.l.b16 %v811
    %v1187 = vunpack.c.h.b16 %v811
    %v1188 = vunpack.c.l.b16 %v812
    %v1189 = vunpack.c.h.b16 %v812
    %v1190 = vunpack.c.l.b16 %v813
    %v1191 = vunpack.c.h.b16 %v813
    %v1192 = vunpack.c.l.b16 %v814
    %v1193 = vunpack.c.h.b16 %v814
    %v1194 = vunpack.c.l.b16 %v815
    %v1195 = vunpack.c.h.b16 %v815
    %v1196 = vunpack.c.l.b16 %v816
    %v1197 = vunpack.c.h.b16 %v816
    %v1198 = vunpack.c.l.b16 %v817
    %v1199 = vunpack.c.h.b16 %v817
    %v1200 = vunpack.c.l.b16 %v818
    %v1201 = vunpack.c.h.b16 %v818
    %v1202 = vunpack.c.l.b16 %v819
    %v1203 = vunpack.c.h.b16 %v819
    %v1204 = vunpack.c.l.b16 %v820
    %v1205 = vunpack.c.h.b16 %v820
    %v1206 = vunpack.c.l.b16 %v821
    %v1207 = vunpack.c.h.b16 %v821
    %v1208 = vunpack.c.l.b16 %v822
    %v1209 = vunpack.c.h.b16 %v822
    %v1210 = vunpack.c.l.b16 %v823
    %v1211 = vunpack.c.h.b16 %v823
    %v1212 = vunpack.c.l.b16 %v824
    %v1213 = vunpack.c.h.b16 %v824
    %v1214 = vunpack.c.l.b16 %v825
    %v1215 = vunpack.c.h.b16 %v825
    %v1216 = vunpack.c.l.b16 %v826
    %v1217 = vunpack.c.h.b16 %v826
    %v1218 = vunpack.c.l.b16 %v827
    %v1219 = vunpack.c.h.b16 %v827
    %v1220 = vunpack.c.l.b16 %v828
    %v1221 = vunpack.c.h.b16 %v828
    %v1222 = vunpack.c.l.b16 %v829
    %v1223 = vunpack.c.h.b16 %v829
    %v1224 = vunpack.c.l.b16 %v830
    %v1225 = vunpack.c.h.b16 %v830
    %v1226 = vunpack.c.l.b16 %v831
    %v1227 = vunpack.c.h.b16 %v831
    %v1228 = vunpack.c.l.b16 %v832
    %v1229 = vunpack.c.h.b16 %v832
    %v1230 = vunpack.c.l.b16 %v833
    %v1231 = vunpack.c.h.b16 %v833
    %v1232 = vunpack.c.l.b16 %v834
    %v1233 = vunpack.c.h.b16 %v834
    %v1234 = vunpack.c.l.b16 %v835
    %v1235 = vunpack.c.h.b16 %v835
    %v1236 = vunpack.c.l.b16 %v836
    %v1237 = vunpack.c.h.b16 %v836
    %v1238 = vunpack.c.l.b16 %v837
    %v1239 = vunpack.c.h.b16 %v837
    %v1240 = vunpack.c.l.b16 %v838
    %v1241 = vunpack.c.h.b16 %v838
    %v1242 = vunpack.c.l.b16 %v839
    %v1243 = vunpack.c.h.b16 %v839
    %v1244 = vunpack.c.l.b16 %v840
    %v1245 = vunpack.c.h.b16 %v840
    %v1246 = vunpack.c.l.b16 %v841
    %v1247 = vunpack.c.h.b16 %v841
    %v1248 = vpack.c.b16 %v996, %v992
    %v1249 = vpack.c.b16 %v997, %v993
    %v1250 = vpack.c.b16 %v998, %v994
    %v1251 = vpack.c.b16 %v999, %v995
    %v1252 = vpack.c.b16 %v1004, %v1000
    %v1253 = vpack.c.b16 %v1005, %v1001
    %v1254 = vpack.c.b16 %v1006, %v1002
    %v1255 = vpack.c.b16 %v1007, %v1003
    %v1256 = vpack.c.b16 %v1012, %v1008
    %v1257 = vpack.c.b16 %v1013, %v1009
    %v1258 = vpack.c.b16 %v1014, %v1010
    %v1259 = vpack.c.b16 %v1015, %v1011
    %v1260 = vpack.c.b16 %v1020, %v1016
    %v1261 = vpack.c.b16 %v1021, %v1017
    %v1262 = vpack.c.b16 %v1022, %v1018
    %v1263 = vpack.c.b16 %v1023, %v1019
    %v1264 = vpack.c.b16 %v1028, %v1024
    %v1265 = vpack.c.b16 %v1029, %v1025
    %v1266 = vpack.c.b16 %v1030, %v1026
    %v1267 = vpack.c.b16 %v1031, %v1027
    %v1268 = vpack.c.b16 %v1036, %v1032
    %v1269 = vpack.c.b16 %v1037, %v1033
    %v1270 = vpack.c.b16 %v1038, %v1034
    %v1271 = vpack.c.b16 %v1039, %v1035
    %v1272 = vpack.c.b16 %v1044, %v1040
    %v1273 = vpack.c.b16 %v1045, %v1041
    %v1274 = vpack.c.b16 %v1046, %v1042
    %v1275 = vpack.c.b16 %v1047, %v1043
    %v1276 = vpack.c.b16 %v1052, %v1048
    %v1277 = vpack.c.b16 %v1053, %v1049
    %v1278 = vpack.c.b16 %v1054, %v1050
    %v1279 = vpack.c.b16 %v1055, %v1051
    %v1280 = vpack.c.b16 %v1060, %v1056
    %v1281 = vpack.c.b16 %v1061, %v1057
    %v1282 = vpack.c.b16 %v1062, %v1058
    %v1283 = vpack.c.b16 %v1063, %v1059
    %v1284 = vpack.c.b16 %v1068, %v1064
    %v1285 = vpack.c.b16 %v1069, %v1065
    %v1286 = vpack.c.b16 %v1070, %v1066
    %v1287 = vpack.c.b16 %v1071, %v1067
    %v1288 = vpack.c.b16 %v1076, %v1072
    %v1289 = vpack.c.b16 %v1077, %v1073
    %v1290 = vpack.c.b16 %v1078, %v1074
    %v1291 = vpack.c.b16 %v1079, %v1075
    %v1292 = vpack.c.b16 %v1084, %v1080
    %v1293 = vpack.c.b16 %v1085, %v1081
    %v1294 = vpack.c.b16 %v1086, %v1082
    %v1295 = vpack.c.b16 %v1087, %v1083
    %v1296 = vpack.c.b16 %v1092, %v1088
    %v1297 = vpack.c.b16 %v1093, %v1089
    %v1298 = vpack.c.b16 %v1094, %v1090
    %v1299 = vpack.c.b16 %v1095, %v1091
    %v1300 = vpack.c.b16 %v1100, %v1096
    %v1301 = vpack.c.b16 %v1101, %v1097
    %v1302 = vpack.c.b16 %v1102, %v1098
    %v1303 = vpack.c.b16 %v1103, %v1099
    %v1304 = vpack.c.b16 %v1108, %v1104
    %v1305 = vpack.c.b16 %v1109, %v1105
    %v1306 = vpack.c.b16 %v1110, %v1106
    %v1307 = vpack.c.b16 %v1111, %v1107
    %v1308 = vpack.c.b16 %v1116, %v1112
    %v1309 = vpack.c.b16 %v1117, %v1113
    %v1310 = vpack.c.b16 %v1118, %v1114
    %v1311 = vpack.c.b16 %v1119, %v1115
    %v1312 = vpack.c.b16 %v1124, %v1120
    %v1313 = vpack.c.b16 %v1125, %v1121
    %v1314 = vpack.c.b16 %v1126, %v1122
    %v1315 = vpack.c.b16 %v1127, %v1123
    %v1316 = vpack.c.b16 %v1132, %v1128
    %v1317 = vpack.c.b16 %v1133, %v1129
    %v1318 = vpack.c.b16 %v1134, %v1130
    %v1319 = vpack.c.b16 %v1135, %v1131
    %v1320 = vpack.c.b16 %v1140, %v1136
    %v1321 = vpack.c.b16 %v1141, %v1137
    %v1322 = vpack.c.b16 %v1142, %v1138
    %v1323 = vpack.c.b16 %v1143, %v1139
    %v1324 = vpack.c.b16 %v1148, %v1144
    %v1325 = vpack.c.b16 %v1149, %v1145
    %v1326 = vpack.c.b16 %v1150, %v1146
    %v1327 = vpack.c.b16 %v1151, %v1147
    %v1328 = vpack.c.b16 %v1156, %v1152
    %v1329 = vpack.c.b16 %v1157, %v1153
    %v1330 = vpack.c.b16 %v1158, %v1154
    %v1331 = vpack.c.b16 %v1159, %v1155
    %v1332 = vpack.c.b16 %v1164, %v1160
    %v1333 = vpack.c.b16 %v1165, %v1161
    %v1334 = vpack.c.b16 %v1166, %v1162
    %v1335 = vpack.c.b16 %v1167, %v1163
    %v1336 = vpack.c.b16 %v1172, %v1168
    %v1337 = vpack.c.b16 %v1173, %v1169
    %v1338 = vpack.c.b16 %v1174, %v1170
    %v1339 = vpack.c.b16 %v1175, %v1171
    %v1340 = vpack.c.b16 %v1180, %v1176
    %v1341 = vpack.c.b16 %v1181, %v1177
    %v1342 = vpack.c.b16 %v1182, %v1178
    %v1343 = vpack.c.b16 %v1183, %v1179
    %v1344 = vpack.c.b16 %v1188, %v1184
    %v1345 = vpack.c.b16 %v1189, %v1185
    %v1346 = vpack.c.b16 %v1190, %v1186
    %v1347 = vpack.c.b16 %v1191, %v1187
    %v1348 = vpack.c.b16 %v1196, %v1192
    %v1349 = vpack.c.b16 %v1197, %v1193
    %v1350 = vpack.c.b16 %v1198, %v1194
    %v1351 = vpack.c.b16 %v1199, %v1195
    %v1352 = vpack.c.b16 %v1204, %v1200
    %v1353 = vpack.c.b16 %v1205, %v1201
    %v1354 = vpack.c.b16 %v1206, %v1202
    %v1355 = vpack.c.b16 %v1207, %v1203
    %v1356 = vpack.c.b16 %v1212, %v1208
    %v1357 = vpack.c.b16 %v1213, %v1209
    %v1358 = vpack.c.b16 %v1214, %v1210
    %v1359 = vpack.c.b16 %v1215, %v1211
    %v1360 = vpack.c.b16 %v1220, %v1216
    %v1361 = vpack.c.b16 %v1221, %v1217
    %v1362 = vpack.c.b16 %v1222, %v1218
    %v1363 = vpack.c.b16 %v1223, %v1219
    %v1364 = vpack.c.b16 %v1228, %v1224
    %v1365 = vpack.c.b16 %v1229, %v1225
    %v1366 = vpack.c.b16 %v1230, %v1226
    %v1367 = vpack.c.b16 %v1231, %v1227
    %v1368 = vpack.c.b16 %v1236, %v1232
    %v1369 = vpack.c.b16 %v1237, %v1233
    %v1370 = vpack.c.b16 %v1238, %v1234
    %v1371 = vpack.c.b16 %v1239, %v1235
    %v1372 = vpack.c.b16 %v1244, %v1240
    %v1373 = vpack.c.b16 %v1245, %v1241
    %v1374 = vpack.c.b16 %v1246, %v1242
    %v1375 = vpack.c.b16 %v1247, %v1243
    %1504 = vmatprep.subr.bf16.mxu0 %v1277
    %1505 = vmatpush1.bf16.msra.mxu0 %v1276
    %1506 = vmatprep.subr.bf16.mxu0 %v1273
    %1507 = vmatpush1.bf16.msra.mxu0 %v1272
    %1508 = vmatprep.subr.bf16.mxu0 %v1269
    %1509 = vmatpush1.bf16.msra.mxu0 %v1268
    %1510 = vmatprep.subr.bf16.mxu0 %v1265
    %1511 = vmatpush1.bf16.msra.mxu0 %v1264
    %1512 = vmatprep.subr.bf16.mxu0 %v1261
    %1513 = vmatpush1.bf16.msra.mxu0 %v1260
    %1514 = vmatprep.subr.bf16.mxu0 %v1257
    %1515 = vmatpush1.bf16.msra.mxu0 %v1256
    %1516 = vmatprep.subr.bf16.mxu0 %v1253
    %1517 = vmatpush1.bf16.msra.mxu0 %v1252
    %1518 = vmatprep.subr.bf16.mxu0 %v1249
    %1519 = vmatpush1.bf16.msra.mxu0 %v1248
    %1520 = vmatprep.subr.bf16.mxu0 %v1309
    %1521 = vmatpush2.bf16.msra.mxu0 %v1308
    %1522 = vmatprep.subr.bf16.mxu0 %v1305
    %1523 = vmatpush2.bf16.msra.mxu0 %v1304
    %1524 = vmatprep.subr.bf16.mxu0 %v1301
    %1525 = vmatpush2.bf16.msra.mxu0 %v1300
    %1526 = vmatprep.subr.bf16.mxu0 %v1297
    %1527 = vmatpush2.bf16.msra.mxu0 %v1296
    %1528 = vmatprep.subr.bf16.mxu0 %v1293
    %1529 = vmatpush2.bf16.msra.mxu0 %v1292
    %1530 = vmatprep.subr.bf16.mxu0 %v1289
    %1531 = vmatpush2.bf16.msra.mxu0 %v1288
    %1532 = vmatprep.subr.bf16.mxu0 %v1285
    %1533 = vmatpush2.bf16.msra.mxu0 %v1284
    %1534 = vmatprep.subr.bf16.mxu0 %v1281
    %1535 = vmatpush2.bf16.msra.mxu0 %v1280
    %1536 = vmatprep.mubr.bf16.mxu0 %v683
    %1537 = vmatmul.mubr.bf16.gmra.mxu0 %v682
    %v1538 = vpop.f32.mrf.mxu0
    %v1539 = vadd.f32 %v847, %v1538
    %v1540 = vpop.f32.mrf.mxu0
    %v1541 = vadd.f32 %v851, %v1540
    %v1542 = vpop.f32.mrf.mxu0
    %v1543 = vadd.f32 %v847, %v1542
    %v1544 = vpop.f32.mrf.mxu0
    %v1545 = vadd.f32 %v851, %v1544
    %1546 = vmatprep.mubr.bf16.mxu0 %v687
    %1547 = vmatmul.mubr.bf16.gmra.mxu0 %v686
    %v1548 = vpop.f32.mrf.mxu0
    %v1549 = vadd.f32 %v847, %v1548
    %v1550 = vpop.f32.mrf.mxu0
    %v1551 = vadd.f32 %v851, %v1550
    %v1552 = vpop.f32.mrf.mxu0
    %v1553 = vadd.f32 %v847, %v1552
    %v1554 = vpop.f32.mrf.mxu0
    %v1555 = vadd.f32 %v851, %v1554
    %1556 = vmatprep.mubr.bf16.mxu0 %v691
    %1557 = vmatmul.mubr.bf16.gmra.mxu0 %v690
    %v1558 = vpop.f32.mrf.mxu0
    %v1559 = vadd.f32 %v847, %v1558
    %v1560 = vpop.f32.mrf.mxu0
    %v1561 = vadd.f32 %v851, %v1560
    %v1562 = vpop.f32.mrf.mxu0
    %v1563 = vadd.f32 %v847, %v1562
    %v1564 = vpop.f32.mrf.mxu0
    %v1565 = vadd.f32 %v851, %v1564
    %1566 = vmatprep.mubr.bf16.mxu0 %v695
    %1567 = vmatmul.mubr.bf16.gmra.mxu0 %v694
    %v1568 = vpop.f32.mrf.mxu0
    %v1569 = vadd.f32 %v847, %v1568
    %v1570 = vpop.f32.mrf.mxu0
    %v1571 = vadd.f32 %v851, %v1570
    %v1572 = vpop.f32.mrf.mxu0
    %v1573 = vadd.f32 %v847, %v1572
    %v1574 = vpop.f32.mrf.mxu0
    %v1575 = vadd.f32 %v851, %v1574
    %1576 = vmatprep.mubr.bf16.mxu0 %v699
    %1577 = vmatmul.mubr.bf16.gmra.mxu0 %v698
    %v1578 = vpop.f32.mrf.mxu0
    %v1579 = vadd.f32 %v847, %v1578
    %v1580 = vpop.f32.mrf.mxu0
    %v1581 = vadd.f32 %v851, %v1580
    %v1582 = vpop.f32.mrf.mxu0
    %v1583 = vadd.f32 %v847, %v1582
    %v1584 = vpop.f32.mrf.mxu0
    %v1585 = vadd.f32 %v851, %v1584
    %1586 = vmatprep.mubr.bf16.mxu0 %v703
    %1587 = vmatmul.mubr.bf16.gmra.mxu0 %v702
    %v1588 = vpop.f32.mrf.mxu0
    %v1589 = vadd.f32 %v847, %v1588
    %v1590 = vpop.f32.mrf.mxu0
    %v1591 = vadd.f32 %v851, %v1590
    %v1592 = vpop.f32.mrf.mxu0
    %v1593 = vadd.f32 %v847, %v1592
    %v1594 = vpop.f32.mrf.mxu0
    %v1595 = vadd.f32 %v851, %v1594
    %1596 = vmatprep.mubr.bf16.mxu0 %v707
    %1597 = vmatmul.mubr.bf16.gmra.mxu0 %v706
    %v1598 = vpop.f32.mrf.mxu0
    %v1599 = vadd.f32 %v847, %v1598
    %v1600 = vpop.f32.mrf.mxu0
    %v1601 = vadd.f32 %v851, %v1600
    %v1602 = vpop.f32.mrf.mxu0
    %v1603 = vadd.f32 %v847, %v1602
    %v1604 = vpop.f32.mrf.mxu0
    %v1605 = vadd.f32 %v851, %v1604
    %1606 = vmatprep.mubr.bf16.mxu0 %v711
    %1607 = vmatmul.mubr.bf16.gmra.mxu0 %v710
    %v1608 = vpop.f32.mrf.mxu0
    %v1609 = vadd.f32 %v847, %v1608
    %v1610 = vpop.f32.mrf.mxu0
    %v1611 = vadd.f32 %v851, %v1610
    %v1612 = vpop.f32.mrf.mxu0
    %v1613 = vadd.f32 %v847, %v1612
    %v1614 = vpop.f32.mrf.mxu0
    %v1615 = vadd.f32 %v851, %v1614
    %1616 = vdwg.mxu0
    %1617 = vmatprep.subr.bf16.mxu0 %v1341
    %1618 = vmatpush1.bf16.msra.mxu0 %v1340
    %1619 = vmatprep.subr.bf16.mxu0 %v1337
    %1620 = vmatpush1.bf16.msra.mxu0 %v1336
    %1621 = vmatprep.subr.bf16.mxu0 %v1333
    %1622 = vmatpush1.bf16.msra.mxu0 %v1332
    %1623 = vmatprep.subr.bf16.mxu0 %v1329
    %1624 = vmatpush1.bf16.msra.mxu0 %v1328
    %1625 = vmatprep.subr.bf16.mxu0 %v1325
    %1626 = vmatpush1.bf16.msra.mxu0 %v1324
    %1627 = vmatprep.subr.bf16.mxu0 %v1321
    %1628 = vmatpush1.bf16.msra.mxu0 %v1320
    %1629 = vmatprep.subr.bf16.mxu0 %v1317
    %1630 = vmatpush1.bf16.msra.mxu0 %v1316
    %1631 = vmatprep.subr.bf16.mxu0 %v1313
    %1632 = vmatpush1.bf16.msra.mxu0 %v1312
    %1633 = vmatprep.subr.bf16.mxu0 %v1373
    %1634 = vmatpush2.bf16.msra.mxu0 %v1372
    %1635 = vmatprep.subr.bf16.mxu0 %v1369
    %1636 = vmatpush2.bf16.msra.mxu0 %v1368
    %1637 = vmatprep.subr.bf16.mxu0 %v1365
    %1638 = vmatpush2.bf16.msra.mxu0 %v1364
    %1639 = vmatprep.subr.bf16.mxu0 %v1361
    %1640 = vmatpush2.bf16.msra.mxu0 %v1360
    %1641 = vmatprep.subr.bf16.mxu0 %v1357
    %1642 = vmatpush2.bf16.msra.mxu0 %v1356
    %1643 = vmatprep.subr.bf16.mxu0 %v1353
    %1644 = vmatpush2.bf16.msra.mxu0 %v1352
    %1645 = vmatprep.subr.bf16.mxu0 %v1349
    %1646 = vmatpush2.bf16.msra.mxu0 %v1348
    %1647 = vmatprep.subr.bf16.mxu0 %v1345
    %1648 = vmatpush2.bf16.msra.mxu0 %v1344
    %1649 = vmatprep.mubr.bf16.mxu0 %v685
    %1650 = vmatmul.mubr.bf16.gmra.mxu0 %v684
    %v1651 = vpop.f32.mrf.mxu0
    %v1652 = vadd.f32 %v1539, %v1651
    %v1653 = vpop.f32.mrf.mxu0
    %v1654 = vadd.f32 %v1541, %v1653
    %v1655 = vpop.f32.mrf.mxu0
    %v1656 = vadd.f32 %v1543, %v1655
    %v1657 = vpop.f32.mrf.mxu0
    %v1658 = vadd.f32 %v1545, %v1657
    %1659 = vmatprep.mubr.bf16.mxu0 %v689
    %1660 = vmatmul.mubr.bf16.gmra.mxu0 %v688
    %v1661 = vpop.f32.mrf.mxu0
    %v1662 = vadd.f32 %v1549, %v1661
    %v1663 = vpop.f32.mrf.mxu0
    %v1664 = vadd.f32 %v1551, %v1663
    %v1665 = vpop.f32.mrf.mxu0
    %v1666 = vadd.f32 %v1553, %v1665
    %v1667 = vpop.f32.mrf.mxu0
    %v1668 = vadd.f32 %v1555, %v1667
    %1669 = vmatprep.mubr.bf16.mxu0 %v693
    %1670 = vmatmul.mubr.bf16.gmra.mxu0 %v692
    %v1671 = vpop.f32.mrf.mxu0
    %v1672 = vadd.f32 %v1559, %v1671
    %v1673 = vpop.f32.mrf.mxu0
    %v1674 = vadd.f32 %v1561, %v1673
    %v1675 = vpop.f32.mrf.mxu0
    %v1676 = vadd.f32 %v1563, %v1675
    %v1677 = vpop.f32.mrf.mxu0
    %v1678 = vadd.f32 %v1565, %v1677
    %1679 = vmatprep.mubr.bf16.mxu0 %v697
    %1680 = vmatmul.mubr.bf16.gmra.mxu0 %v696
    %v1681 = vpop.f32.mrf.mxu0
    %v1682 = vadd.f32 %v1569, %v1681
    %v1683 = vpop.f32.mrf.mxu0
    %v1684 = vadd.f32 %v1571, %v1683
    %v1685 = vpop.f32.mrf.mxu0
    %v1686 = vadd.f32 %v1573, %v1685
    %v1687 = vpop.f32.mrf.mxu0
    %v1688 = vadd.f32 %v1575, %v1687
    %1689 = vmatprep.mubr.bf16.mxu0 %v701
    %1690 = vmatmul.mubr.bf16.gmra.mxu0 %v700
    %v1691 = vpop.f32.mrf.mxu0
    %v1692 = vadd.f32 %v1579, %v1691
    %v1693 = vpop.f32.mrf.mxu0
    %v1694 = vadd.f32 %v1581, %v1693
    %v1695 = vpop.f32.mrf.mxu0
    %v1696 = vadd.f32 %v1583, %v1695
    %v1697 = vpop.f32.mrf.mxu0
    %v1698 = vadd.f32 %v1585, %v1697
    %1699 = vmatprep.mubr.bf16.mxu0 %v705
    %1700 = vmatmul.mubr.bf16.gmra.mxu0 %v704
    %v1701 = vpop.f32.mrf.mxu0
    %v1702 = vadd.f32 %v1589, %v1701
    %v1703 = vpop.f32.mrf.mxu0
    %v1704 = vadd.f32 %v1591, %v1703
    %v1705 = vpop.f32.mrf.mxu0
    %v1706 = vadd.f32 %v1593, %v1705
    %v1707 = vpop.f32.mrf.mxu0
    %v1708 = vadd.f32 %v1595, %v1707
    %1709 = vmatprep.mubr.bf16.mxu0 %v709
    %1710 = vmatmul.mubr.bf16.gmra.mxu0 %v708
    %v1711 = vpop.f32.mrf.mxu0
    %v1712 = vadd.f32 %v1599, %v1711
    %v1713 = vpop.f32.mrf.mxu0
    %v1714 = vadd.f32 %v1601, %v1713
    %v1715 = vpop.f32.mrf.mxu0
    %v1716 = vadd.f32 %v1603, %v1715
    %v1717 = vpop.f32.mrf.mxu0
    %v1718 = vadd.f32 %v1605, %v1717
    %1719 = vmatprep.mubr.bf16.mxu0 %v713
    %1720 = vmatmul.mubr.bf16.gmra.mxu0 %v712
    %v1721 = vpop.f32.mrf.mxu0
    %v1722 = vadd.f32 %v1609, %v1721
    %v1723 = vpop.f32.mrf.mxu0
    %v1724 = vadd.f32 %v1611, %v1723
    %v1725 = vpop.f32.mrf.mxu0
    %v1726 = vadd.f32 %v1613, %v1725
    %v1727 = vpop.f32.mrf.mxu0
    %v1728 = vadd.f32 %v1615, %v1727
    %1729 = vdwg.mxu0
    %1730 = vmatprep.subr.bf16.mxu0 %v1279
    %1731 = vmatpush1.bf16.msra.mxu0 %v1278
    %1732 = vmatprep.subr.bf16.mxu0 %v1275
    %1733 = vmatpush1.bf16.msra.mxu0 %v1274
    %1734 = vmatprep.subr.bf16.mxu0 %v1271
    %1735 = vmatpush1.bf16.msra.mxu0 %v1270
    %1736 = vmatprep.subr.bf16.mxu0 %v1267
    %1737 = vmatpush1.bf16.msra.mxu0 %v1266
    %1738 = vmatprep.subr.bf16.mxu0 %v1263
    %1739 = vmatpush1.bf16.msra.mxu0 %v1262
    %1740 = vmatprep.subr.bf16.mxu0 %v1259
    %1741 = vmatpush1.bf16.msra.mxu0 %v1258
    %1742 = vmatprep.subr.bf16.mxu0 %v1255
    %1743 = vmatpush1.bf16.msra.mxu0 %v1254
    %1744 = vmatprep.subr.bf16.mxu0 %v1251
    %1745 = vmatpush1.bf16.msra.mxu0 %v1250
    %1746 = vmatprep.subr.bf16.mxu0 %v1311
    %1747 = vmatpush2.bf16.msra.mxu0 %v1310
    %1748 = vmatprep.subr.bf16.mxu0 %v1307
    %1749 = vmatpush2.bf16.msra.mxu0 %v1306
    %1750 = vmatprep.subr.bf16.mxu0 %v1303
    %1751 = vmatpush2.bf16.msra.mxu0 %v1302
    %1752 = vmatprep.subr.bf16.mxu0 %v1299
    %1753 = vmatpush2.bf16.msra.mxu0 %v1298
    %1754 = vmatprep.subr.bf16.mxu0 %v1295
    %1755 = vmatpush2.bf16.msra.mxu0 %v1294
    %1756 = vmatprep.subr.bf16.mxu0 %v1291
    %1757 = vmatpush2.bf16.msra.mxu0 %v1290
    %1758 = vmatprep.subr.bf16.mxu0 %v1287
    %1759 = vmatpush2.bf16.msra.mxu0 %v1286
    %1760 = vmatprep.subr.bf16.mxu0 %v1283
    %1761 = vmatpush2.bf16.msra.mxu0 %v1282
    %1762 = vmatprep.mubr.bf16.mxu0 %v683
    %1763 = vmatmul.mubr.bf16.gmra.mxu0 %v682
    %v1764 = vpop.f32.mrf.mxu0
    %v1765 = vadd.f32 %v855, %v1764
    %v1766 = vpop.f32.mrf.mxu0
    %v1767 = vadd.f32 %v859, %v1766
    %v1768 = vpop.f32.mrf.mxu0
    %v1769 = vadd.f32 %v855, %v1768
    %v1770 = vpop.f32.mrf.mxu0
    %v1771 = vadd.f32 %v859, %v1770
    %1772 = vmatprep.mubr.bf16.mxu0 %v687
    %1773 = vmatmul.mubr.bf16.gmra.mxu0 %v686
    %v1774 = vpop.f32.mrf.mxu0
    %v1775 = vadd.f32 %v855, %v1774
    %v1776 = vpop.f32.mrf.mxu0
    %v1777 = vadd.f32 %v859, %v1776
    %v1778 = vpop.f32.mrf.mxu0
    %v1779 = vadd.f32 %v855, %v1778
    %v1780 = vpop.f32.mrf.mxu0
    %v1781 = vadd.f32 %v859, %v1780
    %1782 = vmatprep.mubr.bf16.mxu0 %v691
    %1783 = vmatmul.mubr.bf16.gmra.mxu0 %v690
    %v1784 = vpop.f32.mrf.mxu0
    %v1785 = vadd.f32 %v855, %v1784
    %v1786 = vpop.f32.mrf.mxu0
    %v1787 = vadd.f32 %v859, %v1786
    %v1788 = vpop.f32.mrf.mxu0
    %v1789 = vadd.f32 %v855, %v1788
    %v1790 = vpop.f32.mrf.mxu0
    %v1791 = vadd.f32 %v859, %v1790
    %1792 = vmatprep.mubr.bf16.mxu0 %v695
    %1793 = vmatmul.mubr.bf16.gmra.mxu0 %v694
    %v1794 = vpop.f32.mrf.mxu0
    %v1795 = vadd.f32 %v855, %v1794
    %v1796 = vpop.f32.mrf.mxu0
    %v1797 = vadd.f32 %v859, %v1796
    %v1798 = vpop.f32.mrf.mxu0
    %v1799 = vadd.f32 %v855, %v1798
    %v1800 = vpop.f32.mrf.mxu0
    %v1801 = vadd.f32 %v859, %v1800
    %1802 = vmatprep.mubr.bf16.mxu0 %v699
    %1803 = vmatmul.mubr.bf16.gmra.mxu0 %v698
    %v1804 = vpop.f32.mrf.mxu0
    %v1805 = vadd.f32 %v855, %v1804
    %v1806 = vpop.f32.mrf.mxu0
    %v1807 = vadd.f32 %v859, %v1806
    %v1808 = vpop.f32.mrf.mxu0
    %v1809 = vadd.f32 %v855, %v1808
    %v1810 = vpop.f32.mrf.mxu0
    %v1811 = vadd.f32 %v859, %v1810
    %1812 = vmatprep.mubr.bf16.mxu0 %v703
    %1813 = vmatmul.mubr.bf16.gmra.mxu0 %v702
    %v1814 = vpop.f32.mrf.mxu0
    %v1815 = vadd.f32 %v855, %v1814
    %v1816 = vpop.f32.mrf.mxu0
    %v1817 = vadd.f32 %v859, %v1816
    %v1818 = vpop.f32.mrf.mxu0
    %v1819 = vadd.f32 %v855, %v1818
    %v1820 = vpop.f32.mrf.mxu0
    %v1821 = vadd.f32 %v859, %v1820
    %1822 = vmatprep.mubr.bf16.mxu0 %v707
    %1823 = vmatmul.mubr.bf16.gmra.mxu0 %v706
    %v1824 = vpop.f32.mrf.mxu0
    %v1825 = vadd.f32 %v855, %v1824
    %v1826 = vpop.f32.mrf.mxu0
    %v1827 = vadd.f32 %v859, %v1826
    %v1828 = vpop.f32.mrf.mxu0
    %v1829 = vadd.f32 %v855, %v1828
    %v1830 = vpop.f32.mrf.mxu0
    %v1831 = vadd.f32 %v859, %v1830
    %1832 = vmatprep.mubr.bf16.mxu0 %v711
    %1833 = vmatmul.mubr.bf16.gmra.mxu0 %v710
    %v1834 = vpop.f32.mrf.mxu0
    %v1835 = vadd.f32 %v855, %v1834
    %v1836 = vpop.f32.mrf.mxu0
    %v1837 = vadd.f32 %v859, %v1836
    %v1838 = vpop.f32.mrf.mxu0
    %v1839 = vadd.f32 %v855, %v1838
    %v1840 = vpop.f32.mrf.mxu0
    %v1841 = vadd.f32 %v859, %v1840
    %1842 = vdwg.mxu0
    %1843 = vmatprep.subr.bf16.mxu0 %v1343
    %1844 = vmatpush1.bf16.msra.mxu0 %v1342
    %1845 = vmatprep.subr.bf16.mxu0 %v1339
    %1846 = vmatpush1.bf16.msra.mxu0 %v1338
    %1847 = vmatprep.subr.bf16.mxu0 %v1335
    %1848 = vmatpush1.bf16.msra.mxu0 %v1334
    %1849 = vmatprep.subr.bf16.mxu0 %v1331
    %1850 = vmatpush1.bf16.msra.mxu0 %v1330
    %1851 = vmatprep.subr.bf16.mxu0 %v1327
    %1852 = vmatpush1.bf16.msra.mxu0 %v1326
    %1853 = vmatprep.subr.bf16.mxu0 %v1323
    %1854 = vmatpush1.bf16.msra.mxu0 %v1322
    %1855 = vmatprep.subr.bf16.mxu0 %v1319
    %1856 = vmatpush1.bf16.msra.mxu0 %v1318
    %1857 = vmatprep.subr.bf16.mxu0 %v1315
    %1858 = vmatpush1.bf16.msra.mxu0 %v1314
    %1859 = vmatprep.subr.bf16.mxu0 %v1375
    %1860 = vmatpush2.bf16.msra.mxu0 %v1374
    %1861 = vmatprep.subr.bf16.mxu0 %v1371
    %1862 = vmatpush2.bf16.msra.mxu0 %v1370
    %1863 = vmatprep.subr.bf16.mxu0 %v1367
    %1864 = vmatpush2.bf16.msra.mxu0 %v1366
    %1865 = vmatprep.subr.bf16.mxu0 %v1363
    %1866 = vmatpush2.bf16.msra.mxu0 %v1362
    %1867 = vmatprep.subr.bf16.mxu0 %v1359
    %1868 = vmatpush2.bf16.msra.mxu0 %v1358
    %1869 = vmatprep.subr.bf16.mxu0 %v1355
    %1870 = vmatpush2.bf16.msra.mxu0 %v1354
    %1871 = vmatprep.subr.bf16.mxu0 %v1351
    %1872 = vmatpush2.bf16.msra.mxu0 %v1350
    %1873 = vmatprep.subr.bf16.mxu0 %v1347
    %1874 = vmatpush2.bf16.msra.mxu0 %v1346
    %1875 = vmatprep.mubr.bf16.mxu0 %v685
    %1876 = vmatmul.mubr.bf16.gmra.mxu0 %v684
    %v1877 = vpop.f32.mrf.mxu0
    %v1878 = vadd.f32 %v1765, %v1877
    %v1879 = vpop.f32.mrf.mxu0
    %v1880 = vadd.f32 %v1767, %v1879
    %v1881 = vpop.f32.mrf.mxu0
    %v1882 = vadd.f32 %v1769, %v1881
    %v1883 = vpop.f32.mrf.mxu0
    %v1884 = vadd.f32 %v1771, %v1883
    %1885 = vmatprep.mubr.bf16.mxu0 %v689
    %1886 = vmatmul.mubr.bf16.gmra.mxu0 %v688
    %v1887 = vpop.f32.mrf.mxu0
    %v1888 = vadd.f32 %v1775, %v1887
    %v1889 = vpop.f32.mrf.mxu0
    %v1890 = vadd.f32 %v1777, %v1889
    %v1891 = vpop.f32.mrf.mxu0
    %v1892 = vadd.f32 %v1779, %v1891
    %v1893 = vpop.f32.mrf.mxu0
    %v1894 = vadd.f32 %v1781, %v1893
    %1895 = vmatprep.mubr.bf16.mxu0 %v693
    %1896 = vmatmul.mubr.bf16.gmra.mxu0 %v692
    %v1897 = vpop.f32.mrf.mxu0
    %v1898 = vadd.f32 %v1785, %v1897
    %v1899 = vpop.f32.mrf.mxu0
    %v1900 = vadd.f32 %v1787, %v1899
    %v1901 = vpop.f32.mrf.mxu0
    %v1902 = vadd.f32 %v1789, %v1901
    %v1903 = vpop.f32.mrf.mxu0
    %v1904 = vadd.f32 %v1791, %v1903
    %1905 = vmatprep.mubr.bf16.mxu0 %v697
    %1906 = vmatmul.mubr.bf16.gmra.mxu0 %v696
    %v1907 = vpop.f32.mrf.mxu0
    %v1908 = vadd.f32 %v1795, %v1907
    %v1909 = vpop.f32.mrf.mxu0
    %v1910 = vadd.f32 %v1797, %v1909
    %v1911 = vpop.f32.mrf.mxu0
    %v1912 = vadd.f32 %v1799, %v1911
    %v1913 = vpop.f32.mrf.mxu0
    %v1914 = vadd.f32 %v1801, %v1913
    %1915 = vmatprep.mubr.bf16.mxu0 %v701
    %1916 = vmatmul.mubr.bf16.gmra.mxu0 %v700
    %v1917 = vpop.f32.mrf.mxu0
    %v1918 = vadd.f32 %v1805, %v1917
    %v1919 = vpop.f32.mrf.mxu0
    %v1920 = vadd.f32 %v1807, %v1919
    %v1921 = vpop.f32.mrf.mxu0
    %v1922 = vadd.f32 %v1809, %v1921
    %v1923 = vpop.f32.mrf.mxu0
    %v1924 = vadd.f32 %v1811, %v1923
    %1925 = vmatprep.mubr.bf16.mxu0 %v705
    %1926 = vmatmul.mubr.bf16.gmra.mxu0 %v704
    %v1927 = vpop.f32.mrf.mxu0
    %v1928 = vadd.f32 %v1815, %v1927
    %v1929 = vpop.f32.mrf.mxu0
    %v1930 = vadd.f32 %v1817, %v1929
    %v1931 = vpop.f32.mrf.mxu0
    %v1932 = vadd.f32 %v1819, %v1931
    %v1933 = vpop.f32.mrf.mxu0
    %v1934 = vadd.f32 %v1821, %v1933
    %1935 = vmatprep.mubr.bf16.mxu0 %v709
    %1936 = vmatmul.mubr.bf16.gmra.mxu0 %v708
    %v1937 = vpop.f32.mrf.mxu0
    %v1938 = vadd.f32 %v1825, %v1937
    %v1939 = vpop.f32.mrf.mxu0
    %v1940 = vadd.f32 %v1827, %v1939
    %v1941 = vpop.f32.mrf.mxu0
    %v1942 = vadd.f32 %v1829, %v1941
    %v1943 = vpop.f32.mrf.mxu0
    %v1944 = vadd.f32 %v1831, %v1943
    %1945 = vmatprep.mubr.bf16.mxu0 %v713
    %1946 = vmatmul.mubr.bf16.gmra.mxu0 %v712
    %v1947 = vpop.f32.mrf.mxu0
    %v1948 = vadd.f32 %v1835, %v1947
    %v1949 = vpop.f32.mrf.mxu0
    %v1950 = vadd.f32 %v1837, %v1949
    %v1951 = vpop.f32.mrf.mxu0
    %v1952 = vadd.f32 %v1839, %v1951
    %v1953 = vpop.f32.mrf.mxu0
    %v1954 = vadd.f32 %v1841, %v1953
    %1955 = vdwg.mxu0
    %v1956 = vtanh.pop %v1652
    %v1957 = vtanh.pop %v1654
    %v1958 = vtanh.pop %v1878
    %v1959 = vtanh.pop %v1880
    %v1960 = vtanh.pop %v1656
    %v1961 = vtanh.pop %v1658
    %v1962 = vtanh.pop %v1882
    %v1963 = vtanh.pop %v1884
    %v1964 = vtanh.pop %v1662
    %v1965 = vtanh.pop %v1664
    %v1966 = vtanh.pop %v1888
    %v1967 = vtanh.pop %v1890
    %v1968 = vtanh.pop %v1666
    %v1969 = vtanh.pop %v1668
    %v1970 = vtanh.pop %v1892
    %v1971 = vtanh.pop %v1894
    %v1972 = vtanh.pop %v1672
    %v1973 = vtanh.pop %v1674
    %v1974 = vtanh.pop %v1898
    %v1975 = vtanh.pop %v1900
    %v1976 = vtanh.pop %v1676
    %v1977 = vtanh.pop %v1678
    %v1978 = vtanh.pop %v1902
    %v1979 = vtanh.pop %v1904
    %v1980 = vtanh.pop %v1682
    %v1981 = vtanh.pop %v1684
    %v1982 = vtanh.pop %v1908
    %v1983 = vtanh.pop %v1910
    %v1984 = vtanh.pop %v1686
    %v1985 = vtanh.pop %v1688
    %v1986 = vtanh.pop %v1912
    %v1987 = vtanh.pop %v1914
    %v1988 = vtanh.pop %v1692
    %v1989 = vtanh.pop %v1694
    %v1990 = vtanh.pop %v1918
    %v1991 = vtanh.pop %v1920
    %v1992 = vtanh.pop %v1696
    %v1993 = vtanh.pop %v1698
    %v1994 = vtanh.pop %v1922
    %v1995 = vtanh.pop %v1924
    %v1996 = vtanh.pop %v1702
    %v1997 = vtanh.pop %v1704
    %v1998 = vtanh.pop %v1928
    %v1999 = vtanh.pop %v1930
    %v2000 = vtanh.pop %v1706
    %v2001 = vtanh.pop %v1708
    %v2002 = vtanh.pop %v1932
    %v2003 = vtanh.pop %v1934
    %v2004 = vtanh.pop %v1712
    %v2005 = vtanh.pop %v1714
    %v2006 = vtanh.pop %v1938
    %v2007 = vtanh.pop %v1940
    %v2008 = vtanh.pop %v1716
    %v2009 = vtanh.pop %v1718
    %v2010 = vtanh.pop %v1942
    %v2011 = vtanh.pop %v1944
    %v2012 = vtanh.pop %v1722
    %v2013 = vtanh.pop %v1724
    %v2014 = vtanh.pop %v1948
    %v2015 = vtanh.pop %v1950
    %v2016 = vtanh.pop %v1726
    %v2017 = vtanh.pop %v1728
    %v2018 = vtanh.pop %v1952
    %v2019 = vtanh.pop %v1954
    %v2020 = vpack.c.bf16 %v1960, %v1956
    %v2021 = vpack.c.bf16 %v1961, %v1957
    %v2022 = vpack.c.bf16 %v1962, %v1958
    %v2023 = vpack.c.bf16 %v1963, %v1959
    %v2024 = vpack.c.bf16 %v1968, %v1964
    %v2025 = vpack.c.bf16 %v1969, %v1965
    %v2026 = vpack.c.bf16 %v1970, %v1966
    %v2027 = vpack.c.bf16 %v1971, %v1967
    %v2028 = vpack.c.bf16 %v1976, %v1972
    %v2029 = vpack.c.bf16 %v1977, %v1973
    %v2030 = vpack.c.bf16 %v1978, %v1974
    %v2031 = vpack.c.bf16 %v1979, %v1975
    %v2032 = vpack.c.bf16 %v1984, %v1980
    %v2033 = vpack.c.bf16 %v1985, %v1981
    %v2034 = vpack.c.bf16 %v1986, %v1982
    %v2035 = vpack.c.bf16 %v1987, %v1983
    %v2036 = vpack.c.bf16 %v1992, %v1988
    %v2037 = vpack.c.bf16 %v1993, %v1989
    %v2038 = vpack.c.bf16 %v1994, %v1990
    %v2039 = vpack.c.bf16 %v1995, %v1991
    %v2040 = vpack.c.bf16 %v2000, %v1996
    %v2041 = vpack.c.bf16 %v2001, %v1997
    %v2042 = vpack.c.bf16 %v2002, %v1998
    %v2043 = vpack.c.bf16 %v2003, %v1999
    %v2044 = vpack.c.bf16 %v2008, %v2004
    %v2045 = vpack.c.bf16 %v2009, %v2005
    %v2046 = vpack.c.bf16 %v2010, %v2006
    %v2047 = vpack.c.bf16 %v2011, %v2007
    %v2048 = vpack.c.bf16 %v2016, %v2012
    %v2049 = vpack.c.bf16 %v2017, %v2013
    %v2050 = vpack.c.bf16 %v2018, %v2014
    %v2051 = vpack.c.bf16 %v2019, %v2015
    %v2052 = vld [vmem:[#allocation10] sm:$0xff]
    %v2053 = vld [vmem:[#allocation10 + $0x8] sm:$0xff]
    %v2054 = vld [vmem:[#allocation10 + $0x10] sm:$0xff]
    %v2055 = vld [vmem:[#allocation10 + $0x18] sm:$0xff]
    %v2056 = vld [vmem:[#allocation10 + $0x20] sm:$0xff]
    %v2057 = vld [vmem:[#allocation10 + $0x28] sm:$0xff]
    %v2058 = vld [vmem:[#allocation10 + $0x30] sm:$0xff]
    %v2059 = vld [vmem:[#allocation10 + $0x38] sm:$0xff]
    %v2060 = vld [vmem:[#allocation10 + $0x40] sm:$0xff]
    %v2061 = vld [vmem:[#allocation10 + $0x48] sm:$0xff]
    %v2062 = vld [vmem:[#allocation10 + $0x50] sm:$0xff]
    %v2063 = vld [vmem:[#allocation10 + $0x58] sm:$0xff]
    %v2064 = vld [vmem:[#allocation10 + $0x60] sm:$0xff]
    %v2065 = vld [vmem:[#allocation10 + $0x68] sm:$0xff]
    %v2066 = vld [vmem:[#allocation10 + $0x70] sm:$0xff]
    %v2067 = vld [vmem:[#allocation10 + $0x78] sm:$0xff]
    %v2068 = vld [vmem:[#allocation10 + $0x80] sm:$0xff]
    %v2069 = vld [vmem:[#allocation10 + $0x88] sm:$0xff]
    %v2070 = vld [vmem:[#allocation10 + $0x90] sm:$0xff]
    %v2071 = vld [vmem:[#allocation10 + $0x98] sm:$0xff]
    %v2072 = vld [vmem:[#allocation10 + $0xa0] sm:$0xff]
    %v2073 = vld [vmem:[#allocation10 + $0xa8] sm:$0xff]
    %v2074 = vld [vmem:[#allocation10 + $0xb0] sm:$0xff]
    %v2075 = vld [vmem:[#allocation10 + $0xb8] sm:$0xff]
    %v2076 = vld [vmem:[#allocation10 + $0xc0] sm:$0xff]
    %v2077 = vld [vmem:[#allocation10 + $0xc8] sm:$0xff]
    %v2078 = vld [vmem:[#allocation10 + $0xd0] sm:$0xff]
    %v2079 = vld [vmem:[#allocation10 + $0xd8] sm:$0xff]
    %v2080 = vld [vmem:[#allocation10 + $0xe0] sm:$0xff]
    %v2081 = vld [vmem:[#allocation10 + $0xe8] sm:$0xff]
    %v2082 = vld [vmem:[#allocation10 + $0xf0] sm:$0xff]
    %v2083 = vld [vmem:[#allocation10 + $0xf8] sm:$0xff]
    %v2084 = vld [vmem:[#allocation10 + $0x100] sm:$0xff]
    %v2085 = vld [vmem:[#allocation10 + $0x108] sm:$0xff]
    %v2086 = vld [vmem:[#allocation10 + $0x110] sm:$0xff]
    %v2087 = vld [vmem:[#allocation10 + $0x118] sm:$0xff]
    %v2088 = vld [vmem:[#allocation10 + $0x120] sm:$0xff]
    %v2089 = vld [vmem:[#allocation10 + $0x128] sm:$0xff]
    %v2090 = vld [vmem:[#allocation10 + $0x130] sm:$0xff]
    %v2091 = vld [vmem:[#allocation10 + $0x138] sm:$0xff]
    %v2092 = vld [vmem:[#allocation10 + $0x140] sm:$0xff]
    %v2093 = vld [vmem:[#allocation10 + $0x148] sm:$0xff]
    %v2094 = vld [vmem:[#allocation10 + $0x150] sm:$0xff]
    %v2095 = vld [vmem:[#allocation10 + $0x158] sm:$0xff]
    %v2096 = vld [vmem:[#allocation10 + $0x160] sm:$0xff]
    %v2097 = vld [vmem:[#allocation10 + $0x168] sm:$0xff]
    %v2098 = vld [vmem:[#allocation10 + $0x170] sm:$0xff]
    %v2099 = vld [vmem:[#allocation10 + $0x178] sm:$0xff]
    %v2100 = vld [vmem:[#allocation10 + $0x180] sm:$0xff]
    %v2101 = vld [vmem:[#allocation10 + $0x188] sm:$0xff]
    %v2102 = vld [vmem:[#allocation10 + $0x190] sm:$0xff]
    %v2103 = vld [vmem:[#allocation10 + $0x198] sm:$0xff]
    %v2104 = vld [vmem:[#allocation10 + $0x1a0] sm:$0xff]
    %v2105 = vld [vmem:[#allocation10 + $0x1a8] sm:$0xff]
    %v2106 = vld [vmem:[#allocation10 + $0x1b0] sm:$0xff]
    %v2107 = vld [vmem:[#allocation10 + $0x1b8] sm:$0xff]
    %v2108 = vld [vmem:[#allocation10 + $0x1c0] sm:$0xff]
    %v2109 = vld [vmem:[#allocation10 + $0x1c8] sm:$0xff]
    %v2110 = vld [vmem:[#allocation10 + $0x1d0] sm:$0xff]
    %v2111 = vld [vmem:[#allocation10 + $0x1d8] sm:$0xff]
    %v2112 = vld [vmem:[#allocation10 + $0x1e0] sm:$0xff]
    %v2113 = vld [vmem:[#allocation10 + $0x1e8] sm:$0xff]
    %v2114 = vld [vmem:[#allocation10 + $0x1f0] sm:$0xff]
    %v2115 = vld [vmem:[#allocation10 + $0x1f8] sm:$0xff]
    %v2116 = vld [vmem:[#allocation10 + $0x200] sm:$0xff]
    %v2117 = vld [vmem:[#allocation10 + $0x208] sm:$0xff]
    %v2118 = vld [vmem:[#allocation10 + $0x210] sm:$0xff]
    %v2119 = vld [vmem:[#allocation10 + $0x218] sm:$0xff]
    %v2120 = vld [vmem:[#allocation10 + $0x220] sm:$0xff]
    %v2121 = vld [vmem:[#allocation10 + $0x228] sm:$0xff]
    %v2122 = vld [vmem:[#allocation10 + $0x230] sm:$0xff]
    %v2123 = vld [vmem:[#allocation10 + $0x238] sm:$0xff]
    %v2124 = vld [vmem:[#allocation10 + $0x240] sm:$0xff]
    %v2125 = vld [vmem:[#allocation10 + $0x248] sm:$0xff]
    %v2126 = vld [vmem:[#allocation10 + $0x250] sm:$0xff]
    %v2127 = vld [vmem:[#allocation10 + $0x258] sm:$0xff]
    %v2128 = vld [vmem:[#allocation10 + $0x260] sm:$0xff]
    %v2129 = vld [vmem:[#allocation10 + $0x268] sm:$0xff]
    %v2130 = vld [vmem:[#allocation10 + $0x270] sm:$0xff]
    %v2131 = vld [vmem:[#allocation10 + $0x278] sm:$0xff]
    %v2132 = vld [vmem:[#allocation10 + $0x280] sm:$0xff]
    %v2133 = vld [vmem:[#allocation10 + $0x288] sm:$0xff]
    %v2134 = vld [vmem:[#allocation10 + $0x290] sm:$0xff]
    %v2135 = vld [vmem:[#allocation10 + $0x298] sm:$0xff]
    %v2136 = vld [vmem:[#allocation10 + $0x2a0] sm:$0xff]
    %v2137 = vld [vmem:[#allocation10 + $0x2a8] sm:$0xff]
    %v2138 = vld [vmem:[#allocation10 + $0x2b0] sm:$0xff]
    %v2139 = vld [vmem:[#allocation10 + $0x2b8] sm:$0xff]
    %v2140 = vld [vmem:[#allocation10 + $0x2c0] sm:$0xff]
    %v2141 = vld [vmem:[#allocation10 + $0x2c8] sm:$0xff]
    %v2142 = vld [vmem:[#allocation10 + $0x2d0] sm:$0xff]
    %v2143 = vld [vmem:[#allocation10 + $0x2d8] sm:$0xff]
    %v2144 = vld [vmem:[#allocation10 + $0x2e0] sm:$0xff]
    %v2145 = vld [vmem:[#allocation10 + $0x2e8] sm:$0xff]
    %v2146 = vld [vmem:[#allocation10 + $0x2f0] sm:$0xff]
    %v2147 = vld [vmem:[#allocation10 + $0x2f8] sm:$0xff]
    %v2148 = vld [vmem:[#allocation10 + $0x300] sm:$0xff]
    %v2149 = vld [vmem:[#allocation10 + $0x308] sm:$0xff]
    %v2150 = vld [vmem:[#allocation10 + $0x310] sm:$0xff]
    %v2151 = vld [vmem:[#allocation10 + $0x318] sm:$0xff]
    %v2152 = vld [vmem:[#allocation10 + $0x320] sm:$0xff]
    %v2153 = vld [vmem:[#allocation10 + $0x328] sm:$0xff]
    %v2154 = vld [vmem:[#allocation10 + $0x330] sm:$0xff]
    %v2155 = vld [vmem:[#allocation10 + $0x338] sm:$0xff]
    %v2156 = vld [vmem:[#allocation10 + $0x340] sm:$0xff]
    %v2157 = vld [vmem:[#allocation10 + $0x348] sm:$0xff]
    %v2158 = vld [vmem:[#allocation10 + $0x350] sm:$0xff]
    %v2159 = vld [vmem:[#allocation10 + $0x358] sm:$0xff]
    %v2160 = vld [vmem:[#allocation10 + $0x360] sm:$0xff]
    %v2161 = vld [vmem:[#allocation10 + $0x368] sm:$0xff]
    %v2162 = vld [vmem:[#allocation10 + $0x370] sm:$0xff]
    %v2163 = vld [vmem:[#allocation10 + $0x378] sm:$0xff]
    %v2164 = vld [vmem:[#allocation10 + $0x380] sm:$0xff]
    %v2165 = vld [vmem:[#allocation10 + $0x388] sm:$0xff]
    %v2166 = vld [vmem:[#allocation10 + $0x390] sm:$0xff]
    %v2167 = vld [vmem:[#allocation10 + $0x398] sm:$0xff]
    %v2168 = vld [vmem:[#allocation10 + $0x3a0] sm:$0xff]
    %v2169 = vld [vmem:[#allocation10 + $0x3a8] sm:$0xff]
    %v2170 = vld [vmem:[#allocation10 + $0x3b0] sm:$0xff]
    %v2171 = vld [vmem:[#allocation10 + $0x3b8] sm:$0xff]
    %v2172 = vld [vmem:[#allocation10 + $0x3c0] sm:$0xff]
    %v2173 = vld [vmem:[#allocation10 + $0x3c8] sm:$0xff]
    %v2174 = vld [vmem:[#allocation10 + $0x3d0] sm:$0xff]
    %v2175 = vld [vmem:[#allocation10 + $0x3d8] sm:$0xff]
    %v2176 = vld [vmem:[#allocation10 + $0x3e0] sm:$0xff]
    %v2177 = vld [vmem:[#allocation10 + $0x3e8] sm:$0xff]
    %v2178 = vld [vmem:[#allocation10 + $0x3f0] sm:$0xff]
    %v2179 = vld [vmem:[#allocation10 + $0x3f8] sm:$0xff]
    %v2180 = vld [vmem:[%s6] sm:$0xf]
    %v2182 = vlaneseq
    %v2183 = vshrl.u32 %v2182, 7
    %v2184 = vsub.s32 0, %v2183
    %v2185 = vrot.slane %v2180, %v2184
    %v2186 = vlaneseq
    %v2187 = vshrl.u32 %v2186, 7
    %v2188 = vsub.s32 1, %v2187
    %v2189 = vrot.slane %v2180, %v2188
    %v2190 = vlaneseq
    %v2191 = vshrl.u32 %v2190, 7
    %v2192 = vsub.s32 2, %v2191
    %v2193 = vrot.slane %v2180, %v2192
    %v2194 = vlaneseq
    %v2195 = vshrl.u32 %v2194, 7
    %v2196 = vsub.s32 3, %v2195
    %v2197 = vrot.slane %v2180, %v2196
    %v2330 = vunpack.c.l.b16 %v2052
    %v2331 = vunpack.c.h.b16 %v2052
    %v2332 = vunpack.c.l.b16 %v2053
    %v2333 = vunpack.c.h.b16 %v2053
    %v2334 = vunpack.c.l.b16 %v2054
    %v2335 = vunpack.c.h.b16 %v2054
    %v2336 = vunpack.c.l.b16 %v2055
    %v2337 = vunpack.c.h.b16 %v2055
    %v2338 = vunpack.c.l.b16 %v2056
    %v2339 = vunpack.c.h.b16 %v2056
    %v2340 = vunpack.c.l.b16 %v2057
    %v2341 = vunpack.c.h.b16 %v2057
    %v2342 = vunpack.c.l.b16 %v2058
    %v2343 = vunpack.c.h.b16 %v2058
    %v2344 = vunpack.c.l.b16 %v2059
    %v2345 = vunpack.c.h.b16 %v2059
    %v2346 = vunpack.c.l.b16 %v2060
    %v2347 = vunpack.c.h.b16 %v2060
    %v2348 = vunpack.c.l.b16 %v2061
    %v2349 = vunpack.c.h.b16 %v2061
    %v2350 = vunpack.c.l.b16 %v2062
    %v2351 = vunpack.c.h.b16 %v2062
    %v2352 = vunpack.c.l.b16 %v2063
    %v2353 = vunpack.c.h.b16 %v2063
    %v2354 = vunpack.c.l.b16 %v2064
    %v2355 = vunpack.c.h.b16 %v2064
    %v2356 = vunpack.c.l.b16 %v2065
    %v2357 = vunpack.c.h.b16 %v2065
    %v2358 = vunpack.c.l.b16 %v2066
    %v2359 = vunpack.c.h.b16 %v2066
    %v2360 = vunpack.c.l.b16 %v2067
    %v2361 = vunpack.c.h.b16 %v2067
    %v2362 = vunpack.c.l.b16 %v2068
    %v2363 = vunpack.c.h.b16 %v2068
    %v2364 = vunpack.c.l.b16 %v2069
    %v2365 = vunpack.c.h.b16 %v2069
    %v2366 = vunpack.c.l.b16 %v2070
    %v2367 = vunpack.c.h.b16 %v2070
    %v2368 = vunpack.c.l.b16 %v2071
    %v2369 = vunpack.c.h.b16 %v2071
    %v2370 = vunpack.c.l.b16 %v2072
    %v2371 = vunpack.c.h.b16 %v2072
    %v2372 = vunpack.c.l.b16 %v2073
    %v2373 = vunpack.c.h.b16 %v2073
    %v2374 = vunpack.c.l.b16 %v2074
    %v2375 = vunpack.c.h.b16 %v2074
    %v2376 = vunpack.c.l.b16 %v2075
    %v2377 = vunpack.c.h.b16 %v2075
    %v2378 = vunpack.c.l.b16 %v2076
    %v2379 = vunpack.c.h.b16 %v2076
    %v2380 = vunpack.c.l.b16 %v2077
    %v2381 = vunpack.c.h.b16 %v2077
    %v2382 = vunpack.c.l.b16 %v2078
    %v2383 = vunpack.c.h.b16 %v2078
    %v2384 = vunpack.c.l.b16 %v2079
    %v2385 = vunpack.c.h.b16 %v2079
    %v2386 = vunpack.c.l.b16 %v2080
    %v2387 = vunpack.c.h.b16 %v2080
    %v2388 = vunpack.c.l.b16 %v2081
    %v2389 = vunpack.c.h.b16 %v2081
    %v2390 = vunpack.c.l.b16 %v2082
    %v2391 = vunpack.c.h.b16 %v2082
    %v2392 = vunpack.c.l.b16 %v2083
    %v2393 = vunpack.c.h.b16 %v2083
    %v2394 = vunpack.c.l.b16 %v2084
    %v2395 = vunpack.c.h.b16 %v2084
    %v2396 = vunpack.c.l.b16 %v2085
    %v2397 = vunpack.c.h.b16 %v2085
    %v2398 = vunpack.c.l.b16 %v2086
    %v2399 = vunpack.c.h.b16 %v2086
    %v2400 = vunpack.c.l.b16 %v2087
    %v2401 = vunpack.c.h.b16 %v2087
    %v2402 = vunpack.c.l.b16 %v2088
    %v2403 = vunpack.c.h.b16 %v2088
    %v2404 = vunpack.c.l.b16 %v2089
    %v2405 = vunpack.c.h.b16 %v2089
    %v2406 = vunpack.c.l.b16 %v2090
    %v2407 = vunpack.c.h.b16 %v2090
    %v2408 = vunpack.c.l.b16 %v2091
    %v2409 = vunpack.c.h.b16 %v2091
    %v2410 = vunpack.c.l.b16 %v2092
    %v2411 = vunpack.c.h.b16 %v2092
    %v2412 = vunpack.c.l.b16 %v2093
    %v2413 = vunpack.c.h.b16 %v2093
    %v2414 = vunpack.c.l.b16 %v2094
    %v2415 = vunpack.c.h.b16 %v2094
    %v2416 = vunpack.c.l.b16 %v2095
    %v2417 = vunpack.c.h.b16 %v2095
    %v2418 = vunpack.c.l.b16 %v2096
    %v2419 = vunpack.c.h.b16 %v2096
    %v2420 = vunpack.c.l.b16 %v2097
    %v2421 = vunpack.c.h.b16 %v2097
    %v2422 = vunpack.c.l.b16 %v2098
    %v2423 = vunpack.c.h.b16 %v2098
    %v2424 = vunpack.c.l.b16 %v2099
    %v2425 = vunpack.c.h.b16 %v2099
    %v2426 = vunpack.c.l.b16 %v2100
    %v2427 = vunpack.c.h.b16 %v2100
    %v2428 = vunpack.c.l.b16 %v2101
    %v2429 = vunpack.c.h.b16 %v2101
    %v2430 = vunpack.c.l.b16 %v2102
    %v2431 = vunpack.c.h.b16 %v2102
    %v2432 = vunpack.c.l.b16 %v2103
    %v2433 = vunpack.c.h.b16 %v2103
    %v2434 = vunpack.c.l.b16 %v2104
    %v2435 = vunpack.c.h.b16 %v2104
    %v2436 = vunpack.c.l.b16 %v2105
    %v2437 = vunpack.c.h.b16 %v2105
    %v2438 = vunpack.c.l.b16 %v2106
    %v2439 = vunpack.c.h.b16 %v2106
    %v2440 = vunpack.c.l.b16 %v2107
    %v2441 = vunpack.c.h.b16 %v2107
    %v2442 = vunpack.c.l.b16 %v2108
    %v2443 = vunpack.c.h.b16 %v2108
    %v2444 = vunpack.c.l.b16 %v2109
    %v2445 = vunpack.c.h.b16 %v2109
    %v2446 = vunpack.c.l.b16 %v2110
    %v2447 = vunpack.c.h.b16 %v2110
    %v2448 = vunpack.c.l.b16 %v2111
    %v2449 = vunpack.c.h.b16 %v2111
    %v2450 = vunpack.c.l.b16 %v2112
    %v2451 = vunpack.c.h.b16 %v2112
    %v2452 = vunpack.c.l.b16 %v2113
    %v2453 = vunpack.c.h.b16 %v2113
    %v2454 = vunpack.c.l.b16 %v2114
    %v2455 = vunpack.c.h.b16 %v2114
    %v2456 = vunpack.c.l.b16 %v2115
    %v2457 = vunpack.c.h.b16 %v2115
    %v2458 = vunpack.c.l.b16 %v2116
    %v2459 = vunpack.c.h.b16 %v2116
    %v2460 = vunpack.c.l.b16 %v2117
    %v2461 = vunpack.c.h.b16 %v2117
    %v2462 = vunpack.c.l.b16 %v2118
    %v2463 = vunpack.c.h.b16 %v2118
    %v2464 = vunpack.c.l.b16 %v2119
    %v2465 = vunpack.c.h.b16 %v2119
    %v2466 = vunpack.c.l.b16 %v2120
    %v2467 = vunpack.c.h.b16 %v2120
    %v2468 = vunpack.c.l.b16 %v2121
    %v2469 = vunpack.c.h.b16 %v2121
    %v2470 = vunpack.c.l.b16 %v2122
    %v2471 = vunpack.c.h.b16 %v2122
    %v2472 = vunpack.c.l.b16 %v2123
    %v2473 = vunpack.c.h.b16 %v2123
    %v2474 = vunpack.c.l.b16 %v2124
    %v2475 = vunpack.c.h.b16 %v2124
    %v2476 = vunpack.c.l.b16 %v2125
    %v2477 = vunpack.c.h.b16 %v2125
    %v2478 = vunpack.c.l.b16 %v2126
    %v2479 = vunpack.c.h.b16 %v2126
    %v2480 = vunpack.c.l.b16 %v2127
    %v2481 = vunpack.c.h.b16 %v2127
    %v2482 = vunpack.c.l.b16 %v2128
    %v2483 = vunpack.c.h.b16 %v2128
    %v2484 = vunpack.c.l.b16 %v2129
    %v2485 = vunpack.c.h.b16 %v2129
    %v2486 = vunpack.c.l.b16 %v2130
    %v2487 = vunpack.c.h.b16 %v2130
    %v2488 = vunpack.c.l.b16 %v2131
    %v2489 = vunpack.c.h.b16 %v2131
    %v2490 = vunpack.c.l.b16 %v2132
    %v2491 = vunpack.c.h.b16 %v2132
    %v2492 = vunpack.c.l.b16 %v2133
    %v2493 = vunpack.c.h.b16 %v2133
    %v2494 = vunpack.c.l.b16 %v2134
    %v2495 = vunpack.c.h.b16 %v2134
    %v2496 = vunpack.c.l.b16 %v2135
    %v2497 = vunpack.c.h.b16 %v2135
    %v2498 = vunpack.c.l.b16 %v2136
    %v2499 = vunpack.c.h.b16 %v2136
    %v2500 = vunpack.c.l.b16 %v2137
    %v2501 = vunpack.c.h.b16 %v2137
    %v2502 = vunpack.c.l.b16 %v2138
    %v2503 = vunpack.c.h.b16 %v2138
    %v2504 = vunpack.c.l.b16 %v2139
    %v2505 = vunpack.c.h.b16 %v2139
    %v2506 = vunpack.c.l.b16 %v2140
    %v2507 = vunpack.c.h.b16 %v2140
    %v2508 = vunpack.c.l.b16 %v2141
    %v2509 = vunpack.c.h.b16 %v2141
    %v2510 = vunpack.c.l.b16 %v2142
    %v2511 = vunpack.c.h.b16 %v2142
    %v2512 = vunpack.c.l.b16 %v2143
    %v2513 = vunpack.c.h.b16 %v2143
    %v2514 = vunpack.c.l.b16 %v2144
    %v2515 = vunpack.c.h.b16 %v2144
    %v2516 = vunpack.c.l.b16 %v2145
    %v2517 = vunpack.c.h.b16 %v2145
    %v2518 = vunpack.c.l.b16 %v2146
    %v2519 = vunpack.c.h.b16 %v2146
    %v2520 = vunpack.c.l.b16 %v2147
    %v2521 = vunpack.c.h.b16 %v2147
    %v2522 = vunpack.c.l.b16 %v2148
    %v2523 = vunpack.c.h.b16 %v2148
    %v2524 = vunpack.c.l.b16 %v2149
    %v2525 = vunpack.c.h.b16 %v2149
    %v2526 = vunpack.c.l.b16 %v2150
    %v2527 = vunpack.c.h.b16 %v2150
    %v2528 = vunpack.c.l.b16 %v2151
    %v2529 = vunpack.c.h.b16 %v2151
    %v2530 = vunpack.c.l.b16 %v2152
    %v2531 = vunpack.c.h.b16 %v2152
    %v2532 = vunpack.c.l.b16 %v2153
    %v2533 = vunpack.c.h.b16 %v2153
    %v2534 = vunpack.c.l.b16 %v2154
    %v2535 = vunpack.c.h.b16 %v2154
    %v2536 = vunpack.c.l.b16 %v2155
    %v2537 = vunpack.c.h.b16 %v2155
    %v2538 = vunpack.c.l.b16 %v2156
    %v2539 = vunpack.c.h.b16 %v2156
    %v2540 = vunpack.c.l.b16 %v2157
    %v2541 = vunpack.c.h.b16 %v2157
    %v2542 = vunpack.c.l.b16 %v2158
    %v2543 = vunpack.c.h.b16 %v2158
    %v2544 = vunpack.c.l.b16 %v2159
    %v2545 = vunpack.c.h.b16 %v2159
    %v2546 = vunpack.c.l.b16 %v2160
    %v2547 = vunpack.c.h.b16 %v2160
    %v2548 = vunpack.c.l.b16 %v2161
    %v2549 = vunpack.c.h.b16 %v2161
    %v2550 = vunpack.c.l.b16 %v2162
    %v2551 = vunpack.c.h.b16 %v2162
    %v2552 = vunpack.c.l.b16 %v2163
    %v2553 = vunpack.c.h.b16 %v2163
    %v2554 = vunpack.c.l.b16 %v2164
    %v2555 = vunpack.c.h.b16 %v2164
    %v2556 = vunpack.c.l.b16 %v2165
    %v2557 = vunpack.c.h.b16 %v2165
    %v2558 = vunpack.c.l.b16 %v2166
    %v2559 = vunpack.c.h.b16 %v2166
    %v2560 = vunpack.c.l.b16 %v2167
    %v2561 = vunpack.c.h.b16 %v2167
    %v2562 = vunpack.c.l.b16 %v2168
    %v2563 = vunpack.c.h.b16 %v2168
    %v2564 = vunpack.c.l.b16 %v2169
    %v2565 = vunpack.c.h.b16 %v2169
    %v2566 = vunpack.c.l.b16 %v2170
    %v2567 = vunpack.c.h.b16 %v2170
    %v2568 = vunpack.c.l.b16 %v2171
    %v2569 = vunpack.c.h.b16 %v2171
    %v2570 = vunpack.c.l.b16 %v2172
    %v2571 = vunpack.c.h.b16 %v2172
    %v2572 = vunpack.c.l.b16 %v2173
    %v2573 = vunpack.c.h.b16 %v2173
    %v2574 = vunpack.c.l.b16 %v2174
    %v2575 = vunpack.c.h.b16 %v2174
    %v2576 = vunpack.c.l.b16 %v2175
    %v2577 = vunpack.c.h.b16 %v2175
    %v2578 = vunpack.c.l.b16 %v2176
    %v2579 = vunpack.c.h.b16 %v2176
    %v2580 = vunpack.c.l.b16 %v2177
    %v2581 = vunpack.c.h.b16 %v2177
    %v2582 = vunpack.c.l.b16 %v2178
    %v2583 = vunpack.c.h.b16 %v2178
    %v2584 = vunpack.c.l.b16 %v2179
    %v2585 = vunpack.c.h.b16 %v2179
    %v2586 = vpack.c.b16 %v2334, %v2330
    %v2587 = vpack.c.b16 %v2335, %v2331
    %v2588 = vpack.c.b16 %v2336, %v2332
    %v2589 = vpack.c.b16 %v2337, %v2333
    %v2590 = vpack.c.b16 %v2342, %v2338
    %v2591 = vpack.c.b16 %v2343, %v2339
    %v2592 = vpack.c.b16 %v2344, %v2340
    %v2593 = vpack.c.b16 %v2345, %v2341
    %v2594 = vpack.c.b16 %v2350, %v2346
    %v2595 = vpack.c.b16 %v2351, %v2347
    %v2596 = vpack.c.b16 %v2352, %v2348
    %v2597 = vpack.c.b16 %v2353, %v2349
    %v2598 = vpack.c.b16 %v2358, %v2354
    %v2599 = vpack.c.b16 %v2359, %v2355
    %v2600 = vpack.c.b16 %v2360, %v2356
    %v2601 = vpack.c.b16 %v2361, %v2357
    %v2602 = vpack.c.b16 %v2366, %v2362
    %v2603 = vpack.c.b16 %v2367, %v2363
    %v2604 = vpack.c.b16 %v2368, %v2364
    %v2605 = vpack.c.b16 %v2369, %v2365
    %v2606 = vpack.c.b16 %v2374, %v2370
    %v2607 = vpack.c.b16 %v2375, %v2371
    %v2608 = vpack.c.b16 %v2376, %v2372
    %v2609 = vpack.c.b16 %v2377, %v2373
    %v2610 = vpack.c.b16 %v2382, %v2378
    %v2611 = vpack.c.b16 %v2383, %v2379
    %v2612 = vpack.c.b16 %v2384, %v2380
    %v2613 = vpack.c.b16 %v2385, %v2381
    %v2614 = vpack.c.b16 %v2390, %v2386
    %v2615 = vpack.c.b16 %v2391, %v2387
    %v2616 = vpack.c.b16 %v2392, %v2388
    %v2617 = vpack.c.b16 %v2393, %v2389
    %v2618 = vpack.c.b16 %v2398, %v2394
    %v2619 = vpack.c.b16 %v2399, %v2395
    %v2620 = vpack.c.b16 %v2400, %v2396
    %v2621 = vpack.c.b16 %v2401, %v2397
    %v2622 = vpack.c.b16 %v2406, %v2402
    %v2623 = vpack.c.b16 %v2407, %v2403
    %v2624 = vpack.c.b16 %v2408, %v2404
    %v2625 = vpack.c.b16 %v2409, %v2405
    %v2626 = vpack.c.b16 %v2414, %v2410
    %v2627 = vpack.c.b16 %v2415, %v2411
    %v2628 = vpack.c.b16 %v2416, %v2412
    %v2629 = vpack.c.b16 %v2417, %v2413
    %v2630 = vpack.c.b16 %v2422, %v2418
    %v2631 = vpack.c.b16 %v2423, %v2419
    %v2632 = vpack.c.b16 %v2424, %v2420
    %v2633 = vpack.c.b16 %v2425, %v2421
    %v2634 = vpack.c.b16 %v2430, %v2426
    %v2635 = vpack.c.b16 %v2431, %v2427
    %v2636 = vpack.c.b16 %v2432, %v2428
    %v2637 = vpack.c.b16 %v2433, %v2429
    %v2638 = vpack.c.b16 %v2438, %v2434
    %v2639 = vpack.c.b16 %v2439, %v2435
    %v2640 = vpack.c.b16 %v2440, %v2436
    %v2641 = vpack.c.b16 %v2441, %v2437
    %v2642 = vpack.c.b16 %v2446, %v2442
    %v2643 = vpack.c.b16 %v2447, %v2443
    %v2644 = vpack.c.b16 %v2448, %v2444
    %v2645 = vpack.c.b16 %v2449, %v2445
    %v2646 = vpack.c.b16 %v2454, %v2450
    %v2647 = vpack.c.b16 %v2455, %v2451
    %v2648 = vpack.c.b16 %v2456, %v2452
    %v2649 = vpack.c.b16 %v2457, %v2453
    %v2650 = vpack.c.b16 %v2462, %v2458
    %v2651 = vpack.c.b16 %v2463, %v2459
    %v2652 = vpack.c.b16 %v2464, %v2460
    %v2653 = vpack.c.b16 %v2465, %v2461
    %v2654 = vpack.c.b16 %v2470, %v2466
    %v2655 = vpack.c.b16 %v2471, %v2467
    %v2656 = vpack.c.b16 %v2472, %v2468
    %v2657 = vpack.c.b16 %v2473, %v2469
    %v2658 = vpack.c.b16 %v2478, %v2474
    %v2659 = vpack.c.b16 %v2479, %v2475
    %v2660 = vpack.c.b16 %v2480, %v2476
    %v2661 = vpack.c.b16 %v2481, %v2477
    %v2662 = vpack.c.b16 %v2486, %v2482
    %v2663 = vpack.c.b16 %v2487, %v2483
    %v2664 = vpack.c.b16 %v2488, %v2484
    %v2665 = vpack.c.b16 %v2489, %v2485
    %v2666 = vpack.c.b16 %v2494, %v2490
    %v2667 = vpack.c.b16 %v2495, %v2491
    %v2668 = vpack.c.b16 %v2496, %v2492
    %v2669 = vpack.c.b16 %v2497, %v2493
    %v2670 = vpack.c.b16 %v2502, %v2498
    %v2671 = vpack.c.b16 %v2503, %v2499
    %v2672 = vpack.c.b16 %v2504, %v2500
    %v2673 = vpack.c.b16 %v2505, %v2501
    %v2674 = vpack.c.b16 %v2510, %v2506
    %v2675 = vpack.c.b16 %v2511, %v2507
    %v2676 = vpack.c.b16 %v2512, %v2508
    %v2677 = vpack.c.b16 %v2513, %v2509
    %v2678 = vpack.c.b16 %v2518, %v2514
    %v2679 = vpack.c.b16 %v2519, %v2515
    %v2680 = vpack.c.b16 %v2520, %v2516
    %v2681 = vpack.c.b16 %v2521, %v2517
    %v2682 = vpack.c.b16 %v2526, %v2522
    %v2683 = vpack.c.b16 %v2527, %v2523
    %v2684 = vpack.c.b16 %v2528, %v2524
    %v2685 = vpack.c.b16 %v2529, %v2525
    %v2686 = vpack.c.b16 %v2534, %v2530
    %v2687 = vpack.c.b16 %v2535, %v2531
    %v2688 = vpack.c.b16 %v2536, %v2532
    %v2689 = vpack.c.b16 %v2537, %v2533
    %v2690 = vpack.c.b16 %v2542, %v2538
    %v2691 = vpack.c.b16 %v2543, %v2539
    %v2692 = vpack.c.b16 %v2544, %v2540
    %v2693 = vpack.c.b16 %v2545, %v2541
    %v2694 = vpack.c.b16 %v2550, %v2546
    %v2695 = vpack.c.b16 %v2551, %v2547
    %v2696 = vpack.c.b16 %v2552, %v2548
    %v2697 = vpack.c.b16 %v2553, %v2549
    %v2698 = vpack.c.b16 %v2558, %v2554
    %v2699 = vpack.c.b16 %v2559, %v2555
    %v2700 = vpack.c.b16 %v2560, %v2556
    %v2701 = vpack.c.b16 %v2561, %v2557
    %v2702 = vpack.c.b16 %v2566, %v2562
    %v2703 = vpack.c.b16 %v2567, %v2563
    %v2704 = vpack.c.b16 %v2568, %v2564
    %v2705 = vpack.c.b16 %v2569, %v2565
    %v2706 = vpack.c.b16 %v2574, %v2570
    %v2707 = vpack.c.b16 %v2575, %v2571
    %v2708 = vpack.c.b16 %v2576, %v2572
    %v2709 = vpack.c.b16 %v2577, %v2573
    %v2710 = vpack.c.b16 %v2582, %v2578
    %v2711 = vpack.c.b16 %v2583, %v2579
    %v2712 = vpack.c.b16 %v2584, %v2580
    %v2713 = vpack.c.b16 %v2585, %v2581
    %2842 = vmatprep.subr.bf16.mxu0 %v2615
    %2843 = vmatpush1.bf16.msra.mxu0 %v2614
    %2844 = vmatprep.subr.bf16.mxu0 %v2611
    %2845 = vmatpush1.bf16.msra.mxu0 %v2610
    %2846 = vmatprep.subr.bf16.mxu0 %v2607
    %2847 = vmatpush1.bf16.msra.mxu0 %v2606
    %2848 = vmatprep.subr.bf16.mxu0 %v2603
    %2849 = vmatpush1.bf16.msra.mxu0 %v2602
    %2850 = vmatprep.subr.bf16.mxu0 %v2599
    %2851 = vmatpush1.bf16.msra.mxu0 %v2598
    %2852 = vmatprep.subr.bf16.mxu0 %v2595
    %2853 = vmatpush1.bf16.msra.mxu0 %v2594
    %2854 = vmatprep.subr.bf16.mxu0 %v2591
    %2855 = vmatpush1.bf16.msra.mxu0 %v2590
    %2856 = vmatprep.subr.bf16.mxu0 %v2587
    %2857 = vmatpush1.bf16.msra.mxu0 %v2586
    %2858 = vmatprep.subr.bf16.mxu0 %v2647
    %2859 = vmatpush2.bf16.msra.mxu0 %v2646
    %2860 = vmatprep.subr.bf16.mxu0 %v2643
    %2861 = vmatpush2.bf16.msra.mxu0 %v2642
    %2862 = vmatprep.subr.bf16.mxu0 %v2639
    %2863 = vmatpush2.bf16.msra.mxu0 %v2638
    %2864 = vmatprep.subr.bf16.mxu0 %v2635
    %2865 = vmatpush2.bf16.msra.mxu0 %v2634
    %2866 = vmatprep.subr.bf16.mxu0 %v2631
    %2867 = vmatpush2.bf16.msra.mxu0 %v2630
    %2868 = vmatprep.subr.bf16.mxu0 %v2627
    %2869 = vmatpush2.bf16.msra.mxu0 %v2626
    %2870 = vmatprep.subr.bf16.mxu0 %v2623
    %2871 = vmatpush2.bf16.msra.mxu0 %v2622
    %2872 = vmatprep.subr.bf16.mxu0 %v2619
    %2873 = vmatpush2.bf16.msra.mxu0 %v2618
    %2874 = vmatprep.mubr.bf16.mxu0 %v2021
    %2875 = vmatmul.mubr.bf16.gmra.mxu0 %v2020
    %v2876 = vpop.f32.mrf.mxu0
    %v2877 = vadd.f32 %v2185, %v2876
    %v2878 = vpop.f32.mrf.mxu0
    %v2879 = vadd.f32 %v2189, %v2878
    %v2880 = vpop.f32.mrf.mxu0
    %v2881 = vadd.f32 %v2185, %v2880
    %v2882 = vpop.f32.mrf.mxu0
    %v2883 = vadd.f32 %v2189, %v2882
    %2884 = vmatprep.mubr.bf16.mxu0 %v2025
    %2885 = vmatmul.mubr.bf16.gmra.mxu0 %v2024
    %v2886 = vpop.f32.mrf.mxu0
    %v2887 = vadd.f32 %v2185, %v2886
    %v2888 = vpop.f32.mrf.mxu0
    %v2889 = vadd.f32 %v2189, %v2888
    %v2890 = vpop.f32.mrf.mxu0
    %v2891 = vadd.f32 %v2185, %v2890
    %v2892 = vpop.f32.mrf.mxu0
    %v2893 = vadd.f32 %v2189, %v2892
    %2894 = vmatprep.mubr.bf16.mxu0 %v2029
    %2895 = vmatmul.mubr.bf16.gmra.mxu0 %v2028
    %v2896 = vpop.f32.mrf.mxu0
    %v2897 = vadd.f32 %v2185, %v2896
    %v2898 = vpop.f32.mrf.mxu0
    %v2899 = vadd.f32 %v2189, %v2898
    %v2900 = vpop.f32.mrf.mxu0
    %v2901 = vadd.f32 %v2185, %v2900
    %v2902 = vpop.f32.mrf.mxu0
    %v2903 = vadd.f32 %v2189, %v2902
    %2904 = vmatprep.mubr.bf16.mxu0 %v2033
    %2905 = vmatmul.mubr.bf16.gmra.mxu0 %v2032
    %v2906 = vpop.f32.mrf.mxu0
    %v2907 = vadd.f32 %v2185, %v2906
    %v2908 = vpop.f32.mrf.mxu0
    %v2909 = vadd.f32 %v2189, %v2908
    %v2910 = vpop.f32.mrf.mxu0
    %v2911 = vadd.f32 %v2185, %v2910
    %v2912 = vpop.f32.mrf.mxu0
    %v2913 = vadd.f32 %v2189, %v2912
    %2914 = vmatprep.mubr.bf16.mxu0 %v2037
    %2915 = vmatmul.mubr.bf16.gmra.mxu0 %v2036
    %v2916 = vpop.f32.mrf.mxu0
    %v2917 = vadd.f32 %v2185, %v2916
    %v2918 = vpop.f32.mrf.mxu0
    %v2919 = vadd.f32 %v2189, %v2918
    %v2920 = vpop.f32.mrf.mxu0
    %v2921 = vadd.f32 %v2185, %v2920
    %v2922 = vpop.f32.mrf.mxu0
    %v2923 = vadd.f32 %v2189, %v2922
    %2924 = vmatprep.mubr.bf16.mxu0 %v2041
    %2925 = vmatmul.mubr.bf16.gmra.mxu0 %v2040
    %v2926 = vpop.f32.mrf.mxu0
    %v2927 = vadd.f32 %v2185, %v2926
    %v2928 = vpop.f32.mrf.mxu0
    %v2929 = vadd.f32 %v2189, %v2928
    %v2930 = vpop.f32.mrf.mxu0
    %v2931 = vadd.f32 %v2185, %v2930
    %v2932 = vpop.f32.mrf.mxu0
    %v2933 = vadd.f32 %v2189, %v2932
    %2934 = vmatprep.mubr.bf16.mxu0 %v2045
    %2935 = vmatmul.mubr.bf16.gmra.mxu0 %v2044
    %v2936 = vpop.f32.mrf.mxu0
    %v2937 = vadd.f32 %v2185, %v2936
    %v2938 = vpop.f32.mrf.mxu0
    %v2939 = vadd.f32 %v2189, %v2938
    %v2940 = vpop.f32.mrf.mxu0
    %v2941 = vadd.f32 %v2185, %v2940
    %v2942 = vpop.f32.mrf.mxu0
    %v2943 = vadd.f32 %v2189, %v2942
    %2944 = vmatprep.mubr.bf16.mxu0 %v2049
    %2945 = vmatmul.mubr.bf16.gmra.mxu0 %v2048
    %v2946 = vpop.f32.mrf.mxu0
    %v2947 = vadd.f32 %v2185, %v2946
    %v2948 = vpop.f32.mrf.mxu0
    %v2949 = vadd.f32 %v2189, %v2948
    %v2950 = vpop.f32.mrf.mxu0
    %v2951 = vadd.f32 %v2185, %v2950
    %v2952 = vpop.f32.mrf.mxu0
    %v2953 = vadd.f32 %v2189, %v2952
    %2954 = vdwg.mxu0
    %2955 = vmatprep.subr.bf16.mxu0 %v2679
    %2956 = vmatpush1.bf16.msra.mxu0 %v2678
    %2957 = vmatprep.subr.bf16.mxu0 %v2675
    %2958 = vmatpush1.bf16.msra.mxu0 %v2674
    %2959 = vmatprep.subr.bf16.mxu0 %v2671
    %2960 = vmatpush1.bf16.msra.mxu0 %v2670
    %2961 = vmatprep.subr.bf16.mxu0 %v2667
    %2962 = vmatpush1.bf16.msra.mxu0 %v2666
    %2963 = vmatprep.subr.bf16.mxu0 %v2663
    %2964 = vmatpush1.bf16.msra.mxu0 %v2662
    %2965 = vmatprep.subr.bf16.mxu0 %v2659
    %2966 = vmatpush1.bf16.msra.mxu0 %v2658
    %2967 = vmatprep.subr.bf16.mxu0 %v2655
    %2968 = vmatpush1.bf16.msra.mxu0 %v2654
    %2969 = vmatprep.subr.bf16.mxu0 %v2651
    %2970 = vmatpush1.bf16.msra.mxu0 %v2650
    %2971 = vmatprep.subr.bf16.mxu0 %v2711
    %2972 = vmatpush2.bf16.msra.mxu0 %v2710
    %2973 = vmatprep.subr.bf16.mxu0 %v2707
    %2974 = vmatpush2.bf16.msra.mxu0 %v2706
    %2975 = vmatprep.subr.bf16.mxu0 %v2703
    %2976 = vmatpush2.bf16.msra.mxu0 %v2702
    %2977 = vmatprep.subr.bf16.mxu0 %v2699
    %2978 = vmatpush2.bf16.msra.mxu0 %v2698
    %2979 = vmatprep.subr.bf16.mxu0 %v2695
    %2980 = vmatpush2.bf16.msra.mxu0 %v2694
    %2981 = vmatprep.subr.bf16.mxu0 %v2691
    %2982 = vmatpush2.bf16.msra.mxu0 %v2690
    %2983 = vmatprep.subr.bf16.mxu0 %v2687
    %2984 = vmatpush2.bf16.msra.mxu0 %v2686
    %2985 = vmatprep.subr.bf16.mxu0 %v2683
    %2986 = vmatpush2.bf16.msra.mxu0 %v2682
    %2987 = vmatprep.mubr.bf16.mxu0 %v2023
    %2988 = vmatmul.mubr.bf16.gmra.mxu0 %v2022
    %v2989 = vpop.f32.mrf.mxu0
    %v2990 = vadd.f32 %v2877, %v2989
    %v2991 = vpop.f32.mrf.mxu0
    %v2992 = vadd.f32 %v2879, %v2991
    %v2993 = vpop.f32.mrf.mxu0
    %v2994 = vadd.f32 %v2881, %v2993
    %v2995 = vpop.f32.mrf.mxu0
    %v2996 = vadd.f32 %v2883, %v2995
    %2997 = vmatprep.mubr.bf16.mxu0 %v2027
    %2998 = vmatmul.mubr.bf16.gmra.mxu0 %v2026
    %v2999 = vpop.f32.mrf.mxu0
    %v3000 = vadd.f32 %v2887, %v2999
    %v3001 = vpop.f32.mrf.mxu0
    %v3002 = vadd.f32 %v2889, %v3001
    %v3003 = vpop.f32.mrf.mxu0
    %v3004 = vadd.f32 %v2891, %v3003
    %v3005 = vpop.f32.mrf.mxu0
    %v3006 = vadd.f32 %v2893, %v3005
    %3007 = vmatprep.mubr.bf16.mxu0 %v2031
    %3008 = vmatmul.mubr.bf16.gmra.mxu0 %v2030
    %v3009 = vpop.f32.mrf.mxu0
    %v3010 = vadd.f32 %v2897, %v3009
    %v3011 = vpop.f32.mrf.mxu0
    %v3012 = vadd.f32 %v2899, %v3011
    %v3013 = vpop.f32.mrf.mxu0
    %v3014 = vadd.f32 %v2901, %v3013
    %v3015 = vpop.f32.mrf.mxu0
    %v3016 = vadd.f32 %v2903, %v3015
    %3017 = vmatprep.mubr.bf16.mxu0 %v2035
    %3018 = vmatmul.mubr.bf16.gmra.mxu0 %v2034
    %v3019 = vpop.f32.mrf.mxu0
    %v3020 = vadd.f32 %v2907, %v3019
    %v3021 = vpop.f32.mrf.mxu0
    %v3022 = vadd.f32 %v2909, %v3021
    %v3023 = vpop.f32.mrf.mxu0
    %v3024 = vadd.f32 %v2911, %v3023
    %v3025 = vpop.f32.mrf.mxu0
    %v3026 = vadd.f32 %v2913, %v3025
    %3027 = vmatprep.mubr.bf16.mxu0 %v2039
    %3028 = vmatmul.mubr.bf16.gmra.mxu0 %v2038
    %v3029 = vpop.f32.mrf.mxu0
    %v3030 = vadd.f32 %v2917, %v3029
    %v3031 = vpop.f32.mrf.mxu0
    %v3032 = vadd.f32 %v2919, %v3031
    %v3033 = vpop.f32.mrf.mxu0
    %v3034 = vadd.f32 %v2921, %v3033
    %v3035 = vpop.f32.mrf.mxu0
    %v3036 = vadd.f32 %v2923, %v3035
    %3037 = vmatprep.mubr.bf16.mxu0 %v2043
    %3038 = vmatmul.mubr.bf16.gmra.mxu0 %v2042
    %v3039 = vpop.f32.mrf.mxu0
    %v3040 = vadd.f32 %v2927, %v3039
    %v3041 = vpop.f32.mrf.mxu0
    %v3042 = vadd.f32 %v2929, %v3041
    %v3043 = vpop.f32.mrf.mxu0
    %v3044 = vadd.f32 %v2931, %v3043
    %v3045 = vpop.f32.mrf.mxu0
    %v3046 = vadd.f32 %v2933, %v3045
    %3047 = vmatprep.mubr.bf16.mxu0 %v2047
    %3048 = vmatmul.mubr.bf16.gmra.mxu0 %v2046
    %v3049 = vpop.f32.mrf.mxu0
    %v3050 = vadd.f32 %v2937, %v3049
    %v3051 = vpop.f32.mrf.mxu0
    %v3052 = vadd.f32 %v2939, %v3051
    %v3053 = vpop.f32.mrf.mxu0
    %v3054 = vadd.f32 %v2941, %v3053
    %v3055 = vpop.f32.mrf.mxu0
    %v3056 = vadd.f32 %v2943, %v3055
    %3057 = vmatprep.mubr.bf16.mxu0 %v2051
    %3058 = vmatmul.mubr.bf16.gmra.mxu0 %v2050
    %v3059 = vpop.f32.mrf.mxu0
    %v3060 = vadd.f32 %v2947, %v3059
    %v3061 = vpop.f32.mrf.mxu0
    %v3062 = vadd.f32 %v2949, %v3061
    %v3063 = vpop.f32.mrf.mxu0
    %v3064 = vadd.f32 %v2951, %v3063
    %v3065 = vpop.f32.mrf.mxu0
    %v3066 = vadd.f32 %v2953, %v3065
    %3067 = vdwg.mxu0
    %3068 = vmatprep.subr.bf16.mxu0 %v2617
    %3069 = vmatpush1.bf16.msra.mxu0 %v2616
    %3070 = vmatprep.subr.bf16.mxu0 %v2613
    %3071 = vmatpush1.bf16.msra.mxu0 %v2612
    %3072 = vmatprep.subr.bf16.mxu0 %v2609
    %3073 = vmatpush1.bf16.msra.mxu0 %v2608
    %3074 = vmatprep.subr.bf16.mxu0 %v2605
    %3075 = vmatpush1.bf16.msra.mxu0 %v2604
    %3076 = vmatprep.subr.bf16.mxu0 %v2601
    %3077 = vmatpush1.bf16.msra.mxu0 %v2600
    %3078 = vmatprep.subr.bf16.mxu0 %v2597
    %3079 = vmatpush1.bf16.msra.mxu0 %v2596
    %3080 = vmatprep.subr.bf16.mxu0 %v2593
    %3081 = vmatpush1.bf16.msra.mxu0 %v2592
    %3082 = vmatprep.subr.bf16.mxu0 %v2589
    %3083 = vmatpush1.bf16.msra.mxu0 %v2588
    %3084 = vmatprep.subr.bf16.mxu0 %v2649
    %3085 = vmatpush2.bf16.msra.mxu0 %v2648
    %3086 = vmatprep.subr.bf16.mxu0 %v2645
    %3087 = vmatpush2.bf16.msra.mxu0 %v2644
    %3088 = vmatprep.subr.bf16.mxu0 %v2641
    %3089 = vmatpush2.bf16.msra.mxu0 %v2640
    %3090 = vmatprep.subr.bf16.mxu0 %v2637
    %3091 = vmatpush2.bf16.msra.mxu0 %v2636
    %3092 = vmatprep.subr.bf16.mxu0 %v2633
    %3093 = vmatpush2.bf16.msra.mxu0 %v2632
    %3094 = vmatprep.subr.bf16.mxu0 %v2629
    %3095 = vmatpush2.bf16.msra.mxu0 %v2628
    %3096 = vmatprep.subr.bf16.mxu0 %v2625
    %3097 = vmatpush2.bf16.msra.mxu0 %v2624
    %3098 = vmatprep.subr.bf16.mxu0 %v2621
    %3099 = vmatpush2.bf16.msra.mxu0 %v2620
    %3100 = vmatprep.mubr.bf16.mxu0 %v2021
    %3101 = vmatmul.mubr.bf16.gmra.mxu0 %v2020
    %v3102 = vpop.f32.mrf.mxu0
    %v3103 = vadd.f32 %v2193, %v3102
    %v3104 = vpop.f32.mrf.mxu0
    %v3105 = vadd.f32 %v2197, %v3104
    %v3106 = vpop.f32.mrf.mxu0
    %v3107 = vadd.f32 %v2193, %v3106
    %v3108 = vpop.f32.mrf.mxu0
    %v3109 = vadd.f32 %v2197, %v3108
    %3110 = vmatprep.mubr.bf16.mxu0 %v2025
    %3111 = vmatmul.mubr.bf16.gmra.mxu0 %v2024
    %v3112 = vpop.f32.mrf.mxu0
    %v3113 = vadd.f32 %v2193, %v3112
    %v3114 = vpop.f32.mrf.mxu0
    %v3115 = vadd.f32 %v2197, %v3114
    %v3116 = vpop.f32.mrf.mxu0
    %v3117 = vadd.f32 %v2193, %v3116
    %v3118 = vpop.f32.mrf.mxu0
    %v3119 = vadd.f32 %v2197, %v3118
    %3120 = vmatprep.mubr.bf16.mxu0 %v2029
    %3121 = vmatmul.mubr.bf16.gmra.mxu0 %v2028
    %v3122 = vpop.f32.mrf.mxu0
    %v3123 = vadd.f32 %v2193, %v3122
    %v3124 = vpop.f32.mrf.mxu0
    %v3125 = vadd.f32 %v2197, %v3124
    %v3126 = vpop.f32.mrf.mxu0
    %v3127 = vadd.f32 %v2193, %v3126
    %v3128 = vpop.f32.mrf.mxu0
    %v3129 = vadd.f32 %v2197, %v3128
    %3130 = vmatprep.mubr.bf16.mxu0 %v2033
    %3131 = vmatmul.mubr.bf16.gmra.mxu0 %v2032
    %v3132 = vpop.f32.mrf.mxu0
    %v3133 = vadd.f32 %v2193, %v3132
    %v3134 = vpop.f32.mrf.mxu0
    %v3135 = vadd.f32 %v2197, %v3134
    %v3136 = vpop.f32.mrf.mxu0
    %v3137 = vadd.f32 %v2193, %v3136
    %v3138 = vpop.f32.mrf.mxu0
    %v3139 = vadd.f32 %v2197, %v3138
    %3140 = vmatprep.mubr.bf16.mxu0 %v2037
    %3141 = vmatmul.mubr.bf16.gmra.mxu0 %v2036
    %v3142 = vpop.f32.mrf.mxu0
    %v3143 = vadd.f32 %v2193, %v3142
    %v3144 = vpop.f32.mrf.mxu0
    %v3145 = vadd.f32 %v2197, %v3144
    %v3146 = vpop.f32.mrf.mxu0
    %v3147 = vadd.f32 %v2193, %v3146
    %v3148 = vpop.f32.mrf.mxu0
    %v3149 = vadd.f32 %v2197, %v3148
    %3150 = vmatprep.mubr.bf16.mxu0 %v2041
    %3151 = vmatmul.mubr.bf16.gmra.mxu0 %v2040
    %v3152 = vpop.f32.mrf.mxu0
    %v3153 = vadd.f32 %v2193, %v3152
    %v3154 = vpop.f32.mrf.mxu0
    %v3155 = vadd.f32 %v2197, %v3154
    %v3156 = vpop.f32.mrf.mxu0
    %v3157 = vadd.f32 %v2193, %v3156
    %v3158 = vpop.f32.mrf.mxu0
    %v3159 = vadd.f32 %v2197, %v3158
    %3160 = vmatprep.mubr.bf16.mxu0 %v2045
    %3161 = vmatmul.mubr.bf16.gmra.mxu0 %v2044
    %v3162 = vpop.f32.mrf.mxu0
    %v3163 = vadd.f32 %v2193, %v3162
    %v3164 = vpop.f32.mrf.mxu0
    %v3165 = vadd.f32 %v2197, %v3164
    %v3166 = vpop.f32.mrf.mxu0
    %v3167 = vadd.f32 %v2193, %v3166
    %v3168 = vpop.f32.mrf.mxu0
    %v3169 = vadd.f32 %v2197, %v3168
    %3170 = vmatprep.mubr.bf16.mxu0 %v2049
    %3171 = vmatmul.mubr.bf16.gmra.mxu0 %v2048
    %v3172 = vpop.f32.mrf.mxu0
    %v3173 = vadd.f32 %v2193, %v3172
    %v3174 = vpop.f32.mrf.mxu0
    %v3175 = vadd.f32 %v2197, %v3174
    %v3176 = vpop.f32.mrf.mxu0
    %v3177 = vadd.f32 %v2193, %v3176
    %v3178 = vpop.f32.mrf.mxu0
    %v3179 = vadd.f32 %v2197, %v3178
    %3180 = vdwg.mxu0
    %3181 = vmatprep.subr.bf16.mxu0 %v2681
    %3182 = vmatpush1.bf16.msra.mxu0 %v2680
    %3183 = vmatprep.subr.bf16.mxu0 %v2677
    %3184 = vmatpush1.bf16.msra.mxu0 %v2676
    %3185 = vmatprep.subr.bf16.mxu0 %v2673
    %3186 = vmatpush1.bf16.msra.mxu0 %v2672
    %3187 = vmatprep.subr.bf16.mxu0 %v2669
    %3188 = vmatpush1.bf16.msra.mxu0 %v2668
    %3189 = vmatprep.subr.bf16.mxu0 %v2665
    %3190 = vmatpush1.bf16.msra.mxu0 %v2664
    %3191 = vmatprep.subr.bf16.mxu0 %v2661
    %3192 = vmatpush1.bf16.msra.mxu0 %v2660
    %3193 = vmatprep.subr.bf16.mxu0 %v2657
    %3194 = vmatpush1.bf16.msra.mxu0 %v2656
    %3195 = vmatprep.subr.bf16.mxu0 %v2653
    %3196 = vmatpush1.bf16.msra.mxu0 %v2652
    %3197 = vmatprep.subr.bf16.mxu0 %v2713
    %3198 = vmatpush2.bf16.msra.mxu0 %v2712
    %3199 = vmatprep.subr.bf16.mxu0 %v2709
    %3200 = vmatpush2.bf16.msra.mxu0 %v2708
    %3201 = vmatprep.subr.bf16.mxu0 %v2705
    %3202 = vmatpush2.bf16.msra.mxu0 %v2704
    %3203 = vmatprep.subr.bf16.mxu0 %v2701
    %3204 = vmatpush2.bf16.msra.mxu0 %v2700
    %3205 = vmatprep.subr.bf16.mxu0 %v2697
    %3206 = vmatpush2.bf16.msra.mxu0 %v2696
    %3207 = vmatprep.subr.bf16.mxu0 %v2693
    %3208 = vmatpush2.bf16.msra.mxu0 %v2692
    %3209 = vmatprep.subr.bf16.mxu0 %v2689
    %3210 = vmatpush2.bf16.msra.mxu0 %v2688
    %3211 = vmatprep.subr.bf16.mxu0 %v2685
    %3212 = vmatpush2.bf16.msra.mxu0 %v2684
    %3213 = vmatprep.mubr.bf16.mxu0 %v2023
    %3214 = vmatmul.mubr.bf16.gmra.mxu0 %v2022
    %v3215 = vpop.f32.mrf.mxu0
    %v3216 = vadd.f32 %v3103, %v3215
    %v3217 = vpop.f32.mrf.mxu0
    %v3218 = vadd.f32 %v3105, %v3217
    %v3219 = vpop.f32.mrf.mxu0
    %v3220 = vadd.f32 %v3107, %v3219
    %v3221 = vpop.f32.mrf.mxu0
    %v3222 = vadd.f32 %v3109, %v3221
    %3223 = vmatprep.mubr.bf16.mxu0 %v2027
    %3224 = vmatmul.mubr.bf16.gmra.mxu0 %v2026
    %v3225 = vpop.f32.mrf.mxu0
    %v3226 = vadd.f32 %v3113, %v3225
    %v3227 = vpop.f32.mrf.mxu0
    %v3228 = vadd.f32 %v3115, %v3227
    %v3229 = vpop.f32.mrf.mxu0
    %v3230 = vadd.f32 %v3117, %v3229
    %v3231 = vpop.f32.mrf.mxu0
    %v3232 = vadd.f32 %v3119, %v3231
    %3233 = vmatprep.mubr.bf16.mxu0 %v2031
    %3234 = vmatmul.mubr.bf16.gmra.mxu0 %v2030
    %v3235 = vpop.f32.mrf.mxu0
    %v3236 = vadd.f32 %v3123, %v3235
    %v3237 = vpop.f32.mrf.mxu0
    %v3238 = vadd.f32 %v3125, %v3237
    %v3239 = vpop.f32.mrf.mxu0
    %v3240 = vadd.f32 %v3127, %v3239
    %v3241 = vpop.f32.mrf.mxu0
    %v3242 = vadd.f32 %v3129, %v3241
    %3243 = vmatprep.mubr.bf16.mxu0 %v2035
    %3244 = vmatmul.mubr.bf16.gmra.mxu0 %v2034
    %v3245 = vpop.f32.mrf.mxu0
    %v3246 = vadd.f32 %v3133, %v3245
    %v3247 = vpop.f32.mrf.mxu0
    %v3248 = vadd.f32 %v3135, %v3247
    %v3249 = vpop.f32.mrf.mxu0
    %v3250 = vadd.f32 %v3137, %v3249
    %v3251 = vpop.f32.mrf.mxu0
    %v3252 = vadd.f32 %v3139, %v3251
    %3253 = vmatprep.mubr.bf16.mxu0 %v2039
    %3254 = vmatmul.mubr.bf16.gmra.mxu0 %v2038
    %v3255 = vpop.f32.mrf.mxu0
    %v3256 = vadd.f32 %v3143, %v3255
    %v3257 = vpop.f32.mrf.mxu0
    %v3258 = vadd.f32 %v3145, %v3257
    %v3259 = vpop.f32.mrf.mxu0
    %v3260 = vadd.f32 %v3147, %v3259
    %v3261 = vpop.f32.mrf.mxu0
    %v3262 = vadd.f32 %v3149, %v3261
    %3263 = vmatprep.mubr.bf16.mxu0 %v2043
    %3264 = vmatmul.mubr.bf16.gmra.mxu0 %v2042
    %v3265 = vpop.f32.mrf.mxu0
    %v3266 = vadd.f32 %v3153, %v3265
    %v3267 = vpop.f32.mrf.mxu0
    %v3268 = vadd.f32 %v3155, %v3267
    %v3269 = vpop.f32.mrf.mxu0
    %v3270 = vadd.f32 %v3157, %v3269
    %v3271 = vpop.f32.mrf.mxu0
    %v3272 = vadd.f32 %v3159, %v3271
    %3273 = vmatprep.mubr.bf16.mxu0 %v2047
    %3274 = vmatmul.mubr.bf16.gmra.mxu0 %v2046
    %v3275 = vpop.f32.mrf.mxu0
    %v3276 = vadd.f32 %v3163, %v3275
    %v3277 = vpop.f32.mrf.mxu0
    %v3278 = vadd.f32 %v3165, %v3277
    %v3279 = vpop.f32.mrf.mxu0
    %v3280 = vadd.f32 %v3167, %v3279
    %v3281 = vpop.f32.mrf.mxu0
    %v3282 = vadd.f32 %v3169, %v3281
    %3283 = vmatprep.mubr.bf16.mxu0 %v2051
    %3284 = vmatmul.mubr.bf16.gmra.mxu0 %v2050
    %v3285 = vpop.f32.mrf.mxu0
    %v3286 = vadd.f32 %v3173, %v3285
    %v3287 = vpop.f32.mrf.mxu0
    %v3288 = vadd.f32 %v3175, %v3287
    %v3289 = vpop.f32.mrf.mxu0
    %v3290 = vadd.f32 %v3177, %v3289
    %v3291 = vpop.f32.mrf.mxu0
    %v3292 = vadd.f32 %v3179, %v3291
    %3293 = vdwg.mxu0
    %v3294 = vtanh.pop %v2990
    %v3295 = vtanh.pop %v2992
    %v3296 = vtanh.pop %v3216
    %v3297 = vtanh.pop %v3218
    %v3298 = vtanh.pop %v2994
    %v3299 = vtanh.pop %v2996
    %v3300 = vtanh.pop %v3220
    %v3301 = vtanh.pop %v3222
    %v3302 = vtanh.pop %v3000
    %v3303 = vtanh.pop %v3002
    %v3304 = vtanh.pop %v3226
    %v3305 = vtanh.pop %v3228
    %v3306 = vtanh.pop %v3004
    %v3307 = vtanh.pop %v3006
    %v3308 = vtanh.pop %v3230
    %v3309 = vtanh.pop %v3232
    %v3310 = vtanh.pop %v3010
    %v3311 = vtanh.pop %v3012
    %v3312 = vtanh.pop %v3236
    %v3313 = vtanh.pop %v3238
    %v3314 = vtanh.pop %v3014
    %v3315 = vtanh.pop %v3016
    %v3316 = vtanh.pop %v3240
    %v3317 = vtanh.pop %v3242
    %v3318 = vtanh.pop %v3020
    %v3319 = vtanh.pop %v3022
    %v3320 = vtanh.pop %v3246
    %v3321 = vtanh.pop %v3248
    %v3322 = vtanh.pop %v3024
    %v3323 = vtanh.pop %v3026
    %v3324 = vtanh.pop %v3250
    %v3325 = vtanh.pop %v3252
    %v3326 = vtanh.pop %v3030
    %v3327 = vtanh.pop %v3032
    %v3328 = vtanh.pop %v3256
    %v3329 = vtanh.pop %v3258
    %v3330 = vtanh.pop %v3034
    %v3331 = vtanh.pop %v3036
    %v3332 = vtanh.pop %v3260
    %v3333 = vtanh.pop %v3262
    %v3334 = vtanh.pop %v3040
    %v3335 = vtanh.pop %v3042
    %v3336 = vtanh.pop %v3266
    %v3337 = vtanh.pop %v3268
    %v3338 = vtanh.pop %v3044
    %v3339 = vtanh.pop %v3046
    %v3340 = vtanh.pop %v3270
    %v3341 = vtanh.pop %v3272
    %v3342 = vtanh.pop %v3050
    %v3343 = vtanh.pop %v3052
    %v3344 = vtanh.pop %v3276
    %v3345 = vtanh.pop %v3278
    %v3346 = vtanh.pop %v3054
    %v3347 = vtanh.pop %v3056
    %v3348 = vtanh.pop %v3280
    %v3349 = vtanh.pop %v3282
    %v3350 = vtanh.pop %v3060
    %v3351 = vtanh.pop %v3062
    %v3352 = vtanh.pop %v3286
    %v3353 = vtanh.pop %v3288
    %v3354 = vtanh.pop %v3064
    %v3355 = vtanh.pop %v3066
    %v3356 = vtanh.pop %v3290
    %v3357 = vtanh.pop %v3292
    %v3358 = vpack.c.bf16 %v3298, %v3294
    %v3359 = vpack.c.bf16 %v3299, %v3295
    %v3360 = vpack.c.bf16 %v3300, %v3296
    %v3361 = vpack.c.bf16 %v3301, %v3297
    %v3362 = vpack.c.bf16 %v3306, %v3302
    %v3363 = vpack.c.bf16 %v3307, %v3303
    %v3364 = vpack.c.bf16 %v3308, %v3304
    %v3365 = vpack.c.bf16 %v3309, %v3305
    %v3366 = vpack.c.bf16 %v3314, %v3310
    %v3367 = vpack.c.bf16 %v3315, %v3311
    %v3368 = vpack.c.bf16 %v3316, %v3312
    %v3369 = vpack.c.bf16 %v3317, %v3313
    %v3370 = vpack.c.bf16 %v3322, %v3318
    %v3371 = vpack.c.bf16 %v3323, %v3319
    %v3372 = vpack.c.bf16 %v3324, %v3320
    %v3373 = vpack.c.bf16 %v3325, %v3321
    %v3374 = vpack.c.bf16 %v3330, %v3326
    %v3375 = vpack.c.bf16 %v3331, %v3327
    %v3376 = vpack.c.bf16 %v3332, %v3328
    %v3377 = vpack.c.bf16 %v3333, %v3329
    %v3378 = vpack.c.bf16 %v3338, %v3334
    %v3379 = vpack.c.bf16 %v3339, %v3335
    %v3380 = vpack.c.bf16 %v3340, %v3336
    %v3381 = vpack.c.bf16 %v3341, %v3337
    %v3382 = vpack.c.bf16 %v3346, %v3342
    %v3383 = vpack.c.bf16 %v3347, %v3343
    %v3384 = vpack.c.bf16 %v3348, %v3344
    %v3385 = vpack.c.bf16 %v3349, %v3345
    %v3386 = vpack.c.bf16 %v3354, %v3350
    %v3387 = vpack.c.bf16 %v3355, %v3351
    %v3388 = vpack.c.bf16 %v3356, %v3352
    %v3389 = vpack.c.bf16 %v3357, %v3353
    %v3390 = vld [vmem:[#allocation11] sm:$0xf]
    %v3391 = vld [vmem:[#allocation11 + $0x4] sm:$0xf]
    %v3392 = vld [vmem:[#allocation11 + $0x8] sm:$0xf]
    %v3393 = vld [vmem:[#allocation11 + $0xc] sm:$0xf]
    %v3394 = vld [vmem:[#allocation11 + $0x10] sm:$0xf]
    %v3395 = vld [vmem:[#allocation11 + $0x14] sm:$0xf]
    %v3396 = vld [vmem:[#allocation11 + $0x18] sm:$0xf]
    %v3397 = vld [vmem:[#allocation11 + $0x1c] sm:$0xf]
    %v3398 = vld [vmem:[#allocation11 + $0x20] sm:$0xf]
    %v3399 = vld [vmem:[#allocation11 + $0x24] sm:$0xf]
    %v3400 = vld [vmem:[#allocation11 + $0x28] sm:$0xf]
    %v3401 = vld [vmem:[#allocation11 + $0x2c] sm:$0xf]
    %v3402 = vld [vmem:[#allocation11 + $0x30] sm:$0xf]
    %v3403 = vld [vmem:[#allocation11 + $0x34] sm:$0xf]
    %v3404 = vld [vmem:[#allocation11 + $0x38] sm:$0xf]
    %v3405 = vld [vmem:[#allocation11 + $0x3c] sm:$0xf]
    %v3406 = vld [vmem:[#allocation11 + $0x40] sm:$0xf]
    %v3407 = vld [vmem:[#allocation11 + $0x44] sm:$0xf]
    %v3408 = vld [vmem:[#allocation11 + $0x48] sm:$0xf]
    %v3409 = vld [vmem:[#allocation11 + $0x4c] sm:$0xf]
    %v3410 = vld [vmem:[#allocation11 + $0x50] sm:$0xf]
    %v3411 = vld [vmem:[#allocation11 + $0x54] sm:$0xf]
    %v3412 = vld [vmem:[#allocation11 + $0x58] sm:$0xf]
    %v3413 = vld [vmem:[#allocation11 + $0x5c] sm:$0xf]
    %v3414 = vld [vmem:[#allocation11 + $0x60] sm:$0xf]
    %v3415 = vld [vmem:[#allocation11 + $0x64] sm:$0xf]
    %v3416 = vld [vmem:[#allocation11 + $0x68] sm:$0xf]
    %v3417 = vld [vmem:[#allocation11 + $0x6c] sm:$0xf]
    %v3418 = vld [vmem:[#allocation11 + $0x70] sm:$0xf]
    %v3419 = vld [vmem:[#allocation11 + $0x74] sm:$0xf]
    %v3420 = vld [vmem:[#allocation11 + $0x78] sm:$0xf]
    %v3421 = vld [vmem:[#allocation11 + $0x7c] sm:$0xf]
    %v3422 = vld [vmem:[#allocation11 + $0x80] sm:$0xf]
    %v3423 = vld [vmem:[#allocation11 + $0x84] sm:$0xf]
    %v3424 = vld [vmem:[#allocation11 + $0x88] sm:$0xf]
    %v3425 = vld [vmem:[#allocation11 + $0x8c] sm:$0xf]
    %v3426 = vld [vmem:[#allocation11 + $0x90] sm:$0xf]
    %v3427 = vld [vmem:[#allocation11 + $0x94] sm:$0xf]
    %v3428 = vld [vmem:[#allocation11 + $0x98] sm:$0xf]
    %v3429 = vld [vmem:[#allocation11 + $0x9c] sm:$0xf]
    %v3430 = vld [vmem:[#allocation11 + $0xa0] sm:$0xf]
    %v3431 = vld [vmem:[#allocation11 + $0xa4] sm:$0xf]
    %v3432 = vld [vmem:[#allocation11 + $0xa8] sm:$0xf]
    %v3433 = vld [vmem:[#allocation11 + $0xac] sm:$0xf]
    %v3434 = vld [vmem:[#allocation11 + $0xb0] sm:$0xf]
    %v3435 = vld [vmem:[#allocation11 + $0xb4] sm:$0xf]
    %v3436 = vld [vmem:[#allocation11 + $0xb8] sm:$0xf]
    %v3437 = vld [vmem:[#allocation11 + $0xbc] sm:$0xf]
    %v3438 = vld [vmem:[#allocation11 + $0xc0] sm:$0xf]
    %v3439 = vld [vmem:[#allocation11 + $0xc4] sm:$0xf]
    %v3440 = vld [vmem:[#allocation11 + $0xc8] sm:$0xf]
    %v3441 = vld [vmem:[#allocation11 + $0xcc] sm:$0xf]
    %v3442 = vld [vmem:[#allocation11 + $0xd0] sm:$0xf]
    %v3443 = vld [vmem:[#allocation11 + $0xd4] sm:$0xf]
    %v3444 = vld [vmem:[#allocation11 + $0xd8] sm:$0xf]
    %v3445 = vld [vmem:[#allocation11 + $0xdc] sm:$0xf]
    %v3446 = vld [vmem:[#allocation11 + $0xe0] sm:$0xf]
    %v3447 = vld [vmem:[#allocation11 + $0xe4] sm:$0xf]
    %v3448 = vld [vmem:[#allocation11 + $0xe8] sm:$0xf]
    %v3449 = vld [vmem:[#allocation11 + $0xec] sm:$0xf]
    %v3450 = vld [vmem:[#allocation11 + $0xf0] sm:$0xf]
    %v3451 = vld [vmem:[#allocation11 + $0xf4] sm:$0xf]
    %v3452 = vld [vmem:[#allocation11 + $0xf8] sm:$0xf]
    %v3453 = vld [vmem:[#allocation11 + $0xfc] sm:$0xf]
    %v3454 = vld [vmem:[%s8] sm:$0x1]
    %v3456 = vlaneseq
    %v3457 = vshrl.u32 %v3456, 7
    %v3458 = vsub.s32 0, %v3457
    %v3459 = vrot.slane %v3454, %v3458
    %v3525 = vunpack.c.l.b16 %v3390
    %v3526 = vunpack.c.l.b16 %v3391
    %v3527 = vunpack.c.l.b16 %v3392
    %v3528 = vunpack.c.l.b16 %v3393
    %v3529 = vunpack.c.l.b16 %v3394
    %v3530 = vunpack.c.l.b16 %v3395
    %v3531 = vunpack.c.l.b16 %v3396
    %v3532 = vunpack.c.l.b16 %v3397
    %v3533 = vunpack.c.l.b16 %v3398
    %v3534 = vunpack.c.l.b16 %v3399
    %v3535 = vunpack.c.l.b16 %v3400
    %v3536 = vunpack.c.l.b16 %v3401
    %v3537 = vunpack.c.l.b16 %v3402
    %v3538 = vunpack.c.l.b16 %v3403
    %v3539 = vunpack.c.l.b16 %v3404
    %v3540 = vunpack.c.l.b16 %v3405
    %v3541 = vunpack.c.l.b16 %v3406
    %v3542 = vunpack.c.l.b16 %v3407
    %v3543 = vunpack.c.l.b16 %v3408
    %v3544 = vunpack.c.l.b16 %v3409
    %v3545 = vunpack.c.l.b16 %v3410
    %v3546 = vunpack.c.l.b16 %v3411
    %v3547 = vunpack.c.l.b16 %v3412
    %v3548 = vunpack.c.l.b16 %v3413
    %v3549 = vunpack.c.l.b16 %v3414
    %v3550 = vunpack.c.l.b16 %v3415
    %v3551 = vunpack.c.l.b16 %v3416
    %v3552 = vunpack.c.l.b16 %v3417
    %v3553 = vunpack.c.l.b16 %v3418
    %v3554 = vunpack.c.l.b16 %v3419
    %v3555 = vunpack.c.l.b16 %v3420
    %v3556 = vunpack.c.l.b16 %v3421
    %v3557 = vunpack.c.l.b16 %v3422
    %v3558 = vunpack.c.l.b16 %v3423
    %v3559 = vunpack.c.l.b16 %v3424
    %v3560 = vunpack.c.l.b16 %v3425
    %v3561 = vunpack.c.l.b16 %v3426
    %v3562 = vunpack.c.l.b16 %v3427
    %v3563 = vunpack.c.l.b16 %v3428
    %v3564 = vunpack.c.l.b16 %v3429
    %v3565 = vunpack.c.l.b16 %v3430
    %v3566 = vunpack.c.l.b16 %v3431
    %v3567 = vunpack.c.l.b16 %v3432
    %v3568 = vunpack.c.l.b16 %v3433
    %v3569 = vunpack.c.l.b16 %v3434
    %v3570 = vunpack.c.l.b16 %v3435
    %v3571 = vunpack.c.l.b16 %v3436
    %v3572 = vunpack.c.l.b16 %v3437
    %v3573 = vunpack.c.l.b16 %v3438
    %v3574 = vunpack.c.l.b16 %v3439
    %v3575 = vunpack.c.l.b16 %v3440
    %v3576 = vunpack.c.l.b16 %v3441
    %v3577 = vunpack.c.l.b16 %v3442
    %v3578 = vunpack.c.l.b16 %v3443
    %v3579 = vunpack.c.l.b16 %v3444
    %v3580 = vunpack.c.l.b16 %v3445
    %v3581 = vunpack.c.l.b16 %v3446
    %v3582 = vunpack.c.l.b16 %v3447
    %v3583 = vunpack.c.l.b16 %v3448
    %v3584 = vunpack.c.l.b16 %v3449
    %v3585 = vunpack.c.l.b16 %v3450
    %v3586 = vunpack.c.l.b16 %v3451
    %v3587 = vunpack.c.l.b16 %v3452
    %v3588 = vunpack.c.l.b16 %v3453
    %v3589 = vpack.c.b16 %v3526, %v3525
    %v3590 = vpack.c.b16 %v3528, %v3527
    %v3591 = vpack.c.b16 %v3530, %v3529
    %v3592 = vpack.c.b16 %v3532, %v3531
    %v3593 = vpack.c.b16 %v3534, %v3533
    %v3594 = vpack.c.b16 %v3536, %v3535
    %v3595 = vpack.c.b16 %v3538, %v3537
    %v3596 = vpack.c.b16 %v3540, %v3539
    %v3597 = vpack.c.b16 %v3542, %v3541
    %v3598 = vpack.c.b16 %v3544, %v3543
    %v3599 = vpack.c.b16 %v3546, %v3545
    %v3600 = vpack.c.b16 %v3548, %v3547
    %v3601 = vpack.c.b16 %v3550, %v3549
    %v3602 = vpack.c.b16 %v3552, %v3551
    %v3603 = vpack.c.b16 %v3554, %v3553
    %v3604 = vpack.c.b16 %v3556, %v3555
    %v3605 = vpack.c.b16 %v3558, %v3557
    %v3606 = vpack.c.b16 %v3560, %v3559
    %v3607 = vpack.c.b16 %v3562, %v3561
    %v3608 = vpack.c.b16 %v3564, %v3563
    %v3609 = vpack.c.b16 %v3566, %v3565
    %v3610 = vpack.c.b16 %v3568, %v3567
    %v3611 = vpack.c.b16 %v3570, %v3569
    %v3612 = vpack.c.b16 %v3572, %v3571
    %v3613 = vpack.c.b16 %v3574, %v3573
    %v3614 = vpack.c.b16 %v3576, %v3575
    %v3615 = vpack.c.b16 %v3578, %v3577
    %v3616 = vpack.c.b16 %v3580, %v3579
    %v3617 = vpack.c.b16 %v3582, %v3581
    %v3618 = vpack.c.b16 %v3584, %v3583
    %v3619 = vpack.c.b16 %v3586, %v3585
    %v3620 = vpack.c.b16 %v3588, %v3587
    %3653 = vmatprep.subr.bf16.mxu0 0
    %3654 = vmatpush1.bf16.msra.mxu0 %v3596
    %3655 = vmatprep.subr.bf16.mxu0 0
    %3656 = vmatpush1.bf16.msra.mxu0 %v3595
    %3657 = vmatprep.subr.bf16.mxu0 0
    %3658 = vmatpush1.bf16.msra.mxu0 %v3594
    %3659 = vmatprep.subr.bf16.mxu0 0
    %3660 = vmatpush1.bf16.msra.mxu0 %v3593
    %3661 = vmatprep.subr.bf16.mxu0 0
    %3662 = vmatpush1.bf16.msra.mxu0 %v3592
    %3663 = vmatprep.subr.bf16.mxu0 0
    %3664 = vmatpush1.bf16.msra.mxu0 %v3591
    %3665 = vmatprep.subr.bf16.mxu0 0
    %3666 = vmatpush1.bf16.msra.mxu0 %v3590
    %3667 = vmatprep.subr.bf16.mxu0 0
    %3668 = vmatpush1.bf16.msra.mxu0 %v3589
    %3669 = vmatprep.subr.bf16.mxu0 0
    %3670 = vmatpush2.bf16.msra.mxu0 %v3604
    %3671 = vmatprep.subr.bf16.mxu0 0
    %3672 = vmatpush2.bf16.msra.mxu0 %v3603
    %3673 = vmatprep.subr.bf16.mxu0 0
    %3674 = vmatpush2.bf16.msra.mxu0 %v3602
    %3675 = vmatprep.subr.bf16.mxu0 0
    %3676 = vmatpush2.bf16.msra.mxu0 %v3601
    %3677 = vmatprep.subr.bf16.mxu0 0
    %3678 = vmatpush2.bf16.msra.mxu0 %v3600
    %3679 = vmatprep.subr.bf16.mxu0 0
    %3680 = vmatpush2.bf16.msra.mxu0 %v3599
    %3681 = vmatprep.subr.bf16.mxu0 0
    %3682 = vmatpush2.bf16.msra.mxu0 %v3598
    %3683 = vmatprep.subr.bf16.mxu0 0
    %3684 = vmatpush2.bf16.msra.mxu0 %v3597
    %3685 = vmatprep.mubr.bf16.mxu0 %v3359
    %3686 = vmatmul.mubr.bf16.gmra.mxu0 %v3358
    %v3687 = vpop.f32.mrf.mxu0
    %v3688 = vadd.f32 %v3459, %v3687
    %v3689 = vpop.f32.mrf.mxu0
    %v3690 = vpop.f32.mrf.mxu0
    %v3691 = vadd.f32 %v3459, %v3690
    %v3692 = vpop.f32.mrf.mxu0
    %3693 = vmatprep.mubr.bf16.mxu0 %v3363
    %3694 = vmatmul.mubr.bf16.gmra.mxu0 %v3362
    %v3695 = vpop.f32.mrf.mxu0
    %v3696 = vadd.f32 %v3459, %v3695
    %v3697 = vpop.f32.mrf.mxu0
    %v3698 = vpop.f32.mrf.mxu0
    %v3699 = vadd.f32 %v3459, %v3698
    %v3700 = vpop.f32.mrf.mxu0
    %3701 = vmatprep.mubr.bf16.mxu0 %v3367
    %3702 = vmatmul.mubr.bf16.gmra.mxu0 %v3366
    %v3703 = vpop.f32.mrf.mxu0
    %v3704 = vadd.f32 %v3459, %v3703
    %v3705 = vpop.f32.mrf.mxu0
    %v3706 = vpop.f32.mrf.mxu0
    %v3707 = vadd.f32 %v3459, %v3706
    %v3708 = vpop.f32.mrf.mxu0
    %3709 = vmatprep.mubr.bf16.mxu0 %v3371
    %3710 = vmatmul.mubr.bf16.gmra.mxu0 %v3370
    %v3711 = vpop.f32.mrf.mxu0
    %v3712 = vadd.f32 %v3459, %v3711
    %v3713 = vpop.f32.mrf.mxu0
    %v3714 = vpop.f32.mrf.mxu0
    %v3715 = vadd.f32 %v3459, %v3714
    %v3716 = vpop.f32.mrf.mxu0
    %3717 = vmatprep.mubr.bf16.mxu0 %v3375
    %3718 = vmatmul.mubr.bf16.gmra.mxu0 %v3374
    %v3719 = vpop.f32.mrf.mxu0
    %v3720 = vadd.f32 %v3459, %v3719
    %v3721 = vpop.f32.mrf.mxu0
    %v3722 = vpop.f32.mrf.mxu0
    %v3723 = vadd.f32 %v3459, %v3722
    %v3724 = vpop.f32.mrf.mxu0
    %3725 = vmatprep.mubr.bf16.mxu0 %v3379
    %3726 = vmatmul.mubr.bf16.gmra.mxu0 %v3378
    %v3727 = vpop.f32.mrf.mxu0
    %v3728 = vadd.f32 %v3459, %v3727
    %v3729 = vpop.f32.mrf.mxu0
    %v3730 = vpop.f32.mrf.mxu0
    %v3731 = vadd.f32 %v3459, %v3730
    %v3732 = vpop.f32.mrf.mxu0
    %3733 = vmatprep.mubr.bf16.mxu0 %v3383
    %3734 = vmatmul.mubr.bf16.gmra.mxu0 %v3382
    %v3735 = vpop.f32.mrf.mxu0
    %v3736 = vadd.f32 %v3459, %v3735
    %v3737 = vpop.f32.mrf.mxu0
    %v3738 = vpop.f32.mrf.mxu0
    %v3739 = vadd.f32 %v3459, %v3738
    %v3740 = vpop.f32.mrf.mxu0
    %3741 = vmatprep.mubr.bf16.mxu0 %v3387
    %3742 = vmatmul.mubr.bf16.gmra.mxu0 %v3386
    %v3743 = vpop.f32.mrf.mxu0
    %v3744 = vadd.f32 %v3459, %v3743
    %v3745 = vpop.f32.mrf.mxu0
    %v3746 = vpop.f32.mrf.mxu0
    %v3747 = vadd.f32 %v3459, %v3746
    %v3748 = vpop.f32.mrf.mxu0
    %3749 = vdwg.mxu0
    %3750 = vmatprep.subr.bf16.mxu0 0
    %3751 = vmatpush1.bf16.msra.mxu0 %v3612
    %3752 = vmatprep.subr.bf16.mxu0 0
    %3753 = vmatpush1.bf16.msra.mxu0 %v3611
    %3754 = vmatprep.subr.bf16.mxu0 0
    %3755 = vmatpush1.bf16.msra.mxu0 %v3610
    %3756 = vmatprep.subr.bf16.mxu0 0
    %3757 = vmatpush1.bf16.msra.mxu0 %v3609
    %3758 = vmatprep.subr.bf16.mxu0 0
    %3759 = vmatpush1.bf16.msra.mxu0 %v3608
    %3760 = vmatprep.subr.bf16.mxu0 0
    %3761 = vmatpush1.bf16.msra.mxu0 %v3607
    %3762 = vmatprep.subr.bf16.mxu0 0
    %3763 = vmatpush1.bf16.msra.mxu0 %v3606
    %3764 = vmatprep.subr.bf16.mxu0 0
    %3765 = vmatpush1.bf16.msra.mxu0 %v3605
    %3766 = vmatprep.subr.bf16.mxu0 0
    %3767 = vmatpush2.bf16.msra.mxu0 %v3620
    %3768 = vmatprep.subr.bf16.mxu0 0
    %3769 = vmatpush2.bf16.msra.mxu0 %v3619
    %3770 = vmatprep.subr.bf16.mxu0 0
    %3771 = vmatpush2.bf16.msra.mxu0 %v3618
    %3772 = vmatprep.subr.bf16.mxu0 0
    %3773 = vmatpush2.bf16.msra.mxu0 %v3617
    %3774 = vmatprep.subr.bf16.mxu0 0
    %3775 = vmatpush2.bf16.msra.mxu0 %v3616
    %3776 = vmatprep.subr.bf16.mxu0 0
    %3777 = vmatpush2.bf16.msra.mxu0 %v3615
    %3778 = vmatprep.subr.bf16.mxu0 0
    %3779 = vmatpush2.bf16.msra.mxu0 %v3614
    %3780 = vmatprep.subr.bf16.mxu0 0
    %3781 = vmatpush2.bf16.msra.mxu0 %v3613
    %3782 = vmatprep.mubr.bf16.mxu0 %v3361
    %3783 = vmatmul.mubr.bf16.gmra.mxu0 %v3360
    %v3784 = vpop.f32.mrf.mxu0
    %v3785 = vadd.f32 %v3688, %v3784
    %v3786 = vpop.f32.mrf.mxu0
    %v3787 = vpop.f32.mrf.mxu0
    %v3788 = vadd.f32 %v3691, %v3787
    %v3789 = vpop.f32.mrf.mxu0
    %3790 = vmatprep.mubr.bf16.mxu0 %v3365
    %3791 = vmatmul.mubr.bf16.gmra.mxu0 %v3364
    %v3792 = vpop.f32.mrf.mxu0
    %v3793 = vadd.f32 %v3696, %v3792
    %v3794 = vpop.f32.mrf.mxu0
    %v3795 = vpop.f32.mrf.mxu0
    %v3796 = vadd.f32 %v3699, %v3795
    %v3797 = vpop.f32.mrf.mxu0
    %3798 = vmatprep.mubr.bf16.mxu0 %v3369
    %3799 = vmatmul.mubr.bf16.gmra.mxu0 %v3368
    %v3800 = vpop.f32.mrf.mxu0
    %v3801 = vadd.f32 %v3704, %v3800
    %v3802 = vpop.f32.mrf.mxu0
    %v3803 = vpop.f32.mrf.mxu0
    %v3804 = vadd.f32 %v3707, %v3803
    %v3805 = vpop.f32.mrf.mxu0
    %3806 = vmatprep.mubr.bf16.mxu0 %v3373
    %3807 = vmatmul.mubr.bf16.gmra.mxu0 %v3372
    %v3808 = vpop.f32.mrf.mxu0
    %v3809 = vadd.f32 %v3712, %v3808
    %v3810 = vpop.f32.mrf.mxu0
    %v3811 = vpop.f32.mrf.mxu0
    %v3812 = vadd.f32 %v3715, %v3811
    %v3813 = vpop.f32.mrf.mxu0
    %3814 = vmatprep.mubr.bf16.mxu0 %v3377
    %3815 = vmatmul.mubr.bf16.gmra.mxu0 %v3376
    %v3816 = vpop.f32.mrf.mxu0
    %v3817 = vadd.f32 %v3720, %v3816
    %v3818 = vpop.f32.mrf.mxu0
    %v3819 = vpop.f32.mrf.mxu0
    %v3820 = vadd.f32 %v3723, %v3819
    %v3821 = vpop.f32.mrf.mxu0
    %3822 = vmatprep.mubr.bf16.mxu0 %v3381
    %3823 = vmatmul.mubr.bf16.gmra.mxu0 %v3380
    %v3824 = vpop.f32.mrf.mxu0
    %v3825 = vadd.f32 %v3728, %v3824
    %v3826 = vpop.f32.mrf.mxu0
    %v3827 = vpop.f32.mrf.mxu0
    %v3828 = vadd.f32 %v3731, %v3827
    %v3829 = vpop.f32.mrf.mxu0
    %3830 = vmatprep.mubr.bf16.mxu0 %v3385
    %3831 = vmatmul.mubr.bf16.gmra.mxu0 %v3384
    %v3832 = vpop.f32.mrf.mxu0
    %v3833 = vadd.f32 %v3736, %v3832
    %v3834 = vpop.f32.mrf.mxu0
    %v3835 = vpop.f32.mrf.mxu0
    %v3836 = vadd.f32 %v3739, %v3835
    %v3837 = vpop.f32.mrf.mxu0
    %3838 = vmatprep.mubr.bf16.mxu0 %v3389
    %3839 = vmatmul.mubr.bf16.gmra.mxu0 %v3388
    %v3840 = vpop.f32.mrf.mxu0
    %v3841 = vadd.f32 %v3744, %v3840
    %v3842 = vpop.f32.mrf.mxu0
    %v3843 = vpop.f32.mrf.mxu0
    %v3844 = vadd.f32 %v3747, %v3843
    %v3845 = vpop.f32.mrf.mxu0
    %3846 = vdwg.mxu0
    %3847 = vst [vmem:[#allocation13] sm:$0xff] %v3785
    %3848 = vst [vmem:[#allocation13 + $0x8] sm:$0xff] %v3788
    %3849 = vst [vmem:[#allocation13 + $0x10] sm:$0xff] %v3793
    %3850 = vst [vmem:[#allocation13 + $0x18] sm:$0xff] %v3796
    %3851 = vst [vmem:[#allocation13 + $0x20] sm:$0xff] %v3801
    %3852 = vst [vmem:[#allocation13 + $0x28] sm:$0xff] %v3804
    %3853 = vst [vmem:[#allocation13 + $0x30] sm:$0xff] %v3809
    %3854 = vst [vmem:[#allocation13 + $0x38] sm:$0xff] %v3812
    %3855 = vst [vmem:[#allocation13 + $0x40] sm:$0xff] %v3817
    %3856 = vst [vmem:[#allocation13 + $0x48] sm:$0xff] %v3820
    %3857 = vst [vmem:[#allocation13 + $0x50] sm:$0xff] %v3825
    %3858 = vst [vmem:[#allocation13 + $0x58] sm:$0xff] %v3828
    %3859 = vst [vmem:[#allocation13 + $0x60] sm:$0xff] %v3833
    %3860 = vst [vmem:[#allocation13 + $0x68] sm:$0xff] %v3836
    %3861 = vst [vmem:[#allocation13 + $0x70] sm:$0xff] %v3841
    %3862 = vst [vmem:[#allocation13 + $0x78] sm:$0xff] %v3844
    // Predicated region
    $region62: #{tpu_custom_call.1} parent=1 // pred_check
      _
    $region63: #{tpu_custom_call.1} parent=1 // pred_check_branch
      %3864 = sbr.rel (0) target = $region65
    $region64: #{tpu_custom_call.1} parent=1 // pred_region
      %s3866 = ssub.s32 2048, 2048
      %3867 = vsyncadd [#allocation4], %s3866
      %s3868 = sshll.u32 [#allocation13], 4
      %s3869 = int_to_ptr.vmem [resolvable:$true] %s3868
      %3874 = dma.vmem_to_hbm [thread:$0]  %s3869, 2048, %s9, [#allocation4], 128, 128, 8
    $region65: #{tpu_custom_call.1} parent=1 // pred_fallthru
      _
    // Predicated region
    $region66: #{tpu_custom_call.1} parent=1 // pred_check
      _
    $region67: #{tpu_custom_call.1} parent=1 // pred_check_branch
      %3876 = sbr.rel (0) target = $region69
    $region68: #{tpu_custom_call.1} parent=1 // pred_region
      %3877 = dma.done [#allocation4], 2048
    $region69: #{tpu_custom_call.1} parent=1 // pred_fallthru
      _
    %3878 = vsyncpa [#allocation3], 1
    %3879 = vsyncpa [#allocation6], 1
    %3880 = vsyncpa [#allocation9], 1
    %3881 = vsyncpa [#allocation12], 1
    %3882 = vsyncpa [#allocation4], 1

// kernel: tpu_custom_call.1
$region0: #{tpu_custom_call.1}
  #allocation0 [shape = 'u32[]', space=smem, size = 0x4, offset = 0x4, fixed_abs, tag = 'smem constant byte address 0x4 - core index']
  #allocation1 [shape = 'u32[144,128]{1,0:T(1,128)}', space=vmem, size = 0x12000, scoped, tag = 'internal scratch']
  %s0 = inlined_call_operand.hbm [shape: bf16[128,128], index: 0, kind: input, shape index: {}]
  %s1 = inlined_call_operand.hbm [shape: bf16[128,512], index: 1, kind: input, shape index: {}]
  %s2 = inlined_call_operand.hbm [shape: f32[1,512], index: 2, kind: input, shape index: {}]
  %s3 = inlined_call_operand.hbm [shape: bf16[512,512], index: 3, kind: input, shape index: {}]
  %s4 = inlined_call_operand.vmem [shape: f32[1,512], index: 4, kind: input, shape index: {}]
  %s5 = inlined_call_operand.hbm [shape: bf16[512,512], index: 5, kind: input, shape index: {}]
  %s6 = inlined_call_operand.vmem [shape: f32[1,512], index: 6, kind: input, shape index: {}]
  %s7 = inlined_call_operand.hbm [shape: bf16[512,128], index: 7, kind: input, shape index: {}]
  %s8 = inlined_call_operand.vmem [shape: f32[1,128], index: 8, kind: input, shape index: {}]
  %s9 = inlined_call_operand.hbm [shape: f32[128,128], index: 9, kind: output, shape index: {}]
  %s10 = sld [smem:[#allocation0]]
  $region70: #{tpu_custom_call.1} parent=0
    _
  %s12 = ssub.s32 1, %s10
  %s13 = scalar_select 0, %s12, %s10
  $region1: #{tpu_custom_call.1} parent=0
    #allocation2 [shape = 'u8[32768]{0}', space=vmem, size = 0x8000, scoped, tag = 'input window, operand 0, single buffered']
    #allocation3 [shape = 's32[1]{0}', space=sflag, size = 0x4, scoped, tag = 'scoped memory for tpu_custom_call.1']
    #allocation4 [shape = 's32[1]{0}', space=sflag, size = 0x4, scoped, tag = 'scoped memory for tpu_custom_call.1']
    #allocation5 [shape = 'u8[131072]{0}', space=vmem, size = 0x20000, scoped, tag = 'input window, operand 1, single buffered']
    #allocation6 [shape = 's32[1]{0}', space=sflag, size = 0x4, scoped, tag = 'scoped memory for tpu_custom_call.1']
    #allocation7 [shape = 'u8[2048]{0}', space=vmem, size = 0x800, scoped, tag = 'input window, operand 2, single buffered']
    #allocation8 [shape = 'u8[524288]{0}', space=vmem, size = 0x80000, scoped, tag = 'input window, operand 3, single buffered']
    #allocation9 [shape = 's32[1]{0}', space=sflag, size = 0x4, scoped, tag = 'scoped memory for tpu_custom_call.1']
    #allocation10 [shape = 'u8[524288]{0}', space=vmem, size = 0x80000, scoped, tag = 'input window, operand 5, single buffered']
    #allocation11 [shape = 'u8[131072]{0}', space=vmem, size = 0x20000, scoped, tag = 'input window, operand 7, single buffered']
    #allocation12 [shape = 's32[1]{0}', space=sflag, size = 0x4, scoped, tag = 'scoped memory for tpu_custom_call.1']
    #allocation13 [shape = 'u8[65536]{0}', space=vmem, size = 0x10000, scoped, tag = 'output window, operand 0, single buffered']
    %14 = vsyncpa [#allocation3], 0
    %15 = vsyncpa [#allocation6], 0
    %16 = vsyncpa [#allocation9], 0
    %17 = vsyncpa [#allocation12], 0
    %18 = vsyncpa [#allocation4], 0
    // Predicated region
    $region2: #{tpu_custom_call.1} parent=1 // pred_check
      _
    $region3: #{tpu_custom_call.1} parent=1 // pred_check_branch
      %20 = sbr.rel (0) target = $region5
    $region4: #{tpu_custom_call.1} parent=1 // pred_region
      %s22 = ssub.s32 1024, 1024
      %23 = vsyncadd [#allocation3], %s22
      %s24 = sshll.u32 [#allocation2], 4
      %s25 = int_to_ptr.vmem [resolvable:$true] %s24
      %30 = dma.hbm_to_vmem [thread:$0]  %s0, 1024, %s25, [#allocation3], 64, 64, 4
    $region5: #{tpu_custom_call.1} parent=1 // pred_fallthru
      _
    // Predicated region
    $region6: #{tpu_custom_call.1} parent=1 // pred_check
      _
    $region7: #{tpu_custom_call.1} parent=1 // pred_check_branch
      %32 = sbr.rel (0) target = $region9
    $region8: #{tpu_custom_call.1} parent=1 // pred_region
      %s34 = ssub.s32 4096, 4096
      %35 = vsyncadd [#allocation6], %s34
      %s36 = sshll.u32 [#allocation5], 4
      %s37 = int_to_ptr.vmem [resolvable:$true] %s36
      %42 = dma.hbm_to_vmem [thread:$0]  %s1, 4096, %s37, [#allocation6], 256, 256, 16
    $region9: #{tpu_custom_call.1} parent=1 // pred_fallthru
      _
    // Predicated region
    $region10: #{tpu_custom_call.1} parent=1 // pred_check
      _
    $region11: #{tpu_custom_call.1} parent=1 // pred_check_branch
      %44 = sbr.rel (0) target = $region13
    $region12: #{tpu_custom_call.1} parent=1 // pred_region
      %s46 = ssub.s32 64, 64
      %47 = vsyncadd [#allocation6], %s46
      %s49 = sshll.u32 [#allocation7], 4
      %s50 = int_to_ptr.vmem [resolvable:$true] %s49
      %52 = dma.hbm_to_vmem [thread:$0]  %s2, 64, %s50, [#allocation6]
    $region13: #{tpu_custom_call.1} parent=1 // pred_fallthru
      _
    // Predicated region
    $region14: #{tpu_custom_call.1} parent=1 // pred_check
      _
    $region15: #{tpu_custom_call.1} parent=1 // pred_check_branch
      %54 = sbr.rel (0) target = $region17
    $region16: #{tpu_custom_call.1} parent=1 // pred_region
      %s56 = ssub.s32 16384, 16384
      %57 = vsyncadd [#allocation9], %s56
      %s58 = sshll.u32 [#allocation8], 4
      %s59 = int_to_ptr.vmem [resolvable:$true] %s58
      %64 = dma.hbm_to_vmem [thread:$0]  %s3, 16384, %s59, [#allocation9], 256, 256, 16
    $region17: #{tpu_custom_call.1} parent=1 // pred_fallthru
      _
    // Predicated region
    $region18: #{tpu_custom_call.1} parent=1 // pred_check
      _
    $region19: #{tpu_custom_call.1} parent=1 // pred_check_branch
      %66 = sbr.rel (0) target = $region21
    $region20: #{tpu_custom_call.1} parent=1 // pred_region
      _
    $region21: #{tpu_custom_call.1} parent=1 // pred_fallthru
      _
    // Predicated region
    $region22: #{tpu_custom_call.1} parent=1 // pred_check
      _
    $region23: #{tpu_custom_call.1} parent=1 // pred_check_branch
      %68 = sbr.rel (0) target = $region25
    $region24: #{tpu_custom_call.1} parent=1 // pred_region
      %s70 = ssub.s32 16384, 16384
      %71 = vsyncadd [#allocation9], %s70
      %s72 = sshll.u32 [#allocation10], 4
      %s73 = int_to_ptr.vmem [resolvable:$true] %s72
      %78 = dma.hbm_to_vmem [thread:$0]  %s5, 16384, %s73, [#allocation9], 256, 256, 16
    $region25: #{tpu_custom_call.1} parent=1 // pred_fallthru
      _
    // Predicated region
    $region26: #{tpu_custom_call.1} parent=1 // pred_check
      _
    $region27: #{tpu_custom_call.1} parent=1 // pred_check_branch
      %80 = sbr.rel (0) target = $region29
    $region28: #{tpu_custom_call.1} parent=1 // pred_region
      _
    $region29: #{tpu_custom_call.1} parent=1 // pred_fallthru
      _
    // Predicated region
    $region30: #{tpu_custom_call.1} parent=1 // pred_check
      _
    $region31: #{tpu_custom_call.1} parent=1 // pred_check_branch
      %82 = sbr.rel (0) target = $region33
    $region32: #{tpu_custom_call.1} parent=1 // pred_region
      %s84 = ssub.s32 4096, 4096
      %85 = vsyncadd [#allocation12], %s84
      %s86 = sshll.u32 [#allocation11], 4
      %s87 = int_to_ptr.vmem [resolvable:$true] %s86
      %92 = dma.hbm_to_vmem [thread:$0]  %s7, 4096, %s87, [#allocation12], 64, 64, 4
    $region33: #{tpu_custom_call.1} parent=1 // pred_fallthru
      _
    // Predicated region
    $region34: #{tpu_custom_call.1} parent=1 // pred_check
      _
    $region35: #{tpu_custom_call.1} parent=1 // pred_check_branch
      %94 = sbr.rel (0) target = $region37
    $region36: #{tpu_custom_call.1} parent=1 // pred_region
      _
    $region37: #{tpu_custom_call.1} parent=1 // pred_fallthru
      _
    // Predicated region
    $region38: #{tpu_custom_call.1} parent=1 // pred_check
      _
    $region39: #{tpu_custom_call.1} parent=1 // pred_check_branch
      %96 = sbr.rel (0) target = $region41
    $region40: #{tpu_custom_call.1} parent=1 // pred_region
      %97 = dma.done [#allocation3], 1024
    $region41: #{tpu_custom_call.1} parent=1 // pred_fallthru
      _
    // Predicated region
    $region42: #{tpu_custom_call.1} parent=1 // pred_check
      _
    $region43: #{tpu_custom_call.1} parent=1 // pred_check_branch
      %99 = sbr.rel (0) target = $region45
    $region44: #{tpu_custom_call.1} parent=1 // pred_region
      %100 = dma.done [#allocation6], 4096
    $region45: #{tpu_custom_call.1} parent=1 // pred_fallthru
      _
    // Predicated region
    $region46: #{tpu_custom_call.1} parent=1 // pred_check
      _
    $region47: #{tpu_custom_call.1} parent=1 // pred_check_branch
      %102 = sbr.rel (0) target = $region49
    $region48: #{tpu_custom_call.1} parent=1 // pred_region
      %103 = dma.done [#allocation6], 64
    $region49: #{tpu_custom_call.1} parent=1 // pred_fallthru
      _
    // Predicated region
    $region50: #{tpu_custom_call.1} parent=1 // pred_check
      _
    $region51: #{tpu_custom_call.1} parent=1 // pred_check_branch
      %105 = sbr.rel (0) target = $region53
    $region52: #{tpu_custom_call.1} parent=1 // pred_region
      %106 = dma.done [#allocation9], 16384
    $region53: #{tpu_custom_call.1} parent=1 // pred_fallthru
      _
    // Predicated region
    $region54: #{tpu_custom_call.1} parent=1 // pred_check
      _
    $region55: #{tpu_custom_call.1} parent=1 // pred_check_branch
      %108 = sbr.rel (0) target = $region57
    $region56: #{tpu_custom_call.1} parent=1 // pred_region
      %109 = dma.done [#allocation9], 16384
    $region57: #{tpu_custom_call.1} parent=1 // pred_fallthru
      _
    // Predicated region
    $region58: #{tpu_custom_call.1} parent=1 // pred_check
      _
    $region59: #{tpu_custom_call.1} parent=1 // pred_check_branch
      %111 = sbr.rel (0) target = $region61
    $region60: #{tpu_custom_call.1} parent=1 // pred_region
      %112 = dma.done [#allocation12], 4096
    $region61: #{tpu_custom_call.1} parent=1 // pred_fallthru
      _
    %v114 = vld [vmem:[#allocation2] sm:$0xf]
    %v115 = vld [vmem:[#allocation2 + $0x4] sm:$0xf]
    %v116 = vld [vmem:[#allocation2 + $0x8] sm:$0xf]
    %v117 = vld [vmem:[#allocation2 + $0xc] sm:$0xf]
    %v118 = vld [vmem:[#allocation2 + $0x10] sm:$0xf]
    %v119 = vld [vmem:[#allocation2 + $0x14] sm:$0xf]
    %v120 = vld [vmem:[#allocation2 + $0x18] sm:$0xf]
    %v121 = vld [vmem:[#allocation2 + $0x1c] sm:$0xf]
    %v122 = vld [vmem:[#allocation2 + $0x20] sm:$0xf]
    %v123 = vld [vmem:[#allocation2 + $0x24] sm:$0xf]
    %v124 = vld [vmem:[#allocation2 + $0x28] sm:$0xf]
    %v125 = vld [vmem:[#allocation2 + $0x2c] sm:$0xf]
    %v126 = vld [vmem:[#allocation2 + $0x30] sm:$0xf]
    %v127 = vld [vmem:[#allocation2 + $0x34] sm:$0xf]
    %v128 = vld [vmem:[#allocation2 + $0x38] sm:$0xf]
    %v129 = vld [vmem:[#allocation2 + $0x3c] sm:$0xf]
    %v130 = vld [vmem:[#allocation5] sm:$0xff]
    %v131 = vld [vmem:[#allocation5 + $0x8] sm:$0xff]
    %v132 = vld [vmem:[#allocation5 + $0x10] sm:$0xff]
    %v133 = vld [vmem:[#allocation5 + $0x18] sm:$0xff]
    %v134 = vld [vmem:[#allocation5 + $0x20] sm:$0xff]
    %v135 = vld [vmem:[#allocation5 + $0x28] sm:$0xff]
    %v136 = vld [vmem:[#allocation5 + $0x30] sm:$0xff]
    %v137 = vld [vmem:[#allocation5 + $0x38] sm:$0xff]
    %v138 = vld [vmem:[#allocation5 + $0x40] sm:$0xff]
    %v139 = vld [vmem:[#allocation5 + $0x48] sm:$0xff]
    %v140 = vld [vmem:[#allocation5 + $0x50] sm:$0xff]
    %v141 = vld [vmem:[#allocation5 + $0x58] sm:$0xff]
    %v142 = vld [vmem:[#allocation5 + $0x60] sm:$0xff]
    %v143 = vld [vmem:[#allocation5 + $0x68] sm:$0xff]
    %v144 = vld [vmem:[#allocation5 + $0x70] sm:$0xff]
    %v145 = vld [vmem:[#allocation5 + $0x78] sm:$0xff]
    %v146 = vld [vmem:[#allocation5 + $0x80] sm:$0xff]
    %v147 = vld [vmem:[#allocation5 + $0x88] sm:$0xff]
    %v148 = vld [vmem:[#allocation5 + $0x90] sm:$0xff]
    %v149 = vld [vmem:[#allocation5 + $0x98] sm:$0xff]
    %v150 = vld [vmem:[#allocation5 + $0xa0] sm:$0xff]
    %v151 = vld [vmem:[#allocation5 + $0xa8] sm:$0xff]
    %v152 = vld [vmem:[#allocation5 + $0xb0] sm:$0xff]
    %v153 = vld [vmem:[#allocation5 + $0xb8] sm:$0xff]
    %v154 = vld [vmem:[#allocation5 + $0xc0] sm:$0xff]
    %v155 = vld [vmem:[#allocation5 + $0xc8] sm:$0xff]
    %v156 = vld [vmem:[#allocation5 + $0xd0] sm:$0xff]
    %v157 = vld [vmem:[#allocation5 + $0xd8] sm:$0xff]
    %v158 = vld [vmem:[#allocation5 + $0xe0] sm:$0xff]
    %v159 = vld [vmem:[#allocation5 + $0xe8] sm:$0xff]
    %v160 = vld [vmem:[#allocation5 + $0xf0] sm:$0xff]
    %v161 = vld [vmem:[#allocation5 + $0xf8] sm:$0xff]
    %v162 = vld [vmem:[#allocation7] sm:$0xf]
    %v164 = vlaneseq
    %v165 = vshrl.u32 %v164, 7
    %v166 = vsub.s32 0, %v165
    %v167 = vrot.slane %v162, %v166
    %v168 = vlaneseq
    %v169 = vshrl.u32 %v168, 7
    %v170 = vsub.s32 1, %v169
    %v171 = vrot.slane %v162, %v170
    %v172 = vlaneseq
    %v173 = vshrl.u32 %v172, 7
    %v174 = vsub.s32 2, %v173
    %v175 = vrot.slane %v162, %v174
    %v176 = vlaneseq
    %v177 = vshrl.u32 %v176, 7
    %v178 = vsub.s32 3, %v177
    %v179 = vrot.slane %v162, %v178
    %v200 = vunpack.c.l.b16 %v114
    %v201 = vunpack.c.l.b16 %v115
    %v202 = vunpack.c.l.b16 %v116
    %v203 = vunpack.c.l.b16 %v117
    %v204 = vunpack.c.l.b16 %v118
    %v205 = vunpack.c.l.b16 %v119
    %v206 = vunpack.c.l.b16 %v120
    %v207 = vunpack.c.l.b16 %v121
    %v208 = vunpack.c.l.b16 %v122
    %v209 = vunpack.c.l.b16 %v123
    %v210 = vunpack.c.l.b16 %v124
    %v211 = vunpack.c.l.b16 %v125
    %v212 = vunpack.c.l.b16 %v126
    %v213 = vunpack.c.l.b16 %v127
    %v214 = vunpack.c.l.b16 %v128
    %v215 = vunpack.c.l.b16 %v129
    %v216 = vpack.c.b16 %v201, %v200
    %v217 = vpack.c.b16 %v203, %v202
    %v218 = vpack.c.b16 %v205, %v204
    %v219 = vpack.c.b16 %v207, %v206
    %v220 = vpack.c.b16 %v209, %v208
    %v221 = vpack.c.b16 %v211, %v210
    %v222 = vpack.c.b16 %v213, %v212
    %v223 = vpack.c.b16 %v215, %v214
    %v264 = vunpack.c.l.b16 %v130
    %v265 = vunpack.c.h.b16 %v130
    %v266 = vunpack.c.l.b16 %v131
    %v267 = vunpack.c.h.b16 %v131
    %v268 = vunpack.c.l.b16 %v132
    %v269 = vunpack.c.h.b16 %v132
    %v270 = vunpack.c.l.b16 %v133
    %v271 = vunpack.c.h.b16 %v133
    %v272 = vunpack.c.l.b16 %v134
    %v273 = vunpack.c.h.b16 %v134
    %v274 = vunpack.c.l.b16 %v135
    %v275 = vunpack.c.h.b16 %v135
    %v276 = vunpack.c.l.b16 %v136
    %v277 = vunpack.c.h.b16 %v136
    %v278 = vunpack.c.l.b16 %v137
    %v279 = vunpack.c.h.b16 %v137
    %v280 = vunpack.c.l.b16 %v138
    %v281 = vunpack.c.h.b16 %v138
    %v282 = vunpack.c.l.b16 %v139
    %v283 = vunpack.c.h.b16 %v139
    %v284 = vunpack.c.l.b16 %v140
    %v285 = vunpack.c.h.b16 %v140
    %v286 = vunpack.c.l.b16 %v141
    %v287 = vunpack.c.h.b16 %v141
    %v288 = vunpack.c.l.b16 %v142
    %v289 = vunpack.c.h.b16 %v142
    %v290 = vunpack.c.l.b16 %v143
    %v291 = vunpack.c.h.b16 %v143
    %v292 = vunpack.c.l.b16 %v144
    %v293 = vunpack.c.h.b16 %v144
    %v294 = vunpack.c.l.b16 %v145
    %v295 = vunpack.c.h.b16 %v145
    %v296 = vunpack.c.l.b16 %v146
    %v297 = vunpack.c.h.b16 %v146
    %v298 = vunpack.c.l.b16 %v147
    %v299 = vunpack.c.h.b16 %v147
    %v300 = vunpack.c.l.b16 %v148
    %v301 = vunpack.c.h.b16 %v148
    %v302 = vunpack.c.l.b16 %v149
    %v303 = vunpack.c.h.b16 %v149
    %v304 = vunpack.c.l.b16 %v150
    %v305 = vunpack.c.h.b16 %v150
    %v306 = vunpack.c.l.b16 %v151
    %v307 = vunpack.c.h.b16 %v151
    %v308 = vunpack.c.l.b16 %v152
    %v309 = vunpack.c.h.b16 %v152
    %v310 = vunpack.c.l.b16 %v153
    %v311 = vunpack.c.h.b16 %v153
    %v312 = vunpack.c.l.b16 %v154
    %v313 = vunpack.c.h.b16 %v154
    %v314 = vunpack.c.l.b16 %v155
    %v315 = vunpack.c.h.b16 %v155
    %v316 = vunpack.c.l.b16 %v156
    %v317 = vunpack.c.h.b16 %v156
    %v318 = vunpack.c.l.b16 %v157
    %v319 = vunpack.c.h.b16 %v157
    %v320 = vunpack.c.l.b16 %v158
    %v321 = vunpack.c.h.b16 %v158
    %v322 = vunpack.c.l.b16 %v159
    %v323 = vunpack.c.h.b16 %v159
    %v324 = vunpack.c.l.b16 %v160
    %v325 = vunpack.c.h.b16 %v160
    %v326 = vunpack.c.l.b16 %v161
    %v327 = vunpack.c.h.b16 %v161
    %v328 = vpack.c.b16 %v268, %v264
    %v329 = vpack.c.b16 %v269, %v265
    %v330 = vpack.c.b16 %v270, %v266
    %v331 = vpack.c.b16 %v271, %v267
    %v332 = vpack.c.b16 %v276, %v272
    %v333 = vpack.c.b16 %v277, %v273
    %v334 = vpack.c.b16 %v278, %v274
    %v335 = vpack.c.b16 %v279, %v275
    %v336 = vpack.c.b16 %v284, %v280
    %v337 = vpack.c.b16 %v285, %v281
    %v338 = vpack.c.b16 %v286, %v282
    %v339 = vpack.c.b16 %v287, %v283
    %v340 = vpack.c.b16 %v292, %v288
    %v341 = vpack.c.b16 %v293, %v289
    %v342 = vpack.c.b16 %v294, %v290
    %v343 = vpack.c.b16 %v295, %v291
    %v344 = vpack.c.b16 %v300, %v296
    %v345 = vpack.c.b16 %v301, %v297
    %v346 = vpack.c.b16 %v302, %v298
    %v347 = vpack.c.b16 %v303, %v299
    %v348 = vpack.c.b16 %v308, %v304
    %v349 = vpack.c.b16 %v309, %v305
    %v350 = vpack.c.b16 %v310, %v306
    %v351 = vpack.c.b16 %v311, %v307
    %v352 = vpack.c.b16 %v316, %v312
    %v353 = vpack.c.b16 %v317, %v313
    %v354 = vpack.c.b16 %v318, %v314
    %v355 = vpack.c.b16 %v319, %v315
    %v356 = vpack.c.b16 %v324, %v320
    %v357 = vpack.c.b16 %v325, %v321
    %v358 = vpack.c.b16 %v326, %v322
    %v359 = vpack.c.b16 %v327, %v323
    %392 = vmatprep.subr.bf16.mxu0 %v357
    %393 = vmatpush1.bf16.msra.mxu0 %v356
    %394 = vmatprep.subr.bf16.mxu0 %v353
    %395 = vmatpush1.bf16.msra.mxu0 %v352
    %396 = vmatprep.subr.bf16.mxu0 %v349
    %397 = vmatpush1.bf16.msra.mxu0 %v348
    %398 = vmatprep.subr.bf16.mxu0 %v345
    %399 = vmatpush1.bf16.msra.mxu0 %v344
    %400 = vmatprep.subr.bf16.mxu0 %v341
    %401 = vmatpush1.bf16.msra.mxu0 %v340
    %402 = vmatprep.subr.bf16.mxu0 %v337
    %403 = vmatpush1.bf16.msra.mxu0 %v336
    %404 = vmatprep.subr.bf16.mxu0 %v333
    %405 = vmatpush1.bf16.msra.mxu0 %v332
    %406 = vmatprep.subr.bf16.mxu0 %v329
    %407 = vmatpush1.bf16.msra.mxu0 %v328
    %408 = vmatprep.subr.bf16.mxu0 0
    %409 = vmatpush2.bf16.msra.mxu0 0
    %410 = vmatprep.subr.bf16.mxu0 0
    %411 = vmatpush2.bf16.msra.mxu0 0
    %412 = vmatprep.subr.bf16.mxu0 0
    %413 = vmatpush2.bf16.msra.mxu0 0
    %414 = vmatprep.subr.bf16.mxu0 0
    %415 = vmatpush2.bf16.msra.mxu0 0
    %416 = vmatprep.subr.bf16.mxu0 0
    %417 = vmatpush2.bf16.msra.mxu0 0
    %418 = vmatprep.subr.bf16.mxu0 0
    %419 = vmatpush2.bf16.msra.mxu0 0
    %420 = vmatprep.subr.bf16.mxu0 0
    %421 = vmatpush2.bf16.msra.mxu0 0
    %422 = vmatprep.subr.bf16.mxu0 0
    %423 = vmatpush2.bf16.msra.mxu0 0
    %424 = vmatprep.mubr.bf16.mxu0 0
    %425 = vmatmul.mubr.bf16.gmra.mxu0 %v216
    %v426 = vpop.f32.mrf.mxu0
    %v427 = vadd.f32 %v167, %v426
    %v428 = vpop.f32.mrf.mxu0
    %v429 = vadd.f32 %v171, %v428
    %v430 = vpop.f32.mrf.mxu0
    %v431 = vadd.f32 %v167, %v430
    %v432 = vpop.f32.mrf.mxu0
    %v433 = vadd.f32 %v171, %v432
    %434 = vmatprep.mubr.bf16.mxu0 0
    %435 = vmatmul.mubr.bf16.gmra.mxu0 %v217
    %v436 = vpop.f32.mrf.mxu0
    %v437 = vadd.f32 %v167, %v436
    %v438 = vpop.f32.mrf.mxu0
    %v439 = vadd.f32 %v171, %v438
    %v440 = vpop.f32.mrf.mxu0
    %v441 = vadd.f32 %v167, %v440
    %v442 = vpop.f32.mrf.mxu0
    %v443 = vadd.f32 %v171, %v442
    %444 = vmatprep.mubr.bf16.mxu0 0
    %445 = vmatmul.mubr.bf16.gmra.mxu0 %v218
    %v446 = vpop.f32.mrf.mxu0
    %v447 = vadd.f32 %v167, %v446
    %v448 = vpop.f32.mrf.mxu0
    %v449 = vadd.f32 %v171, %v448
    %v450 = vpop.f32.mrf.mxu0
    %v451 = vadd.f32 %v167, %v450
    %v452 = vpop.f32.mrf.mxu0
    %v453 = vadd.f32 %v171, %v452
    %454 = vmatprep.mubr.bf16.mxu0 0
    %455 = vmatmul.mubr.bf16.gmra.mxu0 %v219
    %v456 = vpop.f32.mrf.mxu0
    %v457 = vadd.f32 %v167, %v456
    %v458 = vpop.f32.mrf.mxu0
    %v459 = vadd.f32 %v171, %v458
    %v460 = vpop.f32.mrf.mxu0
    %v461 = vadd.f32 %v167, %v460
    %v462 = vpop.f32.mrf.mxu0
    %v463 = vadd.f32 %v171, %v462
    %464 = vmatprep.mubr.bf16.mxu0 0
    %465 = vmatmul.mubr.bf16.gmra.mxu0 %v220
    %v466 = vpop.f32.mrf.mxu0
    %v467 = vadd.f32 %v167, %v466
    %v468 = vpop.f32.mrf.mxu0
    %v469 = vadd.f32 %v171, %v468
    %v470 = vpop.f32.mrf.mxu0
    %v471 = vadd.f32 %v167, %v470
    %v472 = vpop.f32.mrf.mxu0
    %v473 = vadd.f32 %v171, %v472
    %474 = vmatprep.mubr.bf16.mxu0 0
    %475 = vmatmul.mubr.bf16.gmra.mxu0 %v221
    %v476 = vpop.f32.mrf.mxu0
    %v477 = vadd.f32 %v167, %v476
    %v478 = vpop.f32.mrf.mxu0
    %v479 = vadd.f32 %v171, %v478
    %v480 = vpop.f32.mrf.mxu0
    %v481 = vadd.f32 %v167, %v480
    %v482 = vpop.f32.mrf.mxu0
    %v483 = vadd.f32 %v171, %v482
    %484 = vmatprep.mubr.bf16.mxu0 0
    %485 = vmatmul.mubr.bf16.gmra.mxu0 %v222
    %v486 = vpop.f32.mrf.mxu0
    %v487 = vadd.f32 %v167, %v486
    %v488 = vpop.f32.mrf.mxu0
    %v489 = vadd.f32 %v171, %v488
    %v490 = vpop.f32.mrf.mxu0
    %v491 = vadd.f32 %v167, %v490
    %v492 = vpop.f32.mrf.mxu0
    %v493 = vadd.f32 %v171, %v492
    %494 = vmatprep.mubr.bf16.mxu0 0
    %495 = vmatmul.mubr.bf16.gmra.mxu0 %v223
    %v496 = vpop.f32.mrf.mxu0
    %v497 = vadd.f32 %v167, %v496
    %v498 = vpop.f32.mrf.mxu0
    %v499 = vadd.f32 %v171, %v498
    %v500 = vpop.f32.mrf.mxu0
    %v501 = vadd.f32 %v167, %v500
    %v502 = vpop.f32.mrf.mxu0
    %v503 = vadd.f32 %v171, %v502
    %504 = vdwg.mxu0
    %505 = vmatprep.subr.bf16.mxu0 %v359
    %506 = vmatpush1.bf16.msra.mxu0 %v358
    %507 = vmatprep.subr.bf16.mxu0 %v355
    %508 = vmatpush1.bf16.msra.mxu0 %v354
    %509 = vmatprep.subr.bf16.mxu0 %v351
    %510 = vmatpush1.bf16.msra.mxu0 %v350
    %511 = vmatprep.subr.bf16.mxu0 %v347
    %512 = vmatpush1.bf16.msra.mxu0 %v346
    %513 = vmatprep.subr.bf16.mxu0 %v343
    %514 = vmatpush1.bf16.msra.mxu0 %v342
    %515 = vmatprep.subr.bf16.mxu0 %v339
    %516 = vmatpush1.bf16.msra.mxu0 %v338
    %517 = vmatprep.subr.bf16.mxu0 %v335
    %518 = vmatpush1.bf16.msra.mxu0 %v334
    %519 = vmatprep.subr.bf16.mxu0 %v331
    %520 = vmatpush1.bf16.msra.mxu0 %v330
    %521 = vmatprep.subr.bf16.mxu0 0
    %522 = vmatpush2.bf16.msra.mxu0 0
    %523 = vmatprep.subr.bf16.mxu0 0
    %524 = vmatpush2.bf16.msra.mxu0 0
    %525 = vmatprep.subr.bf16.mxu0 0
    %526 = vmatpush2.bf16.msra.mxu0 0
    %527 = vmatprep.subr.bf16.mxu0 0
    %528 = vmatpush2.bf16.msra.mxu0 0
    %529 = vmatprep.subr.bf16.mxu0 0
    %530 = vmatpush2.bf16.msra.mxu0 0
    %531 = vmatprep.subr.bf16.mxu0 0
    %532 = vmatpush2.bf16.msra.mxu0 0
    %533 = vmatprep.subr.bf16.mxu0 0
    %534 = vmatpush2.bf16.msra.mxu0 0
    %535 = vmatprep.subr.bf16.mxu0 0
    %536 = vmatpush2.bf16.msra.mxu0 0
    %537 = vmatprep.mubr.bf16.mxu0 0
    %538 = vmatmul.mubr.bf16.gmra.mxu0 %v216
    %v539 = vpop.f32.mrf.mxu0
    %v540 = vadd.f32 %v175, %v539
    %v541 = vpop.f32.mrf.mxu0
    %v542 = vadd.f32 %v179, %v541
    %v543 = vpop.f32.mrf.mxu0
    %v544 = vadd.f32 %v175, %v543
    %v545 = vpop.f32.mrf.mxu0
    %v546 = vadd.f32 %v179, %v545
    %547 = vmatprep.mubr.bf16.mxu0 0
    %548 = vmatmul.mubr.bf16.gmra.mxu0 %v217
    %v549 = vpop.f32.mrf.mxu0
    %v550 = vadd.f32 %v175, %v549
    %v551 = vpop.f32.mrf.mxu0
    %v552 = vadd.f32 %v179, %v551
    %v553 = vpop.f32.mrf.mxu0
    %v554 = vadd.f32 %v175, %v553
    %v555 = vpop.f32.mrf.mxu0
    %v556 = vadd.f32 %v179, %v555
    %557 = vmatprep.mubr.bf16.mxu0 0
    %558 = vmatmul.mubr.bf16.gmra.mxu0 %v218
    %v559 = vpop.f32.mrf.mxu0
    %v560 = vadd.f32 %v175, %v559
    %v561 = vpop.f32.mrf.mxu0
    %v562 = vadd.f32 %v179, %v561
    %v563 = vpop.f32.mrf.mxu0
    %v564 = vadd.f32 %v175, %v563
    %v565 = vpop.f32.mrf.mxu0
    %v566 = vadd.f32 %v179, %v565
    %567 = vmatprep.mubr.bf16.mxu0 0
    %568 = vmatmul.mubr.bf16.gmra.mxu0 %v219
    %v569 = vpop.f32.mrf.mxu0
    %v570 = vadd.f32 %v175, %v569
    %v571 = vpop.f32.mrf.mxu0
    %v572 = vadd.f32 %v179, %v571
    %v573 = vpop.f32.mrf.mxu0
    %v574 = vadd.f32 %v175, %v573
    %v575 = vpop.f32.mrf.mxu0
    %v576 = vadd.f32 %v179, %v575
    %577 = vmatprep.mubr.bf16.mxu0 0
    %578 = vmatmul.mubr.bf16.gmra.mxu0 %v220
    %v579 = vpop.f32.mrf.mxu0
    %v580 = vadd.f32 %v175, %v579
    %v581 = vpop.f32.mrf.mxu0
    %v582 = vadd.f32 %v179, %v581
    %v583 = vpop.f32.mrf.mxu0
    %v584 = vadd.f32 %v175, %v583
    %v585 = vpop.f32.mrf.mxu0
    %v586 = vadd.f32 %v179, %v585
    %587 = vmatprep.mubr.bf16.mxu0 0
    %588 = vmatmul.mubr.bf16.gmra.mxu0 %v221
    %v589 = vpop.f32.mrf.mxu0
    %v590 = vadd.f32 %v175, %v589
    %v591 = vpop.f32.mrf.mxu0
    %v592 = vadd.f32 %v179, %v591
    %v593 = vpop.f32.mrf.mxu0
    %v594 = vadd.f32 %v175, %v593
    %v595 = vpop.f32.mrf.mxu0
    %v596 = vadd.f32 %v179, %v595
    %597 = vmatprep.mubr.bf16.mxu0 0
    %598 = vmatmul.mubr.bf16.gmra.mxu0 %v222
    %v599 = vpop.f32.mrf.mxu0
    %v600 = vadd.f32 %v175, %v599
    %v601 = vpop.f32.mrf.mxu0
    %v602 = vadd.f32 %v179, %v601
    %v603 = vpop.f32.mrf.mxu0
    %v604 = vadd.f32 %v175, %v603
    %v605 = vpop.f32.mrf.mxu0
    %v606 = vadd.f32 %v179, %v605
    %607 = vmatprep.mubr.bf16.mxu0 0
    %608 = vmatmul.mubr.bf16.gmra.mxu0 %v223
    %v609 = vpop.f32.mrf.mxu0
    %v610 = vadd.f32 %v175, %v609
    %v611 = vpop.f32.mrf.mxu0
    %v612 = vadd.f32 %v179, %v611
    %v613 = vpop.f32.mrf.mxu0
    %v614 = vadd.f32 %v175, %v613
    %v615 = vpop.f32.mrf.mxu0
    %v616 = vadd.f32 %v179, %v615
    %617 = vdwg.mxu0
    %v618 = vtanh.pop %v427
    %v619 = vtanh.pop %v429
    %v620 = vtanh.pop %v540
    %v621 = vtanh.pop %v542
    %v622 = vtanh.pop %v431
    %v623 = vtanh.pop %v433
    %v624 = vtanh.pop %v544
    %v625 = vtanh.pop %v546
    %v626 = vtanh.pop %v437
    %v627 = vtanh.pop %v439
    %v628 = vtanh.pop %v550
    %v629 = vtanh.pop %v552
    %v630 = vtanh.pop %v441
    %v631 = vtanh.pop %v443
    %v632 = vtanh.pop %v554
    %v633 = vtanh.pop %v556
    %v634 = vtanh.pop %v447
    %v635 = vtanh.pop %v449
    %v636 = vtanh.pop %v560
    %v637 = vtanh.pop %v562
    %v638 = vtanh.pop %v451
    %v639 = vtanh.pop %v453
    %v640 = vtanh.pop %v564
    %v641 = vtanh.pop %v566
    %v642 = vtanh.pop %v457
    %v643 = vtanh.pop %v459
    %v644 = vtanh.pop %v570
    %v645 = vtanh.pop %v572
    %v646 = vtanh.pop %v461
    %v647 = vtanh.pop %v463
    %v648 = vtanh.pop %v574
    %v649 = vtanh.pop %v576
    %v650 = vtanh.pop %v467
    %v651 = vtanh.pop %v469
    %v652 = vtanh.pop %v580
    %v653 = vtanh.pop %v582
    %v654 = vtanh.pop %v471
    %v655 = vtanh.pop %v473
    %v656 = vtanh.pop %v584
    %v657 = vtanh.pop %v586
    %v658 = vtanh.pop %v477
    %v659 = vtanh.pop %v479
    %v660 = vtanh.pop %v590
    %v661 = vtanh.pop %v592
    %v662 = vtanh.pop %v481
    %v663 = vtanh.pop %v483
    %v664 = vtanh.pop %v594
    %v665 = vtanh.pop %v596
    %v666 = vtanh.pop %v487
    %v667 = vtanh.pop %v489
    %v668 = vtanh.pop %v600
    %v669 = vtanh.pop %v602
    %v670 = vtanh.pop %v491
    %v671 = vtanh.pop %v493
    %v672 = vtanh.pop %v604
    %v673 = vtanh.pop %v606
    %v674 = vtanh.pop %v497
    %v675 = vtanh.pop %v499
    %v676 = vtanh.pop %v610
    %v677 = vtanh.pop %v612
    %v678 = vtanh.pop %v501
    %v679 = vtanh.pop %v503
    %v680 = vtanh.pop %v614
    %v681 = vtanh.pop %v616
    %v682 = vpack.c.bf16 %v622, %v618
    %v683 = vpack.c.bf16 %v623, %v619
    %v684 = vpack.c.bf16 %v624, %v620
    %v685 = vpack.c.bf16 %v625, %v621
    %v686 = vpack.c.bf16 %v630, %v626
    %v687 = vpack.c.bf16 %v631, %v627
    %v688 = vpack.c.bf16 %v632, %v628
    %v689 = vpack.c.bf16 %v633, %v629
    %v690 = vpack.c.bf16 %v638, %v634
    %v691 = vpack.c.bf16 %v639, %v635
    %v692 = vpack.c.bf16 %v640, %v636
    %v693 = vpack.c.bf16 %v641, %v637
    %v694 = vpack.c.bf16 %v646, %v642
    %v695 = vpack.c.bf16 %v647, %v643
    %v696 = vpack.c.bf16 %v648, %v644
    %v697 = vpack.c.bf16 %v649, %v645
    %v698 = vpack.c.bf16 %v654, %v650
    %v699 = vpack.c.bf16 %v655, %v651
    %v700 = vpack.c.bf16 %v656, %v652
    %v701 = vpack.c.bf16 %v657, %v653
    %v702 = vpack.c.bf16 %v662, %v658
    %v703 = vpack.c.bf16 %v663, %v659
    %v704 = vpack.c.bf16 %v664, %v660
    %v705 = vpack.c.bf16 %v665, %v661
    %v706 = vpack.c.bf16 %v670, %v666
    %v707 = vpack.c.bf16 %v671, %v667
    %v708 = vpack.c.bf16 %v672, %v668
    %v709 = vpack.c.bf16 %v673, %v669
    %v710 = vpack.c.bf16 %v678, %v674
    %v711 = vpack.c.bf16 %v679, %v675
    %v712 = vpack.c.bf16 %v680, %v676
    %v713 = vpack.c.bf16 %v681, %v677
    %v714 = vld [vmem:[#allocation8] sm:$0xff]
    %v715 = vld [vmem:[#allocation8 + $0x8] sm:$0xff]
    %v716 = vld [vmem:[#allocation8 + $0x10] sm:$0xff]
    %v717 = vld [vmem:[#allocation8 + $0x18] sm:$0xff]
    %v718 = vld [vmem:[#allocation8 + $0x20] sm:$0xff]
    %v719 = vld [vmem:[#allocation8 + $0x28] sm:$0xff]
    %v720 = vld [vmem:[#allocation8 + $0x30] sm:$0xff]
    %v721 = vld [vmem:[#allocation8 + $0x38] sm:$0xff]
    %v722 = vld [vmem:[#allocation8 + $0x40] sm:$0xff]
    %v723 = vld [vmem:[#allocation8 + $0x48] sm:$0xff]
    %v724 = vld [vmem:[#allocation8 + $0x50] sm:$0xff]
    %v725 = vld [vmem:[#allocation8 + $0x58] sm:$0xff]
    %v726 = vld [vmem:[#allocation8 + $0x60] sm:$0xff]
    %v727 = vld [vmem:[#allocation8 + $0x68] sm:$0xff]
    %v728 = vld [vmem:[#allocation8 + $0x70] sm:$0xff]
    %v729 = vld [vmem:[#allocation8 + $0x78] sm:$0xff]
    %v730 = vld [vmem:[#allocation8 + $0x80] sm:$0xff]
    %v731 = vld [vmem:[#allocation8 + $0x88] sm:$0xff]
    %v732 = vld [vmem:[#allocation8 + $0x90] sm:$0xff]
    %v733 = vld [vmem:[#allocation8 + $0x98] sm:$0xff]
    %v734 = vld [vmem:[#allocation8 + $0xa0] sm:$0xff]
    %v735 = vld [vmem:[#allocation8 + $0xa8] sm:$0xff]
    %v736 = vld [vmem:[#allocation8 + $0xb0] sm:$0xff]
    %v737 = vld [vmem:[#allocation8 + $0xb8] sm:$0xff]
    %v738 = vld [vmem:[#allocation8 + $0xc0] sm:$0xff]
    %v739 = vld [vmem:[#allocation8 + $0xc8] sm:$0xff]
    %v740 = vld [vmem:[#allocation8 + $0xd0] sm:$0xff]
    %v741 = vld [vmem:[#allocation8 + $0xd8] sm:$0xff]
    %v742 = vld [vmem:[#allocation8 + $0xe0] sm:$0xff]
    %v743 = vld [vmem:[#allocation8 + $0xe8] sm:$0xff]
    %v744 = vld [vmem:[#allocation8 + $0xf0] sm:$0xff]
    %v745 = vld [vmem:[#allocation8 + $0xf8] sm:$0xff]
    %v746 = vld [vmem:[#allocation8 + $0x100] sm:$0xff]
    %v747 = vld [vmem:[#allocation8 + $0x108] sm:$0xff]
    %v748 = vld [vmem:[#allocation8 + $0x110] sm:$0xff]
    %v749 = vld [vmem:[#allocation8 + $0x118] sm:$0xff]
    %v750 = vld [vmem:[#allocation8 + $0x120] sm:$0xff]
    %v751 = vld [vmem:[#allocation8 + $0x128] sm:$0xff]
    %v752 = vld [vmem:[#allocation8 + $0x130] sm:$0xff]
    %v753 = vld [vmem:[#allocation8 + $0x138] sm:$0xff]
    %v754 = vld [vmem:[#allocation8 + $0x140] sm:$0xff]
    %v755 = vld [vmem:[#allocation8 + $0x148] sm:$0xff]
    %v756 = vld [vmem:[#allocation8 + $0x150] sm:$0xff]
    %v757 = vld [vmem:[#allocation8 + $0x158] sm:$0xff]
    %v758 = vld [vmem:[#allocation8 + $0x160] sm:$0xff]
    %v759 = vld [vmem:[#allocation8 + $0x168] sm:$0xff]
    %v760 = vld [vmem:[#allocation8 + $0x170] sm:$0xff]
    %v761 = vld [vmem:[#allocation8 + $0x178] sm:$0xff]
    %v762 = vld [vmem:[#allocation8 + $0x180] sm:$0xff]
    %v763 = vld [vmem:[#allocation8 + $0x188] sm:$0xff]
    %v764 = vld [vmem:[#allocation8 + $0x190] sm:$0xff]
    %v765 = vld [vmem:[#allocation8 + $0x198] sm:$0xff]
    %v766 = vld [vmem:[#allocation8 + $0x1a0] sm:$0xff]
    %v767 = vld [vmem:[#allocation8 + $0x1a8] sm:$0xff]
    %v768 = vld [vmem:[#allocation8 + $0x1b0] sm:$0xff]
    %v769 = vld [vmem:[#allocation8 + $0x1b8] sm:$0xff]
    %v770 = vld [vmem:[#allocation8 + $0x1c0] sm:$0xff]
    %v771 = vld [vmem:[#allocation8 + $0x1c8] sm:$0xff]
    %v772 = vld [vmem:[#allocation8 + $0x1d0] sm:$0xff]
    %v773 = vld [vmem:[#allocation8 + $0x1d8] sm:$0xff]
    %v774 = vld [vmem:[#allocation8 + $0x1e0] sm:$0xff]
    %v775 = vld [vmem:[#allocation8 + $0x1e8] sm:$0xff]
    %v776 = vld [vmem:[#allocation8 + $0x1f0] sm:$0xff]
    %v777 = vld [vmem:[#allocation8 + $0x1f8] sm:$0xff]
    %v778 = vld [vmem:[#allocation8 + $0x200] sm:$0xff]
    %v779 = vld [vmem:[#allocation8 + $0x208] sm:$0xff]
    %v780 = vld [vmem:[#allocation8 + $0x210] sm:$0xff]
    %v781 = vld [vmem:[#allocation8 + $0x218] sm:$0xff]
    %v782 = vld [vmem:[#allocation8 + $0x220] sm:$0xff]
    %v783 = vld [vmem:[#allocation8 + $0x228] sm:$0xff]
    %v784 = vld [vmem:[#allocation8 + $0x230] sm:$0xff]
    %v785 = vld [vmem:[#allocation8 + $0x238] sm:$0xff]
    %v786 = vld [vmem:[#allocation8 + $0x240] sm:$0xff]
    %v787 = vld [vmem:[#allocation8 + $0x248] sm:$0xff]
    %v788 = vld [vmem:[#allocation8 + $0x250] sm:$0xff]
    %v789 = vld [vmem:[#allocation8 + $0x258] sm:$0xff]
    %v790 = vld [vmem:[#allocation8 + $0x260] sm:$0xff]
    %v791 = vld [vmem:[#allocation8 + $0x268] sm:$0xff]
    %v792 = vld [vmem:[#allocation8 + $0x270] sm:$0xff]
    %v793 = vld [vmem:[#allocation8 + $0x278] sm:$0xff]
    %v794 = vld [vmem:[#allocation8 + $0x280] sm:$0xff]
    %v795 = vld [vmem:[#allocation8 + $0x288] sm:$0xff]
    %v796 = vld [vmem:[#allocation8 + $0x290] sm:$0xff]
    %v797 = vld [vmem:[#allocation8 + $0x298] sm:$0xff]
    %v798 = vld [vmem:[#allocation8 + $0x2a0] sm:$0xff]
    %v799 = vld [vmem:[#allocation8 + $0x2a8] sm:$0xff]
    %v800 = vld [vmem:[#allocation8 + $0x2b0] sm:$0xff]
    %v801 = vld [vmem:[#allocation8 + $0x2b8] sm:$0xff]
    %v802 = vld [vmem:[#allocation8 + $0x2c0] sm:$0xff]
    %v803 = vld [vmem:[#allocation8 + $0x2c8] sm:$0xff]
    %v804 = vld [vmem:[#allocation8 + $0x2d0] sm:$0xff]
    %v805 = vld [vmem:[#allocation8 + $0x2d8] sm:$0xff]
    %v806 = vld [vmem:[#allocation8 + $0x2e0] sm:$0xff]
    %v807 = vld [vmem:[#allocation8 + $0x2e8] sm:$0xff]
    %v808 = vld [vmem:[#allocation8 + $0x2f0] sm:$0xff]
    %v809 = vld [vmem:[#allocation8 + $0x2f8] sm:$0xff]
    %v810 = vld [vmem:[#allocation8 + $0x300] sm:$0xff]
    %v811 = vld [vmem:[#allocation8 + $0x308] sm:$0xff]
    %v812 = vld [vmem:[#allocation8 + $0x310] sm:$0xff]
    %v813 = vld [vmem:[#allocation8 + $0x318] sm:$0xff]
    %v814 = vld [vmem:[#allocation8 + $0x320] sm:$0xff]
    %v815 = vld [vmem:[#allocation8 + $0x328] sm:$0xff]
    %v816 = vld [vmem:[#allocation8 + $0x330] sm:$0xff]
    %v817 = vld [vmem:[#allocation8 + $0x338] sm:$0xff]
    %v818 = vld [vmem:[#allocation8 + $0x340] sm:$0xff]
    %v819 = vld [vmem:[#allocation8 + $0x348] sm:$0xff]
    %v820 = vld [vmem:[#allocation8 + $0x350] sm:$0xff]
    %v821 = vld [vmem:[#allocation8 + $0x358] sm:$0xff]
    %v822 = vld [vmem:[#allocation8 + $0x360] sm:$0xff]
    %v823 = vld [vmem:[#allocation8 + $0x368] sm:$0xff]
    %v824 = vld [vmem:[#allocation8 + $0x370] sm:$0xff]
    %v825 = vld [vmem:[#allocation8 + $0x378] sm:$0xff]
    %v826 = vld [vmem:[#allocation8 + $0x380] sm:$0xff]
    %v827 = vld [vmem:[#allocation8 + $0x388] sm:$0xff]
    %v828 = vld [vmem:[#allocation8 + $0x390] sm:$0xff]
    %v829 = vld [vmem:[#allocation8 + $0x398] sm:$0xff]
    %v830 = vld [vmem:[#allocation8 + $0x3a0] sm:$0xff]
    %v831 = vld [vmem:[#allocation8 + $0x3a8] sm:$0xff]
    %v832 = vld [vmem:[#allocation8 + $0x3b0] sm:$0xff]
    %v833 = vld [vmem:[#allocation8 + $0x3b8] sm:$0xff]
    %v834 = vld [vmem:[#allocation8 + $0x3c0] sm:$0xff]
    %v835 = vld [vmem:[#allocation8 + $0x3c8] sm:$0xff]
    %v836 = vld [vmem:[#allocation8 + $0x3d0] sm:$0xff]
    %v837 = vld [vmem:[#allocation8 + $0x3d8] sm:$0xff]
    %v838 = vld [vmem:[#allocation8 + $0x3e0] sm:$0xff]
    %v839 = vld [vmem:[#allocation8 + $0x3e8] sm:$0xff]
    %v840 = vld [vmem:[#allocation8 + $0x3f0] sm:$0xff]
    %v841 = vld [vmem:[#allocation8 + $0x3f8] sm:$0xff]
    %v842 = vld [vmem:[%s4] sm:$0xf]
    %v844 = vlaneseq
    %v845 = vshrl.u32 %v844, 7
    %v846 = vsub.s32 0, %v845
    %v847 = vrot.slane %v842, %v846
    %v848 = vlaneseq
    %v849 = vshrl.u32 %v848, 7
    %v850 = vsub.s32 1, %v849
    %v851 = vrot.slane %v842, %v850
    %v852 = vlaneseq
    %v853 = vshrl.u32 %v852, 7
    %v854 = vsub.s32 2, %v853
    %v855 = vrot.slane %v842, %v854
    %v856 = vlaneseq
    %v857 = vshrl.u32 %v856, 7
    %v858 = vsub.s32 3, %v857
    %v859 = vrot.slane %v842, %v858
    %v992 = vunpack.c.l.b16 %v714
    %v993 = vunpack.c.h.b16 %v714
    %v994 = vunpack.c.l.b16 %v715
    %v995 = vunpack.c.h.b16 %v715
    %v996 = vunpack.c.l.b16 %v716
    %v997 = vunpack.c.h.b16 %v716
    %v998 = vunpack.c.l.b16 %v717
    %v999 = vunpack.c.h.b16 %v717
    %v1000 = vunpack.c.l.b16 %v718
    %v1001 = vunpack.c.h.b16 %v718
    %v1002 = vunpack.c.l.b16 %v719
    %v1003 = vunpack.c.h.b16 %v719
    %v1004 = vunpack.c.l.b16 %v720
    %v1005 = vunpack.c.h.b16 %v720
    %v1006 = vunpack.c.l.b16 %v721
    %v1007 = vunpack.c.h.b16 %v721
    %v1008 = vunpack.c.l.b16 %v722
    %v1009 = vunpack.c.h.b16 %v722
    %v1010 = vunpack.c.l.b16 %v723
    %v1011 = vunpack.c.h.b16 %v723
    %v1012 = vunpack.c.l.b16 %v724
    %v1013 = vunpack.c.h.b16 %v724
    %v1014 = vunpack.c.l.b16 %v725
    %v1015 = vunpack.c.h.b16 %v725
    %v1016 = vunpack.c.l.b16 %v726
    %v1017 = vunpack.c.h.b16 %v726
    %v1018 = vunpack.c.l.b16 %v727
    %v1019 = vunpack.c.h.b16 %v727
    %v1020 = vunpack.c.l.b16 %v728
    %v1021 = vunpack.c.h.b16 %v728
    %v1022 = vunpack.c.l.b16 %v729
    %v1023 = vunpack.c.h.b16 %v729
    %v1024 = vunpack.c.l.b16 %v730
    %v1025 = vunpack.c.h.b16 %v730
    %v1026 = vunpack.c.l.b16 %v731
    %v1027 = vunpack.c.h.b16 %v731
    %v1028 = vunpack.c.l.b16 %v732
    %v1029 = vunpack.c.h.b16 %v732
    %v1030 = vunpack.c.l.b16 %v733
    %v1031 = vunpack.c.h.b16 %v733
    %v1032 = vunpack.c.l.b16 %v734
    %v1033 = vunpack.c.h.b16 %v734
    %v1034 = vunpack.c.l.b16 %v735
    %v1035 = vunpack.c.h.b16 %v735
    %v1036 = vunpack.c.l.b16 %v736
    %v1037 = vunpack.c.h.b16 %v736
    %v1038 = vunpack.c.l.b16 %v737
    %v1039 = vunpack.c.h.b16 %v737
    %v1040 = vunpack.c.l.b16 %v738
    %v1041 = vunpack.c.h.b16 %v738
    %v1042 = vunpack.c.l.b16 %v739
    %v1043 = vunpack.c.h.b16 %v739
    %v1044 = vunpack.c.l.b16 %v740
    %v1045 = vunpack.c.h.b16 %v740
    %v1046 = vunpack.c.l.b16 %v741
    %v1047 = vunpack.c.h.b16 %v741
    %v1048 = vunpack.c.l.b16 %v742
    %v1049 = vunpack.c.h.b16 %v742
    %v1050 = vunpack.c.l.b16 %v743
    %v1051 = vunpack.c.h.b16 %v743
    %v1052 = vunpack.c.l.b16 %v744
    %v1053 = vunpack.c.h.b16 %v744
    %v1054 = vunpack.c.l.b16 %v745
    %v1055 = vunpack.c.h.b16 %v745
    %v1056 = vunpack.c.l.b16 %v746
    %v1057 = vunpack.c.h.b16 %v746
    %v1058 = vunpack.c.l.b16 %v747
    %v1059 = vunpack.c.h.b16 %v747
    %v1060 = vunpack.c.l.b16 %v748
    %v1061 = vunpack.c.h.b16 %v748
    %v1062 = vunpack.c.l.b16 %v749
    %v1063 = vunpack.c.h.b16 %v749
    %v1064 = vunpack.c.l.b16 %v750
    %v1065 = vunpack.c.h.b16 %v750
    %v1066 = vunpack.c.l.b16 %v751
    %v1067 = vunpack.c.h.b16 %v751
    %v1068 = vunpack.c.l.b16 %v752
    %v1069 = vunpack.c.h.b16 %v752
    %v1070 = vunpack.c.l.b16 %v753
    %v1071 = vunpack.c.h.b16 %v753
    %v1072 = vunpack.c.l.b16 %v754
    %v1073 = vunpack.c.h.b16 %v754
    %v1074 = vunpack.c.l.b16 %v755
    %v1075 = vunpack.c.h.b16 %v755
    %v1076 = vunpack.c.l.b16 %v756
    %v1077 = vunpack.c.h.b16 %v756
    %v1078 = vunpack.c.l.b16 %v757
    %v1079 = vunpack.c.h.b16 %v757
    %v1080 = vunpack.c.l.b16 %v758
    %v1081 = vunpack.c.h.b16 %v758
    %v1082 = vunpack.c.l.b16 %v759
    %v1083 = vunpack.c.h.b16 %v759
    %v1084 = vunpack.c.l.b16 %v760
    %v1085 = vunpack.c.h.b16 %v760
    %v1086 = vunpack.c.l.b16 %v761
    %v1087 = vunpack.c.h.b16 %v761
    %v1088 = vunpack.c.l.b16 %v762
    %v1089 = vunpack.c.h.b16 %v762
    %v1090 = vunpack.c.l.b16 %v763
    %v1091 = vunpack.c.h.b16 %v763
    %v1092 = vunpack.c.l.b16 %v764
    %v1093 = vunpack.c.h.b16 %v764
    %v1094 = vunpack.c.l.b16 %v765
    %v1095 = vunpack.c.h.b16 %v765
    %v1096 = vunpack.c.l.b16 %v766
    %v1097 = vunpack.c.h.b16 %v766
    %v1098 = vunpack.c.l.b16 %v767
    %v1099 = vunpack.c.h.b16 %v767
    %v1100 = vunpack.c.l.b16 %v768
    %v1101 = vunpack.c.h.b16 %v768
    %v1102 = vunpack.c.l.b16 %v769
    %v1103 = vunpack.c.h.b16 %v769
    %v1104 = vunpack.c.l.b16 %v770
    %v1105 = vunpack.c.h.b16 %v770
    %v1106 = vunpack.c.l.b16 %v771
    %v1107 = vunpack.c.h.b16 %v771
    %v1108 = vunpack.c.l.b16 %v772
    %v1109 = vunpack.c.h.b16 %v772
    %v1110 = vunpack.c.l.b16 %v773
    %v1111 = vunpack.c.h.b16 %v773
    %v1112 = vunpack.c.l.b16 %v774
    %v1113 = vunpack.c.h.b16 %v774
    %v1114 = vunpack.c.l.b16 %v775
    %v1115 = vunpack.c.h.b16 %v775
    %v1116 = vunpack.c.l.b16 %v776
    %v1117 = vunpack.c.h.b16 %v776
    %v1118 = vunpack.c.l.b16 %v777
    %v1119 = vunpack.c.h.b16 %v777
    %v1120 = vunpack.c.l.b16 %v778
    %v1121 = vunpack.c.h.b16 %v778
    %v1122 = vunpack.c.l.b16 %v779
    %v1123 = vunpack.c.h.b16 %v779
    %v1124 = vunpack.c.l.b16 %v780
    %v1125 = vunpack.c.h.b16 %v780
    %v1126 = vunpack.c.l.b16 %v781
    %v1127 = vunpack.c.h.b16 %v781
    %v1128 = vunpack.c.l.b16 %v782
    %v1129 = vunpack.c.h.b16 %v782
    %v1130 = vunpack.c.l.b16 %v783
    %v1131 = vunpack.c.h.b16 %v783
    %v1132 = vunpack.c.l.b16 %v784
    %v1133 = vunpack.c.h.b16 %v784
    %v1134 = vunpack.c.l.b16 %v785
    %v1135 = vunpack.c.h.b16 %v785
    %v1136 = vunpack.c.l.b16 %v786
    %v1137 = vunpack.c.h.b16 %v786
    %v1138 = vunpack.c.l.b16 %v787
    %v1139 = vunpack.c.h.b16 %v787
    %v1140 = vunpack.c.l.b16 %v788
    %v1141 = vunpack.c.h.b16 %v788
    %v1142 = vunpack.c.l.b16 %v789
    %v1143 = vunpack.c.h.b16 %v789
    %v1144 = vunpack.c.l.b16 %v790
    %v1145 = vunpack.c.h.b16 %v790
    %v1146 = vunpack.c.l.b16 %v791
    %v1147 = vunpack.c.h.b16 %v791
    %v1148 = vunpack.c.l.b16 %v792
    %v1149 = vunpack.c.h.b16 %v792
    %v1150 = vunpack.c.l.b16 %v793
    %v1151 = vunpack.c.h.b16 %v793
    %v1152 = vunpack.c.l.b16 %v794
    %v1153 = vunpack.c.h.b16 %v794
    %v1154 = vunpack.c.l.b16 %v795
    %v1155 = vunpack.c.h.b16 %v795
    %v1156 = vunpack.c.l.b16 %v796
    %v1157 = vunpack.c.h.b16 %v796
    %v1158 = vunpack.c.l.b16 %v797
    %v1159 = vunpack.c.h.b16 %v797
    %v1160 = vunpack.c.l.b16 %v798
    %v1161 = vunpack.c.h.b16 %v798
    %v1162 = vunpack.c.l.b16 %v799
    %v1163 = vunpack.c.h.b16 %v799
    %v1164 = vunpack.c.l.b16 %v800
    %v1165 = vunpack.c.h.b16 %v800
    %v1166 = vunpack.c.l.b16 %v801
    %v1167 = vunpack.c.h.b16 %v801
    %v1168 = vunpack.c.l.b16 %v802
    %v1169 = vunpack.c.h.b16 %v802
    %v1170 = vunpack.c.l.b16 %v803
    %v1171 = vunpack.c.h.b16 %v803
    %v1172 = vunpack.c.l.b16 %v804
    %v1173 = vunpack.c.h.b16 %v804
    %v1174 = vunpack.c.l.b16 %v805
    %v1175 = vunpack.c.h.b16 %v805
    %v1176 = vunpack.c.l.b16 %v806
    %v1177 = vunpack.c.h.b16 %v806
    %v1178 = vunpack.c.l.b16 %v807
    %v1179 = vunpack.c.h.b16 %v807
    %v1180 = vunpack.c.l.b16 %v808
    %v1181 = vunpack.c.h.b16 %v808
    %v1182 = vunpack.c.l.b16 %v809
    %v1183 = vunpack.c.h.b16 %v809
    %v1184 = vunpack.c.l.b16 %v810
    %v1185 = vunpack.c.h.b16 %v810
    %v1186 = vunpack.c.l.b16 %v811
    %v1187 = vunpack.c.h.b16 %v811
    %v1188 = vunpack.c.l.b16 %v812
    %v1189 = vunpack.c.h.b16 %v812
    %v1190 = vunpack.c.l.b16 %v813
    %v1191 = vunpack.c.h.b16 %v813
    %v1192 = vunpack.c.l.b16 %v814
    %v1193 = vunpack.c.h.b16 %v814
    %v1194 = vunpack.c.l.b16 %v815
    %v1195 = vunpack.c.h.b16 %v815
    %v1196 = vunpack.c.l.b16 %v816
    %v1197 = vunpack.c.h.b16 %v816
    %v1198 = vunpack.c.l.b16 %v817
    %v1199 = vunpack.c.h.b16 %v817
    %v1200 = vunpack.c.l.b16 %v818
    %v1201 = vunpack.c.h.b16 %v818
    %v1202 = vunpack.c.l.b16 %v819
    %v1203 = vunpack.c.h.b16 %v819
    %v1204 = vunpack.c.l.b16 %v820
    %v1205 = vunpack.c.h.b16 %v820
    %v1206 = vunpack.c.l.b16 %v821
    %v1207 = vunpack.c.h.b16 %v821
    %v1208 = vunpack.c.l.b16 %v822
    %v1209 = vunpack.c.h.b16 %v822
    %v1210 = vunpack.c.l.b16 %v823
    %v1211 = vunpack.c.h.b16 %v823
    %v1212 = vunpack.c.l.b16 %v824
    %v1213 = vunpack.c.h.b16 %v824
    %v1214 = vunpack.c.l.b16 %v825
    %v1215 = vunpack.c.h.b16 %v825
    %v1216 = vunpack.c.l.b16 %v826
    %v1217 = vunpack.c.h.b16 %v826
    %v1218 = vunpack.c.l.b16 %v827
    %v1219 = vunpack.c.h.b16 %v827
    %v1220 = vunpack.c.l.b16 %v828
    %v1221 = vunpack.c.h.b16 %v828
    %v1222 = vunpack.c.l.b16 %v829
    %v1223 = vunpack.c.h.b16 %v829
    %v1224 = vunpack.c.l.b16 %v830
    %v1225 = vunpack.c.h.b16 %v830
    %v1226 = vunpack.c.l.b16 %v831
    %v1227 = vunpack.c.h.b16 %v831
    %v1228 = vunpack.c.l.b16 %v832
    %v1229 = vunpack.c.h.b16 %v832
    %v1230 = vunpack.c.l.b16 %v833
    %v1231 = vunpack.c.h.b16 %v833
    %v1232 = vunpack.c.l.b16 %v834
    %v1233 = vunpack.c.h.b16 %v834
    %v1234 = vunpack.c.l.b16 %v835
    %v1235 = vunpack.c.h.b16 %v835
    %v1236 = vunpack.c.l.b16 %v836
    %v1237 = vunpack.c.h.b16 %v836
    %v1238 = vunpack.c.l.b16 %v837
    %v1239 = vunpack.c.h.b16 %v837
    %v1240 = vunpack.c.l.b16 %v838
    %v1241 = vunpack.c.h.b16 %v838
    %v1242 = vunpack.c.l.b16 %v839
    %v1243 = vunpack.c.h.b16 %v839
    %v1244 = vunpack.c.l.b16 %v840
    %v1245 = vunpack.c.h.b16 %v840
    %v1246 = vunpack.c.l.b16 %v841
    %v1247 = vunpack.c.h.b16 %v841
    %v1248 = vpack.c.b16 %v996, %v992
    %v1249 = vpack.c.b16 %v997, %v993
    %v1250 = vpack.c.b16 %v998, %v994
    %v1251 = vpack.c.b16 %v999, %v995
    %v1252 = vpack.c.b16 %v1004, %v1000
    %v1253 = vpack.c.b16 %v1005, %v1001
    %v1254 = vpack.c.b16 %v1006, %v1002
    %v1255 = vpack.c.b16 %v1007, %v1003
    %v1256 = vpack.c.b16 %v1012, %v1008
    %v1257 = vpack.c.b16 %v1013, %v1009
    %v1258 = vpack.c.b16 %v1014, %v1010
    %v1259 = vpack.c.b16 %v1015, %v1011
    %v1260 = vpack.c.b16 %v1020, %v1016
    %v1261 = vpack.c.b16 %v1021, %v1017
    %v1262 = vpack.c.b16 %v1022, %v1018
    %v1263 = vpack.c.b16 %v1023, %v1019
    %v1264 = vpack.c.b16 %v1028, %v1024
    %v1265 = vpack.c.b16 %v1029, %v1025
    %v1266 = vpack.c.b16 %v1030, %v1026
    %v1267 = vpack.c.b16 %v1031, %v1027
    %v1268 = vpack.c.b16 %v1036, %v1032
    %v1269 = vpack.c.b16 %v1037, %v1033
    %v1270 = vpack.c.b16 %v1038, %v1034
    %v1271 = vpack.c.b16 %v1039, %v1035
    %v1272 = vpack.c.b16 %v1044, %v1040
    %v1273 = vpack.c.b16 %v1045, %v1041
    %v1274 = vpack.c.b16 %v1046, %v1042
    %v1275 = vpack.c.b16 %v1047, %v1043
    %v1276 = vpack.c.b16 %v1052, %v1048
    %v1277 = vpack.c.b16 %v1053, %v1049
    %v1278 = vpack.c.b16 %v1054, %v1050
    %v1279 = vpack.c.b16 %v1055, %v1051
    %v1280 = vpack.c.b16 %v1060, %v1056
    %v1281 = vpack.c.b16 %v1061, %v1057
    %v1282 = vpack.c.b16 %v1062, %v1058
    %v1283 = vpack.c.b16 %v1063, %v1059
    %v1284 = vpack.c.b16 %v1068, %v1064
    %v1285 = vpack.c.b16 %v1069, %v1065
    %v1286 = vpack.c.b16 %v1070, %v1066
    %v1287 = vpack.c.b16 %v1071, %v1067
    %v1288 = vpack.c.b16 %v1076, %v1072
    %v1289 = vpack.c.b16 %v1077, %v1073
    %v1290 = vpack.c.b16 %v1078, %v1074
    %v1291 = vpack.c.b16 %v1079, %v1075
    %v1292 = vpack.c.b16 %v1084, %v1080
    %v1293 = vpack.c.b16 %v1085, %v1081
    %v1294 = vpack.c.b16 %v1086, %v1082
    %v1295 = vpack.c.b16 %v1087, %v1083
    %v1296 = vpack.c.b16 %v1092, %v1088
    %v1297 = vpack.c.b16 %v1093, %v1089
    %v1298 = vpack.c.b16 %v1094, %v1090
    %v1299 = vpack.c.b16 %v1095, %v1091
    %v1300 = vpack.c.b16 %v1100, %v1096
    %v1301 = vpack.c.b16 %v1101, %v1097
    %v1302 = vpack.c.b16 %v1102, %v1098
    %v1303 = vpack.c.b16 %v1103, %v1099
    %v1304 = vpack.c.b16 %v1108, %v1104
    %v1305 = vpack.c.b16 %v1109, %v1105
    %v1306 = vpack.c.b16 %v1110, %v1106
    %v1307 = vpack.c.b16 %v1111, %v1107
    %v1308 = vpack.c.b16 %v1116, %v1112
    %v1309 = vpack.c.b16 %v1117, %v1113
    %v1310 = vpack.c.b16 %v1118, %v1114
    %v1311 = vpack.c.b16 %v1119, %v1115
    %v1312 = vpack.c.b16 %v1124, %v1120
    %v1313 = vpack.c.b16 %v1125, %v1121
    %v1314 = vpack.c.b16 %v1126, %v1122
    %v1315 = vpack.c.b16 %v1127, %v1123
    %v1316 = vpack.c.b16 %v1132, %v1128
    %v1317 = vpack.c.b16 %v1133, %v1129
    %v1318 = vpack.c.b16 %v1134, %v1130
    %v1319 = vpack.c.b16 %v1135, %v1131
    %v1320 = vpack.c.b16 %v1140, %v1136
    %v1321 = vpack.c.b16 %v1141, %v1137
    %v1322 = vpack.c.b16 %v1142, %v1138
    %v1323 = vpack.c.b16 %v1143, %v1139
    %v1324 = vpack.c.b16 %v1148, %v1144
    %v1325 = vpack.c.b16 %v1149, %v1145
    %v1326 = vpack.c.b16 %v1150, %v1146
    %v1327 = vpack.c.b16 %v1151, %v1147
    %v1328 = vpack.c.b16 %v1156, %v1152
    %v1329 = vpack.c.b16 %v1157, %v1153
    %v1330 = vpack.c.b16 %v1158, %v1154
    %v1331 = vpack.c.b16 %v1159, %v1155
    %v1332 = vpack.c.b16 %v1164, %v1160
    %v1333 = vpack.c.b16 %v1165, %v1161
    %v1334 = vpack.c.b16 %v1166, %v1162
    %v1335 = vpack.c.b16 %v1167, %v1163
    %v1336 = vpack.c.b16 %v1172, %v1168
    %v1337 = vpack.c.b16 %v1173, %v1169
    %v1338 = vpack.c.b16 %v1174, %v1170
    %v1339 = vpack.c.b16 %v1175, %v1171
    %v1340 = vpack.c.b16 %v1180, %v1176
    %v1341 = vpack.c.b16 %v1181, %v1177
    %v1342 = vpack.c.b16 %v1182, %v1178
    %v1343 = vpack.c.b16 %v1183, %v1179
    %v1344 = vpack.c.b16 %v1188, %v1184
    %v1345 = vpack.c.b16 %v1189, %v1185
    %v1346 = vpack.c.b16 %v1190, %v1186
    %v1347 = vpack.c.b16 %v1191, %v1187
    %v1348 = vpack.c.b16 %v1196, %v1192
    %v1349 = vpack.c.b16 %v1197, %v1193
    %v1350 = vpack.c.b16 %v1198, %v1194
    %v1351 = vpack.c.b16 %v1199, %v1195
    %v1352 = vpack.c.b16 %v1204, %v1200
    %v1353 = vpack.c.b16 %v1205, %v1201
    %v1354 = vpack.c.b16 %v1206, %v1202
    %v1355 = vpack.c.b16 %v1207, %v1203
    %v1356 = vpack.c.b16 %v1212, %v1208
    %v1357 = vpack.c.b16 %v1213, %v1209
    %v1358 = vpack.c.b16 %v1214, %v1210
    %v1359 = vpack.c.b16 %v1215, %v1211
    %v1360 = vpack.c.b16 %v1220, %v1216
    %v1361 = vpack.c.b16 %v1221, %v1217
    %v1362 = vpack.c.b16 %v1222, %v1218
    %v1363 = vpack.c.b16 %v1223, %v1219
    %v1364 = vpack.c.b16 %v1228, %v1224
    %v1365 = vpack.c.b16 %v1229, %v1225
    %v1366 = vpack.c.b16 %v1230, %v1226
    %v1367 = vpack.c.b16 %v1231, %v1227
    %v1368 = vpack.c.b16 %v1236, %v1232
    %v1369 = vpack.c.b16 %v1237, %v1233
    %v1370 = vpack.c.b16 %v1238, %v1234
    %v1371 = vpack.c.b16 %v1239, %v1235
    %v1372 = vpack.c.b16 %v1244, %v1240
    %v1373 = vpack.c.b16 %v1245, %v1241
    %v1374 = vpack.c.b16 %v1246, %v1242
    %v1375 = vpack.c.b16 %v1247, %v1243
    %1504 = vmatprep.subr.bf16.mxu0 %v1277
    %1505 = vmatpush1.bf16.msra.mxu0 %v1276
    %1506 = vmatprep.subr.bf16.mxu0 %v1273
    %1507 = vmatpush1.bf16.msra.mxu0 %v1272
    %1508 = vmatprep.subr.bf16.mxu0 %v1269
    %1509 = vmatpush1.bf16.msra.mxu0 %v1268
    %1510 = vmatprep.subr.bf16.mxu0 %v1265
    %1511 = vmatpush1.bf16.msra.mxu0 %v1264
    %1512 = vmatprep.subr.bf16.mxu0 %v1261
    %1513 = vmatpush1.bf16.msra.mxu0 %v1260
    %1514 = vmatprep.subr.bf16.mxu0 %v1257
    %1515 = vmatpush1.bf16.msra.mxu0 %v1256
    %1516 = vmatprep.subr.bf16.mxu0 %v1253
    %1517 = vmatpush1.bf16.msra.mxu0 %v1252
    %1518 = vmatprep.subr.bf16.mxu0 %v1249
    %1519 = vmatpush1.bf16.msra.mxu0 %v1248
    %1520 = vmatprep.subr.bf16.mxu0 %v1309
    %1521 = vmatpush2.bf16.msra.mxu0 %v1308
    %1522 = vmatprep.subr.bf16.mxu0 %v1305
    %1523 = vmatpush2.bf16.msra.mxu0 %v1304
    %1524 = vmatprep.subr.bf16.mxu0 %v1301
    %1525 = vmatpush2.bf16.msra.mxu0 %v1300
    %1526 = vmatprep.subr.bf16.mxu0 %v1297
    %1527 = vmatpush2.bf16.msra.mxu0 %v1296
    %1528 = vmatprep.subr.bf16.mxu0 %v1293
    %1529 = vmatpush2.bf16.msra.mxu0 %v1292
    %1530 = vmatprep.subr.bf16.mxu0 %v1289
    %1531 = vmatpush2.bf16.msra.mxu0 %v1288
    %1532 = vmatprep.subr.bf16.mxu0 %v1285
    %1533 = vmatpush2.bf16.msra.mxu0 %v1284
    %1534 = vmatprep.subr.bf16.mxu0 %v1281
    %1535 = vmatpush2.bf16.msra.mxu0 %v1280
    %1536 = vmatprep.mubr.bf16.mxu0 %v683
    %1537 = vmatmul.mubr.bf16.gmra.mxu0 %v682
    %v1538 = vpop.f32.mrf.mxu0
    %v1539 = vadd.f32 %v847, %v1538
    %v1540 = vpop.f32.mrf.mxu0
    %v1541 = vadd.f32 %v851, %v1540
    %v1542 = vpop.f32.mrf.mxu0
    %v1543 = vadd.f32 %v847, %v1542
    %v1544 = vpop.f32.mrf.mxu0
    %v1545 = vadd.f32 %v851, %v1544
    %1546 = vmatprep.mubr.bf16.mxu0 %v687
    %1547 = vmatmul.mubr.bf16.gmra.mxu0 %v686
    %v1548 = vpop.f32.mrf.mxu0
    %v1549 = vadd.f32 %v847, %v1548
    %v1550 = vpop.f32.mrf.mxu0
    %v1551 = vadd.f32 %v851, %v1550
    %v1552 = vpop.f32.mrf.mxu0
    %v1553 = vadd.f32 %v847, %v1552
    %v1554 = vpop.f32.mrf.mxu0
    %v1555 = vadd.f32 %v851, %v1554
    %1556 = vmatprep.mubr.bf16.mxu0 %v691
    %1557 = vmatmul.mubr.bf16.gmra.mxu0 %v690
    %v1558 = vpop.f32.mrf.mxu0
    %v1559 = vadd.f32 %v847, %v1558
    %v1560 = vpop.f32.mrf.mxu0
    %v1561 = vadd.f32 %v851, %v1560
    %v1562 = vpop.f32.mrf.mxu0
    %v1563 = vadd.f32 %v847, %v1562
    %v1564 = vpop.f32.mrf.mxu0
    %v1565 = vadd.f32 %v851, %v1564
    %1566 = vmatprep.mubr.bf16.mxu0 %v695
    %1567 = vmatmul.mubr.bf16.gmra.mxu0 %v694
    %v1568 = vpop.f32.mrf.mxu0
    %v1569 = vadd.f32 %v847, %v1568
    %v1570 = vpop.f32.mrf.mxu0
    %v1571 = vadd.f32 %v851, %v1570
    %v1572 = vpop.f32.mrf.mxu0
    %v1573 = vadd.f32 %v847, %v1572
    %v1574 = vpop.f32.mrf.mxu0
    %v1575 = vadd.f32 %v851, %v1574
    %1576 = vmatprep.mubr.bf16.mxu0 %v699
    %1577 = vmatmul.mubr.bf16.gmra.mxu0 %v698
    %v1578 = vpop.f32.mrf.mxu0
    %v1579 = vadd.f32 %v847, %v1578
    %v1580 = vpop.f32.mrf.mxu0
    %v1581 = vadd.f32 %v851, %v1580
    %v1582 = vpop.f32.mrf.mxu0
    %v1583 = vadd.f32 %v847, %v1582
    %v1584 = vpop.f32.mrf.mxu0
    %v1585 = vadd.f32 %v851, %v1584
    %1586 = vmatprep.mubr.bf16.mxu0 %v703
    %1587 = vmatmul.mubr.bf16.gmra.mxu0 %v702
    %v1588 = vpop.f32.mrf.mxu0
    %v1589 = vadd.f32 %v847, %v1588
    %v1590 = vpop.f32.mrf.mxu0
    %v1591 = vadd.f32 %v851, %v1590
    %v1592 = vpop.f32.mrf.mxu0
    %v1593 = vadd.f32 %v847, %v1592
    %v1594 = vpop.f32.mrf.mxu0
    %v1595 = vadd.f32 %v851, %v1594
    %1596 = vmatprep.mubr.bf16.mxu0 %v707
    %1597 = vmatmul.mubr.bf16.gmra.mxu0 %v706
    %v1598 = vpop.f32.mrf.mxu0
    %v1599 = vadd.f32 %v847, %v1598
    %v1600 = vpop.f32.mrf.mxu0
    %v1601 = vadd.f32 %v851, %v1600
    %v1602 = vpop.f32.mrf.mxu0
    %v1603 = vadd.f32 %v847, %v1602
    %v1604 = vpop.f32.mrf.mxu0
    %v1605 = vadd.f32 %v851, %v1604
    %1606 = vmatprep.mubr.bf16.mxu0 %v711
    %1607 = vmatmul.mubr.bf16.gmra.mxu0 %v710
    %v1608 = vpop.f32.mrf.mxu0
    %v1609 = vadd.f32 %v847, %v1608
    %v1610 = vpop.f32.mrf.mxu0
    %v1611 = vadd.f32 %v851, %v1610
    %v1612 = vpop.f32.mrf.mxu0
    %v1613 = vadd.f32 %v847, %v1612
    %v1614 = vpop.f32.mrf.mxu0
    %v1615 = vadd.f32 %v851, %v1614
    %1616 = vdwg.mxu0
    %1617 = vmatprep.subr.bf16.mxu0 %v1341
    %1618 = vmatpush1.bf16.msra.mxu0 %v1340
    %1619 = vmatprep.subr.bf16.mxu0 %v1337
    %1620 = vmatpush1.bf16.msra.mxu0 %v1336
    %1621 = vmatprep.subr.bf16.mxu0 %v1333
    %1622 = vmatpush1.bf16.msra.mxu0 %v1332
    %1623 = vmatprep.subr.bf16.mxu0 %v1329
    %1624 = vmatpush1.bf16.msra.mxu0 %v1328
    %1625 = vmatprep.subr.bf16.mxu0 %v1325
    %1626 = vmatpush1.bf16.msra.mxu0 %v1324
    %1627 = vmatprep.subr.bf16.mxu0 %v1321
    %1628 = vmatpush1.bf16.msra.mxu0 %v1320
    %1629 = vmatprep.subr.bf16.mxu0 %v1317
    %1630 = vmatpush1.bf16.msra.mxu0 %v1316
    %1631 = vmatprep.subr.bf16.mxu0 %v1313
    %1632 = vmatpush1.bf16.msra.mxu0 %v1312
    %1633 = vmatprep.subr.bf16.mxu0 %v1373
    %1634 = vmatpush2.bf16.msra.mxu0 %v1372
    %1635 = vmatprep.subr.bf16.mxu0 %v1369
    %1636 = vmatpush2.bf16.msra.mxu0 %v1368
    %1637 = vmatprep.subr.bf16.mxu0 %v1365
    %1638 = vmatpush2.bf16.msra.mxu0 %v1364
    %1639 = vmatprep.subr.bf16.mxu0 %v1361
    %1640 = vmatpush2.bf16.msra.mxu0 %v1360
    %1641 = vmatprep.subr.bf16.mxu0 %v1357
    %1642 = vmatpush2.bf16.msra.mxu0 %v1356
    %1643 = vmatprep.subr.bf16.mxu0 %v1353
    %1644 = vmatpush2.bf16.msra.mxu0 %v1352
    %1645 = vmatprep.subr.bf16.mxu0 %v1349
    %1646 = vmatpush2.bf16.msra.mxu0 %v1348
    %1647 = vmatprep.subr.bf16.mxu0 %v1345
    %1648 = vmatpush2.bf16.msra.mxu0 %v1344
    %1649 = vmatprep.mubr.bf16.mxu0 %v685
    %1650 = vmatmul.mubr.bf16.gmra.mxu0 %v684
    %v1651 = vpop.f32.mrf.mxu0
    %v1652 = vadd.f32 %v1539, %v1651
    %v1653 = vpop.f32.mrf.mxu0
    %v1654 = vadd.f32 %v1541, %v1653
    %v1655 = vpop.f32.mrf.mxu0
    %v1656 = vadd.f32 %v1543, %v1655
    %v1657 = vpop.f32.mrf.mxu0
    %v1658 = vadd.f32 %v1545, %v1657
    %1659 = vmatprep.mubr.bf16.mxu0 %v689
    %1660 = vmatmul.mubr.bf16.gmra.mxu0 %v688
    %v1661 = vpop.f32.mrf.mxu0
    %v1662 = vadd.f32 %v1549, %v1661
    %v1663 = vpop.f32.mrf.mxu0
    %v1664 = vadd.f32 %v1551, %v1663
    %v1665 = vpop.f32.mrf.mxu0
    %v1666 = vadd.f32 %v1553, %v1665
    %v1667 = vpop.f32.mrf.mxu0
    %v1668 = vadd.f32 %v1555, %v1667
    %1669 = vmatprep.mubr.bf16.mxu0 %v693
    %1670 = vmatmul.mubr.bf16.gmra.mxu0 %v692
    %v1671 = vpop.f32.mrf.mxu0
    %v1672 = vadd.f32 %v1559, %v1671
    %v1673 = vpop.f32.mrf.mxu0
    %v1674 = vadd.f32 %v1561, %v1673
    %v1675 = vpop.f32.mrf.mxu0
    %v1676 = vadd.f32 %v1563, %v1675
    %v1677 = vpop.f32.mrf.mxu0
    %v1678 = vadd.f32 %v1565, %v1677
    %1679 = vmatprep.mubr.bf16.mxu0 %v697
    %1680 = vmatmul.mubr.bf16.gmra.mxu0 %v696
    %v1681 = vpop.f32.mrf.mxu0
    %v1682 = vadd.f32 %v1569, %v1681
    %v1683 = vpop.f32.mrf.mxu0
    %v1684 = vadd.f32 %v1571, %v1683
    %v1685 = vpop.f32.mrf.mxu0
    %v1686 = vadd.f32 %v1573, %v1685
    %v1687 = vpop.f32.mrf.mxu0
    %v1688 = vadd.f32 %v1575, %v1687
    %1689 = vmatprep.mubr.bf16.mxu0 %v701
    %1690 = vmatmul.mubr.bf16.gmra.mxu0 %v700
    %v1691 = vpop.f32.mrf.mxu0
    %v1692 = vadd.f32 %v1579, %v1691
    %v1693 = vpop.f32.mrf.mxu0
    %v1694 = vadd.f32 %v1581, %v1693
    %v1695 = vpop.f32.mrf.mxu0
    %v1696 = vadd.f32 %v1583, %v1695
    %v1697 = vpop.f32.mrf.mxu0
    %v1698 = vadd.f32 %v1585, %v1697
    %1699 = vmatprep.mubr.bf16.mxu0 %v705
    %1700 = vmatmul.mubr.bf16.gmra.mxu0 %v704
    %v1701 = vpop.f32.mrf.mxu0
    %v1702 = vadd.f32 %v1589, %v1701
    %v1703 = vpop.f32.mrf.mxu0
    %v1704 = vadd.f32 %v1591, %v1703
    %v1705 = vpop.f32.mrf.mxu0
    %v1706 = vadd.f32 %v1593, %v1705
    %v1707 = vpop.f32.mrf.mxu0
    %v1708 = vadd.f32 %v1595, %v1707
    %1709 = vmatprep.mubr.bf16.mxu0 %v709
    %1710 = vmatmul.mubr.bf16.gmra.mxu0 %v708
    %v1711 = vpop.f32.mrf.mxu0
    %v1712 = vadd.f32 %v1599, %v1711
    %v1713 = vpop.f32.mrf.mxu0
    %v1714 = vadd.f32 %v1601, %v1713
    %v1715 = vpop.f32.mrf.mxu0
    %v1716 = vadd.f32 %v1603, %v1715
    %v1717 = vpop.f32.mrf.mxu0
    %v1718 = vadd.f32 %v1605, %v1717
    %1719 = vmatprep.mubr.bf16.mxu0 %v713
    %1720 = vmatmul.mubr.bf16.gmra.mxu0 %v712
    %v1721 = vpop.f32.mrf.mxu0
    %v1722 = vadd.f32 %v1609, %v1721
    %v1723 = vpop.f32.mrf.mxu0
    %v1724 = vadd.f32 %v1611, %v1723
    %v1725 = vpop.f32.mrf.mxu0
    %v1726 = vadd.f32 %v1613, %v1725
    %v1727 = vpop.f32.mrf.mxu0
    %v1728 = vadd.f32 %v1615, %v1727
    %1729 = vdwg.mxu0
    %1730 = vmatprep.subr.bf16.mxu0 %v1279
    %1731 = vmatpush1.bf16.msra.mxu0 %v1278
    %1732 = vmatprep.subr.bf16.mxu0 %v1275
    %1733 = vmatpush1.bf16.msra.mxu0 %v1274
    %1734 = vmatprep.subr.bf16.mxu0 %v1271
    %1735 = vmatpush1.bf16.msra.mxu0 %v1270
    %1736 = vmatprep.subr.bf16.mxu0 %v1267
    %1737 = vmatpush1.bf16.msra.mxu0 %v1266
    %1738 = vmatprep.subr.bf16.mxu0 %v1263
    %1739 = vmatpush1.bf16.msra.mxu0 %v1262
    %1740 = vmatprep.subr.bf16.mxu0 %v1259
    %1741 = vmatpush1.bf16.msra.mxu0 %v1258
    %1742 = vmatprep.subr.bf16.mxu0 %v1255
    %1743 = vmatpush1.bf16.msra.mxu0 %v1254
    %1744 = vmatprep.subr.bf16.mxu0 %v1251
    %1745 = vmatpush1.bf16.msra.mxu0 %v1250
    %1746 = vmatprep.subr.bf16.mxu0 %v1311
    %1747 = vmatpush2.bf16.msra.mxu0 %v1310
    %1748 = vmatprep.subr.bf16.mxu0 %v1307
    %1749 = vmatpush2.bf16.msra.mxu0 %v1306
    %1750 = vmatprep.subr.bf16.mxu0 %v1303
    %1751 = vmatpush2.bf16.msra.mxu0 %v1302
    %1752 = vmatprep.subr.bf16.mxu0 %v1299
    %1753 = vmatpush2.bf16.msra.mxu0 %v1298
    %1754 = vmatprep.subr.bf16.mxu0 %v1295
    %1755 = vmatpush2.bf16.msra.mxu0 %v1294
    %1756 = vmatprep.subr.bf16.mxu0 %v1291
    %1757 = vmatpush2.bf16.msra.mxu0 %v1290
    %1758 = vmatprep.subr.bf16.mxu0 %v1287
    %1759 = vmatpush2.bf16.msra.mxu0 %v1286
    %1760 = vmatprep.subr.bf16.mxu0 %v1283
    %1761 = vmatpush2.bf16.msra.mxu0 %v1282
    %1762 = vmatprep.mubr.bf16.mxu0 %v683
    %1763 = vmatmul.mubr.bf16.gmra.mxu0 %v682
    %v1764 = vpop.f32.mrf.mxu0
    %v1765 = vadd.f32 %v855, %v1764
    %v1766 = vpop.f32.mrf.mxu0
    %v1767 = vadd.f32 %v859, %v1766
    %v1768 = vpop.f32.mrf.mxu0
    %v1769 = vadd.f32 %v855, %v1768
    %v1770 = vpop.f32.mrf.mxu0
    %v1771 = vadd.f32 %v859, %v1770
    %1772 = vmatprep.mubr.bf16.mxu0 %v687
    %1773 = vmatmul.mubr.bf16.gmra.mxu0 %v686
    %v1774 = vpop.f32.mrf.mxu0
    %v1775 = vadd.f32 %v855, %v1774
    %v1776 = vpop.f32.mrf.mxu0
    %v1777 = vadd.f32 %v859, %v1776
    %v1778 = vpop.f32.mrf.mxu0
    %v1779 = vadd.f32 %v855, %v1778
    %v1780 = vpop.f32.mrf.mxu0
    %v1781 = vadd.f32 %v859, %v1780
    %1782 = vmatprep.mubr.bf16.mxu0 %v691
    %1783 = vmatmul.mubr.bf16.gmra.mxu0 %v690
    %v1784 = vpop.f32.mrf.mxu0
    %v1785 = vadd.f32 %v855, %v1784
    %v1786 = vpop.f32.mrf.mxu0
    %v1787 = vadd.f32 %v859, %v1786
    %v1788 = vpop.f32.mrf.mxu0
    %v1789 = vadd.f32 %v855, %v1788
    %v1790 = vpop.f32.mrf.mxu0
    %v1791 = vadd.f32 %v859, %v1790
    %1792 = vmatprep.mubr.bf16.mxu0 %v695
    %1793 = vmatmul.mubr.bf16.gmra.mxu0 %v694
    %v1794 = vpop.f32.mrf.mxu0
    %v1795 = vadd.f32 %v855, %v1794
    %v1796 = vpop.f32.mrf.mxu0
    %v1797 = vadd.f32 %v859, %v1796
    %v1798 = vpop.f32.mrf.mxu0
    %v1799 = vadd.f32 %v855, %v1798
    %v1800 = vpop.f32.mrf.mxu0
    %v1801 = vadd.f32 %v859, %v1800
    %1802 = vmatprep.mubr.bf16.mxu0 %v699
    %1803 = vmatmul.mubr.bf16.gmra.mxu0 %v698
    %v1804 = vpop.f32.mrf.mxu0
    %v1805 = vadd.f32 %v855, %v1804
    %v1806 = vpop.f32.mrf.mxu0
    %v1807 = vadd.f32 %v859, %v1806
    %v1808 = vpop.f32.mrf.mxu0
    %v1809 = vadd.f32 %v855, %v1808
    %v1810 = vpop.f32.mrf.mxu0
    %v1811 = vadd.f32 %v859, %v1810
    %1812 = vmatprep.mubr.bf16.mxu0 %v703
    %1813 = vmatmul.mubr.bf16.gmra.mxu0 %v702
    %v1814 = vpop.f32.mrf.mxu0
    %v1815 = vadd.f32 %v855, %v1814
    %v1816 = vpop.f32.mrf.mxu0
    %v1817 = vadd.f32 %v859, %v1816
    %v1818 = vpop.f32.mrf.mxu0
    %v1819 = vadd.f32 %v855, %v1818
    %v1820 = vpop.f32.mrf.mxu0
    %v1821 = vadd.f32 %v859, %v1820
    %1822 = vmatprep.mubr.bf16.mxu0 %v707
    %1823 = vmatmul.mubr.bf16.gmra.mxu0 %v706
    %v1824 = vpop.f32.mrf.mxu0
    %v1825 = vadd.f32 %v855, %v1824
    %v1826 = vpop.f32.mrf.mxu0
    %v1827 = vadd.f32 %v859, %v1826
    %v1828 = vpop.f32.mrf.mxu0
    %v1829 = vadd.f32 %v855, %v1828
    %v1830 = vpop.f32.mrf.mxu0
    %v1831 = vadd.f32 %v859, %v1830
    %1832 = vmatprep.mubr.bf16.mxu0 %v711
    %1833 = vmatmul.mubr.bf16.gmra.mxu0 %v710
    %v1834 = vpop.f32.mrf.mxu0
    %v1835 = vadd.f32 %v855, %v1834
    %v1836 = vpop.f32.mrf.mxu0
    %v1837 = vadd.f32 %v859, %v1836
    %v1838 = vpop.f32.mrf.mxu0
    %v1839 = vadd.f32 %v855, %v1838
    %v1840 = vpop.f32.mrf.mxu0
    %v1841 = vadd.f32 %v859, %v1840
    %1842 = vdwg.mxu0
    %1843 = vmatprep.subr.bf16.mxu0 %v1343
    %1844 = vmatpush1.bf16.msra.mxu0 %v1342
    %1845 = vmatprep.subr.bf16.mxu0 %v1339
    %1846 = vmatpush1.bf16.msra.mxu0 %v1338
    %1847 = vmatprep.subr.bf16.mxu0 %v1335
    %1848 = vmatpush1.bf16.msra.mxu0 %v1334
    %1849 = vmatprep.subr.bf16.mxu0 %v1331
    %1850 = vmatpush1.bf16.msra.mxu0 %v1330
    %1851 = vmatprep.subr.bf16.mxu0 %v1327
    %1852 = vmatpush1.bf16.msra.mxu0 %v1326
    %1853 = vmatprep.subr.bf16.mxu0 %v1323
    %1854 = vmatpush1.bf16.msra.mxu0 %v1322
    %1855 = vmatprep.subr.bf16.mxu0 %v1319
    %1856 = vmatpush1.bf16.msra.mxu0 %v1318
    %1857 = vmatprep.subr.bf16.mxu0 %v1315
    %1858 = vmatpush1.bf16.msra.mxu0 %v1314
    %1859 = vmatprep.subr.bf16.mxu0 %v1375
    %1860 = vmatpush2.bf16.msra.mxu0 %v1374
    %1861 = vmatprep.subr.bf16.mxu0 %v1371
    %1862 = vmatpush2.bf16.msra.mxu0 %v1370
    %1863 = vmatprep.subr.bf16.mxu0 %v1367
    %1864 = vmatpush2.bf16.msra.mxu0 %v1366
    %1865 = vmatprep.subr.bf16.mxu0 %v1363
    %1866 = vmatpush2.bf16.msra.mxu0 %v1362
    %1867 = vmatprep.subr.bf16.mxu0 %v1359
    %1868 = vmatpush2.bf16.msra.mxu0 %v1358
    %1869 = vmatprep.subr.bf16.mxu0 %v1355
    %1870 = vmatpush2.bf16.msra.mxu0 %v1354
    %1871 = vmatprep.subr.bf16.mxu0 %v1351
    %1872 = vmatpush2.bf16.msra.mxu0 %v1350
    %1873 = vmatprep.subr.bf16.mxu0 %v1347
    %1874 = vmatpush2.bf16.msra.mxu0 %v1346
    %1875 = vmatprep.mubr.bf16.mxu0 %v685
    %1876 = vmatmul.mubr.bf16.gmra.mxu0 %v684
    %v1877 = vpop.f32.mrf.mxu0
    %v1878 = vadd.f32 %v1765, %v1877
    %v1879 = vpop.f32.mrf.mxu0
    %v1880 = vadd.f32 %v1767, %v1879
    %v1881 = vpop.f32.mrf.mxu0
    %v1882 = vadd.f32 %v1769, %v1881
    %v1883 = vpop.f32.mrf.mxu0
    %v1884 = vadd.f32 %v1771, %v1883
    %1885 = vmatprep.mubr.bf16.mxu0 %v689
    %1886 = vmatmul.mubr.bf16.gmra.mxu0 %v688
    %v1887 = vpop.f32.mrf.mxu0
    %v1888 = vadd.f32 %v1775, %v1887
    %v1889 = vpop.f32.mrf.mxu0
    %v1890 = vadd.f32 %v1777, %v1889
    %v1891 = vpop.f32.mrf.mxu0
    %v1892 = vadd.f32 %v1779, %v1891
    %v1893 = vpop.f32.mrf.mxu0
    %v1894 = vadd.f32 %v1781, %v1893
    %1895 = vmatprep.mubr.bf16.mxu0 %v693
    %1896 = vmatmul.mubr.bf16.gmra.mxu0 %v692
    %v1897 = vpop.f32.mrf.mxu0
    %v1898 = vadd.f32 %v1785, %v1897
    %v1899 = vpop.f32.mrf.mxu0
    %v1900 = vadd.f32 %v1787, %v1899
    %v1901 = vpop.f32.mrf.mxu0
    %v1902 = vadd.f32 %v1789, %v1901
    %v1903 = vpop.f32.mrf.mxu0
    %v1904 = vadd.f32 %v1791, %v1903
    %1905 = vmatprep.mubr.bf16.mxu0 %v697
    %1906 = vmatmul.mubr.bf16.gmra.mxu0 %v696
    %v1907 = vpop.f32.mrf.mxu0
    %v1908 = vadd.f32 %v1795, %v1907
    %v1909 = vpop.f32.mrf.mxu0
    %v1910 = vadd.f32 %v1797, %v1909
    %v1911 = vpop.f32.mrf.mxu0
    %v1912 = vadd.f32 %v1799, %v1911
    %v1913 = vpop.f32.mrf.mxu0
    %v1914 = vadd.f32 %v1801, %v1913
    %1915 = vmatprep.mubr.bf16.mxu0 %v701
    %1916 = vmatmul.mubr.bf16.gmra.mxu0 %v700
    %v1917 = vpop.f32.mrf.mxu0
    %v1918 = vadd.f32 %v1805, %v1917
    %v1919 = vpop.f32.mrf.mxu0
    %v1920 = vadd.f32 %v1807, %v1919
    %v1921 = vpop.f32.mrf.mxu0
    %v1922 = vadd.f32 %v1809, %v1921
    %v1923 = vpop.f32.mrf.mxu0
    %v1924 = vadd.f32 %v1811, %v1923
    %1925 = vmatprep.mubr.bf16.mxu0 %v705
    %1926 = vmatmul.mubr.bf16.gmra.mxu0 %v704
    %v1927 = vpop.f32.mrf.mxu0
    %v1928 = vadd.f32 %v1815, %v1927
    %v1929 = vpop.f32.mrf.mxu0
    %v1930 = vadd.f32 %v1817, %v1929
    %v1931 = vpop.f32.mrf.mxu0
    %v1932 = vadd.f32 %v1819, %v1931
    %v1933 = vpop.f32.mrf.mxu0
    %v1934 = vadd.f32 %v1821, %v1933
    %1935 = vmatprep.mubr.bf16.mxu0 %v709
    %1936 = vmatmul.mubr.bf16.gmra.mxu0 %v708
    %v1937 = vpop.f32.mrf.mxu0
    %v1938 = vadd.f32 %v1825, %v1937
    %v1939 = vpop.f32.mrf.mxu0
    %v1940 = vadd.f32 %v1827, %v1939
    %v1941 = vpop.f32.mrf.mxu0
    %v1942 = vadd.f32 %v1829, %v1941
    %v1943 = vpop.f32.mrf.mxu0
    %v1944 = vadd.f32 %v1831, %v1943
    %1945 = vmatprep.mubr.bf16.mxu0 %v713
    %1946 = vmatmul.mubr.bf16.gmra.mxu0 %v712
    %v1947 = vpop.f32.mrf.mxu0
    %v1948 = vadd.f32 %v1835, %v1947
    %v1949 = vpop.f32.mrf.mxu0
    %v1950 = vadd.f32 %v1837, %v1949
    %v1951 = vpop.f32.mrf.mxu0
    %v1952 = vadd.f32 %v1839, %v1951
    %v1953 = vpop.f32.mrf.mxu0
    %v1954 = vadd.f32 %v1841, %v1953
    %1955 = vdwg.mxu0
    %v1956 = vtanh.pop %v1652
    %v1957 = vtanh.pop %v1654
    %v1958 = vtanh.pop %v1878
    %v1959 = vtanh.pop %v1880
    %v1960 = vtanh.pop %v1656
    %v1961 = vtanh.pop %v1658
    %v1962 = vtanh.pop %v1882
    %v1963 = vtanh.pop %v1884
    %v1964 = vtanh.pop %v1662
    %v1965 = vtanh.pop %v1664
    %v1966 = vtanh.pop %v1888
    %v1967 = vtanh.pop %v1890
    %v1968 = vtanh.pop %v1666
    %v1969 = vtanh.pop %v1668
    %v1970 = vtanh.pop %v1892
    %v1971 = vtanh.pop %v1894
    %v1972 = vtanh.pop %v1672
    %v1973 = vtanh.pop %v1674
    %v1974 = vtanh.pop %v1898
    %v1975 = vtanh.pop %v1900
    %v1976 = vtanh.pop %v1676
    %v1977 = vtanh.pop %v1678
    %v1978 = vtanh.pop %v1902
    %v1979 = vtanh.pop %v1904
    %v1980 = vtanh.pop %v1682
    %v1981 = vtanh.pop %v1684
    %v1982 = vtanh.pop %v1908
    %v1983 = vtanh.pop %v1910
    %v1984 = vtanh.pop %v1686
    %v1985 = vtanh.pop %v1688
    %v1986 = vtanh.pop %v1912
    %v1987 = vtanh.pop %v1914
    %v1988 = vtanh.pop %v1692
    %v1989 = vtanh.pop %v1694
    %v1990 = vtanh.pop %v1918
    %v1991 = vtanh.pop %v1920
    %v1992 = vtanh.pop %v1696
    %v1993 = vtanh.pop %v1698
    %v1994 = vtanh.pop %v1922
    %v1995 = vtanh.pop %v1924
    %v1996 = vtanh.pop %v1702
    %v1997 = vtanh.pop %v1704
    %v1998 = vtanh.pop %v1928
    %v1999 = vtanh.pop %v1930
    %v2000 = vtanh.pop %v1706
    %v2001 = vtanh.pop %v1708
    %v2002 = vtanh.pop %v1932
    %v2003 = vtanh.pop %v1934
    %v2004 = vtanh.pop %v1712
    %v2005 = vtanh.pop %v1714
    %v2006 = vtanh.pop %v1938
    %v2007 = vtanh.pop %v1940
    %v2008 = vtanh.pop %v1716
    %v2009 = vtanh.pop %v1718
    %v2010 = vtanh.pop %v1942
    %v2011 = vtanh.pop %v1944
    %v2012 = vtanh.pop %v1722
    %v2013 = vtanh.pop %v1724
    %v2014 = vtanh.pop %v1948
    %v2015 = vtanh.pop %v1950
    %v2016 = vtanh.pop %v1726
    %v2017 = vtanh.pop %v1728
    %v2018 = vtanh.pop %v1952
    %v2019 = vtanh.pop %v1954
    %v2020 = vpack.c.bf16 %v1960, %v1956
    %v2021 = vpack.c.bf16 %v1961, %v1957
    %v2022 = vpack.c.bf16 %v1962, %v1958
    %v2023 = vpack.c.bf16 %v1963, %v1959
    %v2024 = vpack.c.bf16 %v1968, %v1964
    %v2025 = vpack.c.bf16 %v1969, %v1965
    %v2026 = vpack.c.bf16 %v1970, %v1966
    %v2027 = vpack.c.bf16 %v1971, %v1967
    %v2028 = vpack.c.bf16 %v1976, %v1972
    %v2029 = vpack.c.bf16 %v1977, %v1973
    %v2030 = vpack.c.bf16 %v1978, %v1974
    %v2031 = vpack.c.bf16 %v1979, %v1975
    %v2032 = vpack.c.bf16 %v1984, %v1980
    %v2033 = vpack.c.bf16 %v1985, %v1981
    %v2034 = vpack.c.bf16 %v1986, %v1982
    %v2035 = vpack.c.bf16 %v1987, %v1983
    %v2036 = vpack.c.bf16 %v1992, %v1988
    %v2037 = vpack.c.bf16 %v1993, %v1989
    %v2038 = vpack.c.bf16 %v1994, %v1990
    %v2039 = vpack.c.bf16 %v1995, %v1991
    %v2040 = vpack.c.bf16 %v2000, %v1996
    %v2041 = vpack.c.bf16 %v2001, %v1997
    %v2042 = vpack.c.bf16 %v2002, %v1998
    %v2043 = vpack.c.bf16 %v2003, %v1999
    %v2044 = vpack.c.bf16 %v2008, %v2004
    %v2045 = vpack.c.bf16 %v2009, %v2005
    %v2046 = vpack.c.bf16 %v2010, %v2006
    %v2047 = vpack.c.bf16 %v2011, %v2007
    %v2048 = vpack.c.bf16 %v2016, %v2012
    %v2049 = vpack.c.bf16 %v2017, %v2013
    %v2050 = vpack.c.bf16 %v2018, %v2014
    %v2051 = vpack.c.bf16 %v2019, %v2015
    %v2052 = vld [vmem:[#allocation10] sm:$0xff]
    %v2053 = vld [vmem:[#allocation10 + $0x8] sm:$0xff]
    %v2054 = vld [vmem:[#allocation10 + $0x10] sm:$0xff]
    %v2055 = vld [vmem:[#allocation10 + $0x18] sm:$0xff]
    %v2056 = vld [vmem:[#allocation10 + $0x20] sm:$0xff]
    %v2057 = vld [vmem:[#allocation10 + $0x28] sm:$0xff]
    %v2058 = vld [vmem:[#allocation10 + $0x30] sm:$0xff]
    %v2059 = vld [vmem:[#allocation10 + $0x38] sm:$0xff]
    %v2060 = vld [vmem:[#allocation10 + $0x40] sm:$0xff]
    %v2061 = vld [vmem:[#allocation10 + $0x48] sm:$0xff]
    %v2062 = vld [vmem:[#allocation10 + $0x50] sm:$0xff]
    %v2063 = vld [vmem:[#allocation10 + $0x58] sm:$0xff]
    %v2064 = vld [vmem:[#allocation10 + $0x60] sm:$0xff]
    %v2065 = vld [vmem:[#allocation10 + $0x68] sm:$0xff]
    %v2066 = vld [vmem:[#allocation10 + $0x70] sm:$0xff]
    %v2067 = vld [vmem:[#allocation10 + $0x78] sm:$0xff]
    %v2068 = vld [vmem:[#allocation10 + $0x80] sm:$0xff]
    %v2069 = vld [vmem:[#allocation10 + $0x88] sm:$0xff]
    %v2070 = vld [vmem:[#allocation10 + $0x90] sm:$0xff]
    %v2071 = vld [vmem:[#allocation10 + $0x98] sm:$0xff]
    %v2072 = vld [vmem:[#allocation10 + $0xa0] sm:$0xff]
    %v2073 = vld [vmem:[#allocation10 + $0xa8] sm:$0xff]
    %v2074 = vld [vmem:[#allocation10 + $0xb0] sm:$0xff]
    %v2075 = vld [vmem:[#allocation10 + $0xb8] sm:$0xff]
    %v2076 = vld [vmem:[#allocation10 + $0xc0] sm:$0xff]
    %v2077 = vld [vmem:[#allocation10 + $0xc8] sm:$0xff]
    %v2078 = vld [vmem:[#allocation10 + $0xd0] sm:$0xff]
    %v2079 = vld [vmem:[#allocation10 + $0xd8] sm:$0xff]
    %v2080 = vld [vmem:[#allocation10 + $0xe0] sm:$0xff]
    %v2081 = vld [vmem:[#allocation10 + $0xe8] sm:$0xff]
    %v2082 = vld [vmem:[#allocation10 + $0xf0] sm:$0xff]
    %v2083 = vld [vmem:[#allocation10 + $0xf8] sm:$0xff]
    %v2084 = vld [vmem:[#allocation10 + $0x100] sm:$0xff]
    %v2085 = vld [vmem:[#allocation10 + $0x108] sm:$0xff]
    %v2086 = vld [vmem:[#allocation10 + $0x110] sm:$0xff]
    %v2087 = vld [vmem:[#allocation10 + $0x118] sm:$0xff]
    %v2088 = vld [vmem:[#allocation10 + $0x120] sm:$0xff]
    %v2089 = vld [vmem:[#allocation10 + $0x128] sm:$0xff]
    %v2090 = vld [vmem:[#allocation10 + $0x130] sm:$0xff]
    %v2091 = vld [vmem:[#allocation10 + $0x138] sm:$0xff]
    %v2092 = vld [vmem:[#allocation10 + $0x140] sm:$0xff]
    %v2093 = vld [vmem:[#allocation10 + $0x148] sm:$0xff]
    %v2094 = vld [vmem:[#allocation10 + $0x150] sm:$0xff]
    %v2095 = vld [vmem:[#allocation10 + $0x158] sm:$0xff]
    %v2096 = vld [vmem:[#allocation10 + $0x160] sm:$0xff]
    %v2097 = vld [vmem:[#allocation10 + $0x168] sm:$0xff]
    %v2098 = vld [vmem:[#allocation10 + $0x170] sm:$0xff]
    %v2099 = vld [vmem:[#allocation10 + $0x178] sm:$0xff]
    %v2100 = vld [vmem:[#allocation10 + $0x180] sm:$0xff]
    %v2101 = vld [vmem:[#allocation10 + $0x188] sm:$0xff]
    %v2102 = vld [vmem:[#allocation10 + $0x190] sm:$0xff]
    %v2103 = vld [vmem:[#allocation10 + $0x198] sm:$0xff]
    %v2104 = vld [vmem:[#allocation10 + $0x1a0] sm:$0xff]
    %v2105 = vld [vmem:[#allocation10 + $0x1a8] sm:$0xff]
    %v2106 = vld [vmem:[#allocation10 + $0x1b0] sm:$0xff]
    %v2107 = vld [vmem:[#allocation10 + $0x1b8] sm:$0xff]
    %v2108 = vld [vmem:[#allocation10 + $0x1c0] sm:$0xff]
    %v2109 = vld [vmem:[#allocation10 + $0x1c8] sm:$0xff]
    %v2110 = vld [vmem:[#allocation10 + $0x1d0] sm:$0xff]
    %v2111 = vld [vmem:[#allocation10 + $0x1d8] sm:$0xff]
    %v2112 = vld [vmem:[#allocation10 + $0x1e0] sm:$0xff]
    %v2113 = vld [vmem:[#allocation10 + $0x1e8] sm:$0xff]
    %v2114 = vld [vmem:[#allocation10 + $0x1f0] sm:$0xff]
    %v2115 = vld [vmem:[#allocation10 + $0x1f8] sm:$0xff]
    %v2116 = vld [vmem:[#allocation10 + $0x200] sm:$0xff]
    %v2117 = vld [vmem:[#allocation10 + $0x208] sm:$0xff]
    %v2118 = vld [vmem:[#allocation10 + $0x210] sm:$0xff]
    %v2119 = vld [vmem:[#allocation10 + $0x218] sm:$0xff]
    %v2120 = vld [vmem:[#allocation10 + $0x220] sm:$0xff]
    %v2121 = vld [vmem:[#allocation10 + $0x228] sm:$0xff]
    %v2122 = vld [vmem:[#allocation10 + $0x230] sm:$0xff]
    %v2123 = vld [vmem:[#allocation10 + $0x238] sm:$0xff]
    %v2124 = vld [vmem:[#allocation10 + $0x240] sm:$0xff]
    %v2125 = vld [vmem:[#allocation10 + $0x248] sm:$0xff]
    %v2126 = vld [vmem:[#allocation10 + $0x250] sm:$0xff]
    %v2127 = vld [vmem:[#allocation10 + $0x258] sm:$0xff]
    %v2128 = vld [vmem:[#allocation10 + $0x260] sm:$0xff]
    %v2129 = vld [vmem:[#allocation10 + $0x268] sm:$0xff]
    %v2130 = vld [vmem:[#allocation10 + $0x270] sm:$0xff]
    %v2131 = vld [vmem:[#allocation10 + $0x278] sm:$0xff]
    %v2132 = vld [vmem:[#allocation10 + $0x280] sm:$0xff]
    %v2133 = vld [vmem:[#allocation10 + $0x288] sm:$0xff]
    %v2134 = vld [vmem:[#allocation10 + $0x290] sm:$0xff]
    %v2135 = vld [vmem:[#allocation10 + $0x298] sm:$0xff]
    %v2136 = vld [vmem:[#allocation10 + $0x2a0] sm:$0xff]
    %v2137 = vld [vmem:[#allocation10 + $0x2a8] sm:$0xff]
    %v2138 = vld [vmem:[#allocation10 + $0x2b0] sm:$0xff]
    %v2139 = vld [vmem:[#allocation10 + $0x2b8] sm:$0xff]
    %v2140 = vld [vmem:[#allocation10 + $0x2c0] sm:$0xff]
    %v2141 = vld [vmem:[#allocation10 + $0x2c8] sm:$0xff]
    %v2142 = vld [vmem:[#allocation10 + $0x2d0] sm:$0xff]
    %v2143 = vld [vmem:[#allocation10 + $0x2d8] sm:$0xff]
    %v2144 = vld [vmem:[#allocation10 + $0x2e0] sm:$0xff]
    %v2145 = vld [vmem:[#allocation10 + $0x2e8] sm:$0xff]
    %v2146 = vld [vmem:[#allocation10 + $0x2f0] sm:$0xff]
    %v2147 = vld [vmem:[#allocation10 + $0x2f8] sm:$0xff]
    %v2148 = vld [vmem:[#allocation10 + $0x300] sm:$0xff]
    %v2149 = vld [vmem:[#allocation10 + $0x308] sm:$0xff]
    %v2150 = vld [vmem:[#allocation10 + $0x310] sm:$0xff]
    %v2151 = vld [vmem:[#allocation10 + $0x318] sm:$0xff]
    %v2152 = vld [vmem:[#allocation10 + $0x320] sm:$0xff]
    %v2153 = vld [vmem:[#allocation10 + $0x328] sm:$0xff]
    %v2154 = vld [vmem:[#allocation10 + $0x330] sm:$0xff]
    %v2155 = vld [vmem:[#allocation10 + $0x338] sm:$0xff]
    %v2156 = vld [vmem:[#allocation10 + $0x340] sm:$0xff]
    %v2157 = vld [vmem:[#allocation10 + $0x348] sm:$0xff]
    %v2158 = vld [vmem:[#allocation10 + $0x350] sm:$0xff]
    %v2159 = vld [vmem:[#allocation10 + $0x358] sm:$0xff]
    %v2160 = vld [vmem:[#allocation10 + $0x360] sm:$0xff]
    %v2161 = vld [vmem:[#allocation10 + $0x368] sm:$0xff]
    %v2162 = vld [vmem:[#allocation10 + $0x370] sm:$0xff]
    %v2163 = vld [vmem:[#allocation10 + $0x378] sm:$0xff]
    %v2164 = vld [vmem:[#allocation10 + $0x380] sm:$0xff]
    %v2165 = vld [vmem:[#allocation10 + $0x388] sm:$0xff]
    %v2166 = vld [vmem:[#allocation10 + $0x390] sm:$0xff]
    %v2167 = vld [vmem:[#allocation10 + $0x398] sm:$0xff]
    %v2168 = vld [vmem:[#allocation10 + $0x3a0] sm:$0xff]
    %v2169 = vld [vmem:[#allocation10 + $0x3a8] sm:$0xff]
    %v2170 = vld [vmem:[#allocation10 + $0x3b0] sm:$0xff]
    %v2171 = vld [vmem:[#allocation10 + $0x3b8] sm:$0xff]
    %v2172 = vld [vmem:[#allocation10 + $0x3c0] sm:$0xff]
    %v2173 = vld [vmem:[#allocation10 + $0x3c8] sm:$0xff]
    %v2174 = vld [vmem:[#allocation10 + $0x3d0] sm:$0xff]
    %v2175 = vld [vmem:[#allocation10 + $0x3d8] sm:$0xff]
    %v2176 = vld [vmem:[#allocation10 + $0x3e0] sm:$0xff]
    %v2177 = vld [vmem:[#allocation10 + $0x3e8] sm:$0xff]
    %v2178 = vld [vmem:[#allocation10 + $0x3f0] sm:$0xff]
    %v2179 = vld [vmem:[#allocation10 + $0x3f8] sm:$0xff]
    %v2180 = vld [vmem:[%s6] sm:$0xf]
    %v2182 = vlaneseq
    %v2183 = vshrl.u32 %v2182, 7
    %v2184 = vsub.s32 0, %v2183
    %v2185 = vrot.slane %v2180, %v2184
    %v2186 = vlaneseq
    %v2187 = vshrl.u32 %v2186, 7
    %v2188 = vsub.s32 1, %v2187
    %v2189 = vrot.slane %v2180, %v2188
    %v2190 = vlaneseq
    %v2191 = vshrl.u32 %v2190, 7
    %v2192 = vsub.s32 2, %v2191
    %v2193 = vrot.slane %v2180, %v2192
    %v2194 = vlaneseq
    %v2195 = vshrl.u32 %v2194, 7
    %v2196 = vsub.s32 3, %v2195
    %v2197 = vrot.slane %v2180, %v2196
    %v2330 = vunpack.c.l.b16 %v2052
    %v2331 = vunpack.c.h.b16 %v2052
    %v2332 = vunpack.c.l.b16 %v2053
    %v2333 = vunpack.c.h.b16 %v2053
    %v2334 = vunpack.c.l.b16 %v2054
    %v2335 = vunpack.c.h.b16 %v2054
    %v2336 = vunpack.c.l.b16 %v2055
    %v2337 = vunpack.c.h.b16 %v2055
    %v2338 = vunpack.c.l.b16 %v2056
    %v2339 = vunpack.c.h.b16 %v2056
    %v2340 = vunpack.c.l.b16 %v2057
    %v2341 = vunpack.c.h.b16 %v2057
    %v2342 = vunpack.c.l.b16 %v2058
    %v2343 = vunpack.c.h.b16 %v2058
    %v2344 = vunpack.c.l.b16 %v2059
    %v2345 = vunpack.c.h.b16 %v2059
    %v2346 = vunpack.c.l.b16 %v2060
    %v2347 = vunpack.c.h.b16 %v2060
    %v2348 = vunpack.c.l.b16 %v2061
    %v2349 = vunpack.c.h.b16 %v2061
    %v2350 = vunpack.c.l.b16 %v2062
    %v2351 = vunpack.c.h.b16 %v2062
    %v2352 = vunpack.c.l.b16 %v2063
    %v2353 = vunpack.c.h.b16 %v2063
    %v2354 = vunpack.c.l.b16 %v2064
    %v2355 = vunpack.c.h.b16 %v2064
    %v2356 = vunpack.c.l.b16 %v2065
    %v2357 = vunpack.c.h.b16 %v2065
    %v2358 = vunpack.c.l.b16 %v2066
    %v2359 = vunpack.c.h.b16 %v2066
    %v2360 = vunpack.c.l.b16 %v2067
    %v2361 = vunpack.c.h.b16 %v2067
    %v2362 = vunpack.c.l.b16 %v2068
    %v2363 = vunpack.c.h.b16 %v2068
    %v2364 = vunpack.c.l.b16 %v2069
    %v2365 = vunpack.c.h.b16 %v2069
    %v2366 = vunpack.c.l.b16 %v2070
    %v2367 = vunpack.c.h.b16 %v2070
    %v2368 = vunpack.c.l.b16 %v2071
    %v2369 = vunpack.c.h.b16 %v2071
    %v2370 = vunpack.c.l.b16 %v2072
    %v2371 = vunpack.c.h.b16 %v2072
    %v2372 = vunpack.c.l.b16 %v2073
    %v2373 = vunpack.c.h.b16 %v2073
    %v2374 = vunpack.c.l.b16 %v2074
    %v2375 = vunpack.c.h.b16 %v2074
    %v2376 = vunpack.c.l.b16 %v2075
    %v2377 = vunpack.c.h.b16 %v2075
    %v2378 = vunpack.c.l.b16 %v2076
    %v2379 = vunpack.c.h.b16 %v2076
    %v2380 = vunpack.c.l.b16 %v2077
    %v2381 = vunpack.c.h.b16 %v2077
    %v2382 = vunpack.c.l.b16 %v2078
    %v2383 = vunpack.c.h.b16 %v2078
    %v2384 = vunpack.c.l.b16 %v2079
    %v2385 = vunpack.c.h.b16 %v2079
    %v2386 = vunpack.c.l.b16 %v2080
    %v2387 = vunpack.c.h.b16 %v2080
    %v2388 = vunpack.c.l.b16 %v2081
    %v2389 = vunpack.c.h.b16 %v2081
    %v2390 = vunpack.c.l.b16 %v2082
    %v2391 = vunpack.c.h.b16 %v2082
    %v2392 = vunpack.c.l.b16 %v2083
    %v2393 = vunpack.c.h.b16 %v2083
    %v2394 = vunpack.c.l.b16 %v2084
    %v2395 = vunpack.c.h.b16 %v2084
    %v2396 = vunpack.c.l.b16 %v2085
    %v2397 = vunpack.c.h.b16 %v2085
    %v2398 = vunpack.c.l.b16 %v2086
    %v2399 = vunpack.c.h.b16 %v2086
    %v2400 = vunpack.c.l.b16 %v2087
    %v2401 = vunpack.c.h.b16 %v2087
    %v2402 = vunpack.c.l.b16 %v2088
    %v2403 = vunpack.c.h.b16 %v2088
    %v2404 = vunpack.c.l.b16 %v2089
    %v2405 = vunpack.c.h.b16 %v2089
    %v2406 = vunpack.c.l.b16 %v2090
    %v2407 = vunpack.c.h.b16 %v2090
    %v2408 = vunpack.c.l.b16 %v2091
    %v2409 = vunpack.c.h.b16 %v2091
    %v2410 = vunpack.c.l.b16 %v2092
    %v2411 = vunpack.c.h.b16 %v2092
    %v2412 = vunpack.c.l.b16 %v2093
    %v2413 = vunpack.c.h.b16 %v2093
    %v2414 = vunpack.c.l.b16 %v2094
    %v2415 = vunpack.c.h.b16 %v2094
    %v2416 = vunpack.c.l.b16 %v2095
    %v2417 = vunpack.c.h.b16 %v2095
    %v2418 = vunpack.c.l.b16 %v2096
    %v2419 = vunpack.c.h.b16 %v2096
    %v2420 = vunpack.c.l.b16 %v2097
    %v2421 = vunpack.c.h.b16 %v2097
    %v2422 = vunpack.c.l.b16 %v2098
    %v2423 = vunpack.c.h.b16 %v2098
    %v2424 = vunpack.c.l.b16 %v2099
    %v2425 = vunpack.c.h.b16 %v2099
    %v2426 = vunpack.c.l.b16 %v2100
    %v2427 = vunpack.c.h.b16 %v2100
    %v2428 = vunpack.c.l.b16 %v2101
    %v2429 = vunpack.c.h.b16 %v2101
    %v2430 = vunpack.c.l.b16 %v2102
    %v2431 = vunpack.c.h.b16 %v2102
    %v2432 = vunpack.c.l.b16 %v2103
    %v2433 = vunpack.c.h.b16 %v2103
    %v2434 = vunpack.c.l.b16 %v2104
    %v2435 = vunpack.c.h.b16 %v2104
    %v2436 = vunpack.c.l.b16 %v2105
    %v2437 = vunpack.c.h.b16 %v2105
    %v2438 = vunpack.c.l.b16 %v2106
    %v2439 = vunpack.c.h.b16 %v2106
    %v2440 = vunpack.c.l.b16 %v2107
    %v2441 = vunpack.c.h.b16 %v2107
    %v2442 = vunpack.c.l.b16 %v2108
    %v2443 = vunpack.c.h.b16 %v2108
    %v2444 = vunpack.c.l.b16 %v2109
    %v2445 = vunpack.c.h.b16 %v2109
    %v2446 = vunpack.c.l.b16 %v2110
    %v2447 = vunpack.c.h.b16 %v2110
    %v2448 = vunpack.c.l.b16 %v2111
    %v2449 = vunpack.c.h.b16 %v2111
    %v2450 = vunpack.c.l.b16 %v2112
    %v2451 = vunpack.c.h.b16 %v2112
    %v2452 = vunpack.c.l.b16 %v2113
    %v2453 = vunpack.c.h.b16 %v2113
    %v2454 = vunpack.c.l.b16 %v2114
    %v2455 = vunpack.c.h.b16 %v2114
    %v2456 = vunpack.c.l.b16 %v2115
    %v2457 = vunpack.c.h.b16 %v2115
    %v2458 = vunpack.c.l.b16 %v2116
    %v2459 = vunpack.c.h.b16 %v2116
    %v2460 = vunpack.c.l.b16 %v2117
    %v2461 = vunpack.c.h.b16 %v2117
    %v2462 = vunpack.c.l.b16 %v2118
    %v2463 = vunpack.c.h.b16 %v2118
    %v2464 = vunpack.c.l.b16 %v2119
    %v2465 = vunpack.c.h.b16 %v2119
    %v2466 = vunpack.c.l.b16 %v2120
    %v2467 = vunpack.c.h.b16 %v2120
    %v2468 = vunpack.c.l.b16 %v2121
    %v2469 = vunpack.c.h.b16 %v2121
    %v2470 = vunpack.c.l.b16 %v2122
    %v2471 = vunpack.c.h.b16 %v2122
    %v2472 = vunpack.c.l.b16 %v2123
    %v2473 = vunpack.c.h.b16 %v2123
    %v2474 = vunpack.c.l.b16 %v2124
    %v2475 = vunpack.c.h.b16 %v2124
    %v2476 = vunpack.c.l.b16 %v2125
    %v2477 = vunpack.c.h.b16 %v2125
    %v2478 = vunpack.c.l.b16 %v2126
    %v2479 = vunpack.c.h.b16 %v2126
    %v2480 = vunpack.c.l.b16 %v2127
    %v2481 = vunpack.c.h.b16 %v2127
    %v2482 = vunpack.c.l.b16 %v2128
    %v2483 = vunpack.c.h.b16 %v2128
    %v2484 = vunpack.c.l.b16 %v2129
    %v2485 = vunpack.c.h.b16 %v2129
    %v2486 = vunpack.c.l.b16 %v2130
    %v2487 = vunpack.c.h.b16 %v2130
    %v2488 = vunpack.c.l.b16 %v2131
    %v2489 = vunpack.c.h.b16 %v2131
    %v2490 = vunpack.c.l.b16 %v2132
    %v2491 = vunpack.c.h.b16 %v2132
    %v2492 = vunpack.c.l.b16 %v2133
    %v2493 = vunpack.c.h.b16 %v2133
    %v2494 = vunpack.c.l.b16 %v2134
    %v2495 = vunpack.c.h.b16 %v2134
    %v2496 = vunpack.c.l.b16 %v2135
    %v2497 = vunpack.c.h.b16 %v2135
    %v2498 = vunpack.c.l.b16 %v2136
    %v2499 = vunpack.c.h.b16 %v2136
    %v2500 = vunpack.c.l.b16 %v2137
    %v2501 = vunpack.c.h.b16 %v2137
    %v2502 = vunpack.c.l.b16 %v2138
    %v2503 = vunpack.c.h.b16 %v2138
    %v2504 = vunpack.c.l.b16 %v2139
    %v2505 = vunpack.c.h.b16 %v2139
    %v2506 = vunpack.c.l.b16 %v2140
    %v2507 = vunpack.c.h.b16 %v2140
    %v2508 = vunpack.c.l.b16 %v2141
    %v2509 = vunpack.c.h.b16 %v2141
    %v2510 = vunpack.c.l.b16 %v2142
    %v2511 = vunpack.c.h.b16 %v2142
    %v2512 = vunpack.c.l.b16 %v2143
    %v2513 = vunpack.c.h.b16 %v2143
    %v2514 = vunpack.c.l.b16 %v2144
    %v2515 = vunpack.c.h.b16 %v2144
    %v2516 = vunpack.c.l.b16 %v2145
    %v2517 = vunpack.c.h.b16 %v2145
    %v2518 = vunpack.c.l.b16 %v2146
    %v2519 = vunpack.c.h.b16 %v2146
    %v2520 = vunpack.c.l.b16 %v2147
    %v2521 = vunpack.c.h.b16 %v2147
    %v2522 = vunpack.c.l.b16 %v2148
    %v2523 = vunpack.c.h.b16 %v2148
    %v2524 = vunpack.c.l.b16 %v2149
    %v2525 = vunpack.c.h.b16 %v2149
    %v2526 = vunpack.c.l.b16 %v2150
    %v2527 = vunpack.c.h.b16 %v2150
    %v2528 = vunpack.c.l.b16 %v2151
    %v2529 = vunpack.c.h.b16 %v2151
    %v2530 = vunpack.c.l.b16 %v2152
    %v2531 = vunpack.c.h.b16 %v2152
    %v2532 = vunpack.c.l.b16 %v2153
    %v2533 = vunpack.c.h.b16 %v2153
    %v2534 = vunpack.c.l.b16 %v2154
    %v2535 = vunpack.c.h.b16 %v2154
    %v2536 = vunpack.c.l.b16 %v2155
    %v2537 = vunpack.c.h.b16 %v2155
    %v2538 = vunpack.c.l.b16 %v2156
    %v2539 = vunpack.c.h.b16 %v2156
    %v2540 = vunpack.c.l.b16 %v2157
    %v2541 = vunpack.c.h.b16 %v2157
    %v2542 = vunpack.c.l.b16 %v2158
    %v2543 = vunpack.c.h.b16 %v2158
    %v2544 = vunpack.c.l.b16 %v2159
    %v2545 = vunpack.c.h.b16 %v2159
    %v2546 = vunpack.c.l.b16 %v2160
    %v2547 = vunpack.c.h.b16 %v2160
    %v2548 = vunpack.c.l.b16 %v2161
    %v2549 = vunpack.c.h.b16 %v2161
    %v2550 = vunpack.c.l.b16 %v2162
    %v2551 = vunpack.c.h.b16 %v2162
    %v2552 = vunpack.c.l.b16 %v2163
    %v2553 = vunpack.c.h.b16 %v2163
    %v2554 = vunpack.c.l.b16 %v2164
    %v2555 = vunpack.c.h.b16 %v2164
    %v2556 = vunpack.c.l.b16 %v2165
    %v2557 = vunpack.c.h.b16 %v2165
    %v2558 = vunpack.c.l.b16 %v2166
    %v2559 = vunpack.c.h.b16 %v2166
    %v2560 = vunpack.c.l.b16 %v2167
    %v2561 = vunpack.c.h.b16 %v2167
    %v2562 = vunpack.c.l.b16 %v2168
    %v2563 = vunpack.c.h.b16 %v2168
    %v2564 = vunpack.c.l.b16 %v2169
    %v2565 = vunpack.c.h.b16 %v2169
    %v2566 = vunpack.c.l.b16 %v2170
    %v2567 = vunpack.c.h.b16 %v2170
    %v2568 = vunpack.c.l.b16 %v2171
    %v2569 = vunpack.c.h.b16 %v2171
    %v2570 = vunpack.c.l.b16 %v2172
    %v2571 = vunpack.c.h.b16 %v2172
    %v2572 = vunpack.c.l.b16 %v2173
    %v2573 = vunpack.c.h.b16 %v2173
    %v2574 = vunpack.c.l.b16 %v2174
    %v2575 = vunpack.c.h.b16 %v2174
    %v2576 = vunpack.c.l.b16 %v2175
    %v2577 = vunpack.c.h.b16 %v2175
    %v2578 = vunpack.c.l.b16 %v2176
    %v2579 = vunpack.c.h.b16 %v2176
    %v2580 = vunpack.c.l.b16 %v2177
    %v2581 = vunpack.c.h.b16 %v2177
    %v2582 = vunpack.c.l.b16 %v2178
    %v2583 = vunpack.c.h.b16 %v2178
    %v2584 = vunpack.c.l.b16 %v2179
    %v2585 = vunpack.c.h.b16 %v2179
    %v2586 = vpack.c.b16 %v2334, %v2330
    %v2587 = vpack.c.b16 %v2335, %v2331
    %v2588 = vpack.c.b16 %v2336, %v2332
    %v2589 = vpack.c.b16 %v2337, %v2333
    %v2590 = vpack.c.b16 %v2342, %v2338
    %v2591 = vpack.c.b16 %v2343, %v2339
    %v2592 = vpack.c.b16 %v2344, %v2340
    %v2593 = vpack.c.b16 %v2345, %v2341
    %v2594 = vpack.c.b16 %v2350, %v2346
    %v2595 = vpack.c.b16 %v2351, %v2347
    %v2596 = vpack.c.b16 %v2352, %v2348
    %v2597 = vpack.c.b16 %v2353, %v2349
    %v2598 = vpack.c.b16 %v2358, %v2354
    %v2599 = vpack.c.b16 %v2359, %v2355
    %v2600 = vpack.c.b16 %v2360, %v2356
    %v2601 = vpack.c.b16 %v2361, %v2357
    %v2602 = vpack.c.b16 %v2366, %v2362
    %v2603 = vpack.c.b16 %v2367, %v2363
    %v2604 = vpack.c.b16 %v2368, %v2364
    %v2605 = vpack.c.b16 %v2369, %v2365
    %v2606 = vpack.c.b16 %v2374, %v2370
    %v2607 = vpack.c.b16 %v2375, %v2371
    %v2608 = vpack.c.b16 %v2376, %v2372
    %v2609 = vpack.c.b16 %v2377, %v2373
    %v2610 = vpack.c.b16 %v2382, %v2378
    %v2611 = vpack.c.b16 %v2383, %v2379
    %v2612 = vpack.c.b16 %v2384, %v2380
    %v2613 = vpack.c.b16 %v2385, %v2381
    %v2614 = vpack.c.b16 %v2390, %v2386
    %v2615 = vpack.c.b16 %v2391, %v2387
    %v2616 = vpack.c.b16 %v2392, %v2388
    %v2617 = vpack.c.b16 %v2393, %v2389
    %v2618 = vpack.c.b16 %v2398, %v2394
    %v2619 = vpack.c.b16 %v2399, %v2395
    %v2620 = vpack.c.b16 %v2400, %v2396
    %v2621 = vpack.c.b16 %v2401, %v2397
    %v2622 = vpack.c.b16 %v2406, %v2402
    %v2623 = vpack.c.b16 %v2407, %v2403
    %v2624 = vpack.c.b16 %v2408, %v2404
    %v2625 = vpack.c.b16 %v2409, %v2405
    %v2626 = vpack.c.b16 %v2414, %v2410
    %v2627 = vpack.c.b16 %v2415, %v2411
    %v2628 = vpack.c.b16 %v2416, %v2412
    %v2629 = vpack.c.b16 %v2417, %v2413
    %v2630 = vpack.c.b16 %v2422, %v2418
    %v2631 = vpack.c.b16 %v2423, %v2419
    %v2632 = vpack.c.b16 %v2424, %v2420
    %v2633 = vpack.c.b16 %v2425, %v2421
    %v2634 = vpack.c.b16 %v2430, %v2426
    %v2635 = vpack.c.b16 %v2431, %v2427
    %v2636 = vpack.c.b16 %v2432, %v2428
    %v2637 = vpack.c.b16 %v2433, %v2429
    %v2638 = vpack.c.b16 %v2438, %v2434
    %v2639 = vpack.c.b16 %v2439, %v2435
    %v2640 = vpack.c.b16 %v2440, %v2436
    %v2641 = vpack.c.b16 %v2441, %v2437
    %v2642 = vpack.c.b16 %v2446, %v2442
    %v2643 = vpack.c.b16 %v2447, %v2443
    %v2644 = vpack.c.b16 %v2448, %v2444
    %v2645 = vpack.c.b16 %v2449, %v2445
    %v2646 = vpack.c.b16 %v2454, %v2450
    %v2647 = vpack.c.b16 %v2455, %v2451
    %v2648 = vpack.c.b16 %v2456, %v2452
    %v2649 = vpack.c.b16 %v2457, %v2453
    %v2650 = vpack.c.b16 %v2462, %v2458
    %v2651 = vpack.c.b16 %v2463, %v2459
    %v2652 = vpack.c.b16 %v2464, %v2460
    %v2653 = vpack.c.b16 %v2465, %v2461
    %v2654 = vpack.c.b16 %v2470, %v2466
    %v2655 = vpack.c.b16 %v2471, %v2467
    %v2656 = vpack.c.b16 %v2472, %v2468
    %v2657 = vpack.c.b16 %v2473, %v2469
    %v2658 = vpack.c.b16 %v2478, %v2474
    %v2659 = vpack.c.b16 %v2479, %v2475
    %v2660 = vpack.c.b16 %v2480, %v2476
    %v2661 = vpack.c.b16 %v2481, %v2477
    %v2662 = vpack.c.b16 %v2486, %v2482
    %v2663 = vpack.c.b16 %v2487, %v2483
    %v2664 = vpack.c.b16 %v2488, %v2484
    %v2665 = vpack.c.b16 %v2489, %v2485
    %v2666 = vpack.c.b16 %v2494, %v2490
    %v2667 = vpack.c.b16 %v2495, %v2491
    %v2668 = vpack.c.b16 %v2496, %v2492
    %v2669 = vpack.c.b16 %v2497, %v2493
    %v2670 = vpack.c.b16 %v2502, %v2498
    %v2671 = vpack.c.b16 %v2503, %v2499
    %v2672 = vpack.c.b16 %v2504, %v2500
    %v2673 = vpack.c.b16 %v2505, %v2501
    %v2674 = vpack.c.b16 %v2510, %v2506
    %v2675 = vpack.c.b16 %v2511, %v2507
    %v2676 = vpack.c.b16 %v2512, %v2508
    %v2677 = vpack.c.b16 %v2513, %v2509
    %v2678 = vpack.c.b16 %v2518, %v2514
    %v2679 = vpack.c.b16 %v2519, %v2515
    %v2680 = vpack.c.b16 %v2520, %v2516
    %v2681 = vpack.c.b16 %v2521, %v2517
    %v2682 = vpack.c.b16 %v2526, %v2522
    %v2683 = vpack.c.b16 %v2527, %v2523
    %v2684 = vpack.c.b16 %v2528, %v2524
    %v2685 = vpack.c.b16 %v2529, %v2525
    %v2686 = vpack.c.b16 %v2534, %v2530
    %v2687 = vpack.c.b16 %v2535, %v2531
    %v2688 = vpack.c.b16 %v2536, %v2532
    %v2689 = vpack.c.b16 %v2537, %v2533
    %v2690 = vpack.c.b16 %v2542, %v2538
    %v2691 = vpack.c.b16 %v2543, %v2539
    %v2692 = vpack.c.b16 %v2544, %v2540
    %v2693 = vpack.c.b16 %v2545, %v2541
    %v2694 = vpack.c.b16 %v2550, %v2546
    %v2695 = vpack.c.b16 %v2551, %v2547
    %v2696 = vpack.c.b16 %v2552, %v2548
    %v2697 = vpack.c.b16 %v2553, %v2549
    %v2698 = vpack.c.b16 %v2558, %v2554
    %v2699 = vpack.c.b16 %v2559, %v2555
    %v2700 = vpack.c.b16 %v2560, %v2556
    %v2701 = vpack.c.b16 %v2561, %v2557
    %v2702 = vpack.c.b16 %v2566, %v2562
    %v2703 = vpack.c.b16 %v2567, %v2563
    %v2704 = vpack.c.b16 %v2568, %v2564
    %v2705 = vpack.c.b16 %v2569, %v2565
    %v2706 = vpack.c.b16 %v2574, %v2570
    %v2707 = vpack.c.b16 %v2575, %v2571
    %v2708 = vpack.c.b16 %v2576, %v2572
    %v2709 = vpack.c.b16 %v2577, %v2573
    %v2710 = vpack.c.b16 %v2582, %v2578
    %v2711 = vpack.c.b16 %v2583, %v2579
    %v2712 = vpack.c.b16 %v2584, %v2580
    %v2713 = vpack.c.b16 %v2585, %v2581
    %2842 = vmatprep.subr.bf16.mxu0 %v2615
    %2843 = vmatpush1.bf16.msra.mxu0 %v2614
    %2844 = vmatprep.subr.bf16.mxu0 %v2611
    %2845 = vmatpush1.bf16.msra.mxu0 %v2610
    %2846 = vmatprep.subr.bf16.mxu0 %v2607
    %2847 = vmatpush1.bf16.msra.mxu0 %v2606
    %2848 = vmatprep.subr.bf16.mxu0 %v2603
    %2849 = vmatpush1.bf16.msra.mxu0 %v2602
    %2850 = vmatprep.subr.bf16.mxu0 %v2599
    %2851 = vmatpush1.bf16.msra.mxu0 %v2598
    %2852 = vmatprep.subr.bf16.mxu0 %v2595
    %2853 = vmatpush1.bf16.msra.mxu0 %v2594
    %2854 = vmatprep.subr.bf16.mxu0 %v2591
    %2855 = vmatpush1.bf16.msra.mxu0 %v2590
    %2856 = vmatprep.subr.bf16.mxu0 %v2587
    %2857 = vmatpush1.bf16.msra.mxu0 %v2586
    %2858 = vmatprep.subr.bf16.mxu0 %v2647
    %2859 = vmatpush2.bf16.msra.mxu0 %v2646
    %2860 = vmatprep.subr.bf16.mxu0 %v2643
    %2861 = vmatpush2.bf16.msra.mxu0 %v2642
    %2862 = vmatprep.subr.bf16.mxu0 %v2639
    %2863 = vmatpush2.bf16.msra.mxu0 %v2638
    %2864 = vmatprep.subr.bf16.mxu0 %v2635
    %2865 = vmatpush2.bf16.msra.mxu0 %v2634
    %2866 = vmatprep.subr.bf16.mxu0 %v2631
    %2867 = vmatpush2.bf16.msra.mxu0 %v2630
    %2868 = vmatprep.subr.bf16.mxu0 %v2627
    %2869 = vmatpush2.bf16.msra.mxu0 %v2626
    %2870 = vmatprep.subr.bf16.mxu0 %v2623
    %2871 = vmatpush2.bf16.msra.mxu0 %v2622
    %2872 = vmatprep.subr.bf16.mxu0 %v2619
    %2873 = vmatpush2.bf16.msra.mxu0 %v2618
    %2874 = vmatprep.mubr.bf16.mxu0 %v2021
    %2875 = vmatmul.mubr.bf16.gmra.mxu0 %v2020
    %v2876 = vpop.f32.mrf.mxu0
    %v2877 = vadd.f32 %v2185, %v2876
    %v2878 = vpop.f32.mrf.mxu0
    %v2879 = vadd.f32 %v2189, %v2878
    %v2880 = vpop.f32.mrf.mxu0
    %v2881 = vadd.f32 %v2185, %v2880
    %v2882 = vpop.f32.mrf.mxu0
    %v2883 = vadd.f32 %v2189, %v2882
    %2884 = vmatprep.mubr.bf16.mxu0 %v2025
    %2885 = vmatmul.mubr.bf16.gmra.mxu0 %v2024
    %v2886 = vpop.f32.mrf.mxu0
    %v2887 = vadd.f32 %v2185, %v2886
    %v2888 = vpop.f32.mrf.mxu0
    %v2889 = vadd.f32 %v2189, %v2888
    %v2890 = vpop.f32.mrf.mxu0
    %v2891 = vadd.f32 %v2185, %v2890
    %v2892 = vpop.f32.mrf.mxu0
    %v2893 = vadd.f32 %v2189, %v2892
    %2894 = vmatprep.mubr.bf16.mxu0 %v2029
    %2895 = vmatmul.mubr.bf16.gmra.mxu0 %v2028
    %v2896 = vpop.f32.mrf.mxu0
    %v2897 = vadd.f32 %v2185, %v2896
    %v2898 = vpop.f32.mrf.mxu0
    %v2899 = vadd.f32 %v2189, %v2898
    %v2900 = vpop.f32.mrf.mxu0
    %v2901 = vadd.f32 %v2185, %v2900
    %v2902 = vpop.f32.mrf.mxu0
    %v2903 = vadd.f32 %v2189, %v2902
    %2904 = vmatprep.mubr.bf16.mxu0 %v2033
    %2905 = vmatmul.mubr.bf16.gmra.mxu0 %v2032
    %v2906 = vpop.f32.mrf.mxu0
    %v2907 = vadd.f32 %v2185, %v2906
    %v2908 = vpop.f32.mrf.mxu0
    %v2909 = vadd.f32 %v2189, %v2908
    %v2910 = vpop.f32.mrf.mxu0
    %v2911 = vadd.f32 %v2185, %v2910
    %v2912 = vpop.f32.mrf.mxu0
    %v2913 = vadd.f32 %v2189, %v2912
    %2914 = vmatprep.mubr.bf16.mxu0 %v2037
    %2915 = vmatmul.mubr.bf16.gmra.mxu0 %v2036
    %v2916 = vpop.f32.mrf.mxu0
    %v2917 = vadd.f32 %v2185, %v2916
    %v2918 = vpop.f32.mrf.mxu0
    %v2919 = vadd.f32 %v2189, %v2918
    %v2920 = vpop.f32.mrf.mxu0
    %v2921 = vadd.f32 %v2185, %v2920
    %v2922 = vpop.f32.mrf.mxu0
    %v2923 = vadd.f32 %v2189, %v2922
    %2924 = vmatprep.mubr.bf16.mxu0 %v2041
    %2925 = vmatmul.mubr.bf16.gmra.mxu0 %v2040
    %v2926 = vpop.f32.mrf.mxu0
    %v2927 = vadd.f32 %v2185, %v2926
    %v2928 = vpop.f32.mrf.mxu0
    %v2929 = vadd.f32 %v2189, %v2928
    %v2930 = vpop.f32.mrf.mxu0
    %v2931 = vadd.f32 %v2185, %v2930
    %v2932 = vpop.f32.mrf.mxu0
    %v2933 = vadd.f32 %v2189, %v2932
    %2934 = vmatprep.mubr.bf16.mxu0 %v2045
    %2935 = vmatmul.mubr.bf16.gmra.mxu0 %v2044
    %v2936 = vpop.f32.mrf.mxu0
    %v2937 = vadd.f32 %v2185, %v2936
    %v2938 = vpop.f32.mrf.mxu0
    %v2939 = vadd.f32 %v2189, %v2938
    %v2940 = vpop.f32.mrf.mxu0
    %v2941 = vadd.f32 %v2185, %v2940
    %v2942 = vpop.f32.mrf.mxu0
    %v2943 = vadd.f32 %v2189, %v2942
    %2944 = vmatprep.mubr.bf16.mxu0 %v2049
    %2945 = vmatmul.mubr.bf16.gmra.mxu0 %v2048
    %v2946 = vpop.f32.mrf.mxu0
    %v2947 = vadd.f32 %v2185, %v2946
    %v2948 = vpop.f32.mrf.mxu0
    %v2949 = vadd.f32 %v2189, %v2948
    %v2950 = vpop.f32.mrf.mxu0
    %v2951 = vadd.f32 %v2185, %v2950
    %v2952 = vpop.f32.mrf.mxu0
    %v2953 = vadd.f32 %v2189, %v2952
    %2954 = vdwg.mxu0
    %2955 = vmatprep.subr.bf16.mxu0 %v2679
    %2956 = vmatpush1.bf16.msra.mxu0 %v2678
    %2957 = vmatprep.subr.bf16.mxu0 %v2675
    %2958 = vmatpush1.bf16.msra.mxu0 %v2674
    %2959 = vmatprep.subr.bf16.mxu0 %v2671
    %2960 = vmatpush1.bf16.msra.mxu0 %v2670
    %2961 = vmatprep.subr.bf16.mxu0 %v2667
    %2962 = vmatpush1.bf16.msra.mxu0 %v2666
    %2963 = vmatprep.subr.bf16.mxu0 %v2663
    %2964 = vmatpush1.bf16.msra.mxu0 %v2662
    %2965 = vmatprep.subr.bf16.mxu0 %v2659
    %2966 = vmatpush1.bf16.msra.mxu0 %v2658
    %2967 = vmatprep.subr.bf16.mxu0 %v2655
    %2968 = vmatpush1.bf16.msra.mxu0 %v2654
    %2969 = vmatprep.subr.bf16.mxu0 %v2651
    %2970 = vmatpush1.bf16.msra.mxu0 %v2650
    %2971 = vmatprep.subr.bf16.mxu0 %v2711
    %2972 = vmatpush2.bf16.msra.mxu0 %v2710
    %2973 = vmatprep.subr.bf16.mxu0 %v2707
    %2974 = vmatpush2.bf16.msra.mxu0 %v2706
    %2975 = vmatprep.subr.bf16.mxu0 %v2703
    %2976 = vmatpush2.bf16.msra.mxu0 %v2702
    %2977 = vmatprep.subr.bf16.mxu0 %v2699
    %2978 = vmatpush2.bf16.msra.mxu0 %v2698
    %2979 = vmatprep.subr.bf16.mxu0 %v2695
    %2980 = vmatpush2.bf16.msra.mxu0 %v2694
    %2981 = vmatprep.subr.bf16.mxu0 %v2691
    %2982 = vmatpush2.bf16.msra.mxu0 %v2690
    %2983 = vmatprep.subr.bf16.mxu0 %v2687
    %2984 = vmatpush2.bf16.msra.mxu0 %v2686
    %2985 = vmatprep.subr.bf16.mxu0 %v2683
    %2986 = vmatpush2.bf16.msra.mxu0 %v2682
    %2987 = vmatprep.mubr.bf16.mxu0 %v2023
    %2988 = vmatmul.mubr.bf16.gmra.mxu0 %v2022
    %v2989 = vpop.f32.mrf.mxu0
    %v2990 = vadd.f32 %v2877, %v2989
    %v2991 = vpop.f32.mrf.mxu0
    %v2992 = vadd.f32 %v2879, %v2991
    %v2993 = vpop.f32.mrf.mxu0
    %v2994 = vadd.f32 %v2881, %v2993
    %v2995 = vpop.f32.mrf.mxu0
    %v2996 = vadd.f32 %v2883, %v2995
    %2997 = vmatprep.mubr.bf16.mxu0 %v2027
    %2998 = vmatmul.mubr.bf16.gmra.mxu0 %v2026
    %v2999 = vpop.f32.mrf.mxu0
    %v3000 = vadd.f32 %v2887, %v2999
    %v3001 = vpop.f32.mrf.mxu0
    %v3002 = vadd.f32 %v2889, %v3001
    %v3003 = vpop.f32.mrf.mxu0
    %v3004 = vadd.f32 %v2891, %v3003
    %v3005 = vpop.f32.mrf.mxu0
    %v3006 = vadd.f32 %v2893, %v3005
    %3007 = vmatprep.mubr.bf16.mxu0 %v2031
    %3008 = vmatmul.mubr.bf16.gmra.mxu0 %v2030
    %v3009 = vpop.f32.mrf.mxu0
    %v3010 = vadd.f32 %v2897, %v3009
    %v3011 = vpop.f32.mrf.mxu0
    %v3012 = vadd.f32 %v2899, %v3011
    %v3013 = vpop.f32.mrf.mxu0
    %v3014 = vadd.f32 %v2901, %v3013
    %v3015 = vpop.f32.mrf.mxu0
    %v3016 = vadd.f32 %v2903, %v3015
    %3017 = vmatprep.mubr.bf16.mxu0 %v2035
    %3018 = vmatmul.mubr.bf16.gmra.mxu0 %v2034
    %v3019 = vpop.f32.mrf.mxu0
    %v3020 = vadd.f32 %v2907, %v3019
    %v3021 = vpop.f32.mrf.mxu0
    %v3022 = vadd.f32 %v2909, %v3021
    %v3023 = vpop.f32.mrf.mxu0
    %v3024 = vadd.f32 %v2911, %v3023
    %v3025 = vpop.f32.mrf.mxu0
    %v3026 = vadd.f32 %v2913, %v3025
    %3027 = vmatprep.mubr.bf16.mxu0 %v2039
    %3028 = vmatmul.mubr.bf16.gmra.mxu0 %v2038
    %v3029 = vpop.f32.mrf.mxu0
    %v3030 = vadd.f32 %v2917, %v3029
    %v3031 = vpop.f32.mrf.mxu0
    %v3032 = vadd.f32 %v2919, %v3031
    %v3033 = vpop.f32.mrf.mxu0
    %v3034 = vadd.f32 %v2921, %v3033
    %v3035 = vpop.f32.mrf.mxu0
    %v3036 = vadd.f32 %v2923, %v3035
    %3037 = vmatprep.mubr.bf16.mxu0 %v2043
    %3038 = vmatmul.mubr.bf16.gmra.mxu0 %v2042
    %v3039 = vpop.f32.mrf.mxu0
    %v3040 = vadd.f32 %v2927, %v3039
    %v3041 = vpop.f32.mrf.mxu0
    %v3042 = vadd.f32 %v2929, %v3041
    %v3043 = vpop.f32.mrf.mxu0
    %v3044 = vadd.f32 %v2931, %v3043
    %v3045 = vpop.f32.mrf.mxu0
    %v3046 = vadd.f32 %v2933, %v3045
    %3047 = vmatprep.mubr.bf16.mxu0 %v2047
    %3048 = vmatmul.mubr.bf16.gmra.mxu0 %v2046
    %v3049 = vpop.f32.mrf.mxu0
    %v3050 = vadd.f32 %v2937, %v3049
    %v3051 = vpop.f32.mrf.mxu0
    %v3052 = vadd.f32 %v2939, %v3051
    %v3053 = vpop.f32.mrf.mxu0
    %v3054 = vadd.f32 %v2941, %v3053
    %v3055 = vpop.f32.mrf.mxu0
    %v3056 = vadd.f32 %v2943, %v3055
    %3057 = vmatprep.mubr.bf16.mxu0 %v2051
    %3058 = vmatmul.mubr.bf16.gmra.mxu0 %v2050
    %v3059 = vpop.f32.mrf.mxu0
    %v3060 = vadd.f32 %v2947, %v3059
    %v3061 = vpop.f32.mrf.mxu0
    %v3062 = vadd.f32 %v2949, %v3061
    %v3063 = vpop.f32.mrf.mxu0
    %v3064 = vadd.f32 %v2951, %v3063
    %v3065 = vpop.f32.mrf.mxu0
    %v3066 = vadd.f32 %v2953, %v3065
    %3067 = vdwg.mxu0
    %3068 = vmatprep.subr.bf16.mxu0 %v2617
    %3069 = vmatpush1.bf16.msra.mxu0 %v2616
    %3070 = vmatprep.subr.bf16.mxu0 %v2613
    %3071 = vmatpush1.bf16.msra.mxu0 %v2612
    %3072 = vmatprep.subr.bf16.mxu0 %v2609
    %3073 = vmatpush1.bf16.msra.mxu0 %v2608
    %3074 = vmatprep.subr.bf16.mxu0 %v2605
    %3075 = vmatpush1.bf16.msra.mxu0 %v2604
    %3076 = vmatprep.subr.bf16.mxu0 %v2601
    %3077 = vmatpush1.bf16.msra.mxu0 %v2600
    %3078 = vmatprep.subr.bf16.mxu0 %v2597
    %3079 = vmatpush1.bf16.msra.mxu0 %v2596
    %3080 = vmatprep.subr.bf16.mxu0 %v2593
    %3081 = vmatpush1.bf16.msra.mxu0 %v2592
    %3082 = vmatprep.subr.bf16.mxu0 %v2589
    %3083 = vmatpush1.bf16.msra.mxu0 %v2588
    %3084 = vmatprep.subr.bf16.mxu0 %v2649
    %3085 = vmatpush2.bf16.msra.mxu0 %v2648
    %3086 = vmatprep.subr.bf16.mxu0 %v2645
    %3087 = vmatpush2.bf16.msra.mxu0 %v2644
    %3088 = vmatprep.subr.bf16.mxu0 %v2641
    %3089 = vmatpush2.bf16.msra.mxu0 %v2640
    %3090 = vmatprep.subr.bf16.mxu0 %v2637
    %3091 = vmatpush2.bf16.msra.mxu0 %v2636
    %3092 = vmatprep.subr.bf16.mxu0 %v2633
    %3093 = vmatpush2.bf16.msra.mxu0 %v2632
    %3094 = vmatprep.subr.bf16.mxu0 %v2629
    %3095 = vmatpush2.bf16.msra.mxu0 %v2628
    %3096 = vmatprep.subr.bf16.mxu0 %v2625
    %3097 = vmatpush2.bf16.msra.mxu0 %v2624
    %3098 = vmatprep.subr.bf16.mxu0 %v2621
    %3099 = vmatpush2.bf16.msra.mxu0 %v2620
    %3100 = vmatprep.mubr.bf16.mxu0 %v2021
    %3101 = vmatmul.mubr.bf16.gmra.mxu0 %v2020
    %v3102 = vpop.f32.mrf.mxu0
    %v3103 = vadd.f32 %v2193, %v3102
    %v3104 = vpop.f32.mrf.mxu0
    %v3105 = vadd.f32 %v2197, %v3104
    %v3106 = vpop.f32.mrf.mxu0
    %v3107 = vadd.f32 %v2193, %v3106
    %v3108 = vpop.f32.mrf.mxu0
    %v3109 = vadd.f32 %v2197, %v3108
    %3110 = vmatprep.mubr.bf16.mxu0 %v2025
    %3111 = vmatmul.mubr.bf16.gmra.mxu0 %v2024
    %v3112 = vpop.f32.mrf.mxu0
    %v3113 = vadd.f32 %v2193, %v3112
    %v3114 = vpop.f32.mrf.mxu0
    %v3115 = vadd.f32 %v2197, %v3114
    %v3116 = vpop.f32.mrf.mxu0
    %v3117 = vadd.f32 %v2193, %v3116
    %v3118 = vpop.f32.mrf.mxu0
    %v3119 = vadd.f32 %v2197, %v3118
    %3120 = vmatprep.mubr.bf16.mxu0 %v2029
    %3121 = vmatmul.mubr.bf16.gmra.mxu0 %v2028
    %v3122 = vpop.f32.mrf.mxu0
    %v3123 = vadd.f32 %v2193, %v3122
    %v3124 = vpop.f32.mrf.mxu0
    %v3125 = vadd.f32 %v2197, %v3124
    %v3126 = vpop.f32.mrf.mxu0
    %v3127 = vadd.f32 %v2193, %v3126
    %v3128 = vpop.f32.mrf.mxu0
    %v3129 = vadd.f32 %v2197, %v3128
    %3130 = vmatprep.mubr.bf16.mxu0 %v2033
    %3131 = vmatmul.mubr.bf16.gmra.mxu0 %v2032
    %v3132 = vpop.f32.mrf.mxu0
    %v3133 = vadd.f32 %v2193, %v3132
    %v3134 = vpop.f32.mrf.mxu0
    %v3135 = vadd.f32 %v2197, %v3134
    %v3136 = vpop.f32.mrf.mxu0
    %v3137 = vadd.f32 %v2193, %v3136
    %v3138 = vpop.f32.mrf.mxu0
    %v3139 = vadd.f32 %v2197, %v3138
    %3140 = vmatprep.mubr.bf16.mxu0 %v2037
    %3141 = vmatmul.mubr.bf16.gmra.mxu0 %v2036
    %v3142 = vpop.f32.mrf.mxu0
    %v3143 = vadd.f32 %v2193, %v3142
    %v3144 = vpop.f32.mrf.mxu0
    %v3145 = vadd.f32 %v2197, %v3144
    %v3146 = vpop.f32.mrf.mxu0
    %v3147 = vadd.f32 %v2193, %v3146
    %v3148 = vpop.f32.mrf.mxu0
    %v3149 = vadd.f32 %v2197, %v3148
    %3150 = vmatprep.mubr.bf16.mxu0 %v2041
    %3151 = vmatmul.mubr.bf16.gmra.mxu0 %v2040
    %v3152 = vpop.f32.mrf.mxu0
    %v3153 = vadd.f32 %v2193, %v3152
    %v3154 = vpop.f32.mrf.mxu0
    %v3155 = vadd.f32 %v2197, %v3154
    %v3156 = vpop.f32.mrf.mxu0
    %v3157 = vadd.f32 %v2193, %v3156
    %v3158 = vpop.f32.mrf.mxu0
    %v3159 = vadd.f32 %v2197, %v3158
    %3160 = vmatprep.mubr.bf16.mxu0 %v2045
    %3161 = vmatmul.mubr.bf16.gmra.mxu0 %v2044
    %v3162 = vpop.f32.mrf.mxu0
    %v3163 = vadd.f32 %v2193, %v3162
    %v3164 = vpop.f32.mrf.mxu0
    %v3165 = vadd.f32 %v2197, %v3164
    %v3166 = vpop.f32.mrf.mxu0
    %v3167 = vadd.f32 %v2193, %v3166
    %v3168 = vpop.f32.mrf.mxu0
    %v3169 = vadd.f32 %v2197, %v3168
    %3170 = vmatprep.mubr.bf16.mxu0 %v2049
    %3171 = vmatmul.mubr.bf16.gmra.mxu0 %v2048
    %v3172 = vpop.f32.mrf.mxu0
    %v3173 = vadd.f32 %v2193, %v3172
    %v3174 = vpop.f32.mrf.mxu0
    %v3175 = vadd.f32 %v2197, %v3174
    %v3176 = vpop.f32.mrf.mxu0
    %v3177 = vadd.f32 %v2193, %v3176
    %v3178 = vpop.f32.mrf.mxu0
    %v3179 = vadd.f32 %v2197, %v3178
    %3180 = vdwg.mxu0
    %3181 = vmatprep.subr.bf16.mxu0 %v2681
    %3182 = vmatpush1.bf16.msra.mxu0 %v2680
    %3183 = vmatprep.subr.bf16.mxu0 %v2677
    %3184 = vmatpush1.bf16.msra.mxu0 %v2676
    %3185 = vmatprep.subr.bf16.mxu0 %v2673
    %3186 = vmatpush1.bf16.msra.mxu0 %v2672
    %3187 = vmatprep.subr.bf16.mxu0 %v2669
    %3188 = vmatpush1.bf16.msra.mxu0 %v2668
    %3189 = vmatprep.subr.bf16.mxu0 %v2665
    %3190 = vmatpush1.bf16.msra.mxu0 %v2664
    %3191 = vmatprep.subr.bf16.mxu0 %v2661
    %3192 = vmatpush1.bf16.msra.mxu0 %v2660
    %3193 = vmatprep.subr.bf16.mxu0 %v2657
    %3194 = vmatpush1.bf16.msra.mxu0 %v2656
    %3195 = vmatprep.subr.bf16.mxu0 %v2653
    %3196 = vmatpush1.bf16.msra.mxu0 %v2652
    %3197 = vmatprep.subr.bf16.mxu0 %v2713
    %3198 = vmatpush2.bf16.msra.mxu0 %v2712
    %3199 = vmatprep.subr.bf16.mxu0 %v2709
    %3200 = vmatpush2.bf16.msra.mxu0 %v2708
    %3201 = vmatprep.subr.bf16.mxu0 %v2705
    %3202 = vmatpush2.bf16.msra.mxu0 %v2704
    %3203 = vmatprep.subr.bf16.mxu0 %v2701
    %3204 = vmatpush2.bf16.msra.mxu0 %v2700
    %3205 = vmatprep.subr.bf16.mxu0 %v2697
    %3206 = vmatpush2.bf16.msra.mxu0 %v2696
    %3207 = vmatprep.subr.bf16.mxu0 %v2693
    %3208 = vmatpush2.bf16.msra.mxu0 %v2692
    %3209 = vmatprep.subr.bf16.mxu0 %v2689
    %3210 = vmatpush2.bf16.msra.mxu0 %v2688
    %3211 = vmatprep.subr.bf16.mxu0 %v2685
    %3212 = vmatpush2.bf16.msra.mxu0 %v2684
    %3213 = vmatprep.mubr.bf16.mxu0 %v2023
    %3214 = vmatmul.mubr.bf16.gmra.mxu0 %v2022
    %v3215 = vpop.f32.mrf.mxu0
    %v3216 = vadd.f32 %v3103, %v3215
    %v3217 = vpop.f32.mrf.mxu0
    %v3218 = vadd.f32 %v3105, %v3217
    %v3219 = vpop.f32.mrf.mxu0
    %v3220 = vadd.f32 %v3107, %v3219
    %v3221 = vpop.f32.mrf.mxu0
    %v3222 = vadd.f32 %v3109, %v3221
    %3223 = vmatprep.mubr.bf16.mxu0 %v2027
    %3224 = vmatmul.mubr.bf16.gmra.mxu0 %v2026
    %v3225 = vpop.f32.mrf.mxu0
    %v3226 = vadd.f32 %v3113, %v3225
    %v3227 = vpop.f32.mrf.mxu0
    %v3228 = vadd.f32 %v3115, %v3227
    %v3229 = vpop.f32.mrf.mxu0
    %v3230 = vadd.f32 %v3117, %v3229
    %v3231 = vpop.f32.mrf.mxu0
    %v3232 = vadd.f32 %v3119, %v3231
    %3233 = vmatprep.mubr.bf16.mxu0 %v2031
    %3234 = vmatmul.mubr.bf16.gmra.mxu0 %v2030
    %v3235 = vpop.f32.mrf.mxu0
    %v3236 = vadd.f32 %v3123, %v3235
    %v3237 = vpop.f32.mrf.mxu0
    %v3238 = vadd.f32 %v3125, %v3237
    %v3239 = vpop.f32.mrf.mxu0
    %v3240 = vadd.f32 %v3127, %v3239
    %v3241 = vpop.f32.mrf.mxu0
    %v3242 = vadd.f32 %v3129, %v3241
    %3243 = vmatprep.mubr.bf16.mxu0 %v2035
    %3244 = vmatmul.mubr.bf16.gmra.mxu0 %v2034
    %v3245 = vpop.f32.mrf.mxu0
    %v3246 = vadd.f32 %v3133, %v3245
    %v3247 = vpop.f32.mrf.mxu0
    %v3248 = vadd.f32 %v3135, %v3247
    %v3249 = vpop.f32.mrf.mxu0
    %v3250 = vadd.f32 %v3137, %v3249
    %v3251 = vpop.f32.mrf.mxu0
    %v3252 = vadd.f32 %v3139, %v3251
    %3253 = vmatprep.mubr.bf16.mxu0 %v2039
    %3254 = vmatmul.mubr.bf16.gmra.mxu0 %v2038
    %v3255 = vpop.f32.mrf.mxu0
    %v3256 = vadd.f32 %v3143, %v3255
    %v3257 = vpop.f32.mrf.mxu0
    %v3258 = vadd.f32 %v3145, %v3257
    %v3259 = vpop.f32.mrf.mxu0
    %v3260 = vadd.f32 %v3147, %v3259
    %v3261 = vpop.f32.mrf.mxu0
    %v3262 = vadd.f32 %v3149, %v3261
    %3263 = vmatprep.mubr.bf16.mxu0 %v2043
    %3264 = vmatmul.mubr.bf16.gmra.mxu0 %v2042
    %v3265 = vpop.f32.mrf.mxu0
    %v3266 = vadd.f32 %v3153, %v3265
    %v3267 = vpop.f32.mrf.mxu0
    %v3268 = vadd.f32 %v3155, %v3267
    %v3269 = vpop.f32.mrf.mxu0
    %v3270 = vadd.f32 %v3157, %v3269
    %v3271 = vpop.f32.mrf.mxu0
    %v3272 = vadd.f32 %v3159, %v3271
    %3273 = vmatprep.mubr.bf16.mxu0 %v2047
    %3274 = vmatmul.mubr.bf16.gmra.mxu0 %v2046
    %v3275 = vpop.f32.mrf.mxu0
    %v3276 = vadd.f32 %v3163, %v3275
    %v3277 = vpop.f32.mrf.mxu0
    %v3278 = vadd.f32 %v3165, %v3277
    %v3279 = vpop.f32.mrf.mxu0
    %v3280 = vadd.f32 %v3167, %v3279
    %v3281 = vpop.f32.mrf.mxu0
    %v3282 = vadd.f32 %v3169, %v3281
    %3283 = vmatprep.mubr.bf16.mxu0 %v2051
    %3284 = vmatmul.mubr.bf16.gmra.mxu0 %v2050
    %v3285 = vpop.f32.mrf.mxu0
    %v3286 = vadd.f32 %v3173, %v3285
    %v3287 = vpop.f32.mrf.mxu0
    %v3288 = vadd.f32 %v3175, %v3287
    %v3289 = vpop.f32.mrf.mxu0
    %v3290 = vadd.f32 %v3177, %v3289
    %v3291 = vpop.f32.mrf.mxu0
    %v3292 = vadd.f32 %v3179, %v3291
    %3293 = vdwg.mxu0
    %v3294 = vtanh.pop %v2990
    %v3295 = vtanh.pop %v2992
    %v3296 = vtanh.pop %v3216
    %v3297 = vtanh.pop %v3218
    %v3298 = vtanh.pop %v2994
    %v3299 = vtanh.pop %v2996
    %v3300 = vtanh.pop %v3220
    %v3301 = vtanh.pop %v3222
    %v3302 = vtanh.pop %v3000
    %v3303 = vtanh.pop %v3002
    %v3304 = vtanh.pop %v3226
    %v3305 = vtanh.pop %v3228
    %v3306 = vtanh.pop %v3004
    %v3307 = vtanh.pop %v3006
    %v3308 = vtanh.pop %v3230
    %v3309 = vtanh.pop %v3232
    %v3310 = vtanh.pop %v3010
    %v3311 = vtanh.pop %v3012
    %v3312 = vtanh.pop %v3236
    %v3313 = vtanh.pop %v3238
    %v3314 = vtanh.pop %v3014
    %v3315 = vtanh.pop %v3016
    %v3316 = vtanh.pop %v3240
    %v3317 = vtanh.pop %v3242
    %v3318 = vtanh.pop %v3020
    %v3319 = vtanh.pop %v3022
    %v3320 = vtanh.pop %v3246
    %v3321 = vtanh.pop %v3248
    %v3322 = vtanh.pop %v3024
    %v3323 = vtanh.pop %v3026
    %v3324 = vtanh.pop %v3250
    %v3325 = vtanh.pop %v3252
    %v3326 = vtanh.pop %v3030
    %v3327 = vtanh.pop %v3032
    %v3328 = vtanh.pop %v3256
    %v3329 = vtanh.pop %v3258
    %v3330 = vtanh.pop %v3034
    %v3331 = vtanh.pop %v3036
    %v3332 = vtanh.pop %v3260
    %v3333 = vtanh.pop %v3262
    %v3334 = vtanh.pop %v3040
    %v3335 = vtanh.pop %v3042
    %v3336 = vtanh.pop %v3266
    %v3337 = vtanh.pop %v3268
    %v3338 = vtanh.pop %v3044
    %v3339 = vtanh.pop %v3046
    %v3340 = vtanh.pop %v3270
    %v3341 = vtanh.pop %v3272
    %v3342 = vtanh.pop %v3050
    %v3343 = vtanh.pop %v3052
    %v3344 = vtanh.pop %v3276
    %v3345 = vtanh.pop %v3278
    %v3346 = vtanh.pop %v3054
    %v3347 = vtanh.pop %v3056
    %v3348 = vtanh.pop %v3280
    %v3349 = vtanh.pop %v3282
    %v3350 = vtanh.pop %v3060
    %v3351 = vtanh.pop %v3062
    %v3352 = vtanh.pop %v3286
    %v3353 = vtanh.pop %v3288
    %v3354 = vtanh.pop %v3064
    %v3355 = vtanh.pop %v3066
    %v3356 = vtanh.pop %v3290
    %v3357 = vtanh.pop %v3292
    %v3358 = vpack.c.bf16 %v3298, %v3294
    %v3359 = vpack.c.bf16 %v3299, %v3295
    %v3360 = vpack.c.bf16 %v3300, %v3296
    %v3361 = vpack.c.bf16 %v3301, %v3297
    %v3362 = vpack.c.bf16 %v3306, %v3302
    %v3363 = vpack.c.bf16 %v3307, %v3303
    %v3364 = vpack.c.bf16 %v3308, %v3304
    %v3365 = vpack.c.bf16 %v3309, %v3305
    %v3366 = vpack.c.bf16 %v3314, %v3310
    %v3367 = vpack.c.bf16 %v3315, %v3311
    %v3368 = vpack.c.bf16 %v3316, %v3312
    %v3369 = vpack.c.bf16 %v3317, %v3313
    %v3370 = vpack.c.bf16 %v3322, %v3318
    %v3371 = vpack.c.bf16 %v3323, %v3319
    %v3372 = vpack.c.bf16 %v3324, %v3320
    %v3373 = vpack.c.bf16 %v3325, %v3321
    %v3374 = vpack.c.bf16 %v3330, %v3326
    %v3375 = vpack.c.bf16 %v3331, %v3327
    %v3376 = vpack.c.bf16 %v3332, %v3328
    %v3377 = vpack.c.bf16 %v3333, %v3329
    %v3378 = vpack.c.bf16 %v3338, %v3334
    %v3379 = vpack.c.bf16 %v3339, %v3335
    %v3380 = vpack.c.bf16 %v3340, %v3336
    %v3381 = vpack.c.bf16 %v3341, %v3337
    %v3382 = vpack.c.bf16 %v3346, %v3342
    %v3383 = vpack.c.bf16 %v3347, %v3343
    %v3384 = vpack.c.bf16 %v3348, %v3344
    %v3385 = vpack.c.bf16 %v3349, %v3345
    %v3386 = vpack.c.bf16 %v3354, %v3350
    %v3387 = vpack.c.bf16 %v3355, %v3351
    %v3388 = vpack.c.bf16 %v3356, %v3352
    %v3389 = vpack.c.bf16 %v3357, %v3353
    %v3390 = vld [vmem:[#allocation11] sm:$0xf]
    %v3391 = vld [vmem:[#allocation11 + $0x4] sm:$0xf]
    %v3392 = vld [vmem:[#allocation11 + $0x8] sm:$0xf]
    %v3393 = vld [vmem:[#allocation11 + $0xc] sm:$0xf]
    %v3394 = vld [vmem:[#allocation11 + $0x10] sm:$0xf]
    %v3395 = vld [vmem:[#allocation11 + $0x14] sm:$0xf]
    %v3396 = vld [vmem:[#allocation11 + $0x18] sm:$0xf]
    %v3397 = vld [vmem:[#allocation11 + $0x1c] sm:$0xf]
    %v3398 = vld [vmem:[#allocation11 + $0x20] sm:$0xf]
    %v3399 = vld [vmem:[#allocation11 + $0x24] sm:$0xf]
    %v3400 = vld [vmem:[#allocation11 + $0x28] sm:$0xf]
    %v3401 = vld [vmem:[#allocation11 + $0x2c] sm:$0xf]
    %v3402 = vld [vmem:[#allocation11 + $0x30] sm:$0xf]
    %v3403 = vld [vmem:[#allocation11 + $0x34] sm:$0xf]
    %v3404 = vld [vmem:[#allocation11 + $0x38] sm:$0xf]
    %v3405 = vld [vmem:[#allocation11 + $0x3c] sm:$0xf]
    %v3406 = vld [vmem:[#allocation11 + $0x40] sm:$0xf]
    %v3407 = vld [vmem:[#allocation11 + $0x44] sm:$0xf]
    %v3408 = vld [vmem:[#allocation11 + $0x48] sm:$0xf]
    %v3409 = vld [vmem:[#allocation11 + $0x4c] sm:$0xf]
    %v3410 = vld [vmem:[#allocation11 + $0x50] sm:$0xf]
    %v3411 = vld [vmem:[#allocation11 + $0x54] sm:$0xf]
    %v3412 = vld [vmem:[#allocation11 + $0x58] sm:$0xf]
    %v3413 = vld [vmem:[#allocation11 + $0x5c] sm:$0xf]
    %v3414 = vld [vmem:[#allocation11 + $0x60] sm:$0xf]
    %v3415 = vld [vmem:[#allocation11 + $0x64] sm:$0xf]
    %v3416 = vld [vmem:[#allocation11 + $0x68] sm:$0xf]
    %v3417 = vld [vmem:[#allocation11 + $0x6c] sm:$0xf]
    %v3418 = vld [vmem:[#allocation11 + $0x70] sm:$0xf]
    %v3419 = vld [vmem:[#allocation11 + $0x74] sm:$0xf]
    %v3420 = vld [vmem:[#allocation11 + $0x78] sm:$0xf]
    %v3421 = vld [vmem:[#allocation11 + $0x7c] sm:$0xf]
    %v3422 = vld [vmem:[#allocation11 + $0x80] sm:$0xf]
    %v3423 = vld [vmem:[#allocation11 + $0x84] sm:$0xf]
    %v3424 = vld [vmem:[#allocation11 + $0x88] sm:$0xf]
    %v3425 = vld [vmem:[#allocation11 + $0x8c] sm:$0xf]
    %v3426 = vld [vmem:[#allocation11 + $0x90] sm:$0xf]
    %v3427 = vld [vmem:[#allocation11 + $0x94] sm:$0xf]
    %v3428 = vld [vmem:[#allocation11 + $0x98] sm:$0xf]
    %v3429 = vld [vmem:[#allocation11 + $0x9c] sm:$0xf]
    %v3430 = vld [vmem:[#allocation11 + $0xa0] sm:$0xf]
    %v3431 = vld [vmem:[#allocation11 + $0xa4] sm:$0xf]
    %v3432 = vld [vmem:[#allocation11 + $0xa8] sm:$0xf]
    %v3433 = vld [vmem:[#allocation11 + $0xac] sm:$0xf]
    %v3434 = vld [vmem:[#allocation11 + $0xb0] sm:$0xf]
    %v3435 = vld [vmem:[#allocation11 + $0xb4] sm:$0xf]
    %v3436 = vld [vmem:[#allocation11 + $0xb8] sm:$0xf]
    %v3437 = vld [vmem:[#allocation11 + $0xbc] sm:$0xf]
    %v3438 = vld [vmem:[#allocation11 + $0xc0] sm:$0xf]
    %v3439 = vld [vmem:[#allocation11 + $0xc4] sm:$0xf]
    %v3440 = vld [vmem:[#allocation11 + $0xc8] sm:$0xf]
    %v3441 = vld [vmem:[#allocation11 + $0xcc] sm:$0xf]
    %v3442 = vld [vmem:[#allocation11 + $0xd0] sm:$0xf]
    %v3443 = vld [vmem:[#allocation11 + $0xd4] sm:$0xf]
    %v3444 = vld [vmem:[#allocation11 + $0xd8] sm:$0xf]
    %v3445 = vld [vmem:[#allocation11 + $0xdc] sm:$0xf]
    %v3446 = vld [vmem:[#allocation11 + $0xe0] sm:$0xf]
    %v3447 = vld [vmem:[#allocation11 + $0xe4] sm:$0xf]
    %v3448 = vld [vmem:[#allocation11 + $0xe8] sm:$0xf]
    %v3449 = vld [vmem:[#allocation11 + $0xec] sm:$0xf]
    %v3450 = vld [vmem:[#allocation11 + $0xf0] sm:$0xf]
    %v3451 = vld [vmem:[#allocation11 + $0xf4] sm:$0xf]
    %v3452 = vld [vmem:[#allocation11 + $0xf8] sm:$0xf]
    %v3453 = vld [vmem:[#allocation11 + $0xfc] sm:$0xf]
    %v3454 = vld [vmem:[%s8] sm:$0x1]
    %v3456 = vlaneseq
    %v3457 = vshrl.u32 %v3456, 7
    %v3458 = vsub.s32 0, %v3457
    %v3459 = vrot.slane %v3454, %v3458
    %v3525 = vunpack.c.l.b16 %v3390
    %v3526 = vunpack.c.l.b16 %v3391
    %v3527 = vunpack.c.l.b16 %v3392
    %v3528 = vunpack.c.l.b16 %v3393
    %v3529 = vunpack.c.l.b16 %v3394
    %v3530 = vunpack.c.l.b16 %v3395
    %v3531 = vunpack.c.l.b16 %v3396
    %v3532 = vunpack.c.l.b16 %v3397
    %v3533 = vunpack.c.l.b16 %v3398
    %v3534 = vunpack.c.l.b16 %v3399
    %v3535 = vunpack.c.l.b16 %v3400
    %v3536 = vunpack.c.l.b16 %v3401
    %v3537 = vunpack.c.l.b16 %v3402
    %v3538 = vunpack.c.l.b16 %v3403
    %v3539 = vunpack.c.l.b16 %v3404
    %v3540 = vunpack.c.l.b16 %v3405
    %v3541 = vunpack.c.l.b16 %v3406
    %v3542 = vunpack.c.l.b16 %v3407
    %v3543 = vunpack.c.l.b16 %v3408
    %v3544 = vunpack.c.l.b16 %v3409
    %v3545 = vunpack.c.l.b16 %v3410
    %v3546 = vunpack.c.l.b16 %v3411
    %v3547 = vunpack.c.l.b16 %v3412
    %v3548 = vunpack.c.l.b16 %v3413
    %v3549 = vunpack.c.l.b16 %v3414
    %v3550 = vunpack.c.l.b16 %v3415
    %v3551 = vunpack.c.l.b16 %v3416
    %v3552 = vunpack.c.l.b16 %v3417
    %v3553 = vunpack.c.l.b16 %v3418
    %v3554 = vunpack.c.l.b16 %v3419
    %v3555 = vunpack.c.l.b16 %v3420
    %v3556 = vunpack.c.l.b16 %v3421
    %v3557 = vunpack.c.l.b16 %v3422
    %v3558 = vunpack.c.l.b16 %v3423
    %v3559 = vunpack.c.l.b16 %v3424
    %v3560 = vunpack.c.l.b16 %v3425
    %v3561 = vunpack.c.l.b16 %v3426
    %v3562 = vunpack.c.l.b16 %v3427
    %v3563 = vunpack.c.l.b16 %v3428
    %v3564 = vunpack.c.l.b16 %v3429
    %v3565 = vunpack.c.l.b16 %v3430
    %v3566 = vunpack.c.l.b16 %v3431
    %v3567 = vunpack.c.l.b16 %v3432
    %v3568 = vunpack.c.l.b16 %v3433
    %v3569 = vunpack.c.l.b16 %v3434
    %v3570 = vunpack.c.l.b16 %v3435
    %v3571 = vunpack.c.l.b16 %v3436
    %v3572 = vunpack.c.l.b16 %v3437
    %v3573 = vunpack.c.l.b16 %v3438
    %v3574 = vunpack.c.l.b16 %v3439
    %v3575 = vunpack.c.l.b16 %v3440
    %v3576 = vunpack.c.l.b16 %v3441
    %v3577 = vunpack.c.l.b16 %v3442
    %v3578 = vunpack.c.l.b16 %v3443
    %v3579 = vunpack.c.l.b16 %v3444
    %v3580 = vunpack.c.l.b16 %v3445
    %v3581 = vunpack.c.l.b16 %v3446
    %v3582 = vunpack.c.l.b16 %v3447
    %v3583 = vunpack.c.l.b16 %v3448
    %v3584 = vunpack.c.l.b16 %v3449
    %v3585 = vunpack.c.l.b16 %v3450
    %v3586 = vunpack.c.l.b16 %v3451
    %v3587 = vunpack.c.l.b16 %v3452
    %v3588 = vunpack.c.l.b16 %v3453
    %v3589 = vpack.c.b16 %v3526, %v3525
    %v3590 = vpack.c.b16 %v3528, %v3527
    %v3591 = vpack.c.b16 %v3530, %v3529
    %v3592 = vpack.c.b16 %v3532, %v3531
    %v3593 = vpack.c.b16 %v3534, %v3533
    %v3594 = vpack.c.b16 %v3536, %v3535
    %v3595 = vpack.c.b16 %v3538, %v3537
    %v3596 = vpack.c.b16 %v3540, %v3539
    %v3597 = vpack.c.b16 %v3542, %v3541
    %v3598 = vpack.c.b16 %v3544, %v3543
    %v3599 = vpack.c.b16 %v3546, %v3545
    %v3600 = vpack.c.b16 %v3548, %v3547
    %v3601 = vpack.c.b16 %v3550, %v3549
    %v3602 = vpack.c.b16 %v3552, %v3551
    %v3603 = vpack.c.b16 %v3554, %v3553
    %v3604 = vpack.c.b16 %v3556, %v3555
    %v3605 = vpack.c.b16 %v3558, %v3557
    %v3606 = vpack.c.b16 %v3560, %v3559
    %v3607 = vpack.c.b16 %v3562, %v3561
    %v3608 = vpack.c.b16 %v3564, %v3563
    %v3609 = vpack.c.b16 %v3566, %v3565
    %v3610 = vpack.c.b16 %v3568, %v3567
    %v3611 = vpack.c.b16 %v3570, %v3569
    %v3612 = vpack.c.b16 %v3572, %v3571
    %v3613 = vpack.c.b16 %v3574, %v3573
    %v3614 = vpack.c.b16 %v3576, %v3575
    %v3615 = vpack.c.b16 %v3578, %v3577
    %v3616 = vpack.c.b16 %v3580, %v3579
    %v3617 = vpack.c.b16 %v3582, %v3581
    %v3618 = vpack.c.b16 %v3584, %v3583
    %v3619 = vpack.c.b16 %v3586, %v3585
    %v3620 = vpack.c.b16 %v3588, %v3587
    %3653 = vmatprep.subr.bf16.mxu0 0
    %3654 = vmatpush1.bf16.msra.mxu0 %v3596
    %3655 = vmatprep.subr.bf16.mxu0 0
    %3656 = vmatpush1.bf16.msra.mxu0 %v3595
    %3657 = vmatprep.subr.bf16.mxu0 0
    %3658 = vmatpush1.bf16.msra.mxu0 %v3594
    %3659 = vmatprep.subr.bf16.mxu0 0
    %3660 = vmatpush1.bf16.msra.mxu0 %v3593
    %3661 = vmatprep.subr.bf16.mxu0 0
    %3662 = vmatpush1.bf16.msra.mxu0 %v3592
    %3663 = vmatprep.subr.bf16.mxu0 0
    %3664 = vmatpush1.bf16.msra.mxu0 %v3591
    %3665 = vmatprep.subr.bf16.mxu0 0
    %3666 = vmatpush1.bf16.msra.mxu0 %v3590
    %3667 = vmatprep.subr.bf16.mxu0 0
    %3668 = vmatpush1.bf16.msra.mxu0 %v3589
    %3669 = vmatprep.subr.bf16.mxu0 0
    %3670 = vmatpush2.bf16.msra.mxu0 %v3604
    %3671 = vmatprep.subr.bf16.mxu0 0
    %3672 = vmatpush2.bf16.msra.mxu0 %v3603
    %3673 = vmatprep.subr.bf16.mxu0 0
    %3674 = vmatpush2.bf16.msra.mxu0 %v3602
    %3675 = vmatprep.subr.bf16.mxu0 0
    %3676 = vmatpush2.bf16.msra.mxu0 %v3601
    %3677 = vmatprep.subr.bf16.mxu0 0
    %3678 = vmatpush2.bf16.msra.mxu0 %v3600
    %3679 = vmatprep.subr.bf16.mxu0 0
    %3680 = vmatpush2.bf16.msra.mxu0 %v3599
    %3681 = vmatprep.subr.bf16.mxu0 0
    %3682 = vmatpush2.bf16.msra.mxu0 %v3598
    %3683 = vmatprep.subr.bf16.mxu0 0
    %3684 = vmatpush2.bf16.msra.mxu0 %v3597
    %3685 = vmatprep.mubr.bf16.mxu0 %v3359
    %3686 = vmatmul.mubr.bf16.gmra.mxu0 %v3358
    %v3687 = vpop.f32.mrf.mxu0
    %v3688 = vadd.f32 %v3459, %v3687
    %v3689 = vpop.f32.mrf.mxu0
    %v3690 = vpop.f32.mrf.mxu0
    %v3691 = vadd.f32 %v3459, %v3690
    %v3692 = vpop.f32.mrf.mxu0
    %3693 = vmatprep.mubr.bf16.mxu0 %v3363
    %3694 = vmatmul.mubr.bf16.gmra.mxu0 %v3362
    %v3695 = vpop.f32.mrf.mxu0
    %v3696 = vadd.f32 %v3459, %v3695
    %v3697 = vpop.f32.mrf.mxu0
    %v3698 = vpop.f32.mrf.mxu0
    %v3699 = vadd.f32 %v3459, %v3698
    %v3700 = vpop.f32.mrf.mxu0
    %3701 = vmatprep.mubr.bf16.mxu0 %v3367
    %3702 = vmatmul.mubr.bf16.gmra.mxu0 %v3366
    %v3703 = vpop.f32.mrf.mxu0
    %v3704 = vadd.f32 %v3459, %v3703
    %v3705 = vpop.f32.mrf.mxu0
    %v3706 = vpop.f32.mrf.mxu0
    %v3707 = vadd.f32 %v3459, %v3706
    %v3708 = vpop.f32.mrf.mxu0
    %3709 = vmatprep.mubr.bf16.mxu0 %v3371
    %3710 = vmatmul.mubr.bf16.gmra.mxu0 %v3370
    %v3711 = vpop.f32.mrf.mxu0
    %v3712 = vadd.f32 %v3459, %v3711
    %v3713 = vpop.f32.mrf.mxu0
    %v3714 = vpop.f32.mrf.mxu0
    %v3715 = vadd.f32 %v3459, %v3714
    %v3716 = vpop.f32.mrf.mxu0
    %3717 = vmatprep.mubr.bf16.mxu0 %v3375
    %3718 = vmatmul.mubr.bf16.gmra.mxu0 %v3374
    %v3719 = vpop.f32.mrf.mxu0
    %v3720 = vadd.f32 %v3459, %v3719
    %v3721 = vpop.f32.mrf.mxu0
    %v3722 = vpop.f32.mrf.mxu0
    %v3723 = vadd.f32 %v3459, %v3722
    %v3724 = vpop.f32.mrf.mxu0
    %3725 = vmatprep.mubr.bf16.mxu0 %v3379
    %3726 = vmatmul.mubr.bf16.gmra.mxu0 %v3378
    %v3727 = vpop.f32.mrf.mxu0
    %v3728 = vadd.f32 %v3459, %v3727
    %v3729 = vpop.f32.mrf.mxu0
    %v3730 = vpop.f32.mrf.mxu0
    %v3731 = vadd.f32 %v3459, %v3730
    %v3732 = vpop.f32.mrf.mxu0
    %3733 = vmatprep.mubr.bf16.mxu0 %v3383
    %3734 = vmatmul.mubr.bf16.gmra.mxu0 %v3382
    %v3735 = vpop.f32.mrf.mxu0
    %v3736 = vadd.f32 %v3459, %v3735
    %v3737 = vpop.f32.mrf.mxu0
    %v3738 = vpop.f32.mrf.mxu0
    %v3739 = vadd.f32 %v3459, %v3738
    %v3740 = vpop.f32.mrf.mxu0
    %3741 = vmatprep.mubr.bf16.mxu0 %v3387
    %3742 = vmatmul.mubr.bf16.gmra.mxu0 %v3386
    %v3743 = vpop.f32.mrf.mxu0
    %v3744 = vadd.f32 %v3459, %v3743
    %v3745 = vpop.f32.mrf.mxu0
    %v3746 = vpop.f32.mrf.mxu0
    %v3747 = vadd.f32 %v3459, %v3746
    %v3748 = vpop.f32.mrf.mxu0
    %3749 = vdwg.mxu0
    %3750 = vmatprep.subr.bf16.mxu0 0
    %3751 = vmatpush1.bf16.msra.mxu0 %v3612
    %3752 = vmatprep.subr.bf16.mxu0 0
    %3753 = vmatpush1.bf16.msra.mxu0 %v3611
    %3754 = vmatprep.subr.bf16.mxu0 0
    %3755 = vmatpush1.bf16.msra.mxu0 %v3610
    %3756 = vmatprep.subr.bf16.mxu0 0
    %3757 = vmatpush1.bf16.msra.mxu0 %v3609
    %3758 = vmatprep.subr.bf16.mxu0 0
    %3759 = vmatpush1.bf16.msra.mxu0 %v3608
    %3760 = vmatprep.subr.bf16.mxu0 0
    %3761 = vmatpush1.bf16.msra.mxu0 %v3607
    %3762 = vmatprep.subr.bf16.mxu0 0
    %3763 = vmatpush1.bf16.msra.mxu0 %v3606
    %3764 = vmatprep.subr.bf16.mxu0 0
    %3765 = vmatpush1.bf16.msra.mxu0 %v3605
    %3766 = vmatprep.subr.bf16.mxu0 0
    %3767 = vmatpush2.bf16.msra.mxu0 %v3620
    %3768 = vmatprep.subr.bf16.mxu0 0
    %3769 = vmatpush2.bf16.msra.mxu0 %v3619
    %3770 = vmatprep.subr.bf16.mxu0 0
    %3771 = vmatpush2.bf16.msra.mxu0 %v3618
    %3772 = vmatprep.subr.bf16.mxu0 0
    %3773 = vmatpush2.bf16.msra.mxu0 %v3617
    %3774 = vmatprep.subr.bf16.mxu0 0
    %3775 = vmatpush2.bf16.msra.mxu0 %v3616
    %3776 = vmatprep.subr.bf16.mxu0 0
    %3777 = vmatpush2.bf16.msra.mxu0 %v3615
    %3778 = vmatprep.subr.bf16.mxu0 0
    %3779 = vmatpush2.bf16.msra.mxu0 %v3614
    %3780 = vmatprep.subr.bf16.mxu0 0
    %3781 = vmatpush2.bf16.msra.mxu0 %v3613
    %3782 = vmatprep.mubr.bf16.mxu0 %v3361
    %3783 = vmatmul.mubr.bf16.gmra.mxu0 %v3360
    %v3784 = vpop.f32.mrf.mxu0
    %v3785 = vadd.f32 %v3688, %v3784
    %v3786 = vpop.f32.mrf.mxu0
    %v3787 = vpop.f32.mrf.mxu0
    %v3788 = vadd.f32 %v3691, %v3787
    %v3789 = vpop.f32.mrf.mxu0
    %3790 = vmatprep.mubr.bf16.mxu0 %v3365
    %3791 = vmatmul.mubr.bf16.gmra.mxu0 %v3364
    %v3792 = vpop.f32.mrf.mxu0
    %v3793 = vadd.f32 %v3696, %v3792
    %v3794 = vpop.f32.mrf.mxu0
    %v3795 = vpop.f32.mrf.mxu0
    %v3796 = vadd.f32 %v3699, %v3795
    %v3797 = vpop.f32.mrf.mxu0
    %3798 = vmatprep.mubr.bf16.mxu0 %v3369
    %3799 = vmatmul.mubr.bf16.gmra.mxu0 %v3368
    %v3800 = vpop.f32.mrf.mxu0
    %v3801 = vadd.f32 %v3704, %v3800
    %v3802 = vpop.f32.mrf.mxu0
    %v3803 = vpop.f32.mrf.mxu0
    %v3804 = vadd.f32 %v3707, %v3803
    %v3805 = vpop.f32.mrf.mxu0
    %3806 = vmatprep.mubr.bf16.mxu0 %v3373
    %3807 = vmatmul.mubr.bf16.gmra.mxu0 %v3372
    %v3808 = vpop.f32.mrf.mxu0
    %v3809 = vadd.f32 %v3712, %v3808
    %v3810 = vpop.f32.mrf.mxu0
    %v3811 = vpop.f32.mrf.mxu0
    %v3812 = vadd.f32 %v3715, %v3811
    %v3813 = vpop.f32.mrf.mxu0
    %3814 = vmatprep.mubr.bf16.mxu0 %v3377
    %3815 = vmatmul.mubr.bf16.gmra.mxu0 %v3376
    %v3816 = vpop.f32.mrf.mxu0
    %v3817 = vadd.f32 %v3720, %v3816
    %v3818 = vpop.f32.mrf.mxu0
    %v3819 = vpop.f32.mrf.mxu0
    %v3820 = vadd.f32 %v3723, %v3819
    %v3821 = vpop.f32.mrf.mxu0
    %3822 = vmatprep.mubr.bf16.mxu0 %v3381
    %3823 = vmatmul.mubr.bf16.gmra.mxu0 %v3380
    %v3824 = vpop.f32.mrf.mxu0
    %v3825 = vadd.f32 %v3728, %v3824
    %v3826 = vpop.f32.mrf.mxu0
    %v3827 = vpop.f32.mrf.mxu0
    %v3828 = vadd.f32 %v3731, %v3827
    %v3829 = vpop.f32.mrf.mxu0
    %3830 = vmatprep.mubr.bf16.mxu0 %v3385
    %3831 = vmatmul.mubr.bf16.gmra.mxu0 %v3384
    %v3832 = vpop.f32.mrf.mxu0
    %v3833 = vadd.f32 %v3736, %v3832
    %v3834 = vpop.f32.mrf.mxu0
    %v3835 = vpop.f32.mrf.mxu0
    %v3836 = vadd.f32 %v3739, %v3835
    %v3837 = vpop.f32.mrf.mxu0
    %3838 = vmatprep.mubr.bf16.mxu0 %v3389
    %3839 = vmatmul.mubr.bf16.gmra.mxu0 %v3388
    %v3840 = vpop.f32.mrf.mxu0
    %v3841 = vadd.f32 %v3744, %v3840
    %v3842 = vpop.f32.mrf.mxu0
    %v3843 = vpop.f32.mrf.mxu0
    %v3844 = vadd.f32 %v3747, %v3843
    %v3845 = vpop.f32.mrf.mxu0
    %3846 = vdwg.mxu0
    %3847 = vst [vmem:[#allocation13] sm:$0xff] %v3785
    %3848 = vst [vmem:[#allocation13 + $0x8] sm:$0xff] %v3788
    %3849 = vst [vmem:[#allocation13 + $0x10] sm:$0xff] %v3793
    %3850 = vst [vmem:[#allocation13 + $0x18] sm:$0xff] %v3796
    %3851 = vst [vmem:[#allocation13 + $0x20] sm:$0xff] %v3801
    %3852 = vst [vmem:[#allocation13 + $0x28] sm:$0xff] %v3804
    %3853 = vst [vmem:[#allocation13 + $0x30] sm:$0xff] %v3809
    %3854 = vst [vmem:[#allocation13 + $0x38] sm:$0xff] %v3812
    %3855 = vst [vmem:[#allocation13 + $0x40] sm:$0xff] %v3817
    %3856 = vst [vmem:[#allocation13 + $0x48] sm:$0xff] %v3820
    %3857 = vst [vmem:[#allocation13 + $0x50] sm:$0xff] %v3825
    %3858 = vst [vmem:[#allocation13 + $0x58] sm:$0xff] %v3828
    %3859 = vst [vmem:[#allocation13 + $0x60] sm:$0xff] %v3833
    %3860 = vst [vmem:[#allocation13 + $0x68] sm:$0xff] %v3836
    %3861 = vst [vmem:[#allocation13 + $0x70] sm:$0xff] %v3841
    %3862 = vst [vmem:[#allocation13 + $0x78] sm:$0xff] %v3844
    // Predicated region
    $region62: #{tpu_custom_call.1} parent=1 // pred_check
      _
    $region63: #{tpu_custom_call.1} parent=1 // pred_check_branch
      %3864 = sbr.rel (0) target = $region65
    $region64: #{tpu_custom_call.1} parent=1 // pred_region
      %s3866 = ssub.s32 2048, 2048
      %3867 = vsyncadd [#allocation4], %s3866
      %s3868 = sshll.u32 [#allocation13], 4
      %s3869 = int_to_ptr.vmem [resolvable:$true] %s3868
      %3874 = dma.vmem_to_hbm [thread:$0]  %s3869, 2048, %s9, [#allocation4], 128, 128, 8
    $region65: #{tpu_custom_call.1} parent=1 // pred_fallthru
      _
    // Predicated region
    $region66: #{tpu_custom_call.1} parent=1 // pred_check
      _
    $region67: #{tpu_custom_call.1} parent=1 // pred_check_branch
      %3876 = sbr.rel (0) target = $region69
    $region68: #{tpu_custom_call.1} parent=1 // pred_region
      %3877 = dma.done [#allocation4], 2048
    $region69: #{tpu_custom_call.1} parent=1 // pred_fallthru
      _
    %3878 = vsyncpa [#allocation3], 1
    %3879 = vsyncpa [#allocation6], 1
    %3880 = vsyncpa [#allocation9], 1
    %3881 = vsyncpa [#allocation12], 1
    %3882 = vsyncpa [#allocation4], 1

</llo_original>
